<compile_context>
chip_gen: v7x
topology: tpu7x:2x2x1
jax: 0.10.0
libtpu: 0.0.40
codegen_flags: <defaults>
</compile_context>

<pallas_src>
import functools
import math

import jax
import jax.numpy as jnp
from jax.experimental import pallas as pl
from jax.experimental.pallas import tpu as pltpu


# ------------------------------ small helpers ------------------------------

def _round_up(x, m):
    return (x + m - 1) // m * m


def _pick_tile(dim, cap):
    """Largest multiple of 128 <= cap that divides dim (dim is a 128-multiple)."""
    t = max(128, min(cap, dim) // 128 * 128)
    while dim % t:
        t -= 128
    return t


def _vmem_budget_bytes():
    # 3/4 of physical VMEM, capped at 96 MiB:
    #   v5e/v6e (128 MiB VMEM) -> 96 MiB;  v7x (64 MiB / TensorCore) -> 48 MiB.
    try:
        cap = pltpu.get_tpu_info().vmem_capacity_bytes
        return int(max(32 << 20, min((cap * 3) // 4, 96 << 20)))
    except Exception:
        return 64 << 20


def _mosaic_params(dimension_semantics):
    return pltpu.CompilerParams(dimension_semantics=dimension_semantics,
                                vmem_limit_bytes=_vmem_budget_bytes())


_SQRT_HALF = 0.7071067811865476


def _erf(x):
    # Abramowitz & Stegun 7.1.26 (|err| <= 1.5e-7): exp + rationals only, so it
    # lowers on the TPU VPU/EUP without requiring a native erf primitive.
    a1, a2, a3, a4, a5 = 0.254829592, -0.284496736, 1.421413741, -1.453152027, 1.061405429
    p = 0.3275911
    sign = jnp.where(x < 0.0, -1.0, 1.0)
    ax = jnp.abs(x)
    t = 1.0 / (1.0 + p * ax)
    poly = ((((a5 * t + a4) * t + a3) * t + a2) * t + a1) * t
    return sign * (1.0 - poly * jnp.exp(-ax * ax))


def _gelu_exact(x):
    # torch.nn.GELU default (erf form), not the tanh approximation.
    return 0.5 * x * (1.0 + _erf(x * _SQRT_HALF))


def _layernorm(x, gamma, beta, eps=1e-5):
    mu = jnp.mean(x, axis=-1, keepdims=True)
    var = jnp.mean(jnp.square(x - mu), axis=-1, keepdims=True)
    return (x - mu) * jax.lax.rsqrt(var + eps) * gamma + beta


# ------------------------- tiled linear (MXU) kernel -------------------------

def _linear_kernel(activation, x_ref, w_ref, b_ref, o_ref, acc_ref):
    @pl.when(pl.program_id(2) == 0)
    def _():
        acc_ref[...] = jnp.zeros_like(acc_ref)

    acc_ref[...] += jnp.dot(x_ref[...].astype(jnp.bfloat16), w_ref[...],
                            preferred_element_type=jnp.float32)

    @pl.when(pl.program_id(2) == pl.num_programs(2) - 1)
    def _():
        y = acc_ref[...] + b_ref[...]
        if activation == "gelu":
            y = _gelu_exact(y)
        o_ref[...] = y.astype(o_ref.dtype)


def pallas_linear(x, w_p, b_p, n_out, activation=None, out_dtype=jnp.float32,
                  tm_cap=512, tn_cap=1024, tk_cap=1024):
    """x: (..., K) f32  @  pre-padded bf16 w_p: (Kp, Np)  +  f32 b_p: (1, Np)."""
    orig = x.shape
    K = orig[-1]
    Kp, Np = w_p.shape
    x2 = x.reshape(-1, K)
    M = x2.shape[0]
    if Kp != K:
        x2 = jnp.pad(x2, ((0, 0), (0, Kp - K)))
    tm = min(tm_cap, _round_up(M, 16))
    Mp = _round_up(M, tm)
    if Mp != M:
        x2 = jnp.pad(x2, ((0, Mp - M), (0, 0)))
    tn = _pick_tile(Np, tn_cap)
    tk = _pick_tile(Kp, tk_cap)
    gk = Kp // tk

    if gk > 1:
        # Weight-streaming regime: deeper buffering on the weight stream.
        w_spec = pl.BlockSpec((tk, tn), lambda i, j, k: (k, j),
                              pipeline_mode=pl.Buffered(3))
    else:
        w_spec = pl.BlockSpec((tk, tn), lambda i, j, k: (k, j))

    out = pl.pallas_call(
        functools.partial(_linear_kernel, activation),
        out_shape=jax.ShapeDtypeStruct((Mp, Np), out_dtype),
        grid=(Mp // tm, Np // tn, gk),
        in_specs=[
            pl.BlockSpec((tm, tk), lambda i, j, k: (i, k)),
            w_spec,
            pl.BlockSpec((1, tn), lambda i, j, k: (0, j)),
        ],
        out_specs=pl.BlockSpec((tm, tn), lambda i, j, k: (i, j)),
        scratch_shapes=[pltpu.VMEM((tm, tn), jnp.float32)],
        compiler_params=_mosaic_params(("parallel", "parallel", "arbitrary")),
    )(x2, w_p, b_p)

    return out[:M, :n_out].reshape(orig[:-1] + (n_out,))


# ----------------------- layernorm kernel (embeddings) -----------------------

def _ln_kernel(x_ref, g_ref, b_ref, o_ref):
    o_ref[...] = _layernorm(x_ref[...], g_ref[...], b_ref[...])


def pallas_layernorm(x, gamma, beta):
    shape = x.shape
    H = shape[-1]
    x2 = x.reshape(-1, H).astype(jnp.float32)
    M = x2.shape[0]
    tm = min(1024, _round_up(M, 8))          # large memory-bound tiles
    Mp = _round_up(M, tm)
    if Mp != M:
        x2 = jnp.pad(x2, ((0, Mp - M), (0, 0)))
    out = pl.pallas_call(
        _ln_kernel,
        out_shape=jax.ShapeDtypeStruct((Mp, H), jnp.float32),
        grid=(Mp // tm,),
        in_specs=[pl.BlockSpec((tm, H), lambda i: (i, 0)),
                  pl.BlockSpec((1, H), lambda i: (0, 0)),
                  pl.BlockSpec((1, H), lambda i: (0, 0))],
        out_specs=pl.BlockSpec((tm, H), lambda i: (i, 0)),
        compiler_params=_mosaic_params(("parallel",)),
    )(x2, gamma, beta)
    return out[:M].reshape(shape)


# -------------------- fused attention block (per batch elem) --------------------
# One grid step = one batch element: projection(s) + all-head attention +
# output projection + residual + LayerNorm, all in VMEM.  grid=(B,) keeps both
# v7x TensorCores busy at B>=2.
# TODO(synk): for long sequences, tile the query axis as a second parallel
# grid dim (requires re-projecting K/V per query tile or a two-pass scheme).

def _attention_core(q, k, v, mask, n_heads, scale, ctx_ref):
    """Per-head attention; head outputs written straight into VMEM ctx scratch."""
    dh = q.shape[-1] // n_heads
    for h in range(n_heads):                 # static unroll, VMEM-resident
        lo = h * dh
        qh = q[:, lo:lo + dh].astype(jnp.bfloat16)
        kh = k[:, lo:lo + dh].astype(jnp.bfloat16)
        vh = v[:, lo:lo + dh].astype(jnp.bfloat16)
        s = jax.lax.dot_general(qh, kh, (((1,), (1,)), ((), ())),
                                preferred_element_type=jnp.float32) * scale
        s = s + mask
        s = s - jnp.max(s, axis=-1, keepdims=True)
        p = jnp.exp(s)
        p = p / jnp.sum(p, axis=-1, keepdims=True)   # exact divide (parity)
        ctx_ref[:, lo:lo + dh] = jnp.dot(p.astype(jnp.bfloat16), vh,
                                         preferred_element_type=jnp.float32)


def _self_attn_block_kernel(n_heads, scale,
                            x_ref, m_ref, wqkv_ref, bqkv_ref, wo_ref, bo_ref,
                            g_ref, b_ref, o_ref, ctx_ref):
    x = x_ref[0]                                   # (S, H) f32
    H = x.shape[-1]
    qkv = jnp.dot(x.astype(jnp.bfloat16), wqkv_ref[...],
                  preferred_element_type=jnp.float32) + bqkv_ref[...]
    _attention_core(qkv[:, :H], qkv[:, H:2 * H], qkv[:, 2 * H:],
                    m_ref[0], n_heads, scale, ctx_ref)
    attn = jnp.dot(ctx_ref[...].astype(jnp.bfloat16), wo_ref[...],
                   preferred_element_type=jnp.float32) + bo_ref[...]
    o_ref[0] = _layernorm(attn + x, g_ref[...], b_ref[...])


def pallas_self_attn_block(x, mask_add, p, ln_g, ln_b, n_heads):
    B, S, H = x.shape
    Bm, Mq, Sk = mask_add.shape
    mask_idx = (lambda b: (0, 0, 0)) if Bm == 1 else (lambda b: (b, 0, 0))
    scale = 1.0 / math.sqrt(H // n_heads)
    return pl.pallas_call(
        functools.partial(_self_attn_block_kernel, n_heads, scale),
        out_shape=jax.ShapeDtypeStruct((B, S, H), jnp.float32),
        grid=(B,),
        in_specs=[
            pl.BlockSpec((1, S, H), lambda b: (b, 0, 0)),
            pl.BlockSpec((1, Mq, Sk), mask_idx),
            pl.BlockSpec(p["w_qkv"].shape, lambda b: (0, 0)),
            pl.BlockSpec(p["b_qkv"].shape, lambda b: (0, 0)),
            pl.BlockSpec(p["wo"].shape, lambda b: (0, 0)),
            pl.BlockSpec(p["bo"].shape, lambda b: (0, 0)),
            pl.BlockSpec(ln_g.shape, lambda b: (0, 0)),
            pl.BlockSpec(ln_b.shape, lambda b: (0, 0)),
        ],
        out_specs=pl.BlockSpec((1, S, H), lambda b: (b, 0, 0)),
        scratch_shapes=[pltpu.VMEM((S, H), jnp.float32)],
        compiler_params=_mosaic_params(("parallel",)),
    )(x, mask_add.astype(jnp.float32),
      p["w_qkv"], p["b_qkv"], p["wo"], p["bo"], ln_g, ln_b)


def _cross_attn_block_kernel(n_heads, scale,
                             x_ref, e_ref, m_ref, wq_ref, bq_ref, wkv_ref,
                             bkv_ref, wo_ref, bo_ref, g_ref, b_ref,
                             o_ref, ctx_ref):
    x = x_ref[0]                                   # (Sq, D)
    e = e_ref[0]                                   # (Se, D)
    D = x.shape[-1]
    q = jnp.dot(x.astype(jnp.bfloat16), wq_ref[...],
                preferred_element_type=jnp.float32) + bq_ref[...]
    kv = jnp.dot(e.astype(jnp.bfloat16), wkv_ref[...],
                 preferred_element_type=jnp.float32) + bkv_ref[...]
    _attention_core(q, kv[:, :D], kv[:, D:], m_ref[0], n_heads, scale, ctx_ref)
    attn = jnp.dot(ctx_ref[...].astype(jnp.bfloat16), wo_ref[...],
                   preferred_element_type=jnp.float32) + bo_ref[...]
    o_ref[0] = _layernorm(attn + x, g_ref[...], b_ref[...])


def pallas_cross_attn_block(x, enc, mask_add, p, ln_g, ln_b, n_heads):
    B, Sq, D = x.shape
    Se = enc.shape[1]
    Bm, Mq, Sk = mask_add.shape
    mask_idx = (lambda b: (0, 0, 0)) if Bm == 1 else (lambda b: (b, 0, 0))
    scale = 1.0 / math.sqrt(D // n_heads)
    return pl.pallas_call(
        functools.partial(_cross_attn_block_kernel, n_heads, scale),
        out_shape=jax.ShapeDtypeStruct((B, Sq, D), jnp.float32),
        grid=(B,),
        in_specs=[
            pl.BlockSpec((1, Sq, D), lambda b: (b, 0, 0)),
            pl.BlockSpec((1, Se, D), lambda b: (b, 0, 0)),
            pl.BlockSpec((1, Mq, Sk), mask_idx),
            pl.BlockSpec(p["wq"].shape, lambda b: (0, 0)),
            pl.BlockSpec(p["bq"].shape, lambda b: (0, 0)),
            pl.BlockSpec(p["w_kv"].shape, lambda b: (0, 0)),
            pl.BlockSpec(p["b_kv"].shape, lambda b: (0, 0)),
            pl.BlockSpec(p["wo"].shape, lambda b: (0, 0)),
            pl.BlockSpec(p["bo"].shape, lambda b: (0, 0)),
            pl.BlockSpec(ln_g.shape, lambda b: (0, 0)),
            pl.BlockSpec(ln_b.shape, lambda b: (0, 0)),
        ],
        out_specs=pl.BlockSpec((1, Sq, D), lambda b: (b, 0, 0)),
        scratch_shapes=[pltpu.VMEM((Sq, D), jnp.float32)],
        compiler_params=_mosaic_params(("parallel",)),
    )(x, enc, mask_add.astype(jnp.float32),
      p["wq"], p["bq"], p["w_kv"], p["b_kv"], p["wo"], p["bo"], ln_g, ln_b)


# --------------------------- fused FFN block kernel ---------------------------

def _ffn_block_kernel(x_ref, w1_ref, b1_ref, w2_ref, b2_ref, g_ref, b_ref, o_ref):
    x = x_ref[...]                                 # (tm, H) f32
    h = jnp.dot(x.astype(jnp.bfloat16), w1_ref[...],
                preferred_element_type=jnp.float32) + b1_ref[...]
    h = _gelu_exact(h)
    y = jnp.dot(h.astype(jnp.bfloat16), w2_ref[...],
                preferred_element_type=jnp.float32) + b2_ref[...] + x
    o_ref[...] = _layernorm(y, g_ref[...], b_ref[...])


def pallas_ffn_block(x, w1, b1, w2, b2, ln_g, ln_b):
    shape = x.shape
    H = shape[-1]
    x2 = x.reshape(-1, H)
    M = x2.shape[0]
    tm = min(512, _round_up(M, 16))
    Mp = _round_up(M, tm)
    if Mp != M:
        x2 = jnp.pad(x2, ((0, Mp - M), (0, 0)))
    out = pl.pallas_call(
        _ffn_block_kernel,
        out_shape=jax.ShapeDtypeStruct((Mp, H), jnp.float32),
        grid=(Mp // tm,),
        in_specs=[
            pl.BlockSpec((tm, H), lambda i: (i, 0)),
            pl.BlockSpec(w1.shape, lambda i: (0, 0)),
            pl.BlockSpec(b1.shape, lambda i: (0, 0)),
            pl.BlockSpec(w2.shape, lambda i: (0, 0)),
            pl.BlockSpec(b2.shape, lambda i: (0, 0)),
            pl.BlockSpec(ln_g.shape, lambda i: (0, 0)),
            pl.BlockSpec(ln_b.shape, lambda i: (0, 0)),
        ],
        out_specs=pl.BlockSpec((tm, H), lambda i: (i, 0)),
        compiler_params=_mosaic_params(("parallel",)),
    )(x2, w1, b1, w2, b2, ln_g, ln_b)
    return out[:M].reshape(shape)


# --------------------- LM head + fused cross-entropy kernel ---------------------

def _lm_head_ce_kernel(vocab, x_ref, w_ref, b_ref, lbl_ref,
                       logits_ref, nll_ref, acc_ref):
    @pl.when(pl.program_id(1) == 0)
    def _():
        acc_ref[...] = jnp.zeros_like(acc_ref)

    acc_ref[...] += jnp.dot(x_ref[...].astype(jnp.bfloat16), w_ref[...],
                            preferred_element_type=jnp.float32)

    @pl.when(pl.program_id(1) == pl.num_programs(1) - 1)
    def _():
        logits = acc_ref[...] + b_ref[...]                       # (tm, Vp) f32
        logits_ref[...] = logits
        # Fused CE epilogue: log-sum-exp + label gather while logits are in VMEM.
        col = jax.lax.broadcasted_iota(jnp.int32, logits.shape, 1)
        masked = jnp.where(col < vocab, logits, -1e30)           # ignore pad cols
        m = jnp.max(masked, axis=-1, keepdims=True)
        lse = jnp.log(jnp.sum(jnp.exp(masked - m), axis=-1, keepdims=True)) + m
        lbl = lbl_ref[...]                                       # (tm, 1) int32
        tgt = jnp.sum(jnp.where(col == lbl, logits, 0.0), axis=-1, keepdims=True)
        valid = (lbl >= 0).astype(jnp.float32)                   # HF ignore_index
        nll_ref[...] = (lse - tgt) * valid


def pallas_lm_head_ce(x, w_p, b_p, labels, vocab):
    """Fused LM head: logits = x @ W + b, plus in-kernel CE(NLL) per row."""
    B, S, K = x.shape
    Kp, Vp = w_p.shape

    if Vp > 8192:
        # TODO(synk): for a real ~60k-vocab Marian head, tile the vocab axis and
        # keep an online max / log-sum-exp so f32 logits never round-trip HBM.
        logits = pallas_linear(x, w_p, b_p, vocab)
        logp = jax.nn.log_softmax(logits, axis=-1)
        valid = labels >= 0
        safe = jnp.where(valid, labels, 0)
        nll = -jnp.take_along_axis(logp, safe[..., None], axis=-1)[..., 0]
        loss = jnp.sum(jnp.where(valid, nll, 0.0)) / jnp.maximum(jnp.sum(valid), 1)
        return loss, logits

    x2 = x.reshape(-1, K)
    lbl2 = labels.reshape(-1, 1).astype(jnp.int32)
    M = x2.shape[0]
    if Kp != K:
        x2 = jnp.pad(x2, ((0, 0), (0, Kp - K)))
    tm = min(256, _round_up(M, 16))
    Mp = _round_up(M, tm)
    if Mp != M:
        x2 = jnp.pad(x2, ((0, Mp - M), (0, 0)))
        lbl2 = jnp.pad(lbl2, ((0, Mp - M), (0, 0)), constant_values=-1)
    tk = _pick_tile(Kp, 512)
    gk = Kp // tk

    logits, nll = pl.pallas_call(
        functools.partial(_lm_head_ce_kernel, vocab),
        out_shape=(jax.ShapeDtypeStruct((Mp, Vp), jnp.float32),
                   jax.ShapeDtypeStruct((Mp, 1), jnp.float32)),
        grid=(Mp // tm, gk),
        in_specs=[
            pl.BlockSpec((tm, tk), lambda i, k: (i, k)),
            pl.BlockSpec((tk, Vp), lambda i, k: (k, 0)),
            pl.BlockSpec((1, Vp), lambda i, k: (0, 0)),
            pl.BlockSpec((tm, 1), lambda i, k: (i, 0)),
        ],
        out_specs=(pl.BlockSpec((tm, Vp), lambda i, k: (i, 0)),
                   pl.BlockSpec((tm, 1), lambda i, k: (i, 0))),
        scratch_shapes=[pltpu.VMEM((tm, Vp), jnp.float32)],
        compiler_params=_mosaic_params(("parallel", "arbitrary")),
    )(x2, w_p, b_p, lbl2)

    logits = logits[:M, :vocab].reshape(B, S, vocab)
    n_valid = jnp.maximum(jnp.sum(labels >= 0), 1).astype(jnp.float32)
    loss = jnp.sum(nll[:M, 0]) / n_valid
    return loss, logits


# ------------------------------ model pieces ------------------------------

def bert_encoder(p, input_ids, attention_mask, cfg):
    S = input_ids.shape[1]
    pos = jnp.arange(S)
    h = p["word_emb"][input_ids] + p["pos_emb"][pos][None]        # gather glue
    h = pallas_layernorm(h, p["ln_emb_g"], p["ln_emb_b"])
    # Un-replicated additive key mask (B, 1, S); broadcast inside the kernel.
    key_mask = (1.0 - attention_mask.astype(jnp.float32))[:, None, :] * -1e9
    h = pallas_self_attn_block(h, key_mask, p["attn"], p["ln1_g"], p["ln1_b"],
                               cfg["n_heads"])
    h = pallas_ffn_block(h, p["ffn_w1"], p["ffn_b1"], p["ffn_w2"], p["ffn_b2"],
                         p["ln2_g"], p["ln2_b"])
    return h                                                      # last_hidden_state


def shift_tokens_right(labels, decoder_start_token_id):
    B = labels.shape[0]
    start = jnp.full((B, 1), decoder_start_token_id, labels.dtype)
    return jnp.concatenate([start, labels[:, :-1]], axis=1)


def marian_decoder(p, encoder_hidden, attention_mask, labels, cfg):
    B, S = labels.shape
    dec_ids = shift_tokens_right(labels, cfg["decoder_start_token_id"])
    pos = jnp.arange(S)
    h = (p["dec_emb"][dec_ids] * math.sqrt(cfg["d_model"])
         + p["dec_pos_emb"][pos][None])

    causal = (1.0 - jnp.tril(jnp.ones((S, S), jnp.float32)))[None] * -1e9  # (1,S,S)
    h = pallas_self_attn_block(h, causal, p["self_attn"], p["ln1_g"], p["ln1_b"],
                               cfg["n_heads"])

    cross_mask = (1.0 - attention_mask.astype(jnp.float32))[:, None, :] * -1e9  # (B,1,Se)
    h = pallas_cross_attn_block(h, encoder_hidden, cross_mask, p["cross_attn"],
                                p["ln2_g"], p["ln2_b"], cfg["n_heads"])

    h = pallas_ffn_block(h, p["ffn_w1"], p["ffn_b1"], p["ffn_w2"], p["ffn_b2"],
                         p["ln3_g"], p["ln3_b"])

    loss, logits = pallas_lm_head_ce(h, p["lm_head_w"], p["final_logits_bias"],
                                     labels, cfg["vocab"])
    return loss, logits


def mbert_to_marian_forward(params, input_ids, attention_mask, labels, cfg):
    # encoder_outputs = self.bert(...)
    enc_h = bert_encoder(params["bert"], input_ids, attention_mask, cfg["bert"])
    # projected_hidden = self.projection(hidden_states)
    projected = pallas_linear(enc_h, params["projection"]["w"],
                              params["projection"]["b"], cfg["marian"]["d_model"])
    # marian_output = self.marian(encoder_outputs=(projected_hidden,), ...)
    loss, logits = marian_decoder(params["marian"], projected, attention_mask,
                                  labels, cfg["marian"])
    return {"loss": loss, "logits": logits, "encoder_last_hidden_state": projected}


# ----------------------------- parameter init -----------------------------

def init_params(key, cfg):
    keys = iter(jax.random.split(key, 64))

    def nk():
        return next(keys)

    def dense(din, dout):
        # Weight prep hoisted to init: pad feature dims to 128-lane multiples and
        # cast to bf16 ONCE; bias pre-shaped (1, Np) f32 (no per-forward copies).
        kp, np_ = _round_up(din, 128), _round_up(dout, 128)
        w = jax.random.normal(nk(), (din, dout), jnp.float32) * 0.02
        if (kp, np_) != (din, dout):
            w = jnp.pad(w, ((0, kp - din), (0, np_ - dout)))
        return w.astype(jnp.bfloat16), jnp.zeros((1, np_), jnp.float32)

    def ln(h):
        return jnp.ones((1, h), jnp.float32), jnp.zeros((1, h), jnp.float32)

    def self_attn_params(d):
        w_qkv, b_qkv = dense(d, 3 * d)       # fused Q|K|V projection
        wo, bo = dense(d, d)
        return dict(w_qkv=w_qkv, b_qkv=b_qkv, wo=wo, bo=bo)

    def cross_attn_params(d):
        wq, bq = dense(d, d)
        w_kv, b_kv = dense(d, 2 * d)         # fused K|V projection
        wo, bo = dense(d, d)
        return dict(wq=wq, bq=bq, w_kv=w_kv, b_kv=b_kv, wo=wo, bo=bo)

    bc, mc = cfg["bert"], cfg["marian"]
    H, I = bc["hidden"], bc["intermediate"]
    D, F = mc["d_model"], mc["ffn"]
    # The fused block kernels assume lane-dense (multiple-of-128) feature dims.
    assert H % 128 == 0 and I % 128 == 0 and D % 128 == 0 and F % 128 == 0

    bert = dict(
        word_emb=jax.random.normal(nk(), (bc["vocab"], H), jnp.float32) * 0.02,
        pos_emb=jax.random.normal(nk(), (bc["max_pos"], H), jnp.float32) * 0.02,
        attn=self_attn_params(H),
    )
    bert["ln_emb_g"], bert["ln_emb_b"] = ln(H)
    bert["ln1_g"], bert["ln1_b"] = ln(H)
    bert["ln2_g"], bert["ln2_b"] = ln(H)
    bert["ffn_w1"], bert["ffn_b1"] = dense(H, I)
    bert["ffn_w2"], bert["ffn_b2"] = dense(I, H)

    dec_emb = jax.random.normal(nk(), (mc["vocab"], D), jnp.float32) * 0.02
    Dp, Vp = _round_up(D, 128), _round_up(mc["vocab"], 128)
    lm_head_w = dec_emb.T
    if (Dp, Vp) != (D, mc["vocab"]):
        lm_head_w = jnp.pad(lm_head_w, ((0, Dp - D), (0, Vp - mc["vocab"])))
    marian = dict(
        dec_emb=dec_emb,
        dec_pos_emb=jax.random.normal(nk(), (mc["max_pos"], D), jnp.float32) * 0.02,
        self_attn=self_attn_params(D),
        cross_attn=cross_attn_params(D),
        # Tied LM head: transpose + pad + bf16 cast of dec_emb done ONCE here.
        lm_head_w=lm_head_w.astype(jnp.bfloat16),
        final_logits_bias=jnp.zeros((1, Vp), jnp.float32),
    )
    marian["ln1_g"], marian["ln1_b"] = ln(D)
    marian["ln2_g"], marian["ln2_b"] = ln(D)
    marian["ln3_g"], marian["ln3_b"] = ln(D)
    marian["ffn_w1"], marian["ffn_b1"] = dense(D, F)
    marian["ffn_w2"], marian["ffn_b2"] = dense(F, D)

    pw, pb = dense(H, D)   # nn.Linear(bert.hidden_size, marian.d_model)
    return dict(bert=bert, marian=marian, projection=dict(w=pw, b=pb))


# ---------------------------------- main ----------------------------------

if __name__ == "__main__":
    B, S = 2, 8
    # Lane-dense (multiple-of-128) feature dims, still small.
    cfg = dict(
        bert=dict(vocab=256, hidden=128, intermediate=256, n_heads=4, max_pos=S),
        marian=dict(vocab=256, d_model=128, ffn=256, n_heads=4, max_pos=S,
                    decoder_start_token_id=0),
    )

    root = jax.random.PRNGKey(0)
    k_param, k_ids, k_lbl = jax.random.split(root, 3)
    params = init_params(k_param, cfg)

    input_ids = jax.random.randint(k_ids, (B, S), 0, cfg["bert"]["vocab"], jnp.int32)
    labels = jax.random.randint(k_lbl, (B, S), 0, cfg["marian"]["vocab"], jnp.int32)
    attention_mask = jnp.array(
        [[1, 1, 1, 1, 1, 1, 1, 1],
         [1, 1, 1, 1, 1, 1, 0, 0]], dtype=jnp.int32)

    fwd = jax.jit(lambda p, ids, m, lbl: mbert_to_marian_forward(p, ids, m, lbl, cfg))
    out = fwd(params, input_ids, attention_mask, labels)
    jax.block_until_ready((out["loss"], out["logits"]))

    assert out["logits"].shape == (B, S, cfg["marian"]["vocab"])
    assert out["encoder_last_hidden_state"].shape == (B, S, cfg["marian"]["d_model"])
    assert bool(jnp.isfinite(out["loss"]))
    # TODO(synk): pretrained HF BERT/Marian weight stacks are replaced with
    # deterministic single-layer synthetic equivalents (same dataflow).
    print("KERNEL_OK")
</pallas_src>

<mosaic_0001>
module attributes {stable_mosaic.version = 11 : i64} {
  func.func @_self_attn_block_kernel(%arg0: i32, %arg1: memref<1x8x128xf32, #tpu.memory_space<vmem>>, %arg2: memref<1x1x8xf32, #tpu.memory_space<vmem>>, %arg3: memref<128x384xbf16, #tpu.memory_space<vmem>>, %arg4: memref<1x384xf32, #tpu.memory_space<vmem>>, %arg5: memref<128x128xbf16, #tpu.memory_space<vmem>>, %arg6: memref<1x128xf32, #tpu.memory_space<vmem>>, %arg7: memref<1x128xf32, #tpu.memory_space<vmem>>, %arg8: memref<1x128xf32, #tpu.memory_space<vmem>>, %arg9: memref<1x8x128xf32, #tpu.memory_space<vmem>>, %arg10: memref<8x128xf32, #tpu.memory_space<vmem>>) attributes {dimension_semantics = [#tpu.dimension_semantics<parallel>], iteration_bounds = array<i64: 2>, scalar_prefetch = 0 : i64, scratch_operands = 1 : i64, tpu.core_type = #tpu.core_type<tc>, window_params = [{transform_indices = @transform_0, window_bounds = array<i64: 1, 8, 128>}, {transform_indices = @transform_1, window_bounds = array<i64: 1, 1, 8>}, {pipeline_mode = #tpu.pipeline_mode<synchronous>, transform_indices = @transform_2, window_bounds = array<i64: 128, 384>}, {pipeline_mode = #tpu.pipeline_mode<synchronous>, transform_indices = @transform_3, window_bounds = array<i64: 1, 384>}, {pipeline_mode = #tpu.pipeline_mode<synchronous>, transform_indices = @transform_4, window_bounds = array<i64: 128, 128>}, {pipeline_mode = #tpu.pipeline_mode<synchronous>, transform_indices = @transform_5, window_bounds = array<i64: 1, 128>}, {pipeline_mode = #tpu.pipeline_mode<synchronous>, transform_indices = @transform_6, window_bounds = array<i64: 1, 128>}, {pipeline_mode = #tpu.pipeline_mode<synchronous>, transform_indices = @transform_7, window_bounds = array<i64: 1, 128>}, {transform_indices = @transform_8, window_bounds = array<i64: 1, 8, 128>}]} {
    %c0 = arith.constant 0 : index
    %c0_0 = arith.constant 0 : index
    %c0_1 = arith.constant 0 : index
    %0 = vector.load %arg1[%c0, %c0_0, %c0_1] : memref<1x8x128xf32, #tpu.memory_space<vmem>>, vector<1x8x128xf32>
    %1 = vector.shape_cast %0 : vector<1x8x128xf32> to vector<8x128xf32>
    %2 = arith.truncf %1 : vector<8x128xf32> to vector<8x128xbf16>
    %c0_2 = arith.constant 0 : index
    %c0_3 = arith.constant 0 : index
    %3 = vector.load %arg3[%c0_2, %c0_3] : memref<128x384xbf16, #tpu.memory_space<vmem>>, vector<128x384xbf16>
    %cst = arith.constant dense<0.000000e+00> : vector<8x384xf32>
    %4 = tpu.matmul %2, %3, %cst {dimension_numbers = #tpu.dot_dimension_numbers<[1], [0], [0], [1], [0, 0, 1, 1], [], []>} : vector<8x128xbf16>, vector<128x384xbf16>, vector<8x384xf32> -> vector<8x384xf32>
    %c0_4 = arith.constant 0 : index
    %c0_5 = arith.constant 0 : index
    %5 = vector.load %arg4[%c0_4, %c0_5] : memref<1x384xf32, #tpu.memory_space<vmem>>, vector<1x384xf32>
    %6 = vector.broadcast %5 : vector<1x384xf32> to vector<8x384xf32>
    %7 = arith.addf %4, %6 : vector<8x384xf32>
    %8 = vector.extract_strided_slice %7 {offsets = [0, 0], sizes = [8, 128], strides = [1, 1]} : vector<8x384xf32> to vector<8x128xf32>
    %9 = vector.extract_strided_slice %7 {offsets = [0, 128], sizes = [8, 128], strides = [1, 1]} : vector<8x384xf32> to vector<8x128xf32>
    %10 = vector.extract_strided_slice %7 {offsets = [0, 256], sizes = [8, 128], strides = [1, 1]} : vector<8x384xf32> to vector<8x128xf32>
    %c0_6 = arith.constant 0 : index
    %c0_7 = arith.constant 0 : index
    %c0_8 = arith.constant 0 : index
    %11 = vector.load %arg2[%c0_6, %c0_7, %c0_8] : memref<1x1x8xf32, #tpu.memory_space<vmem>>, vector<1x1x8xf32>
    %12 = vector.shape_cast %11 : vector<1x1x8xf32> to vector<1x8xf32>
    %13 = vector.extract_strided_slice %8 {offsets = [0, 0], sizes = [8, 32], strides = [1, 1]} : vector<8x128xf32> to vector<8x32xf32>
    %14 = arith.truncf %13 : vector<8x32xf32> to vector<8x32xbf16>
    %15 = vector.extract_strided_slice %9 {offsets = [0, 0], sizes = [8, 32], strides = [1, 1]} : vector<8x128xf32> to vector<8x32xf32>
    %16 = arith.truncf %15 : vector<8x32xf32> to vector<8x32xbf16>
    %17 = vector.extract_strided_slice %10 {offsets = [0, 0], sizes = [8, 32], strides = [1, 1]} : vector<8x128xf32> to vector<8x32xf32>
    %18 = arith.truncf %17 : vector<8x32xf32> to vector<8x32xbf16>
    %cst_9 = arith.constant dense<0.000000e+00> : vector<8x8xf32>
    %19 = tpu.matmul %14, %16, %cst_9 {dimension_numbers = #tpu.dot_dimension_numbers<[1], [1], [0], [0], [0, 0, 1, 0], [], []>} : vector<8x32xbf16>, vector<8x32xbf16>, vector<8x8xf32> -> vector<8x8xf32>
    %cst_10 = arith.constant 0.176776692 : f32
    %20 = vector.broadcast %cst_10 : f32 to vector<8x8xf32>
    %21 = arith.mulf %19, %20 : vector<8x8xf32>
    %22 = vector.broadcast %12 : vector<1x8xf32> to vector<8x8xf32>
    %23 = arith.addf %21, %22 : vector<8x8xf32>
    %cst_11 = arith.constant dense<0xFF800000> : vector<8xf32>
    %24 = vector.multi_reduction <maximumf>, %23, %cst_11 [1] : vector<8x8xf32> to vector<8xf32>
    %25 = vector.shape_cast %24 : vector<8xf32> to vector<8x1xf32>
    %26 = vector.broadcast %25 : vector<8x1xf32> to vector<8x8xf32>
    %27 = arith.subf %23, %26 : vector<8x8xf32>
    %28 = math.exp %27 : vector<8x8xf32>
    %cst_12 = arith.constant dense<0.000000e+00> : vector<8xf32>
    %29 = vector.multi_reduction <add>, %28, %cst_12 [1] : vector<8x8xf32> to vector<8xf32>
    %30 = vector.shape_cast %29 : vector<8xf32> to vector<8x1xf32>
    %31 = vector.broadcast %30 : vector<8x1xf32> to vector<8x8xf32>
    %32 = arith.divf %28, %31 : vector<8x8xf32>
    %33 = arith.truncf %32 : vector<8x8xf32> to vector<8x8xbf16>
    %cst_13 = arith.constant dense<0.000000e+00> : vector<8x32xf32>
    %34 = tpu.matmul %33, %18, %cst_13 {dimension_numbers = #tpu.dot_dimension_numbers<[1], [0], [0], [1], [0, 0, 1, 1], [], []>} : vector<8x8xbf16>, vector<8x32xbf16>, vector<8x32xf32> -> vector<8x32xf32>
    %c0_14 = arith.constant 0 : index
    %c0_15 = arith.constant 0 : index
    %35 = vector.load %arg10[%c0_14, %c0_15] : memref<8x128xf32, #tpu.memory_space<vmem>>, vector<8x32xf32>
    tpu.vector_store %arg10[%c0_14, %c0_15], %34 {strides = array<i32>} : memref<8x128xf32, #tpu.memory_space<vmem>>, vector<8x32xf32>,
    %36 = vector.extract_strided_slice %8 {offsets = [0, 32], sizes = [8, 32], strides = [1, 1]} : vector<8x128xf32> to vector<8x32xf32>
    %37 = arith.truncf %36 : vector<8x32xf32> to vector<8x32xbf16>
    %38 = vector.extract_strided_slice %9 {offsets = [0, 32], sizes = [8, 32], strides = [1, 1]} : vector<8x128xf32> to vector<8x32xf32>
    %39 = arith.truncf %38 : vector<8x32xf32> to vector<8x32xbf16>
    %40 = vector.extract_strided_slice %10 {offsets = [0, 32], sizes = [8, 32], strides = [1, 1]} : vector<8x128xf32> to vector<8x32xf32>
    %41 = arith.truncf %40 : vector<8x32xf32> to vector<8x32xbf16>
    %cst_16 = arith.constant dense<0.000000e+00> : vector<8x8xf32>
    %42 = tpu.matmul %37, %39, %cst_16 {dimension_numbers = #tpu.dot_dimension_numbers<[1], [1], [0], [0], [0, 0, 1, 0], [], []>} : vector<8x32xbf16>, vector<8x32xbf16>, vector<8x8xf32> -> vector<8x8xf32>
    %cst_17 = arith.constant 0.176776692 : f32
    %43 = vector.broadcast %cst_17 : f32 to vector<8x8xf32>
    %44 = arith.mulf %42, %43 : vector<8x8xf32>
    %45 = vector.broadcast %12 : vector<1x8xf32> to vector<8x8xf32>
    %46 = arith.addf %44, %45 : vector<8x8xf32>
    %cst_18 = arith.constant dense<0xFF800000> : vector<8xf32>
    %47 = vector.multi_reduction <maximumf>, %46, %cst_18 [1] : vector<8x8xf32> to vector<8xf32>
    %48 = vector.shape_cast %47 : vector<8xf32> to vector<8x1xf32>
    %49 = vector.broadcast %48 : vector<8x1xf32> to vector<8x8xf32>
    %50 = arith.subf %46, %49 : vector<8x8xf32>
    %51 = math.exp %50 : vector<8x8xf32>
    %cst_19 = arith.constant dense<0.000000e+00> : vector<8xf32>
    %52 = vector.multi_reduction <add>, %51, %cst_19 [1] : vector<8x8xf32> to vector<8xf32>
    %53 = vector.shape_cast %52 : vector<8xf32> to vector<8x1xf32>
    %54 = vector.broadcast %53 : vector<8x1xf32> to vector<8x8xf32>
    %55 = arith.divf %51, %54 : vector<8x8xf32>
    %56 = arith.truncf %55 : vector<8x8xf32> to vector<8x8xbf16>
    %cst_20 = arith.constant dense<0.000000e+00> : vector<8x32xf32>
    %57 = tpu.matmul %56, %41, %cst_20 {dimension_numbers = #tpu.dot_dimension_numbers<[1], [0], [0], [1], [0, 0, 1, 1], [], []>} : vector<8x8xbf16>, vector<8x32xbf16>, vector<8x32xf32> -> vector<8x32xf32>
    %c0_21 = arith.constant 0 : index
    %c32 = arith.constant 32 : index
    %58 = vector.load %arg10[%c0_21, %c32] : memref<8x128xf32, #tpu.memory_space<vmem>>, vector<8x32xf32>
    tpu.vector_store %arg10[%c0_21, %c32], %57 {strides = array<i32>} : memref<8x128xf32, #tpu.memory_space<vmem>>, vector<8x32xf32>,
    %59 = vector.extract_strided_slice %8 {offsets = [0, 64], sizes = [8, 32], strides = [1, 1]} : vector<8x128xf32> to vector<8x32xf32>
    %60 = arith.truncf %59 : vector<8x32xf32> to vector<8x32xbf16>
    %61 = vector.extract_strided_slice %9 {offsets = [0, 64], sizes = [8, 32], strides = [1, 1]} : vector<8x128xf32> to vector<8x32xf32>
    %62 = arith.truncf %61 : vector<8x32xf32> to vector<8x32xbf16>
    %63 = vector.extract_strided_slice %10 {offsets = [0, 64], sizes = [8, 32], strides = [1, 1]} : vector<8x128xf32> to vector<8x32xf32>
    %64 = arith.truncf %63 : vector<8x32xf32> to vector<8x32xbf16>
    %cst_22 = arith.constant dense<0.000000e+00> : vector<8x8xf32>
    %65 = tpu.matmul %60, %62, %cst_22 {dimension_numbers = #tpu.dot_dimension_numbers<[1], [1], [0], [0], [0, 0, 1, 0], [], []>} : vector<8x32xbf16>, vector<8x32xbf16>, vector<8x8xf32> -> vector<8x8xf32>
    %cst_23 = arith.constant 0.176776692 : f32
    %66 = vector.broadcast %cst_23 : f32 to vector<8x8xf32>
    %67 = arith.mulf %65, %66 : vector<8x8xf32>
    %68 = vector.broadcast %12 : vector<1x8xf32> to vector<8x8xf32>
    %69 = arith.addf %67, %68 : vector<8x8xf32>
    %cst_24 = arith.constant dense<0xFF800000> : vector<8xf32>
    %70 = vector.multi_reduction <maximumf>, %69, %cst_24 [1] : vector<8x8xf32> to vector<8xf32>
    %71 = vector.shape_cast %70 : vector<8xf32> to vector<8x1xf32>
    %72 = vector.broadcast %71 : vector<8x1xf32> to vector<8x8xf32>
    %73 = arith.subf %69, %72 : vector<8x8xf32>
    %74 = math.exp %73 : vector<8x8xf32>
    %cst_25 = arith.constant dense<0.000000e+00> : vector<8xf32>
    %75 = vector.multi_reduction <add>, %74, %cst_25 [1] : vector<8x8xf32> to vector<8xf32>
    %76 = vector.shape_cast %75 : vector<8xf32> to vector<8x1xf32>
    %77 = vector.broadcast %76 : vector<8x1xf32> to vector<8x8xf32>
    %78 = arith.divf %74, %77 : vector<8x8xf32>
    %79 = arith.truncf %78 : vector<8x8xf32> to vector<8x8xbf16>
    %cst_26 = arith.constant dense<0.000000e+00> : vector<8x32xf32>
    %80 = tpu.matmul %79, %64, %cst_26 {dimension_numbers = #tpu.dot_dimension_numbers<[1], [0], [0], [1], [0, 0, 1, 1], [], []>} : vector<8x8xbf16>, vector<8x32xbf16>, vector<8x32xf32> -> vector<8x32xf32>
    %c0_27 = arith.constant 0 : index
    %c64 = arith.constant 64 : index
    %81 = vector.load %arg10[%c0_27, %c64] : memref<8x128xf32, #tpu.memory_space<vmem>>, vector<8x32xf32>
    tpu.vector_store %arg10[%c0_27, %c64], %80 {strides = array<i32>} : memref<8x128xf32, #tpu.memory_space<vmem>>, vector<8x32xf32>,
    %82 = vector.extract_strided_slice %8 {offsets = [0, 96], sizes = [8, 32], strides = [1, 1]} : vector<8x128xf32> to vector<8x32xf32>
    %83 = arith.truncf %82 : vector<8x32xf32> to vector<8x32xbf16>
    %84 = vector.extract_strided_slice %9 {offsets = [0, 96], sizes = [8, 32], strides = [1, 1]} : vector<8x128xf32> to vector<8x32xf32>
    %85 = arith.truncf %84 : vector<8x32xf32> to vector<8x32xbf16>
    %86 = vector.extract_strided_slice %10 {offsets = [0, 96], sizes = [8, 32], strides = [1, 1]} : vector<8x128xf32> to vector<8x32xf32>
    %87 = arith.truncf %86 : vector<8x32xf32> to vector<8x32xbf16>
    %cst_28 = arith.constant dense<0.000000e+00> : vector<8x8xf32>
    %88 = tpu.matmul %83, %85, %cst_28 {dimension_numbers = #tpu.dot_dimension_numbers<[1], [1], [0], [0], [0, 0, 1, 0], [], []>} : vector<8x32xbf16>, vector<8x32xbf16>, vector<8x8xf32> -> vector<8x8xf32>
    %cst_29 = arith.constant 0.176776692 : f32
    %89 = vector.broadcast %cst_29 : f32 to vector<8x8xf32>
    %90 = arith.mulf %88, %89 : vector<8x8xf32>
    %91 = vector.broadcast %12 : vector<1x8xf32> to vector<8x8xf32>
    %92 = arith.addf %90, %91 : vector<8x8xf32>
    %cst_30 = arith.constant dense<0xFF800000> : vector<8xf32>
    %93 = vector.multi_reduction <maximumf>, %92, %cst_30 [1] : vector<8x8xf32> to vector<8xf32>
    %94 = vector.shape_cast %93 : vector<8xf32> to vector<8x1xf32>
    %95 = vector.broadcast %94 : vector<8x1xf32> to vector<8x8xf32>
    %96 = arith.subf %92, %95 : vector<8x8xf32>
    %97 = math.exp %96 : vector<8x8xf32>
    %cst_31 = arith.constant dense<0.000000e+00> : vector<8xf32>
    %98 = vector.multi_reduction <add>, %97, %cst_31 [1] : vector<8x8xf32> to vector<8xf32>
    %99 = vector.shape_cast %98 : vector<8xf32> to vector<8x1xf32>
    %100 = vector.broadcast %99 : vector<8x1xf32> to vector<8x8xf32>
    %101 = arith.divf %97, %100 : vector<8x8xf32>
    %102 = arith.truncf %101 : vector<8x8xf32> to vector<8x8xbf16>
    %cst_32 = arith.constant dense<0.000000e+00> : vector<8x32xf32>
    %103 = tpu.matmul %102, %87, %cst_32 {dimension_numbers = #tpu.dot_dimension_numbers<[1], [0], [0], [1], [0, 0, 1, 1], [], []>} : vector<8x8xbf16>, vector<8x32xbf16>, vector<8x32xf32> -> vector<8x32xf32>
    %c0_33 = arith.constant 0 : index
    %c96 = arith.constant 96 : index
    %104 = vector.load %arg10[%c0_33, %c96] : memref<8x128xf32, #tpu.memory_space<vmem>>, vector<8x32xf32>
    tpu.vector_store %arg10[%c0_33, %c96], %103 {strides = array<i32>} : memref<8x128xf32, #tpu.memory_space<vmem>>, vector<8x32xf32>,
    %c0_34 = arith.constant 0 : index
    %c0_35 = arith.constant 0 : index
    %105 = vector.load %arg10[%c0_34, %c0_35] : memref<8x128xf32, #tpu.memory_space<vmem>>, vector<8x128xf32>
    %106 = arith.truncf %105 : vector<8x128xf32> to vector<8x128xbf16>
    %c0_36 = arith.constant 0 : index
    %c0_37 = arith.constant 0 : index
    %107 = vector.load %arg5[%c0_36, %c0_37] : memref<128x128xbf16, #tpu.memory_space<vmem>>, vector<128x128xbf16>
    %cst_38 = arith.constant dense<0.000000e+00> : vector<8x128xf32>
    %108 = tpu.matmul %106, %107, %cst_38 {dimension_numbers = #tpu.dot_dimension_numbers<[1], [0], [0], [1], [0, 0, 1, 1], [], []>} : vector<8x128xbf16>, vector<128x128xbf16>, vector<8x128xf32> -> vector<8x128xf32>
    %c0_39 = arith.constant 0 : index
    %c0_40 = arith.constant 0 : index
    %109 = vector.load %arg6[%c0_39, %c0_40] : memref<1x128xf32, #tpu.memory_space<vmem>>, vector<1x128xf32>
    %110 = vector.broadcast %109 : vector<1x128xf32> to vector<8x128xf32>
    %111 = arith.addf %108, %110 : vector<8x128xf32>
    %112 = arith.addf %111, %1 : vector<8x128xf32>
    %c0_41 = arith.constant 0 : index
    %c0_42 = arith.constant 0 : index
    %113 = vector.load %arg7[%c0_41, %c0_42] : memref<1x128xf32, #tpu.memory_space<vmem>>, vector<1x128xf32>
    %c0_43 = arith.constant 0 : index
    %c0_44 = arith.constant 0 : index
    %114 = vector.load %arg8[%c0_43, %c0_44] : memref<1x128xf32, #tpu.memory_space<vmem>>, vector<1x128xf32>
    %cst_45 = arith.constant dense<0.000000e+00> : vector<8xf32>
    %115 = vector.multi_reduction <add>, %112, %cst_45 [1] : vector<8x128xf32> to vector<8xf32>
    %116 = vector.shape_cast %115 : vector<8xf32> to vector<8x1xf32>
    %cst_46 = arith.constant 1.280000e+02 : f32
    %117 = vector.broadcast %cst_46 : f32 to vector<8x1xf32>
    %118 = arith.divf %116, %117 : vector<8x1xf32>
    %119 = vector.broadcast %118 : vector<8x1xf32> to vector<8x128xf32>
    %120 = arith.subf %112, %119 : vector<8x128xf32>
    %121 = arith.mulf %120, %120 : vector<8x128xf32>
    %cst_47 = arith.constant dense<0.000000e+00> : vector<8xf32>
    %122 = vector.multi_reduction <add>, %121, %cst_47 [1] : vector<8x128xf32> to vector<8xf32>
    %123 = vector.shape_cast %122 : vector<8xf32> to vector<8x1xf32>
    %cst_48 = arith.constant 1.280000e+02 : f32
    %124 = vector.broadcast %cst_48 : f32 to vector<8x1xf32>
    %125 = arith.divf %123, %124 : vector<8x1xf32>
    %126 = vector.broadcast %118 : vector<8x1xf32> to vector<8x128xf32>
    %127 = arith.subf %112, %126 : vector<8x128xf32>
    %cst_49 = arith.constant 9.99999974E-6 : f32
    %128 = vector.broadcast %cst_49 : f32 to vector<8x1xf32>
    %129 = arith.addf %125, %128 : vector<8x1xf32>
    %130 = math.rsqrt %129 : vector<8x1xf32>
    %131 = vector.broadcast %130 : vector<8x1xf32> to vector<8x128xf32>
    %132 = arith.mulf %127, %131 : vector<8x128xf32>
    %133 = vector.broadcast %113 : vector<1x128xf32> to vector<8x128xf32>
    %134 = arith.mulf %132, %133 : vector<8x128xf32>
    %135 = vector.broadcast %114 : vector<1x128xf32> to vector<8x128xf32>
    %136 = arith.addf %134, %135 : vector<8x128xf32>
    %c0_50 = arith.constant 0 : index
    %c0_51 = arith.constant 0 : index
    %c0_52 = arith.constant 0 : index
    %137 = vector.load %arg9[%c0_50, %c0_51, %c0_52] : memref<1x8x128xf32, #tpu.memory_space<vmem>>, vector<1x8x128xf32>
    %138 = vector.shape_cast %137 : vector<1x8x128xf32> to vector<8x128xf32>
    %139 = vector.shape_cast %136 : vector<8x128xf32> to vector<1x8x128xf32>
    tpu.vector_store %arg9[%c0_50, %c0_51, %c0_52], %139 {strides = array<i32>} : memref<1x8x128xf32, #tpu.memory_space<vmem>>, vector<1x8x128xf32>,
    return
  }
  func.func @transform_0(%arg0: i32) -> (i32, i32, i32) {
    %c0_i32 = arith.constant 0 : i32
    %c0_i32_0 = arith.constant 0 : i32
    %c0_i32_1 = arith.constant 0 : i32
    return %arg0, %c0_i32, %c0_i32_0 : i32, i32, i32
  }
  func.func @transform_1(%arg0: i32) -> (i32, i32, i32) {
    %c0_i32 = arith.constant 0 : i32
    %c0_i32_0 = arith.constant 0 : i32
    %c0_i32_1 = arith.constant 0 : i32
    return %arg0, %c0_i32, %c0_i32_0 : i32, i32, i32
  }
  func.func @transform_2(%arg0: i32) -> (i32, i32) {
    %c0_i32 = arith.constant 0 : i32
    %c0_i32_0 = arith.constant 0 : i32
    %c0_i32_1 = arith.constant 0 : i32
    return %c0_i32, %c0_i32_0 : i32, i32
  }
  func.func @transform_3(%arg0: i32) -> (i32, i32) {
    %c0_i32 = arith.constant 0 : i32
    %c0_i32_0 = arith.constant 0 : i32
    %c0_i32_1 = arith.constant 0 : i32
    return %c0_i32, %c0_i32_0 : i32, i32
  }
  func.func @transform_4(%arg0: i32) -> (i32, i32) {
    %c0_i32 = arith.constant 0 : i32
    %c0_i32_0 = arith.constant 0 : i32
    %c0_i32_1 = arith.constant 0 : i32
    return %c0_i32, %c0_i32_0 : i32, i32
  }
  func.func @transform_5(%arg0: i32) -> (i32, i32) {
    %c0_i32 = arith.constant 0 : i32
    %c0_i32_0 = arith.constant 0 : i32
    %c0_i32_1 = arith.constant 0 : i32
    return %c0_i32, %c0_i32_0 : i32, i32
  }
  func.func @transform_6(%arg0: i32) -> (i32, i32) {
    %c0_i32 = arith.constant 0 : i32
    %c0_i32_0 = arith.constant 0 : i32
    %c0_i32_1 = arith.constant 0 : i32
    return %c0_i32, %c0_i32_0 : i32, i32
  }
  func.func @transform_7(%arg0: i32) -> (i32, i32) {
    %c0_i32 = arith.constant 0 : i32
    %c0_i32_0 = arith.constant 0 : i32
    %c0_i32_1 = arith.constant 0 : i32
    return %c0_i32, %c0_i32_0 : i32, i32
  }
  func.func @transform_8(%arg0: i32) -> (i32, i32, i32) {
    %c0_i32 = arith.constant 0 : i32
    %c0_i32_0 = arith.constant 0 : i32
    %c0_i32_1 = arith.constant 0 : i32
    return %arg0, %c0_i32, %c0_i32_0 : i32, i32, i32
  }
}

module attributes {stable_mosaic.version = 11 : i64} {
  func.func @_ln_kernel(%arg0: i32, %arg1: memref<16x128xf32, #tpu.memory_space<vmem>>, %arg2: memref<1x128xf32, #tpu.memory_space<vmem>>, %arg3: memref<1x128xf32, #tpu.memory_space<vmem>>, %arg4: memref<16x128xf32, #tpu.memory_space<vmem>>) attributes {dimension_semantics = [#tpu.dimension_semantics<parallel>], iteration_bounds = array<i64: 1>, scalar_prefetch = 0 : i64, scratch_operands = 0 : i64, tpu.core_type = #tpu.core_type<tc>, window_params = [{transform_indices = @transform_0, window_bounds = array<i64: 16, 128>}, {pipeline_mode = #tpu.pipeline_mode<synchronous>, transform_indices = @transform_1, window_bounds = array<i64: 1, 128>}, {pipeline_mode = #tpu.pipeline_mode<synchronous>, transform_indices = @transform_2, window_bounds = array<i64: 1, 128>}, {transform_indices = @transform_3, window_bounds = array<i64: 16, 128>}]} {
    %c0 = arith.constant 0 : index
    %c0_0 = arith.constant 0 : index
    %0 = vector.load %arg1[%c0, %c0_0] : memref<16x128xf32, #tpu.memory_space<vmem>>, vector<16x128xf32>
    %c0_1 = arith.constant 0 : index
    %c0_2 = arith.constant 0 : index
    %1 = vector.load %arg2[%c0_1, %c0_2] : memref<1x128xf32, #tpu.memory_space<vmem>>, vector<1x128xf32>
    %c0_3 = arith.constant 0 : index
    %c0_4 = arith.constant 0 : index
    %2 = vector.load %arg3[%c0_3, %c0_4] : memref<1x128xf32, #tpu.memory_space<vmem>>, vector<1x128xf32>
    %cst = arith.constant dense<0.000000e+00> : vector<16xf32>
    %3 = vector.multi_reduction <add>, %0, %cst [1] : vector<16x128xf32> to vector<16xf32>
    %4 = vector.shape_cast %3 : vector<16xf32> to vector<16x1xf32>
    %cst_5 = arith.constant 1.280000e+02 : f32
    %5 = vector.broadcast %cst_5 : f32 to vector<16x1xf32>
    %6 = arith.divf %4, %5 : vector<16x1xf32>
    %7 = vector.broadcast %6 : vector<16x1xf32> to vector<16x128xf32>
    %8 = arith.subf %0, %7 : vector<16x128xf32>
    %9 = arith.mulf %8, %8 : vector<16x128xf32>
    %cst_6 = arith.constant dense<0.000000e+00> : vector<16xf32>
    %10 = vector.multi_reduction <add>, %9, %cst_6 [1] : vector<16x128xf32> to vector<16xf32>
    %11 = vector.shape_cast %10 : vector<16xf32> to vector<16x1xf32>
    %cst_7 = arith.constant 1.280000e+02 : f32
    %12 = vector.broadcast %cst_7 : f32 to vector<16x1xf32>
    %13 = arith.divf %11, %12 : vector<16x1xf32>
    %14 = vector.broadcast %6 : vector<16x1xf32> to vector<16x128xf32>
    %15 = arith.subf %0, %14 : vector<16x128xf32>
    %cst_8 = arith.constant 9.99999974E-6 : f32
    %16 = vector.broadcast %cst_8 : f32 to vector<16x1xf32>
    %17 = arith.addf %13, %16 : vector<16x1xf32>
    %18 = math.rsqrt %17 : vector<16x1xf32>
    %19 = vector.broadcast %18 : vector<16x1xf32> to vector<16x128xf32>
    %20 = arith.mulf %15, %19 : vector<16x128xf32>
    %21 = vector.broadcast %1 : vector<1x128xf32> to vector<16x128xf32>
    %22 = arith.mulf %20, %21 : vector<16x128xf32>
    %23 = vector.broadcast %2 : vector<1x128xf32> to vector<16x128xf32>
    %24 = arith.addf %22, %23 : vector<16x128xf32>
    %c0_9 = arith.constant 0 : index
    %c0_10 = arith.constant 0 : index
    %25 = vector.load %arg4[%c0_9, %c0_10] : memref<16x128xf32, #tpu.memory_space<vmem>>, vector<16x128xf32>
    tpu.vector_store %arg4[%c0_9, %c0_10], %24 {strides = array<i32>} : memref<16x128xf32, #tpu.memory_space<vmem>>, vector<16x128xf32>,
    return
  }
  func.func @transform_0(%arg0: i32) -> (i32, i32) {
    %c0_i32 = arith.constant 0 : i32
    %c0_i32_0 = arith.constant 0 : i32
    return %arg0, %c0_i32 : i32, i32
  }
  func.func @transform_1(%arg0: i32) -> (i32, i32) {
    %c0_i32 = arith.constant 0 : i32
    %c0_i32_0 = arith.constant 0 : i32
    %c0_i32_1 = arith.constant 0 : i32
    return %c0_i32, %c0_i32_0 : i32, i32
  }
  func.func @transform_2(%arg0: i32) -> (i32, i32) {
    %c0_i32 = arith.constant 0 : i32
    %c0_i32_0 = arith.constant 0 : i32
    %c0_i32_1 = arith.constant 0 : i32
    return %c0_i32, %c0_i32_0 : i32, i32
  }
  func.func @transform_3(%arg0: i32) -> (i32, i32) {
    %c0_i32 = arith.constant 0 : i32
    %c0_i32_0 = arith.constant 0 : i32
    return %arg0, %c0_i32 : i32, i32
  }
}

module attributes {stable_mosaic.version = 11 : i64} {
  func.func @_ffn_block_kernel(%arg0: i32, %arg1: memref<16x128xf32, #tpu.memory_space<vmem>>, %arg2: memref<128x256xbf16, #tpu.memory_space<vmem>>, %arg3: memref<1x256xf32, #tpu.memory_space<vmem>>, %arg4: memref<256x128xbf16, #tpu.memory_space<vmem>>, %arg5: memref<1x128xf32, #tpu.memory_space<vmem>>, %arg6: memref<1x128xf32, #tpu.memory_space<vmem>>, %arg7: memref<1x128xf32, #tpu.memory_space<vmem>>, %arg8: memref<16x128xf32, #tpu.memory_space<vmem>>) attributes {dimension_semantics = [#tpu.dimension_semantics<parallel>], iteration_bounds = array<i64: 1>, scalar_prefetch = 0 : i64, scratch_operands = 0 : i64, tpu.core_type = #tpu.core_type<tc>, window_params = [{transform_indices = @transform_0, window_bounds = array<i64: 16, 128>}, {pipeline_mode = #tpu.pipeline_mode<synchronous>, transform_indices = @transform_1, window_bounds = array<i64: 128, 256>}, {pipeline_mode = #tpu.pipeline_mode<synchronous>, transform_indices = @transform_2, window_bounds = array<i64: 1, 256>}, {pipeline_mode = #tpu.pipeline_mode<synchronous>, transform_indices = @transform_3, window_bounds = array<i64: 256, 128>}, {pipeline_mode = #tpu.pipeline_mode<synchronous>, transform_indices = @transform_4, window_bounds = array<i64: 1, 128>}, {pipeline_mode = #tpu.pipeline_mode<synchronous>, transform_indices = @transform_5, window_bounds = array<i64: 1, 128>}, {pipeline_mode = #tpu.pipeline_mode<synchronous>, transform_indices = @transform_6, window_bounds = array<i64: 1, 128>}, {transform_indices = @transform_7, window_bounds = array<i64: 16, 128>}]} {
    %c0 = arith.constant 0 : index
    %c0_0 = arith.constant 0 : index
    %0 = vector.load %arg1[%c0, %c0_0] : memref<16x128xf32, #tpu.memory_space<vmem>>, vector<16x128xf32>
    %1 = arith.truncf %0 : vector<16x128xf32> to vector<16x128xbf16>
    %c0_1 = arith.constant 0 : index
    %c0_2 = arith.constant 0 : index
    %2 = vector.load %arg2[%c0_1, %c0_2] : memref<128x256xbf16, #tpu.memory_space<vmem>>, vector<128x256xbf16>
    %cst = arith.constant dense<0.000000e+00> : vector<16x256xf32>
    %3 = tpu.matmul %1, %2, %cst {dimension_numbers = #tpu.dot_dimension_numbers<[1], [0], [0], [1], [0, 0, 1, 1], [], []>} : vector<16x128xbf16>, vector<128x256xbf16>, vector<16x256xf32> -> vector<16x256xf32>
    %c0_3 = arith.constant 0 : index
    %c0_4 = arith.constant 0 : index
    %4 = vector.load %arg3[%c0_3, %c0_4] : memref<1x256xf32, #tpu.memory_space<vmem>>, vector<1x256xf32>
    %5 = vector.broadcast %4 : vector<1x256xf32> to vector<16x256xf32>
    %6 = arith.addf %3, %5 : vector<16x256xf32>
    %cst_5 = arith.constant 5.000000e-01 : f32
    %7 = vector.broadcast %cst_5 : f32 to vector<16x256xf32>
    %8 = arith.mulf %7, %6 : vector<16x256xf32>
    %cst_6 = arith.constant 0.707106769 : f32
    %9 = vector.broadcast %cst_6 : f32 to vector<16x256xf32>
    %10 = arith.mulf %6, %9 : vector<16x256xf32>
    %cst_7 = arith.constant 0.000000e+00 : f32
    %11 = vector.broadcast %cst_7 : f32 to vector<16x256xf32>
    %12 = arith.cmpf olt, %10, %11 : vector<16x256xf32>
    %cst_8 = arith.constant -1.000000e+00 : f32
    %cst_9 = arith.constant 1.000000e+00 : f32
    %13 = vector.broadcast %cst_8 : f32 to vector<16x256xf32>
    %14 = vector.broadcast %cst_9 : f32 to vector<16x256xf32>
    %15 = arith.select %12, %13, %14 : vector<16x256xi1>, vector<16x256xf32>
    %16 = math.absf %10 : vector<16x256xf32>
    %cst_10 = arith.constant 0.327591091 : f32
    %17 = vector.broadcast %cst_10 : f32 to vector<16x256xf32>
    %18 = arith.mulf %17, %16 : vector<16x256xf32>
    %cst_11 = arith.constant 1.000000e+00 : f32
    %19 = vector.broadcast %cst_11 : f32 to vector<16x256xf32>
    %20 = arith.addf %19, %18 : vector<16x256xf32>
    %cst_12 = arith.constant 1.000000e+00 : f32
    %21 = vector.broadcast %cst_12 : f32 to vector<16x256xf32>
    %22 = arith.divf %21, %20 : vector<16x256xf32>
    %cst_13 = arith.constant 1.06140542 : f32
    %23 = vector.broadcast %cst_13 : f32 to vector<16x256xf32>
    %24 = arith.mulf %23, %22 : vector<16x256xf32>
    %cst_14 = arith.constant -1.45315206 : f32
    %25 = vector.broadcast %cst_14 : f32 to vector<16x256xf32>
    %26 = arith.addf %24, %25 : vector<16x256xf32>
    %27 = arith.mulf %26, %22 : vector<16x256xf32>
    %cst_15 = arith.constant 1.42141378 : f32
    %28 = vector.broadcast %cst_15 : f32 to vector<16x256xf32>
    %29 = arith.addf %27, %28 : vector<16x256xf32>
    %30 = arith.mulf %29, %22 : vector<16x256xf32>
    %cst_16 = arith.constant -0.284496725 : f32
    %31 = vector.broadcast %cst_16 : f32 to vector<16x256xf32>
    %32 = arith.addf %30, %31 : vector<16x256xf32>
    %33 = arith.mulf %32, %22 : vector<16x256xf32>
    %cst_17 = arith.constant 0.254829586 : f32
    %34 = vector.broadcast %cst_17 : f32 to vector<16x256xf32>
    %35 = arith.addf %33, %34 : vector<16x256xf32>
    %36 = arith.mulf %35, %22 : vector<16x256xf32>
    %cst_18 = arith.constant 0.000000e+00 : f32
    %37 = vector.broadcast %cst_18 : f32 to vector<16x256xf32>
    %38 = arith.subf %37, %16 : vector<16x256xf32>
    %39 = arith.mulf %38, %16 : vector<16x256xf32>
    %40 = math.exp %39 : vector<16x256xf32>
    %41 = arith.mulf %36, %40 : vector<16x256xf32>
    %cst_19 = arith.constant 1.000000e+00 : f32
    %42 = vector.broadcast %cst_19 : f32 to vector<16x256xf32>
    %43 = arith.subf %42, %41 : vector<16x256xf32>
    %44 = arith.mulf %15, %43 : vector<16x256xf32>
    %cst_20 = arith.constant 1.000000e+00 : f32
    %45 = vector.broadcast %cst_20 : f32 to vector<16x256xf32>
    %46 = arith.addf %45, %44 : vector<16x256xf32>
    %47 = arith.mulf %8, %46 : vector<16x256xf32>
    %48 = arith.truncf %47 : vector<16x256xf32> to vector<16x256xbf16>
    %c0_21 = arith.constant 0 : index
    %c0_22 = arith.constant 0 : index
    %49 = vector.load %arg4[%c0_21, %c0_22] : memref<256x128xbf16, #tpu.memory_space<vmem>>, vector<256x128xbf16>
    %cst_23 = arith.constant dense<0.000000e+00> : vector<16x128xf32>
    %50 = tpu.matmul %48, %49, %cst_23 {dimension_numbers = #tpu.dot_dimension_numbers<[1], [0], [0], [1], [0, 0, 1, 1], [], []>} : vector<16x256xbf16>, vector<256x128xbf16>, vector<16x128xf32> -> vector<16x128xf32>
    %c0_24 = arith.constant 0 : index
    %c0_25 = arith.constant 0 : index
    %51 = vector.load %arg5[%c0_24, %c0_25] : memref<1x128xf32, #tpu.memory_space<vmem>>, vector<1x128xf32>
    %52 = vector.broadcast %51 : vector<1x128xf32> to vector<16x128xf32>
    %53 = arith.addf %50, %52 : vector<16x128xf32>
    %54 = arith.addf %53, %0 : vector<16x128xf32>
    %c0_26 = arith.constant 0 : index
    %c0_27 = arith.constant 0 : index
    %55 = vector.load %arg6[%c0_26, %c0_27] : memref<1x128xf32, #tpu.memory_space<vmem>>, vector<1x128xf32>
    %c0_28 = arith.constant 0 : index
    %c0_29 = arith.constant 0 : index
    %56 = vector.load %arg7[%c0_28, %c0_29] : memref<1x128xf32, #tpu.memory_space<vmem>>, vector<1x128xf32>
    %cst_30 = arith.constant dense<0.000000e+00> : vector<16xf32>
    %57 = vector.multi_reduction <add>, %54, %cst_30 [1] : vector<16x128xf32> to vector<16xf32>
    %58 = vector.shape_cast %57 : vector<16xf32> to vector<16x1xf32>
    %cst_31 = arith.constant 1.280000e+02 : f32
    %59 = vector.broadcast %cst_31 : f32 to vector<16x1xf32>
    %60 = arith.divf %58, %59 : vector<16x1xf32>
    %61 = vector.broadcast %60 : vector<16x1xf32> to vector<16x128xf32>
    %62 = arith.subf %54, %61 : vector<16x128xf32>
    %63 = arith.mulf %62, %62 : vector<16x128xf32>
    %cst_32 = arith.constant dense<0.000000e+00> : vector<16xf32>
    %64 = vector.multi_reduction <add>, %63, %cst_32 [1] : vector<16x128xf32> to vector<16xf32>
    %65 = vector.shape_cast %64 : vector<16xf32> to vector<16x1xf32>
    %cst_33 = arith.constant 1.280000e+02 : f32
    %66 = vector.broadcast %cst_33 : f32 to vector<16x1xf32>
    %67 = arith.divf %65, %66 : vector<16x1xf32>
    %68 = vector.broadcast %60 : vector<16x1xf32> to vector<16x128xf32>
    %69 = arith.subf %54, %68 : vector<16x128xf32>
    %cst_34 = arith.constant 9.99999974E-6 : f32
    %70 = vector.broadcast %cst_34 : f32 to vector<16x1xf32>
    %71 = arith.addf %67, %70 : vector<16x1xf32>
    %72 = math.rsqrt %71 : vector<16x1xf32>
    %73 = vector.broadcast %72 : vector<16x1xf32> to vector<16x128xf32>
    %74 = arith.mulf %69, %73 : vector<16x128xf32>
    %75 = vector.broadcast %55 : vector<1x128xf32> to vector<16x128xf32>
    %76 = arith.mulf %74, %75 : vector<16x128xf32>
    %77 = vector.broadcast %56 : vector<1x128xf32> to vector<16x128xf32>
    %78 = arith.addf %76, %77 : vector<16x128xf32>
    %c0_35 = arith.constant 0 : index
    %c0_36 = arith.constant 0 : index
    %79 = vector.load %arg8[%c0_35, %c0_36] : memref<16x128xf32, #tpu.memory_space<vmem>>, vector<16x128xf32>
    tpu.vector_store %arg8[%c0_35, %c0_36], %78 {strides = array<i32>} : memref<16x128xf32, #tpu.memory_space<vmem>>, vector<16x128xf32>,
    return
  }
  func.func @transform_0(%arg0: i32) -> (i32, i32) {
    %c0_i32 = arith.constant 0 : i32
    %c0_i32_0 = arith.constant 0 : i32
    return %arg0, %c0_i32 : i32, i32
  }
  func.func @transform_1(%arg0: i32) -> (i32, i32) {
    %c0_i32 = arith.constant 0 : i32
    %c0_i32_0 = arith.constant 0 : i32
    %c0_i32_1 = arith.constant 0 : i32
    return %c0_i32, %c0_i32_0 : i32, i32
  }
  func.func @transform_2(%arg0: i32) -> (i32, i32) {
    %c0_i32 = arith.constant 0 : i32
    %c0_i32_0 = arith.constant 0 : i32
    %c0_i32_1 = arith.constant 0 : i32
    return %c0_i32, %c0_i32_0 : i32, i32
  }
  func.func @transform_3(%arg0: i32) -> (i32, i32) {
    %c0_i32 = arith.constant 0 : i32
    %c0_i32_0 = arith.constant 0 : i32
    %c0_i32_1 = arith.constant 0 : i32
    return %c0_i32, %c0_i32_0 : i32, i32
  }
  func.func @transform_4(%arg0: i32) -> (i32, i32) {
    %c0_i32 = arith.constant 0 : i32
    %c0_i32_0 = arith.constant 0 : i32
    %c0_i32_1 = arith.constant 0 : i32
    return %c0_i32, %c0_i32_0 : i32, i32
  }
  func.func @transform_5(%arg0: i32) -> (i32, i32) {
    %c0_i32 = arith.constant 0 : i32
    %c0_i32_0 = arith.constant 0 : i32
    %c0_i32_1 = arith.constant 0 : i32
    return %c0_i32, %c0_i32_0 : i32, i32
  }
  func.func @transform_6(%arg0: i32) -> (i32, i32) {
    %c0_i32 = arith.constant 0 : i32
    %c0_i32_0 = arith.constant 0 : i32
    %c0_i32_1 = arith.constant 0 : i32
    return %c0_i32, %c0_i32_0 : i32, i32
  }
  func.func @transform_7(%arg0: i32) -> (i32, i32) {
    %c0_i32 = arith.constant 0 : i32
    %c0_i32_0 = arith.constant 0 : i32
    return %arg0, %c0_i32 : i32, i32
  }
}

module attributes {stable_mosaic.version = 11 : i64} {
  func.func @_linear_kernel(%arg0: i32, %arg1: i32, %arg2: i32, %arg3: memref<16x128xf32, #tpu.memory_space<vmem>>, %arg4: memref<128x128xbf16, #tpu.memory_space<vmem>>, %arg5: memref<1x128xf32, #tpu.memory_space<vmem>>, %arg6: memref<16x128xf32, #tpu.memory_space<vmem>>, %arg7: memref<16x128xf32, #tpu.memory_space<vmem>>) attributes {dimension_semantics = [#tpu.dimension_semantics<parallel>, #tpu.dimension_semantics<parallel>, #tpu.dimension_semantics<arbitrary>], iteration_bounds = array<i64: 1, 1, 1>, scalar_prefetch = 0 : i64, scratch_operands = 1 : i64, tpu.core_type = #tpu.core_type<tc>, window_params = [{transform_indices = @transform_0, window_bounds = array<i64: 16, 128>}, {transform_indices = @transform_1, window_bounds = array<i64: 128, 128>}, {transform_indices = @transform_2, window_bounds = array<i64: 1, 128>}, {transform_indices = @transform_3, window_bounds = array<i64: 16, 128>}]} {
    %c0_i32 = arith.constant 0 : i32
    %0 = arith.cmpi eq, %arg2, %c0_i32 : i32
    %1 = arith.extui %0 : i1 to i32
    %c0_i32_0 = arith.constant 0 : i32
    %2 = arith.cmpi ne, %1, %c0_i32_0 : i32
    scf.if %2 {
      %cst_10 = arith.constant 0.000000e+00 : f32
      %13 = vector.broadcast %cst_10 : f32 to vector<16x128xf32>
      %c0_11 = arith.constant 0 : index
      %c0_12 = arith.constant 0 : index
      %14 = vector.load %arg7[%c0_11, %c0_12] : memref<16x128xf32, #tpu.memory_space<vmem>>, vector<16x128xf32>
      tpu.vector_store %arg7[%c0_11, %c0_12], %13 {strides = array<i32>} : memref<16x128xf32, #tpu.memory_space<vmem>>, vector<16x128xf32>,
    } else {
    }
    %c0 = arith.constant 0 : index
    %c0_1 = arith.constant 0 : index
    %3 = vector.load %arg7[%c0, %c0_1] : memref<16x128xf32, #tpu.memory_space<vmem>>, vector<16x128xf32>
    %c0_2 = arith.constant 0 : index
    %c0_3 = arith.constant 0 : index
    %4 = vector.load %arg3[%c0_2, %c0_3] : memref<16x128xf32, #tpu.memory_space<vmem>>, vector<16x128xf32>
    %5 = arith.truncf %4 : vector<16x128xf32> to vector<16x128xbf16>
    %c0_4 = arith.constant 0 : index
    %c0_5 = arith.constant 0 : index
    %6 = vector.load %arg4[%c0_4, %c0_5] : memref<128x128xbf16, #tpu.memory_space<vmem>>, vector<128x128xbf16>
    %cst = arith.constant dense<0.000000e+00> : vector<16x128xf32>
    %7 = tpu.matmul %5, %6, %cst {dimension_numbers = #tpu.dot_dimension_numbers<[1], [0], [0], [1], [0, 0, 1, 1], [], []>} : vector<16x128xbf16>, vector<128x128xbf16>, vector<16x128xf32> -> vector<16x128xf32>
    %8 = arith.addf %3, %7 : vector<16x128xf32>
    %c0_6 = arith.constant 0 : index
    %c0_7 = arith.constant 0 : index
    %9 = vector.load %arg7[%c0_6, %c0_7] : memref<16x128xf32, #tpu.memory_space<vmem>>, vector<16x128xf32>
    tpu.vector_store %arg7[%c0_6, %c0_7], %8 {strides = array<i32>} : memref<16x128xf32, #tpu.memory_space<vmem>>, vector<16x128xf32>,
    %c0_i32_8 = arith.constant 0 : i32
    %10 = arith.cmpi eq, %arg2, %c0_i32_8 : i32
    %11 = arith.extui %10 : i1 to i32
    %c0_i32_9 = arith.constant 0 : i32
    %12 = arith.cmpi ne, %11, %c0_i32_9 : i32
    scf.if %12 {
      %c0_10 = arith.constant 0 : index
      %c0_11 = arith.constant 0 : index
      %13 = vector.load %arg7[%c0_10, %c0_11] : memref<16x128xf32, #tpu.memory_space<vmem>>, vector<16x128xf32>
      %c0_12 = arith.constant 0 : index
      %c0_13 = arith.constant 0 : index
      %14 = vector.load %arg5[%c0_12, %c0_13] : memref<1x128xf32, #tpu.memory_space<vmem>>, vector<1x128xf32>
      %15 = vector.broadcast %14 : vector<1x128xf32> to vector<16x128xf32>
      %16 = arith.addf %13, %15 : vector<16x128xf32>
      %c0_14 = arith.constant 0 : index
      %c0_15 = arith.constant 0 : index
      %17 = vector.load %arg6[%c0_14, %c0_15] : memref<16x128xf32, #tpu.memory_space<vmem>>, vector<16x128xf32>
      tpu.vector_store %arg6[%c0_14, %c0_15], %16 {strides = array<i32>} : memref<16x128xf32, #tpu.memory_space<vmem>>, vector<16x128xf32>,
    } else {
    }
    return
  }
  func.func @transform_0(%arg0: i32, %arg1: i32, %arg2: i32) -> (i32, i32) {
    %c0_i32 = arith.constant 0 : i32
    return %arg0, %arg2 : i32, i32
  }
  func.func @transform_1(%arg0: i32, %arg1: i32, %arg2: i32) -> (i32, i32) {
    %c0_i32 = arith.constant 0 : i32
    return %arg2, %arg1 : i32, i32
  }
  func.func @transform_2(%arg0: i32, %arg1: i32, %arg2: i32) -> (i32, i32) {
    %c0_i32 = arith.constant 0 : i32
    %c0_i32_0 = arith.constant 0 : i32
    return %c0_i32, %arg1 : i32, i32
  }
  func.func @transform_3(%arg0: i32, %arg1: i32, %arg2: i32) -> (i32, i32) {
    %c0_i32 = arith.constant 0 : i32
    return %arg0, %arg1 : i32, i32
  }
}

module attributes {stable_mosaic.version = 11 : i64} {
  func.func @_self_attn_block_kernel(%arg0: i32, %arg1: memref<1x8x128xf32, #tpu.memory_space<vmem>>, %arg2: memref<1x8x8xf32, #tpu.memory_space<vmem>>, %arg3: memref<128x384xbf16, #tpu.memory_space<vmem>>, %arg4: memref<1x384xf32, #tpu.memory_space<vmem>>, %arg5: memref<128x128xbf16, #tpu.memory_space<vmem>>, %arg6: memref<1x128xf32, #tpu.memory_space<vmem>>, %arg7: memref<1x128xf32, #tpu.memory_space<vmem>>, %arg8: memref<1x128xf32, #tpu.memory_space<vmem>>, %arg9: memref<1x8x128xf32, #tpu.memory_space<vmem>>, %arg10: memref<8x128xf32, #tpu.memory_space<vmem>>) attributes {dimension_semantics = [#tpu.dimension_semantics<parallel>], iteration_bounds = array<i64: 2>, scalar_prefetch = 0 : i64, scratch_operands = 1 : i64, tpu.core_type = #tpu.core_type<tc>, window_params = [{transform_indices = @transform_0, window_bounds = array<i64: 1, 8, 128>}, {pipeline_mode = #tpu.pipeline_mode<synchronous>, transform_indices = @transform_1, window_bounds = array<i64: 1, 8, 8>}, {pipeline_mode = #tpu.pipeline_mode<synchronous>, transform_indices = @transform_2, window_bounds = array<i64: 128, 384>}, {pipeline_mode = #tpu.pipeline_mode<synchronous>, transform_indices = @transform_3, window_bounds = array<i64: 1, 384>}, {pipeline_mode = #tpu.pipeline_mode<synchronous>, transform_indices = @transform_4, window_bounds = array<i64: 128, 128>}, {pipeline_mode = #tpu.pipeline_mode<synchronous>, transform_indices = @transform_5, window_bounds = array<i64: 1, 128>}, {pipeline_mode = #tpu.pipeline_mode<synchronous>, transform_indices = @transform_6, window_bounds = array<i64: 1, 128>}, {pipeline_mode = #tpu.pipeline_mode<synchronous>, transform_indices = @transform_7, window_bounds = array<i64: 1, 128>}, {transform_indices = @transform_8, window_bounds = array<i64: 1, 8, 128>}]} {
    %c0 = arith.constant 0 : index
    %c0_0 = arith.constant 0 : index
    %c0_1 = arith.constant 0 : index
    %0 = vector.load %arg1[%c0, %c0_0, %c0_1] : memref<1x8x128xf32, #tpu.memory_space<vmem>>, vector<1x8x128xf32>
    %1 = vector.shape_cast %0 : vector<1x8x128xf32> to vector<8x128xf32>
    %2 = arith.truncf %1 : vector<8x128xf32> to vector<8x128xbf16>
    %c0_2 = arith.constant 0 : index
    %c0_3 = arith.constant 0 : index
    %3 = vector.load %arg3[%c0_2, %c0_3] : memref<128x384xbf16, #tpu.memory_space<vmem>>, vector<128x384xbf16>
    %cst = arith.constant dense<0.000000e+00> : vector<8x384xf32>
    %4 = tpu.matmul %2, %3, %cst {dimension_numbers = #tpu.dot_dimension_numbers<[1], [0], [0], [1], [0, 0, 1, 1], [], []>} : vector<8x128xbf16>, vector<128x384xbf16>, vector<8x384xf32> -> vector<8x384xf32>
    %c0_4 = arith.constant 0 : index
    %c0_5 = arith.constant 0 : index
    %5 = vector.load %arg4[%c0_4, %c0_5] : memref<1x384xf32, #tpu.memory_space<vmem>>, vector<1x384xf32>
    %6 = vector.broadcast %5 : vector<1x384xf32> to vector<8x384xf32>
    %7 = arith.addf %4, %6 : vector<8x384xf32>
    %8 = vector.extract_strided_slice %7 {offsets = [0, 0], sizes = [8, 128], strides = [1, 1]} : vector<8x384xf32> to vector<8x128xf32>
    %9 = vector.extract_strided_slice %7 {offsets = [0, 128], sizes = [8, 128], strides = [1, 1]} : vector<8x384xf32> to vector<8x128xf32>
    %10 = vector.extract_strided_slice %7 {offsets = [0, 256], sizes = [8, 128], strides = [1, 1]} : vector<8x384xf32> to vector<8x128xf32>
    %c0_6 = arith.constant 0 : index
    %c0_7 = arith.constant 0 : index
    %c0_8 = arith.constant 0 : index
    %11 = vector.load %arg2[%c0_6, %c0_7, %c0_8] : memref<1x8x8xf32, #tpu.memory_space<vmem>>, vector<1x8x8xf32>
    %12 = vector.shape_cast %11 : vector<1x8x8xf32> to vector<8x8xf32>
    %13 = vector.extract_strided_slice %8 {offsets = [0, 0], sizes = [8, 32], strides = [1, 1]} : vector<8x128xf32> to vector<8x32xf32>
    %14 = arith.truncf %13 : vector<8x32xf32> to vector<8x32xbf16>
    %15 = vector.extract_strided_slice %9 {offsets = [0, 0], sizes = [8, 32], strides = [1, 1]} : vector<8x128xf32> to vector<8x32xf32>
    %16 = arith.truncf %15 : vector<8x32xf32> to vector<8x32xbf16>
    %17 = vector.extract_strided_slice %10 {offsets = [0, 0], sizes = [8, 32], strides = [1, 1]} : vector<8x128xf32> to vector<8x32xf32>
    %18 = arith.truncf %17 : vector<8x32xf32> to vector<8x32xbf16>
    %cst_9 = arith.constant dense<0.000000e+00> : vector<8x8xf32>
    %19 = tpu.matmul %14, %16, %cst_9 {dimension_numbers = #tpu.dot_dimension_numbers<[1], [1], [0], [0], [0, 0, 1, 0], [], []>} : vector<8x32xbf16>, vector<8x32xbf16>, vector<8x8xf32> -> vector<8x8xf32>
    %cst_10 = arith.constant 0.176776692 : f32
    %20 = vector.broadcast %cst_10 : f32 to vector<8x8xf32>
    %21 = arith.mulf %19, %20 : vector<8x8xf32>
    %22 = arith.addf %21, %12 : vector<8x8xf32>
    %cst_11 = arith.constant dense<0xFF800000> : vector<8xf32>
    %23 = vector.multi_reduction <maximumf>, %22, %cst_11 [1] : vector<8x8xf32> to vector<8xf32>
    %24 = vector.shape_cast %23 : vector<8xf32> to vector<8x1xf32>
    %25 = vector.broadcast %24 : vector<8x1xf32> to vector<8x8xf32>
    %26 = arith.subf %22, %25 : vector<8x8xf32>
    %27 = math.exp %26 : vector<8x8xf32>
    %cst_12 = arith.constant dense<0.000000e+00> : vector<8xf32>
    %28 = vector.multi_reduction <add>, %27, %cst_12 [1] : vector<8x8xf32> to vector<8xf32>
    %29 = vector.shape_cast %28 : vector<8xf32> to vector<8x1xf32>
    %30 = vector.broadcast %29 : vector<8x1xf32> to vector<8x8xf32>
    %31 = arith.divf %27, %30 : vector<8x8xf32>
    %32 = arith.truncf %31 : vector<8x8xf32> to vector<8x8xbf16>
    %cst_13 = arith.constant dense<0.000000e+00> : vector<8x32xf32>
    %33 = tpu.matmul %32, %18, %cst_13 {dimension_numbers = #tpu.dot_dimension_numbers<[1], [0], [0], [1], [0, 0, 1, 1], [], []>} : vector<8x8xbf16>, vector<8x32xbf16>, vector<8x32xf32> -> vector<8x32xf32>
    %c0_14 = arith.constant 0 : index
    %c0_15 = arith.constant 0 : index
    %34 = vector.load %arg10[%c0_14, %c0_15] : memref<8x128xf32, #tpu.memory_space<vmem>>, vector<8x32xf32>
    tpu.vector_store %arg10[%c0_14, %c0_15], %33 {strides = array<i32>} : memref<8x128xf32, #tpu.memory_space<vmem>>, vector<8x32xf32>,
    %35 = vector.extract_strided_slice %8 {offsets = [0, 32], sizes = [8, 32], strides = [1, 1]} : vector<8x128xf32> to vector<8x32xf32>
    %36 = arith.truncf %35 : vector<8x32xf32> to vector<8x32xbf16>
    %37 = vector.extract_strided_slice %9 {offsets = [0, 32], sizes = [8, 32], strides = [1, 1]} : vector<8x128xf32> to vector<8x32xf32>
    %38 = arith.truncf %37 : vector<8x32xf32> to vector<8x32xbf16>
    %39 = vector.extract_strided_slice %10 {offsets = [0, 32], sizes = [8, 32], strides = [1, 1]} : vector<8x128xf32> to vector<8x32xf32>
    %40 = arith.truncf %39 : vector<8x32xf32> to vector<8x32xbf16>
    %cst_16 = arith.constant dense<0.000000e+00> : vector<8x8xf32>
    %41 = tpu.matmul %36, %38, %cst_16 {dimension_numbers = #tpu.dot_dimension_numbers<[1], [1], [0], [0], [0, 0, 1, 0], [], []>} : vector<8x32xbf16>, vector<8x32xbf16>, vector<8x8xf32> -> vector<8x8xf32>
    %cst_17 = arith.constant 0.176776692 : f32
    %42 = vector.broadcast %cst_17 : f32 to vector<8x8xf32>
    %43 = arith.mulf %41, %42 : vector<8x8xf32>
    %44 = arith.addf %43, %12 : vector<8x8xf32>
    %cst_18 = arith.constant dense<0xFF800000> : vector<8xf32>
    %45 = vector.multi_reduction <maximumf>, %44, %cst_18 [1] : vector<8x8xf32> to vector<8xf32>
    %46 = vector.shape_cast %45 : vector<8xf32> to vector<8x1xf32>
    %47 = vector.broadcast %46 : vector<8x1xf32> to vector<8x8xf32>
    %48 = arith.subf %44, %47 : vector<8x8xf32>
    %49 = math.exp %48 : vector<8x8xf32>
    %cst_19 = arith.constant dense<0.000000e+00> : vector<8xf32>
    %50 = vector.multi_reduction <add>, %49, %cst_19 [1] : vector<8x8xf32> to vector<8xf32>
    %51 = vector.shape_cast %50 : vector<8xf32> to vector<8x1xf32>
    %52 = vector.broadcast %51 : vector<8x1xf32> to vector<8x8xf32>
    %53 = arith.divf %49, %52 : vector<8x8xf32>
    %54 = arith.truncf %53 : vector<8x8xf32> to vector<8x8xbf16>
    %cst_20 = arith.constant dense<0.000000e+00> : vector<8x32xf32>
    %55 = tpu.matmul %54, %40, %cst_20 {dimension_numbers = #tpu.dot_dimension_numbers<[1], [0], [0], [1], [0, 0, 1, 1], [], []>} : vector<8x8xbf16>, vector<8x32xbf16>, vector<8x32xf32> -> vector<8x32xf32>
    %c0_21 = arith.constant 0 : index
    %c32 = arith.constant 32 : index
    %56 = vector.load %arg10[%c0_21, %c32] : memref<8x128xf32, #tpu.memory_space<vmem>>, vector<8x32xf32>
    tpu.vector_store %arg10[%c0_21, %c32], %55 {strides = array<i32>} : memref<8x128xf32, #tpu.memory_space<vmem>>, vector<8x32xf32>,
    %57 = vector.extract_strided_slice %8 {offsets = [0, 64], sizes = [8, 32], strides = [1, 1]} : vector<8x128xf32> to vector<8x32xf32>
    %58 = arith.truncf %57 : vector<8x32xf32> to vector<8x32xbf16>
    %59 = vector.extract_strided_slice %9 {offsets = [0, 64], sizes = [8, 32], strides = [1, 1]} : vector<8x128xf32> to vector<8x32xf32>
    %60 = arith.truncf %59 : vector<8x32xf32> to vector<8x32xbf16>
    %61 = vector.extract_strided_slice %10 {offsets = [0, 64], sizes = [8, 32], strides = [1, 1]} : vector<8x128xf32> to vector<8x32xf32>
    %62 = arith.truncf %61 : vector<8x32xf32> to vector<8x32xbf16>
    %cst_22 = arith.constant dense<0.000000e+00> : vector<8x8xf32>
    %63 = tpu.matmul %58, %60, %cst_22 {dimension_numbers = #tpu.dot_dimension_numbers<[1], [1], [0], [0], [0, 0, 1, 0], [], []>} : vector<8x32xbf16>, vector<8x32xbf16>, vector<8x8xf32> -> vector<8x8xf32>
    %cst_23 = arith.constant 0.176776692 : f32
    %64 = vector.broadcast %cst_23 : f32 to vector<8x8xf32>
    %65 = arith.mulf %63, %64 : vector<8x8xf32>
    %66 = arith.addf %65, %12 : vector<8x8xf32>
    %cst_24 = arith.constant dense<0xFF800000> : vector<8xf32>
    %67 = vector.multi_reduction <maximumf>, %66, %cst_24 [1] : vector<8x8xf32> to vector<8xf32>
    %68 = vector.shape_cast %67 : vector<8xf32> to vector<8x1xf32>
    %69 = vector.broadcast %68 : vector<8x1xf32> to vector<8x8xf32>
    %70 = arith.subf %66, %69 : vector<8x8xf32>
    %71 = math.exp %70 : vector<8x8xf32>
    %cst_25 = arith.constant dense<0.000000e+00> : vector<8xf32>
    %72 = vector.multi_reduction <add>, %71, %cst_25 [1] : vector<8x8xf32> to vector<8xf32>
    %73 = vector.shape_cast %72 : vector<8xf32> to vector<8x1xf32>
    %74 = vector.broadcast %73 : vector<8x1xf32> to vector<8x8xf32>
    %75 = arith.divf %71, %74 : vector<8x8xf32>
    %76 = arith.truncf %75 : vector<8x8xf32> to vector<8x8xbf16>
    %cst_26 = arith.constant dense<0.000000e+00> : vector<8x32xf32>
    %77 = tpu.matmul %76, %62, %cst_26 {dimension_numbers = #tpu.dot_dimension_numbers<[1], [0], [0], [1], [0, 0, 1, 1], [], []>} : vector<8x8xbf16>, vector<8x32xbf16>, vector<8x32xf32> -> vector<8x32xf32>
    %c0_27 = arith.constant 0 : index
    %c64 = arith.constant 64 : index
    %78 = vector.load %arg10[%c0_27, %c64] : memref<8x128xf32, #tpu.memory_space<vmem>>, vector<8x32xf32>
    tpu.vector_store %arg10[%c0_27, %c64], %77 {strides = array<i32>} : memref<8x128xf32, #tpu.memory_space<vmem>>, vector<8x32xf32>,
    %79 = vector.extract_strided_slice %8 {offsets = [0, 96], sizes = [8, 32], strides = [1, 1]} : vector<8x128xf32> to vector<8x32xf32>
    %80 = arith.truncf %79 : vector<8x32xf32> to vector<8x32xbf16>
    %81 = vector.extract_strided_slice %9 {offsets = [0, 96], sizes = [8, 32], strides = [1, 1]} : vector<8x128xf32> to vector<8x32xf32>
    %82 = arith.truncf %81 : vector<8x32xf32> to vector<8x32xbf16>
    %83 = vector.extract_strided_slice %10 {offsets = [0, 96], sizes = [8, 32], strides = [1, 1]} : vector<8x128xf32> to vector<8x32xf32>
    %84 = arith.truncf %83 : vector<8x32xf32> to vector<8x32xbf16>
    %cst_28 = arith.constant dense<0.000000e+00> : vector<8x8xf32>
    %85 = tpu.matmul %80, %82, %cst_28 {dimension_numbers = #tpu.dot_dimension_numbers<[1], [1], [0], [0], [0, 0, 1, 0], [], []>} : vector<8x32xbf16>, vector<8x32xbf16>, vector<8x8xf32> -> vector<8x8xf32>
    %cst_29 = arith.constant 0.176776692 : f32
    %86 = vector.broadcast %cst_29 : f32 to vector<8x8xf32>
    %87 = arith.mulf %85, %86 : vector<8x8xf32>
    %88 = arith.addf %87, %12 : vector<8x8xf32>
    %cst_30 = arith.constant dense<0xFF800000> : vector<8xf32>
    %89 = vector.multi_reduction <maximumf>, %88, %cst_30 [1] : vector<8x8xf32> to vector<8xf32>
    %90 = vector.shape_cast %89 : vector<8xf32> to vector<8x1xf32>
    %91 = vector.broadcast %90 : vector<8x1xf32> to vector<8x8xf32>
    %92 = arith.subf %88, %91 : vector<8x8xf32>
    %93 = math.exp %92 : vector<8x8xf32>
    %cst_31 = arith.constant dense<0.000000e+00> : vector<8xf32>
    %94 = vector.multi_reduction <add>, %93, %cst_31 [1] : vector<8x8xf32> to vector<8xf32>
    %95 = vector.shape_cast %94 : vector<8xf32> to vector<8x1xf32>
    %96 = vector.broadcast %95 : vector<8x1xf32> to vector<8x8xf32>
    %97 = arith.divf %93, %96 : vector<8x8xf32>
    %98 = arith.truncf %97 : vector<8x8xf32> to vector<8x8xbf16>
    %cst_32 = arith.constant dense<0.000000e+00> : vector<8x32xf32>
    %99 = tpu.matmul %98, %84, %cst_32 {dimension_numbers = #tpu.dot_dimension_numbers<[1], [0], [0], [1], [0, 0, 1, 1], [], []>} : vector<8x8xbf16>, vector<8x32xbf16>, vector<8x32xf32> -> vector<8x32xf32>
    %c0_33 = arith.constant 0 : index
    %c96 = arith.constant 96 : index
    %100 = vector.load %arg10[%c0_33, %c96] : memref<8x128xf32, #tpu.memory_space<vmem>>, vector<8x32xf32>
    tpu.vector_store %arg10[%c0_33, %c96], %99 {strides = array<i32>} : memref<8x128xf32, #tpu.memory_space<vmem>>, vector<8x32xf32>,
    %c0_34 = arith.constant 0 : index
    %c0_35 = arith.constant 0 : index
    %101 = vector.load %arg10[%c0_34, %c0_35] : memref<8x128xf32, #tpu.memory_space<vmem>>, vector<8x128xf32>
    %102 = arith.truncf %101 : vector<8x128xf32> to vector<8x128xbf16>
    %c0_36 = arith.constant 0 : index
    %c0_37 = arith.constant 0 : index
    %103 = vector.load %arg5[%c0_36, %c0_37] : memref<128x128xbf16, #tpu.memory_space<vmem>>, vector<128x128xbf16>
    %cst_38 = arith.constant dense<0.000000e+00> : vector<8x128xf32>
    %104 = tpu.matmul %102, %103, %cst_38 {dimension_numbers = #tpu.dot_dimension_numbers<[1], [0], [0], [1], [0, 0, 1, 1], [], []>} : vector<8x128xbf16>, vector<128x128xbf16>, vector<8x128xf32> -> vector<8x128xf32>
    %c0_39 = arith.constant 0 : index
    %c0_40 = arith.constant 0 : index
    %105 = vector.load %arg6[%c0_39, %c0_40] : memref<1x128xf32, #tpu.memory_space<vmem>>, vector<1x128xf32>
    %106 = vector.broadcast %105 : vector<1x128xf32> to vector<8x128xf32>
    %107 = arith.addf %104, %106 : vector<8x128xf32>
    %108 = arith.addf %107, %1 : vector<8x128xf32>
    %c0_41 = arith.constant 0 : index
    %c0_42 = arith.constant 0 : index
    %109 = vector.load %arg7[%c0_41, %c0_42] : memref<1x128xf32, #tpu.memory_space<vmem>>, vector<1x128xf32>
    %c0_43 = arith.constant 0 : index
    %c0_44 = arith.constant 0 : index
    %110 = vector.load %arg8[%c0_43, %c0_44] : memref<1x128xf32, #tpu.memory_space<vmem>>, vector<1x128xf32>
    %cst_45 = arith.constant dense<0.000000e+00> : vector<8xf32>
    %111 = vector.multi_reduction <add>, %108, %cst_45 [1] : vector<8x128xf32> to vector<8xf32>
    %112 = vector.shape_cast %111 : vector<8xf32> to vector<8x1xf32>
    %cst_46 = arith.constant 1.280000e+02 : f32
    %113 = vector.broadcast %cst_46 : f32 to vector<8x1xf32>
    %114 = arith.divf %112, %113 : vector<8x1xf32>
    %115 = vector.broadcast %114 : vector<8x1xf32> to vector<8x128xf32>
    %116 = arith.subf %108, %115 : vector<8x128xf32>
    %117 = arith.mulf %116, %116 : vector<8x128xf32>
    %cst_47 = arith.constant dense<0.000000e+00> : vector<8xf32>
    %118 = vector.multi_reduction <add>, %117, %cst_47 [1] : vector<8x128xf32> to vector<8xf32>
    %119 = vector.shape_cast %118 : vector<8xf32> to vector<8x1xf32>
    %cst_48 = arith.constant 1.280000e+02 : f32
    %120 = vector.broadcast %cst_48 : f32 to vector<8x1xf32>
    %121 = arith.divf %119, %120 : vector<8x1xf32>
    %122 = vector.broadcast %114 : vector<8x1xf32> to vector<8x128xf32>
    %123 = arith.subf %108, %122 : vector<8x128xf32>
    %cst_49 = arith.constant 9.99999974E-6 : f32
    %124 = vector.broadcast %cst_49 : f32 to vector<8x1xf32>
    %125 = arith.addf %121, %124 : vector<8x1xf32>
    %126 = math.rsqrt %125 : vector<8x1xf32>
    %127 = vector.broadcast %126 : vector<8x1xf32> to vector<8x128xf32>
    %128 = arith.mulf %123, %127 : vector<8x128xf32>
    %129 = vector.broadcast %109 : vector<1x128xf32> to vector<8x128xf32>
    %130 = arith.mulf %128, %129 : vector<8x128xf32>
    %131 = vector.broadcast %110 : vector<1x128xf32> to vector<8x128xf32>
    %132 = arith.addf %130, %131 : vector<8x128xf32>
    %c0_50 = arith.constant 0 : index
    %c0_51 = arith.constant 0 : index
    %c0_52 = arith.constant 0 : index
    %133 = vector.load %arg9[%c0_50, %c0_51, %c0_52] : memref<1x8x128xf32, #tpu.memory_space<vmem>>, vector<1x8x128xf32>
    %134 = vector.shape_cast %133 : vector<1x8x128xf32> to vector<8x128xf32>
    %135 = vector.shape_cast %132 : vector<8x128xf32> to vector<1x8x128xf32>
    tpu.vector_store %arg9[%c0_50, %c0_51, %c0_52], %135 {strides = array<i32>} : memref<1x8x128xf32, #tpu.memory_space<vmem>>, vector<1x8x128xf32>,
    return
  }
  func.func @transform_0(%arg0: i32) -> (i32, i32, i32) {
    %c0_i32 = arith.constant 0 : i32
    %c0_i32_0 = arith.constant 0 : i32
    %c0_i32_1 = arith.constant 0 : i32
    return %arg0, %c0_i32, %c0_i32_0 : i32, i32, i32
  }
  func.func @transform_1(%arg0: i32) -> (i32, i32, i32) {
    %c0_i32 = arith.constant 0 : i32
    %c0_i32_0 = arith.constant 0 : i32
    %c0_i32_1 = arith.constant 0 : i32
    %c0_i32_2 = arith.constant 0 : i32
    return %c0_i32, %c0_i32_0, %c0_i32_1 : i32, i32, i32
  }
  func.func @transform_2(%arg0: i32) -> (i32, i32) {
    %c0_i32 = arith.constant 0 : i32
    %c0_i32_0 = arith.constant 0 : i32
    %c0_i32_1 = arith.constant 0 : i32
    return %c0_i32, %c0_i32_0 : i32, i32
  }
  func.func @transform_3(%arg0: i32) -> (i32, i32) {
    %c0_i32 = arith.constant 0 : i32
    %c0_i32_0 = arith.constant 0 : i32
    %c0_i32_1 = arith.constant 0 : i32
    return %c0_i32, %c0_i32_0 : i32, i32
  }
  func.func @transform_4(%arg0: i32) -> (i32, i32) {
    %c0_i32 = arith.constant 0 : i32
    %c0_i32_0 = arith.constant 0 : i32
    %c0_i32_1 = arith.constant 0 : i32
    return %c0_i32, %c0_i32_0 : i32, i32
  }
  func.func @transform_5(%arg0: i32) -> (i32, i32) {
    %c0_i32 = arith.constant 0 : i32
    %c0_i32_0 = arith.constant 0 : i32
    %c0_i32_1 = arith.constant 0 : i32
    return %c0_i32, %c0_i32_0 : i32, i32
  }
  func.func @transform_6(%arg0: i32) -> (i32, i32) {
    %c0_i32 = arith.constant 0 : i32
    %c0_i32_0 = arith.constant 0 : i32
    %c0_i32_1 = arith.constant 0 : i32
    return %c0_i32, %c0_i32_0 : i32, i32
  }
  func.func @transform_7(%arg0: i32) -> (i32, i32) {
    %c0_i32 = arith.constant 0 : i32
    %c0_i32_0 = arith.constant 0 : i32
    %c0_i32_1 = arith.constant 0 : i32
    return %c0_i32, %c0_i32_0 : i32, i32
  }
  func.func @transform_8(%arg0: i32) -> (i32, i32, i32) {
    %c0_i32 = arith.constant 0 : i32
    %c0_i32_0 = arith.constant 0 : i32
    %c0_i32_1 = arith.constant 0 : i32
    return %arg0, %c0_i32, %c0_i32_0 : i32, i32, i32
  }
}

module attributes {stable_mosaic.version = 11 : i64} {
  func.func @_cross_attn_block_kernel(%arg0: i32, %arg1: memref<1x8x128xf32, #tpu.memory_space<vmem>>, %arg2: memref<1x8x128xf32, #tpu.memory_space<vmem>>, %arg3: memref<1x1x8xf32, #tpu.memory_space<vmem>>, %arg4: memref<128x128xbf16, #tpu.memory_space<vmem>>, %arg5: memref<1x128xf32, #tpu.memory_space<vmem>>, %arg6: memref<128x256xbf16, #tpu.memory_space<vmem>>, %arg7: memref<1x256xf32, #tpu.memory_space<vmem>>, %arg8: memref<128x128xbf16, #tpu.memory_space<vmem>>, %arg9: memref<1x128xf32, #tpu.memory_space<vmem>>, %arg10: memref<1x128xf32, #tpu.memory_space<vmem>>, %arg11: memref<1x128xf32, #tpu.memory_space<vmem>>, %arg12: memref<1x8x128xf32, #tpu.memory_space<vmem>>, %arg13: memref<8x128xf32, #tpu.memory_space<vmem>>) attributes {dimension_semantics = [#tpu.dimension_semantics<parallel>], iteration_bounds = array<i64: 2>, scalar_prefetch = 0 : i64, scratch_operands = 1 : i64, tpu.core_type = #tpu.core_type<tc>, window_params = [{transform_indices = @transform_0, window_bounds = array<i64: 1, 8, 128>}, {transform_indices = @transform_1, window_bounds = array<i64: 1, 8, 128>}, {transform_indices = @transform_2, window_bounds = array<i64: 1, 1, 8>}, {pipeline_mode = #tpu.pipeline_mode<synchronous>, transform_indices = @transform_3, window_bounds = array<i64: 128, 128>}, {pipeline_mode = #tpu.pipeline_mode<synchronous>, transform_indices = @transform_4, window_bounds = array<i64: 1, 128>}, {pipeline_mode = #tpu.pipeline_mode<synchronous>, transform_indices = @transform_5, window_bounds = array<i64: 128, 256>}, {pipeline_mode = #tpu.pipeline_mode<synchronous>, transform_indices = @transform_6, window_bounds = array<i64: 1, 256>}, {pipeline_mode = #tpu.pipeline_mode<synchronous>, transform_indices = @transform_7, window_bounds = array<i64: 128, 128>}, {pipeline_mode = #tpu.pipeline_mode<synchronous>, transform_indices = @transform_8, window_bounds = array<i64: 1, 128>}, {pipeline_mode = #tpu.pipeline_mode<synchronous>, transform_indices = @transform_9, window_bounds = array<i64: 1, 128>}, {pipeline_mode = #tpu.pipeline_mode<synchronous>, transform_indices = @transform_10, window_bounds = array<i64: 1, 128>}, {transform_indices = @transform_11, window_bounds = array<i64: 1, 8, 128>}]} {
    %c0 = arith.constant 0 : index
    %c0_0 = arith.constant 0 : index
    %c0_1 = arith.constant 0 : index
    %0 = vector.load %arg1[%c0, %c0_0, %c0_1] : memref<1x8x128xf32, #tpu.memory_space<vmem>>, vector<1x8x128xf32>
    %1 = vector.shape_cast %0 : vector<1x8x128xf32> to vector<8x128xf32>
    %c0_2 = arith.constant 0 : index
    %c0_3 = arith.constant 0 : index
    %c0_4 = arith.constant 0 : index
    %2 = vector.load %arg2[%c0_2, %c0_3, %c0_4] : memref<1x8x128xf32, #tpu.memory_space<vmem>>, vector<1x8x128xf32>
    %3 = vector.shape_cast %2 : vector<1x8x128xf32> to vector<8x128xf32>
    %4 = arith.truncf %1 : vector<8x128xf32> to vector<8x128xbf16>
    %c0_5 = arith.constant 0 : index
    %c0_6 = arith.constant 0 : index
    %5 = vector.load %arg4[%c0_5, %c0_6] : memref<128x128xbf16, #tpu.memory_space<vmem>>, vector<128x128xbf16>
    %cst = arith.constant dense<0.000000e+00> : vector<8x128xf32>
    %6 = tpu.matmul %4, %5, %cst {dimension_numbers = #tpu.dot_dimension_numbers<[1], [0], [0], [1], [0, 0, 1, 1], [], []>} : vector<8x128xbf16>, vector<128x128xbf16>, vector<8x128xf32> -> vector<8x128xf32>
    %c0_7 = arith.constant 0 : index
    %c0_8 = arith.constant 0 : index
    %7 = vector.load %arg5[%c0_7, %c0_8] : memref<1x128xf32, #tpu.memory_space<vmem>>, vector<1x128xf32>
    %8 = vector.broadcast %7 : vector<1x128xf32> to vector<8x128xf32>
    %9 = arith.addf %6, %8 : vector<8x128xf32>
    %10 = arith.truncf %3 : vector<8x128xf32> to vector<8x128xbf16>
    %c0_9 = arith.constant 0 : index
    %c0_10 = arith.constant 0 : index
    %11 = vector.load %arg6[%c0_9, %c0_10] : memref<128x256xbf16, #tpu.memory_space<vmem>>, vector<128x256xbf16>
    %cst_11 = arith.constant dense<0.000000e+00> : vector<8x256xf32>
    %12 = tpu.matmul %10, %11, %cst_11 {dimension_numbers = #tpu.dot_dimension_numbers<[1], [0], [0], [1], [0, 0, 1, 1], [], []>} : vector<8x128xbf16>, vector<128x256xbf16>, vector<8x256xf32> -> vector<8x256xf32>
    %c0_12 = arith.constant 0 : index
    %c0_13 = arith.constant 0 : index
    %13 = vector.load %arg7[%c0_12, %c0_13] : memref<1x256xf32, #tpu.memory_space<vmem>>, vector<1x256xf32>
    %14 = vector.broadcast %13 : vector<1x256xf32> to vector<8x256xf32>
    %15 = arith.addf %12, %14 : vector<8x256xf32>
    %16 = vector.extract_strided_slice %15 {offsets = [0, 0], sizes = [8, 128], strides = [1, 1]} : vector<8x256xf32> to vector<8x128xf32>
    %17 = vector.extract_strided_slice %15 {offsets = [0, 128], sizes = [8, 128], strides = [1, 1]} : vector<8x256xf32> to vector<8x128xf32>
    %c0_14 = arith.constant 0 : index
    %c0_15 = arith.constant 0 : index
    %c0_16 = arith.constant 0 : index
    %18 = vector.load %arg3[%c0_14, %c0_15, %c0_16] : memref<1x1x8xf32, #tpu.memory_space<vmem>>, vector<1x1x8xf32>
    %19 = vector.shape_cast %18 : vector<1x1x8xf32> to vector<1x8xf32>
    %20 = vector.extract_strided_slice %9 {offsets = [0, 0], sizes = [8, 32], strides = [1, 1]} : vector<8x128xf32> to vector<8x32xf32>
    %21 = arith.truncf %20 : vector<8x32xf32> to vector<8x32xbf16>
    %22 = vector.extract_strided_slice %16 {offsets = [0, 0], sizes = [8, 32], strides = [1, 1]} : vector<8x128xf32> to vector<8x32xf32>
    %23 = arith.truncf %22 : vector<8x32xf32> to vector<8x32xbf16>
    %24 = vector.extract_strided_slice %17 {offsets = [0, 0], sizes = [8, 32], strides = [1, 1]} : vector<8x128xf32> to vector<8x32xf32>
    %25 = arith.truncf %24 : vector<8x32xf32> to vector<8x32xbf16>
    %cst_17 = arith.constant dense<0.000000e+00> : vector<8x8xf32>
    %26 = tpu.matmul %21, %23, %cst_17 {dimension_numbers = #tpu.dot_dimension_numbers<[1], [1], [0], [0], [0, 0, 1, 0], [], []>} : vector<8x32xbf16>, vector<8x32xbf16>, vector<8x8xf32> -> vector<8x8xf32>
    %cst_18 = arith.constant 0.176776692 : f32
    %27 = vector.broadcast %cst_18 : f32 to vector<8x8xf32>
    %28 = arith.mulf %26, %27 : vector<8x8xf32>
    %29 = vector.broadcast %19 : vector<1x8xf32> to vector<8x8xf32>
    %30 = arith.addf %28, %29 : vector<8x8xf32>
    %cst_19 = arith.constant dense<0xFF800000> : vector<8xf32>
    %31 = vector.multi_reduction <maximumf>, %30, %cst_19 [1] : vector<8x8xf32> to vector<8xf32>
    %32 = vector.shape_cast %31 : vector<8xf32> to vector<8x1xf32>
    %33 = vector.broadcast %32 : vector<8x1xf32> to vector<8x8xf32>
    %34 = arith.subf %30, %33 : vector<8x8xf32>
    %35 = math.exp %34 : vector<8x8xf32>
    %cst_20 = arith.constant dense<0.000000e+00> : vector<8xf32>
    %36 = vector.multi_reduction <add>, %35, %cst_20 [1] : vector<8x8xf32> to vector<8xf32>
    %37 = vector.shape_cast %36 : vector<8xf32> to vector<8x1xf32>
    %38 = vector.broadcast %37 : vector<8x1xf32> to vector<8x8xf32>
    %39 = arith.divf %35, %38 : vector<8x8xf32>
    %40 = arith.truncf %39 : vector<8x8xf32> to vector<8x8xbf16>
    %cst_21 = arith.constant dense<0.000000e+00> : vector<8x32xf32>
    %41 = tpu.matmul %40, %25, %cst_21 {dimension_numbers = #tpu.dot_dimension_numbers<[1], [0], [0], [1], [0, 0, 1, 1], [], []>} : vector<8x8xbf16>, vector<8x32xbf16>, vector<8x32xf32> -> vector<8x32xf32>
    %c0_22 = arith.constant 0 : index
    %c0_23 = arith.constant 0 : index
    %42 = vector.load %arg13[%c0_22, %c0_23] : memref<8x128xf32, #tpu.memory_space<vmem>>, vector<8x32xf32>
    tpu.vector_store %arg13[%c0_22, %c0_23], %41 {strides = array<i32>} : memref<8x128xf32, #tpu.memory_space<vmem>>, vector<8x32xf32>,
    %43 = vector.extract_strided_slice %9 {offsets = [0, 32], sizes = [8, 32], strides = [1, 1]} : vector<8x128xf32> to vector<8x32xf32>
    %44 = arith.truncf %43 : vector<8x32xf32> to vector<8x32xbf16>
    %45 = vector.extract_strided_slice %16 {offsets = [0, 32], sizes = [8, 32], strides = [1, 1]} : vector<8x128xf32> to vector<8x32xf32>
    %46 = arith.truncf %45 : vector<8x32xf32> to vector<8x32xbf16>
    %47 = vector.extract_strided_slice %17 {offsets = [0, 32], sizes = [8, 32], strides = [1, 1]} : vector<8x128xf32> to vector<8x32xf32>
    %48 = arith.truncf %47 : vector<8x32xf32> to vector<8x32xbf16>
    %cst_24 = arith.constant dense<0.000000e+00> : vector<8x8xf32>
    %49 = tpu.matmul %44, %46, %cst_24 {dimension_numbers = #tpu.dot_dimension_numbers<[1], [1], [0], [0], [0, 0, 1, 0], [], []>} : vector<8x32xbf16>, vector<8x32xbf16>, vector<8x8xf32> -> vector<8x8xf32>
    %cst_25 = arith.constant 0.176776692 : f32
    %50 = vector.broadcast %cst_25 : f32 to vector<8x8xf32>
    %51 = arith.mulf %49, %50 : vector<8x8xf32>
    %52 = vector.broadcast %19 : vector<1x8xf32> to vector<8x8xf32>
    %53 = arith.addf %51, %52 : vector<8x8xf32>
    %cst_26 = arith.constant dense<0xFF800000> : vector<8xf32>
    %54 = vector.multi_reduction <maximumf>, %53, %cst_26 [1] : vector<8x8xf32> to vector<8xf32>
    %55 = vector.shape_cast %54 : vector<8xf32> to vector<8x1xf32>
    %56 = vector.broadcast %55 : vector<8x1xf32> to vector<8x8xf32>
    %57 = arith.subf %53, %56 : vector<8x8xf32>
    %58 = math.exp %57 : vector<8x8xf32>
    %cst_27 = arith.constant dense<0.000000e+00> : vector<8xf32>
    %59 = vector.multi_reduction <add>, %58, %cst_27 [1] : vector<8x8xf32> to vector<8xf32>
    %60 = vector.shape_cast %59 : vector<8xf32> to vector<8x1xf32>
    %61 = vector.broadcast %60 : vector<8x1xf32> to vector<8x8xf32>
    %62 = arith.divf %58, %61 : vector<8x8xf32>
    %63 = arith.truncf %62 : vector<8x8xf32> to vector<8x8xbf16>
    %cst_28 = arith.constant dense<0.000000e+00> : vector<8x32xf32>
    %64 = tpu.matmul %63, %48, %cst_28 {dimension_numbers = #tpu.dot_dimension_numbers<[1], [0], [0], [1], [0, 0, 1, 1], [], []>} : vector<8x8xbf16>, vector<8x32xbf16>, vector<8x32xf32> -> vector<8x32xf32>
    %c0_29 = arith.constant 0 : index
    %c32 = arith.constant 32 : index
    %65 = vector.load %arg13[%c0_29, %c32] : memref<8x128xf32, #tpu.memory_space<vmem>>, vector<8x32xf32>
    tpu.vector_store %arg13[%c0_29, %c32], %64 {strides = array<i32>} : memref<8x128xf32, #tpu.memory_space<vmem>>, vector<8x32xf32>,
    %66 = vector.extract_strided_slice %9 {offsets = [0, 64], sizes = [8, 32], strides = [1, 1]} : vector<8x128xf32> to vector<8x32xf32>
    %67 = arith.truncf %66 : vector<8x32xf32> to vector<8x32xbf16>
    %68 = vector.extract_strided_slice %16 {offsets = [0, 64], sizes = [8, 32], strides = [1, 1]} : vector<8x128xf32> to vector<8x32xf32>
    %69 = arith.truncf %68 : vector<8x32xf32> to vector<8x32xbf16>
    %70 = vector.extract_strided_slice %17 {offsets = [0, 64], sizes = [8, 32], strides = [1, 1]} : vector<8x128xf32> to vector<8x32xf32>
    %71 = arith.truncf %70 : vector<8x32xf32> to vector<8x32xbf16>
    %cst_30 = arith.constant dense<0.000000e+00> : vector<8x8xf32>
    %72 = tpu.matmul %67, %69, %cst_30 {dimension_numbers = #tpu.dot_dimension_numbers<[1], [1], [0], [0], [0, 0, 1, 0], [], []>} : vector<8x32xbf16>, vector<8x32xbf16>, vector<8x8xf32> -> vector<8x8xf32>
    %cst_31 = arith.constant 0.176776692 : f32
    %73 = vector.broadcast %cst_31 : f32 to vector<8x8xf32>
    %74 = arith.mulf %72, %73 : vector<8x8xf32>
    %75 = vector.broadcast %19 : vector<1x8xf32> to vector<8x8xf32>
    %76 = arith.addf %74, %75 : vector<8x8xf32>
    %cst_32 = arith.constant dense<0xFF800000> : vector<8xf32>
    %77 = vector.multi_reduction <maximumf>, %76, %cst_32 [1] : vector<8x8xf32> to vector<8xf32>
    %78 = vector.shape_cast %77 : vector<8xf32> to vector<8x1xf32>
    %79 = vector.broadcast %78 : vector<8x1xf32> to vector<8x8xf32>
    %80 = arith.subf %76, %79 : vector<8x8xf32>
    %81 = math.exp %80 : vector<8x8xf32>
    %cst_33 = arith.constant dense<0.000000e+00> : vector<8xf32>
    %82 = vector.multi_reduction <add>, %81, %cst_33 [1] : vector<8x8xf32> to vector<8xf32>
    %83 = vector.shape_cast %82 : vector<8xf32> to vector<8x1xf32>
    %84 = vector.broadcast %83 : vector<8x1xf32> to vector<8x8xf32>
    %85 = arith.divf %81, %84 : vector<8x8xf32>
    %86 = arith.truncf %85 : vector<8x8xf32> to vector<8x8xbf16>
    %cst_34 = arith.constant dense<0.000000e+00> : vector<8x32xf32>
    %87 = tpu.matmul %86, %71, %cst_34 {dimension_numbers = #tpu.dot_dimension_numbers<[1], [0], [0], [1], [0, 0, 1, 1], [], []>} : vector<8x8xbf16>, vector<8x32xbf16>, vector<8x32xf32> -> vector<8x32xf32>
    %c0_35 = arith.constant 0 : index
    %c64 = arith.constant 64 : index
    %88 = vector.load %arg13[%c0_35, %c64] : memref<8x128xf32, #tpu.memory_space<vmem>>, vector<8x32xf32>
    tpu.vector_store %arg13[%c0_35, %c64], %87 {strides = array<i32>} : memref<8x128xf32, #tpu.memory_space<vmem>>, vector<8x32xf32>,
    %89 = vector.extract_strided_slice %9 {offsets = [0, 96], sizes = [8, 32], strides = [1, 1]} : vector<8x128xf32> to vector<8x32xf32>
    %90 = arith.truncf %89 : vector<8x32xf32> to vector<8x32xbf16>
    %91 = vector.extract_strided_slice %16 {offsets = [0, 96], sizes = [8, 32], strides = [1, 1]} : vector<8x128xf32> to vector<8x32xf32>
    %92 = arith.truncf %91 : vector<8x32xf32> to vector<8x32xbf16>
    %93 = vector.extract_strided_slice %17 {offsets = [0, 96], sizes = [8, 32], strides = [1, 1]} : vector<8x128xf32> to vector<8x32xf32>
    %94 = arith.truncf %93 : vector<8x32xf32> to vector<8x32xbf16>
    %cst_36 = arith.constant dense<0.000000e+00> : vector<8x8xf32>
    %95 = tpu.matmul %90, %92, %cst_36 {dimension_numbers = #tpu.dot_dimension_numbers<[1], [1], [0], [0], [0, 0, 1, 0], [], []>} : vector<8x32xbf16>, vector<8x32xbf16>, vector<8x8xf32> -> vector<8x8xf32>
    %cst_37 = arith.constant 0.176776692 : f32
    %96 = vector.broadcast %cst_37 : f32 to vector<8x8xf32>
    %97 = arith.mulf %95, %96 : vector<8x8xf32>
    %98 = vector.broadcast %19 : vector<1x8xf32> to vector<8x8xf32>
    %99 = arith.addf %97, %98 : vector<8x8xf32>
    %cst_38 = arith.constant dense<0xFF800000> : vector<8xf32>
    %100 = vector.multi_reduction <maximumf>, %99, %cst_38 [1] : vector<8x8xf32> to vector<8xf32>
    %101 = vector.shape_cast %100 : vector<8xf32> to vector<8x1xf32>
    %102 = vector.broadcast %101 : vector<8x1xf32> to vector<8x8xf32>
    %103 = arith.subf %99, %102 : vector<8x8xf32>
    %104 = math.exp %103 : vector<8x8xf32>
    %cst_39 = arith.constant dense<0.000000e+00> : vector<8xf32>
    %105 = vector.multi_reduction <add>, %104, %cst_39 [1] : vector<8x8xf32> to vector<8xf32>
    %106 = vector.shape_cast %105 : vector<8xf32> to vector<8x1xf32>
    %107 = vector.broadcast %106 : vector<8x1xf32> to vector<8x8xf32>
    %108 = arith.divf %104, %107 : vector<8x8xf32>
    %109 = arith.truncf %108 : vector<8x8xf32> to vector<8x8xbf16>
    %cst_40 = arith.constant dense<0.000000e+00> : vector<8x32xf32>
    %110 = tpu.matmul %109, %94, %cst_40 {dimension_numbers = #tpu.dot_dimension_numbers<[1], [0], [0], [1], [0, 0, 1, 1], [], []>} : vector<8x8xbf16>, vector<8x32xbf16>, vector<8x32xf32> -> vector<8x32xf32>
    %c0_41 = arith.constant 0 : index
    %c96 = arith.constant 96 : index
    %111 = vector.load %arg13[%c0_41, %c96] : memref<8x128xf32, #tpu.memory_space<vmem>>, vector<8x32xf32>
    tpu.vector_store %arg13[%c0_41, %c96], %110 {strides = array<i32>} : memref<8x128xf32, #tpu.memory_space<vmem>>, vector<8x32xf32>,
    %c0_42 = arith.constant 0 : index
    %c0_43 = arith.constant 0 : index
    %112 = vector.load %arg13[%c0_42, %c0_43] : memref<8x128xf32, #tpu.memory_space<vmem>>, vector<8x128xf32>
    %113 = arith.truncf %112 : vector<8x128xf32> to vector<8x128xbf16>
    %c0_44 = arith.constant 0 : index
    %c0_45 = arith.constant 0 : index
    %114 = vector.load %arg8[%c0_44, %c0_45] : memref<128x128xbf16, #tpu.memory_space<vmem>>, vector<128x128xbf16>
    %cst_46 = arith.constant dense<0.000000e+00> : vector<8x128xf32>
    %115 = tpu.matmul %113, %114, %cst_46 {dimension_numbers = #tpu.dot_dimension_numbers<[1], [0], [0], [1], [0, 0, 1, 1], [], []>} : vector<8x128xbf16>, vector<128x128xbf16>, vector<8x128xf32> -> vector<8x128xf32>
    %c0_47 = arith.constant 0 : index
    %c0_48 = arith.constant 0 : index
    %116 = vector.load %arg9[%c0_47, %c0_48] : memref<1x128xf32, #tpu.memory_space<vmem>>, vector<1x128xf32>
    %117 = vector.broadcast %116 : vector<1x128xf32> to vector<8x128xf32>
    %118 = arith.addf %115, %117 : vector<8x128xf32>
    %119 = arith.addf %118, %1 : vector<8x128xf32>
    %c0_49 = arith.constant 0 : index
    %c0_50 = arith.constant 0 : index
    %120 = vector.load %arg10[%c0_49, %c0_50] : memref<1x128xf32, #tpu.memory_space<vmem>>, vector<1x128xf32>
    %c0_51 = arith.constant 0 : index
    %c0_52 = arith.constant 0 : index
    %121 = vector.load %arg11[%c0_51, %c0_52] : memref<1x128xf32, #tpu.memory_space<vmem>>, vector<1x128xf32>
    %cst_53 = arith.constant dense<0.000000e+00> : vector<8xf32>
    %122 = vector.multi_reduction <add>, %119, %cst_53 [1] : vector<8x128xf32> to vector<8xf32>
    %123 = vector.shape_cast %122 : vector<8xf32> to vector<8x1xf32>
    %cst_54 = arith.constant 1.280000e+02 : f32
    %124 = vector.broadcast %cst_54 : f32 to vector<8x1xf32>
    %125 = arith.divf %123, %124 : vector<8x1xf32>
    %126 = vector.broadcast %125 : vector<8x1xf32> to vector<8x128xf32>
    %127 = arith.subf %119, %126 : vector<8x128xf32>
    %128 = arith.mulf %127, %127 : vector<8x128xf32>
    %cst_55 = arith.constant dense<0.000000e+00> : vector<8xf32>
    %129 = vector.multi_reduction <add>, %128, %cst_55 [1] : vector<8x128xf32> to vector<8xf32>
    %130 = vector.shape_cast %129 : vector<8xf32> to vector<8x1xf32>
    %cst_56 = arith.constant 1.280000e+02 : f32
    %131 = vector.broadcast %cst_56 : f32 to vector<8x1xf32>
    %132 = arith.divf %130, %131 : vector<8x1xf32>
    %133 = vector.broadcast %125 : vector<8x1xf32> to vector<8x128xf32>
    %134 = arith.subf %119, %133 : vector<8x128xf32>
    %cst_57 = arith.constant 9.99999974E-6 : f32
    %135 = vector.broadcast %cst_57 : f32 to vector<8x1xf32>
    %136 = arith.addf %132, %135 : vector<8x1xf32>
    %137 = math.rsqrt %136 : vector<8x1xf32>
    %138 = vector.broadcast %137 : vector<8x1xf32> to vector<8x128xf32>
    %139 = arith.mulf %134, %138 : vector<8x128xf32>
    %140 = vector.broadcast %120 : vector<1x128xf32> to vector<8x128xf32>
    %141 = arith.mulf %139, %140 : vector<8x128xf32>
    %142 = vector.broadcast %121 : vector<1x128xf32> to vector<8x128xf32>
    %143 = arith.addf %141, %142 : vector<8x128xf32>
    %c0_58 = arith.constant 0 : index
    %c0_59 = arith.constant 0 : index
    %c0_60 = arith.constant 0 : index
    %144 = vector.load %arg12[%c0_58, %c0_59, %c0_60] : memref<1x8x128xf32, #tpu.memory_space<vmem>>, vector<1x8x128xf32>
    %145 = vector.shape_cast %144 : vector<1x8x128xf32> to vector<8x128xf32>
    %146 = vector.shape_cast %143 : vector<8x128xf32> to vector<1x8x128xf32>
    tpu.vector_store %arg12[%c0_58, %c0_59, %c0_60], %146 {strides = array<i32>} : memref<1x8x128xf32, #tpu.memory_space<vmem>>, vector<1x8x128xf32>,
    return
  }
  func.func @transform_0(%arg0: i32) -> (i32, i32, i32) {
    %c0_i32 = arith.constant 0 : i32
    %c0_i32_0 = arith.constant 0 : i32
    %c0_i32_1 = arith.constant 0 : i32
    return %arg0, %c0_i32, %c0_i32_0 : i32, i32, i32
  }
  func.func @transform_1(%arg0: i32) -> (i32, i32, i32) {
    %c0_i32 = arith.constant 0 : i32
    %c0_i32_0 = arith.constant 0 : i32
    %c0_i32_1 = arith.constant 0 : i32
    return %arg0, %c0_i32, %c0_i32_0 : i32, i32, i32
  }
  func.func @transform_2(%arg0: i32) -> (i32, i32, i32) {
    %c0_i32 = arith.constant 0 : i32
    %c0_i32_0 = arith.constant 0 : i32
    %c0_i32_1 = arith.constant 0 : i32
    return %arg0, %c0_i32, %c0_i32_0 : i32, i32, i32
  }
  func.func @transform_3(%arg0: i32) -> (i32, i32) {
    %c0_i32 = arith.constant 0 : i32
    %c0_i32_0 = arith.constant 0 : i32
    %c0_i32_1 = arith.constant 0 : i32
    return %c0_i32, %c0_i32_0 : i32, i32
  }
  func.func @transform_4(%arg0: i32) -> (i32, i32) {
    %c0_i32 = arith.constant 0 : i32
    %c0_i32_0 = arith.constant 0 : i32
    %c0_i32_1 = arith.constant 0 : i32
    return %c0_i32, %c0_i32_0 : i32, i32
  }
  func.func @transform_5(%arg0: i32) -> (i32, i32) {
    %c0_i32 = arith.constant 0 : i32
    %c0_i32_0 = arith.constant 0 : i32
    %c0_i32_1 = arith.constant 0 : i32
    return %c0_i32, %c0_i32_0 : i32, i32
  }
  func.func @transform_6(%arg0: i32) -> (i32, i32) {
    %c0_i32 = arith.constant 0 : i32
    %c0_i32_0 = arith.constant 0 : i32
    %c0_i32_1 = arith.constant 0 : i32
    return %c0_i32, %c0_i32_0 : i32, i32
  }
  func.func @transform_7(%arg0: i32) -> (i32, i32) {
    %c0_i32 = arith.constant 0 : i32
    %c0_i32_0 = arith.constant 0 : i32
    %c0_i32_1 = arith.constant 0 : i32
    return %c0_i32, %c0_i32_0 : i32, i32
  }
  func.func @transform_8(%arg0: i32) -> (i32, i32) {
    %c0_i32 = arith.constant 0 : i32
    %c0_i32_0 = arith.constant 0 : i32
    %c0_i32_1 = arith.constant 0 : i32
    return %c0_i32, %c0_i32_0 : i32, i32
  }
  func.func @transform_9(%arg0: i32) -> (i32, i32) {
    %c0_i32 = arith.constant 0 : i32
    %c0_i32_0 = arith.constant 0 : i32
    %c0_i32_1 = arith.constant 0 : i32
    return %c0_i32, %c0_i32_0 : i32, i32
  }
  func.func @transform_10(%arg0: i32) -> (i32, i32) {
    %c0_i32 = arith.constant 0 : i32
    %c0_i32_0 = arith.constant 0 : i32
    %c0_i32_1 = arith.constant 0 : i32
    return %c0_i32, %c0_i32_0 : i32, i32
  }
  func.func @transform_11(%arg0: i32) -> (i32, i32, i32) {
    %c0_i32 = arith.constant 0 : i32
    %c0_i32_0 = arith.constant 0 : i32
    %c0_i32_1 = arith.constant 0 : i32
    return %arg0, %c0_i32, %c0_i32_0 : i32, i32, i32
  }
}

module attributes {stable_mosaic.version = 11 : i64} {
  func.func @_lm_head_ce_kernel(%arg0: i32, %arg1: i32, %arg2: memref<16x128xf32, #tpu.memory_space<vmem>>, %arg3: memref<128x256xbf16, #tpu.memory_space<vmem>>, %arg4: memref<1x256xf32, #tpu.memory_space<vmem>>, %arg5: memref<16x1xi32, #tpu.memory_space<vmem>>, %arg6: memref<16x256xf32, #tpu.memory_space<vmem>>, %arg7: memref<16x1xf32, #tpu.memory_space<vmem>>, %arg8: memref<16x256xf32, #tpu.memory_space<vmem>>) attributes {dimension_semantics = [#tpu.dimension_semantics<parallel>, #tpu.dimension_semantics<arbitrary>], iteration_bounds = array<i64: 1, 1>, scalar_prefetch = 0 : i64, scratch_operands = 1 : i64, tpu.core_type = #tpu.core_type<tc>, window_params = [{transform_indices = @transform_0, window_bounds = array<i64: 16, 128>}, {transform_indices = @transform_1, window_bounds = array<i64: 128, 256>}, {pipeline_mode = #tpu.pipeline_mode<synchronous>, transform_indices = @transform_2, window_bounds = array<i64: 1, 256>}, {transform_indices = @transform_3, window_bounds = array<i64: 16, 1>}, {transform_indices = @transform_4, window_bounds = array<i64: 16, 256>}, {transform_indices = @transform_5, window_bounds = array<i64: 16, 1>}]} {
    %c0_i32 = arith.constant 0 : i32
    %0 = arith.cmpi eq, %arg1, %c0_i32 : i32
    %1 = arith.extui %0 : i1 to i32
    %c0_i32_0 = arith.constant 0 : i32
    %2 = arith.cmpi ne, %1, %c0_i32_0 : i32
    scf.if %2 {
      %cst_10 = arith.constant 0.000000e+00 : f32
      %13 = vector.broadcast %cst_10 : f32 to vector<16x256xf32>
      %c0_11 = arith.constant 0 : index
      %c0_12 = arith.constant 0 : index
      %14 = vector.load %arg8[%c0_11, %c0_12] : memref<16x256xf32, #tpu.memory_space<vmem>>, vector<16x256xf32>
      tpu.vector_store %arg8[%c0_11, %c0_12], %13 {strides = array<i32>} : memref<16x256xf32, #tpu.memory_space<vmem>>, vector<16x256xf32>,
    } else {
    }
    %c0 = arith.constant 0 : index
    %c0_1 = arith.constant 0 : index
    %3 = vector.load %arg8[%c0, %c0_1] : memref<16x256xf32, #tpu.memory_space<vmem>>, vector<16x256xf32>
    %c0_2 = arith.constant 0 : index
    %c0_3 = arith.constant 0 : index
    %4 = vector.load %arg2[%c0_2, %c0_3] : memref<16x128xf32, #tpu.memory_space<vmem>>, vector<16x128xf32>
    %5 = arith.truncf %4 : vector<16x128xf32> to vector<16x128xbf16>
    %c0_4 = arith.constant 0 : index
    %c0_5 = arith.constant 0 : index
    %6 = vector.load %arg3[%c0_4, %c0_5] : memref<128x256xbf16, #tpu.memory_space<vmem>>, vector<128x256xbf16>
    %cst = arith.constant dense<0.000000e+00> : vector<16x256xf32>
    %7 = tpu.matmul %5, %6, %cst {dimension_numbers = #tpu.dot_dimension_numbers<[1], [0], [0], [1], [0, 0, 1, 1], [], []>} : vector<16x128xbf16>, vector<128x256xbf16>, vector<16x256xf32> -> vector<16x256xf32>
    %8 = arith.addf %3, %7 : vector<16x256xf32>
    %c0_6 = arith.constant 0 : index
    %c0_7 = arith.constant 0 : index
    %9 = vector.load %arg8[%c0_6, %c0_7] : memref<16x256xf32, #tpu.memory_space<vmem>>, vector<16x256xf32>
    tpu.vector_store %arg8[%c0_6, %c0_7], %8 {strides = array<i32>} : memref<16x256xf32, #tpu.memory_space<vmem>>, vector<16x256xf32>,
    %c0_i32_8 = arith.constant 0 : i32
    %10 = arith.cmpi eq, %arg1, %c0_i32_8 : i32
    %11 = arith.extui %10 : i1 to i32
    %c0_i32_9 = arith.constant 0 : i32
    %12 = arith.cmpi ne, %11, %c0_i32_9 : i32
    scf.if %12 {
      %c0_10 = arith.constant 0 : index
      %c0_11 = arith.constant 0 : index
      %13 = vector.load %arg8[%c0_10, %c0_11] : memref<16x256xf32, #tpu.memory_space<vmem>>, vector<16x256xf32>
      %c0_12 = arith.constant 0 : index
      %c0_13 = arith.constant 0 : index
      %14 = vector.load %arg4[%c0_12, %c0_13] : memref<1x256xf32, #tpu.memory_space<vmem>>, vector<1x256xf32>
      %15 = vector.broadcast %14 : vector<1x256xf32> to vector<16x256xf32>
      %16 = arith.addf %13, %15 : vector<16x256xf32>
      %c0_14 = arith.constant 0 : index
      %c0_15 = arith.constant 0 : index
      %17 = vector.load %arg6[%c0_14, %c0_15] : memref<16x256xf32, #tpu.memory_space<vmem>>, vector<16x256xf32>
      tpu.vector_store %arg6[%c0_14, %c0_15], %16 {strides = array<i32>} : memref<16x256xf32, #tpu.memory_space<vmem>>, vector<16x256xf32>,
      %18 = tpu.iota {dimensions = array<i32: 1>} : vector<16x256xi32>
      %c256_i32 = arith.constant 256 : i32
      %19 = vector.broadcast %c256_i32 : i32 to vector<16x256xi32>
      %20 = arith.cmpi slt, %18, %19 : vector<16x256xi32>
      %cst_16 = arith.constant -1.000000e+30 : f32
      %21 = vector.broadcast %cst_16 : f32 to vector<16x256xf32>
      %22 = arith.select %20, %16, %21 : vector<16x256xi1>, vector<16x256xf32>
      %cst_17 = arith.constant dense<0xFF800000> : vector<16xf32>
      %23 = vector.multi_reduction <maximumf>, %22, %cst_17 [1] : vector<16x256xf32> to vector<16xf32>
      %24 = vector.shape_cast %23 : vector<16xf32> to vector<16x1xf32>
      %25 = vector.broadcast %24 : vector<16x1xf32> to vector<16x256xf32>
      %26 = arith.subf %22, %25 : vector<16x256xf32>
      %27 = math.exp %26 : vector<16x256xf32>
      %cst_18 = arith.constant dense<0.000000e+00> : vector<16xf32>
      %28 = vector.multi_reduction <add>, %27, %cst_18 [1] : vector<16x256xf32> to vector<16xf32>
      %29 = vector.shape_cast %28 : vector<16xf32> to vector<16x1xf32>
      %30 = math.log %29 : vector<16x1xf32>
      %31 = arith.addf %30, %24 : vector<16x1xf32>
      %c0_19 = arith.constant 0 : index
      %c0_20 = arith.constant 0 : index
      %32 = vector.load %arg5[%c0_19, %c0_20] : memref<16x1xi32, #tpu.memory_space<vmem>>, vector<16x1xi32>
      %33 = vector.broadcast %32 : vector<16x1xi32> to vector<16x256xi32>
      %34 = arith.cmpi eq, %18, %33 : vector<16x256xi32>
      %cst_21 = arith.constant 0.000000e+00 : f32
      %35 = vector.broadcast %cst_21 : f32 to vector<16x256xf32>
      %36 = arith.select %34, %16, %35 : vector<16x256xi1>, vector<16x256xf32>
      %cst_22 = arith.constant dense<0.000000e+00> : vector<16xf32>
      %37 = vector.multi_reduction <add>, %36, %cst_22 [1] : vector<16x256xf32> to vector<16xf32>
      %38 = vector.shape_cast %37 : vector<16xf32> to vector<16x1xf32>
      %c0_i32_23 = arith.constant 0 : i32
      %39 = vector.broadcast %c0_i32_23 : i32 to vector<16x1xi32>
      %40 = arith.cmpi sge, %32, %39 : vector<16x1xi32>
      %41 = arith.extui %40 : vector<16x1xi1> to vector<16x1xi32>
      %42 = arith.sitofp %41 : vector<16x1xi32> to vector<16x1xf32>
      %43 = arith.subf %31, %38 : vector<16x1xf32>
      %44 = arith.mulf %43, %42 : vector<16x1xf32>
      %c0_24 = arith.constant 0 : index
      %c0_25 = arith.constant 0 : index
      %45 = vector.load %arg7[%c0_24, %c0_25] : memref<16x1xf32, #tpu.memory_space<vmem>>, vector<16x1xf32>
      tpu.vector_store %arg7[%c0_24, %c0_25], %44 {strides = array<i32>} : memref<16x1xf32, #tpu.memory_space<vmem>>, vector<16x1xf32>,
    } else {
    }
    return
  }
  func.func @transform_0(%arg0: i32, %arg1: i32) -> (i32, i32) {
    %c0_i32 = arith.constant 0 : i32
    return %arg0, %arg1 : i32, i32
  }
  func.func @transform_1(%arg0: i32, %arg1: i32) -> (i32, i32) {
    %c0_i32 = arith.constant 0 : i32
    %c0_i32_0 = arith.constant 0 : i32
    return %arg1, %c0_i32 : i32, i32
  }
  func.func @transform_2(%arg0: i32, %arg1: i32) -> (i32, i32) {
    %c0_i32 = arith.constant 0 : i32
    %c0_i32_0 = arith.constant 0 : i32
    %c0_i32_1 = arith.constant 0 : i32
    return %c0_i32, %c0_i32_0 : i32, i32
  }
  func.func @transform_3(%arg0: i32, %arg1: i32) -> (i32, i32) {
    %c0_i32 = arith.constant 0 : i32
    %c0_i32_0 = arith.constant 0 : i32
    return %arg0, %c0_i32 : i32, i32
  }
  func.func @transform_4(%arg0: i32, %arg1: i32) -> (i32, i32) {
    %c0_i32 = arith.constant 0 : i32
    %c0_i32_0 = arith.constant 0 : i32
    return %arg0, %c0_i32 : i32, i32
  }
  func.func @transform_5(%arg0: i32, %arg1: i32) -> (i32, i32) {
    %c0_i32 = arith.constant 0 : i32
    %c0_i32_0 = arith.constant 0 : i32
    return %arg0, %c0_i32 : i32, i32
  }
}

</mosaic_0001>

<llo_original>
// kernel: _lambda_.8
$region0: #{_lambda_.8}
  #allocation0 [shape = 'u32[]', space=smem, size = 0x4, offset = 0x4, fixed_abs, tag = 'smem constant byte address 0x4 - core index']
  #allocation1 [shape = 'u32[144,128]{1,0:T(1,128)}', space=vmem, size = 0x12000, scoped, tag = 'internal scratch']
  %s0 = inlined_call_operand.hbm [shape: f32[16,128], index: 0, kind: input, shape index: {}]
  %s1 = inlined_call_operand.hbm [shape: f32[1,128], index: 1, kind: input, shape index: {}]
  %s2 = inlined_call_operand.hbm [shape: f32[1,128], index: 2, kind: input, shape index: {}]
  %s3 = inlined_call_operand.hbm [shape: f32[16,128], index: 3, kind: output, shape index: {}]
  %s4 = sld [smem:[#allocation0]]
  $region34: #{_lambda_.8} parent=0
    _
  %s6 = ssub.s32 1, %s4
  %s7 = scalar_select 0, %s6, %s4
  $region1: #{_lambda_.8} parent=0
    #allocation2 [shape = 'u8[8192]{0}', space=vmem, size = 0x2000, scoped, tag = 'input window, operand 0, single buffered']
    #allocation3 [shape = 's32[1]{0}', space=sflag, size = 0x4, scoped, tag = 'scoped memory for _lambda_.8']
    #allocation4 [shape = 's32[1]{0}', space=sflag, size = 0x4, scoped, tag = 'scoped memory for _lambda_.8']
    #allocation5 [shape = 'u8[512]{0}', space=vmem, size = 0x400, scoped, tag = 'input window, operand 1, single buffered']
    #allocation6 [shape = 's32[1]{0}', space=sflag, size = 0x4, scoped, tag = 'scoped memory for _lambda_.8']
    #allocation7 [shape = 'u8[512]{0}', space=vmem, size = 0x400, scoped, tag = 'input window, operand 2, single buffered']
    #allocation8 [shape = 'u8[8192]{0}', space=vmem, size = 0x2000, scoped, tag = 'output window, operand 0, single buffered']
    %8 = vsyncpa [#allocation3], 0
    %9 = vsyncpa [#allocation6], 0
    %10 = vsyncpa [#allocation4], 0
    // Predicated region
    $region2: #{_lambda_.8} parent=1 // pred_check
      _
    $region3: #{_lambda_.8} parent=1 // pred_check_branch
      %12 = sbr.rel (0) target = $region5
    $region4: #{_lambda_.8} parent=1 // pred_region
      %s14 = ssub.s32 256, 256
      %15 = vsyncadd [#allocation3], %s14
      %s16 = sshll.u32 [#allocation2], 4
      %s17 = int_to_ptr.vmem [resolvable:$true] %s16
      %22 = dma.hbm_to_vmem [thread:$0]  %s0, 256, %s17, [#allocation3], 128, 128, 8
    $region5: #{_lambda_.8} parent=1 // pred_fallthru
      _
    // Predicated region
    $region6: #{_lambda_.8} parent=1 // pred_check
      _
    $region7: #{_lambda_.8} parent=1 // pred_check_branch
      %24 = sbr.rel (0) target = $region9
    $region8: #{_lambda_.8} parent=1 // pred_region
      %s26 = ssub.s32 16, 16
      %27 = vsyncadd [#allocation6], %s26
      %s29 = sshll.u32 [#allocation5], 4
      %s30 = int_to_ptr.vmem [resolvable:$true] %s29
      %32 = dma.hbm_to_vmem [thread:$0]  %s1, 16, %s30, [#allocation6]
    $region9: #{_lambda_.8} parent=1 // pred_fallthru
      _
    // Predicated region
    $region10: #{_lambda_.8} parent=1 // pred_check
      _
    $region11: #{_lambda_.8} parent=1 // pred_check_branch
      %34 = sbr.rel (0) target = $region13
    $region12: #{_lambda_.8} parent=1 // pred_region
      %s36 = ssub.s32 16, 16
      %37 = vsyncadd [#allocation6], %s36
      %s39 = sshll.u32 [#allocation7], 4
      %s40 = int_to_ptr.vmem [resolvable:$true] %s39
      %42 = dma.hbm_to_vmem [thread:$0]  %s2, 16, %s40, [#allocation6]
    $region13: #{_lambda_.8} parent=1 // pred_fallthru
      _
    // Predicated region
    $region14: #{_lambda_.8} parent=1 // pred_check
      _
    $region15: #{_lambda_.8} parent=1 // pred_check_branch
      %44 = sbr.rel (0) target = $region17
    $region16: #{_lambda_.8} parent=1 // pred_region
      %45 = dma.done [#allocation3], 256
    $region17: #{_lambda_.8} parent=1 // pred_fallthru
      _
    // Predicated region
    $region18: #{_lambda_.8} parent=1 // pred_check
      _
    $region19: #{_lambda_.8} parent=1 // pred_check_branch
      %47 = sbr.rel (0) target = $region21
    $region20: #{_lambda_.8} parent=1 // pred_region
      %48 = dma.done [#allocation6], 16
    $region21: #{_lambda_.8} parent=1 // pred_fallthru
      _
    // Predicated region
    $region22: #{_lambda_.8} parent=1 // pred_check
      _
    $region23: #{_lambda_.8} parent=1 // pred_check_branch
      %50 = sbr.rel (0) target = $region25
    $region24: #{_lambda_.8} parent=1 // pred_region
      %51 = dma.done [#allocation6], 16
    $region25: #{_lambda_.8} parent=1 // pred_fallthru
      _
    %v52 = vld [vmem:[#allocation2] sm:$0xff]
    %v53 = vld [vmem:[#allocation2 + $0x8] sm:$0xff]
    %v54 = vld [vmem:[#allocation5] sm:$0x1]
    %v55 = vld [vmem:[#allocation7] sm:$0x1]
    %56 = vadd.xlane.f32.xlu0 %v52
    %v57 = vpop.xlane.xlu0 %56
    %58 = vadd.xlane.f32.xlu0 %v53
    %v59 = vpop.xlane.xlu0 %58
    %v60 = vrcp.pop 128.0
    %v61 = vmul.f32 %v57, %v60
    %v62 = vmul.f32 %v59, %v60
    %v63 = vsub.f32 %v52, %v61
    %v64 = vsub.f32 %v53, %v62
    %v65 = vmul.f32 %v63, %v63
    %v66 = vmul.f32 %v64, %v64
    %67 = vadd.xlane.f32.xlu0 %v65
    %v68 = vpop.xlane.xlu0 %67
    %69 = vadd.xlane.f32.xlu0 %v66
    %v70 = vpop.xlane.xlu0 %69
    %v71 = vmul.f32 %v68, %v60
    %v72 = vmul.f32 %v70, %v60
    %v73 = vadd.f32 %v71, 1e-05
    %v74 = vadd.f32 %v72, 1e-05
    %v75 = vrsqrt.pop %v73
    %v76 = vrsqrt.pop %v74
    %v77 = vmul.f32 %v63, %v75
    %v78 = vmul.f32 %v64, %v76
    %v80 = vlaneseq
    %v81 = vshrl.u32 %v80, 7
    %v82 = vsub.s32 0, %v81
    %v83 = vrot.slane %v54, %v82
    %v85 = vmul.f32 %v77, %v83
    %v86 = vmul.f32 %v78, %v83
    %v88 = vlaneseq
    %v89 = vshrl.u32 %v88, 7
    %v90 = vsub.s32 0, %v89
    %v91 = vrot.slane %v55, %v90
    %v93 = vadd.f32 %v85, %v91
    %v94 = vadd.f32 %v86, %v91
    %95 = vst [vmem:[#allocation8] sm:$0xff] %v93
    %96 = vst [vmem:[#allocation8 + $0x8] sm:$0xff] %v94
    // Predicated region
    $region26: #{_lambda_.8} parent=1 // pred_check
      _
    $region27: #{_lambda_.8} parent=1 // pred_check_branch
      %98 = sbr.rel (0) target = $region29
    $region28: #{_lambda_.8} parent=1 // pred_region
      %s100 = ssub.s32 256, 256
      %101 = vsyncadd [#allocation4], %s100
      %s102 = sshll.u32 [#allocation8], 4
      %s103 = int_to_ptr.vmem [resolvable:$true] %s102
      %108 = dma.vmem_to_hbm [thread:$0]  %s103, 256, %s3, [#allocation4], 128, 128, 8
    $region29: #{_lambda_.8} parent=1 // pred_fallthru
      _
    // Predicated region
    $region30: #{_lambda_.8} parent=1 // pred_check
      _
    $region31: #{_lambda_.8} parent=1 // pred_check_branch
      %110 = sbr.rel (0) target = $region33
    $region32: #{_lambda_.8} parent=1 // pred_region
      %111 = dma.done [#allocation4], 256
    $region33: #{_lambda_.8} parent=1 // pred_fallthru
      _
    %112 = vsyncpa [#allocation3], 1
    %113 = vsyncpa [#allocation6], 1
    %114 = vsyncpa [#allocation4], 1

// kernel: _lambda_.11
$region0: #{_lambda_.11}
  #allocation0 [shape = 'u32[]', space=smem, size = 0x4, offset = 0x4, fixed_abs, tag = 'smem constant byte address 0x4 - core index']
  #allocation1 [shape = 'u32[144,128]{1,0:T(1,128)}', space=vmem, size = 0x12000, scoped, tag = 'internal scratch']
  #allocation2 [shape = 'f32[16,128]{1,0:T(8,128)}', space=vmem, size = 0x2000, scoped, tag = 'scratch operand']
  %s0 = inlined_call_operand.hbm [shape: f32[16,128], index: 0, kind: input, shape index: {}]
  %s1 = inlined_call_operand.hbm [shape: bf16[128,128], index: 1, kind: input, shape index: {}]
  %s2 = inlined_call_operand.hbm [shape: f32[1,128], index: 2, kind: input, shape index: {}]
  %s3 = inlined_call_operand.hbm [shape: f32[16,128], index: 3, kind: output, shape index: {}]
  %s4 = sld [smem:[#allocation0]]
  $region42: #{_lambda_.11} parent=0
    _
  %s6 = ssub.s32 1, %s4
  %s7 = scalar_select 0, %s6, %s4
  $region1: #{_lambda_.11} parent=0
    #allocation3 [shape = 'u8[8192]{0}', space=vmem, size = 0x2000, scoped, tag = 'input window, operand 0, single buffered']
    #allocation4 [shape = 's32[1]{0}', space=sflag, size = 0x4, scoped, tag = 'scoped memory for _lambda_.11']
    #allocation5 [shape = 's32[1]{0}', space=sflag, size = 0x4, scoped, tag = 'scoped memory for _lambda_.11']
    #allocation6 [shape = 'u8[32768]{0}', space=vmem, size = 0x8000, scoped, tag = 'input window, operand 1, single buffered']
    #allocation7 [shape = 's32[1]{0}', space=sflag, size = 0x4, scoped, tag = 'scoped memory for _lambda_.11']
    #allocation8 [shape = 'u8[512]{0}', space=vmem, size = 0x400, scoped, tag = 'input window, operand 2, single buffered']
    #allocation9 [shape = 'u8[8192]{0}', space=vmem, size = 0x2000, scoped, tag = 'output window, operand 0, single buffered']
    %8 = vsyncpa [#allocation4], 0
    %9 = vsyncpa [#allocation7], 0
    %10 = vsyncpa [#allocation5], 0
    // Predicated region
    $region2: #{_lambda_.11} parent=1 // pred_check
      _
    $region3: #{_lambda_.11} parent=1 // pred_check_branch
      %12 = sbr.rel (0) target = $region5
    $region4: #{_lambda_.11} parent=1 // pred_region
      %s14 = ssub.s32 256, 256
      %15 = vsyncadd [#allocation4], %s14
      %s16 = sshll.u32 [#allocation3], 4
      %s17 = int_to_ptr.vmem [resolvable:$true] %s16
      %22 = dma.hbm_to_vmem [thread:$0]  %s0, 256, %s17, [#allocation4], 128, 128, 8
    $region5: #{_lambda_.11} parent=1 // pred_fallthru
      _
    // Predicated region
    $region6: #{_lambda_.11} parent=1 // pred_check
      _
    $region7: #{_lambda_.11} parent=1 // pred_check_branch
      %24 = sbr.rel (0) target = $region9
    $region8: #{_lambda_.11} parent=1 // pred_region
      %s26 = ssub.s32 1024, 1024
      %27 = vsyncadd [#allocation7], %s26
      %s28 = sshll.u32 [#allocation6], 4
      %s29 = int_to_ptr.vmem [resolvable:$true] %s28
      %34 = dma.hbm_to_vmem [thread:$0]  %s1, 1024, %s29, [#allocation7], 64, 64, 4
    $region9: #{_lambda_.11} parent=1 // pred_fallthru
      _
    // Predicated region
    $region10: #{_lambda_.11} parent=1 // pred_check
      _
    $region11: #{_lambda_.11} parent=1 // pred_check_branch
      %36 = sbr.rel (0) target = $region13
    $region12: #{_lambda_.11} parent=1 // pred_region
      %s38 = ssub.s32 16, 16
      %39 = vsyncadd [#allocation7], %s38
      %s41 = sshll.u32 [#allocation8], 4
      %s42 = int_to_ptr.vmem [resolvable:$true] %s41
      %44 = dma.hbm_to_vmem [thread:$0]  %s2, 16, %s42, [#allocation7]
    $region13: #{_lambda_.11} parent=1 // pred_fallthru
      _
    // Predicated region
    $region14: #{_lambda_.11} parent=1 // pred_check
      _
    $region15: #{_lambda_.11} parent=1 // pred_check_branch
      %46 = sbr.rel (0) target = $region17
    $region16: #{_lambda_.11} parent=1 // pred_region
      %47 = dma.done [#allocation4], 256
    $region17: #{_lambda_.11} parent=1 // pred_fallthru
      _
    // Predicated region
    $region18: #{_lambda_.11} parent=1 // pred_check
      _
    $region19: #{_lambda_.11} parent=1 // pred_check_branch
      %49 = sbr.rel (0) target = $region21
    $region20: #{_lambda_.11} parent=1 // pred_region
      %50 = dma.done [#allocation7], 1024
    $region21: #{_lambda_.11} parent=1 // pred_fallthru
      _
    // Predicated region
    $region22: #{_lambda_.11} parent=1 // pred_check
      _
    $region23: #{_lambda_.11} parent=1 // pred_check_branch
      %52 = sbr.rel (0) target = $region25
    $region24: #{_lambda_.11} parent=1 // pred_region
      %53 = dma.done [#allocation7], 16
    $region25: #{_lambda_.11} parent=1 // pred_fallthru
      _
    %p55 = scmp.eq.s32.totalorder 0, 0
    // Predicated region
    $region26: #{_lambda_.11} parent=1 // pred_check
      %p56 = pneg %p55
    $region27: #{_lambda_.11} parent=1 // pred_check_branch
      %58 = sbr.rel (%p56) target = $region29
    $region28: #{_lambda_.11} parent=1 // pred_region
      %59 = vst [vmem:[#allocation2] sm:$0xff] 0.0
      %60 = vst [vmem:[#allocation2 + $0x8] sm:$0xff] 0.0
    $region29: #{_lambda_.11} parent=1 // pred_fallthru
      _
    %v61 = vld [vmem:[#allocation2] sm:$0xff]
    %v62 = vld [vmem:[#allocation2 + $0x8] sm:$0xff]
    %v63 = vld [vmem:[#allocation3] sm:$0xff]
    %v64 = vld [vmem:[#allocation3 + $0x8] sm:$0xff]
    %v65 = vpack.c.bf16 %v64, %v63
    %v66 = vld [vmem:[#allocation6] sm:$0xf]
    %v67 = vld [vmem:[#allocation6 + $0x4] sm:$0xf]
    %v68 = vld [vmem:[#allocation6 + $0x8] sm:$0xf]
    %v69 = vld [vmem:[#allocation6 + $0xc] sm:$0xf]
    %v70 = vld [vmem:[#allocation6 + $0x10] sm:$0xf]
    %v71 = vld [vmem:[#allocation6 + $0x14] sm:$0xf]
    %v72 = vld [vmem:[#allocation6 + $0x18] sm:$0xf]
    %v73 = vld [vmem:[#allocation6 + $0x1c] sm:$0xf]
    %v74 = vld [vmem:[#allocation6 + $0x20] sm:$0xf]
    %v75 = vld [vmem:[#allocation6 + $0x24] sm:$0xf]
    %v76 = vld [vmem:[#allocation6 + $0x28] sm:$0xf]
    %v77 = vld [vmem:[#allocation6 + $0x2c] sm:$0xf]
    %v78 = vld [vmem:[#allocation6 + $0x30] sm:$0xf]
    %v79 = vld [vmem:[#allocation6 + $0x34] sm:$0xf]
    %v80 = vld [vmem:[#allocation6 + $0x38] sm:$0xf]
    %v81 = vld [vmem:[#allocation6 + $0x3c] sm:$0xf]
    %v98 = vunpack.c.l.b16 %v66
    %v99 = vunpack.c.l.b16 %v67
    %v100 = vunpack.c.l.b16 %v68
    %v101 = vunpack.c.l.b16 %v69
    %v102 = vunpack.c.l.b16 %v70
    %v103 = vunpack.c.l.b16 %v71
    %v104 = vunpack.c.l.b16 %v72
    %v105 = vunpack.c.l.b16 %v73
    %v106 = vunpack.c.l.b16 %v74
    %v107 = vunpack.c.l.b16 %v75
    %v108 = vunpack.c.l.b16 %v76
    %v109 = vunpack.c.l.b16 %v77
    %v110 = vunpack.c.l.b16 %v78
    %v111 = vunpack.c.l.b16 %v79
    %v112 = vunpack.c.l.b16 %v80
    %v113 = vunpack.c.l.b16 %v81
    %v114 = vpack.c.b16 %v99, %v98
    %v115 = vpack.c.b16 %v101, %v100
    %v116 = vpack.c.b16 %v103, %v102
    %v117 = vpack.c.b16 %v105, %v104
    %v118 = vpack.c.b16 %v107, %v106
    %v119 = vpack.c.b16 %v109, %v108
    %v120 = vpack.c.b16 %v111, %v110
    %v121 = vpack.c.b16 %v113, %v112
    %130 = vmatprep.subr.bf16.mxu0 0
    %131 = vmatpush1.bf16.msra.mxu0 %v114
    %132 = vmatprep.subr.bf16.mxu0 0
    %133 = vmatpush1.bf16.msra.mxu0 %v115
    %134 = vmatprep.subr.bf16.mxu0 0
    %135 = vmatpush1.bf16.msra.mxu0 %v116
    %136 = vmatprep.subr.bf16.mxu0 0
    %137 = vmatpush1.bf16.msra.mxu0 %v117
    %138 = vmatprep.subr.bf16.mxu0 0
    %139 = vmatpush1.bf16.msra.mxu0 %v118
    %140 = vmatprep.subr.bf16.mxu0 0
    %141 = vmatpush1.bf16.msra.mxu0 %v119
    %142 = vmatprep.subr.bf16.mxu0 0
    %143 = vmatpush1.bf16.msra.mxu0 %v120
    %144 = vmatprep.subr.bf16.mxu0 0
    %145 = vmatpush1.bf16.msra.mxu0 %v121
    %146 = vmatprep.subr.bf16.mxu0 0
    %147 = vmatpush1.bf16.msra.mxu0 0
    %148 = vmatprep.subr.bf16.mxu0 0
    %149 = vmatpush1.bf16.msra.mxu0 0
    %150 = vmatprep.subr.bf16.mxu0 0
    %151 = vmatpush1.bf16.msra.mxu0 0
    %152 = vmatprep.subr.bf16.mxu0 0
    %153 = vmatpush1.bf16.msra.mxu0 0
    %154 = vmatprep.subr.bf16.mxu0 0
    %155 = vmatpush1.bf16.msra.mxu0 0
    %156 = vmatprep.subr.bf16.mxu0 0
    %157 = vmatpush1.bf16.msra.mxu0 0
    %158 = vmatprep.subr.bf16.mxu0 0
    %159 = vmatpush1.bf16.msra.mxu0 0
    %160 = vmatprep.subr.bf16.mxu0 0
    %161 = vmatpush1.bf16.msra.mxu0 0
    %162 = vmatprep.mubr.bf16.mxu0 0
    %163 = vmatmul.mubr.bf16.gmra.mrb[0].mxu0 %v65
    %v164 = vpop.f32.mrb[0].mxu0
    %v165 = vadd.f32 0.0, %v164
    %v166 = vpop.f32.mrb[0].mxu0
    %v167 = vpop.f32.mrb[0].mxu0
    %v168 = vadd.f32 0.0, %v167
    %v169 = vpop.f32.mrb[0].mxu0
    %170 = vdwg.mxu0
    %v171 = vadd.f32 %v61, %v165
    %v172 = vadd.f32 %v62, %v168
    %173 = vst [vmem:[#allocation2] sm:$0xff] %v171
    %174 = vst [vmem:[#allocation2 + $0x8] sm:$0xff] %v172
    // Predicated region
    $region30: #{_lambda_.11} parent=1 // pred_check
      %p175 = pneg %p55
    $region31: #{_lambda_.11} parent=1 // pred_check_branch
      %177 = sbr.rel (%p175) target = $region33
    $region32: #{_lambda_.11} parent=1 // pred_region
      %v178 = vld [vmem:[#allocation2] sm:$0xff]
      %v179 = vld [vmem:[#allocation2 + $0x8] sm:$0xff]
      %v180 = vld [vmem:[#allocation8] sm:$0x1]
      %v182 = vlaneseq
      %v183 = vshrl.u32 %v182, 7
      %v184 = vsub.s32 0, %v183
      %v185 = vrot.slane %v180, %v184
      %v187 = vadd.f32 %v178, %v185
      %v188 = vadd.f32 %v179, %v185
      %189 = vst [vmem:[#allocation9] sm:$0xff] %v187
      %190 = vst [vmem:[#allocation9 + $0x8] sm:$0xff] %v188
    $region33: #{_lambda_.11} parent=1 // pred_fallthru
      _
    // Predicated region
    $region34: #{_lambda_.11} parent=1 // pred_check
      _
    $region35: #{_lambda_.11} parent=1 // pred_check_branch
      %192 = sbr.rel (0) target = $region37
    $region36: #{_lambda_.11} parent=1 // pred_region
      %s194 = ssub.s32 256, 256
      %195 = vsyncadd [#allocation5], %s194
      %s196 = sshll.u32 [#allocation9], 4
      %s197 = int_to_ptr.vmem [resolvable:$true] %s196
      %202 = dma.vmem_to_hbm [thread:$0]  %s197, 256, %s3, [#allocation5], 128, 128, 8
    $region37: #{_lambda_.11} parent=1 // pred_fallthru
      _
    // Predicated region
    $region38: #{_lambda_.11} parent=1 // pred_check
      _
    $region39: #{_lambda_.11} parent=1 // pred_check_branch
      %204 = sbr.rel (0) target = $region41
    $region40: #{_lambda_.11} parent=1 // pred_region
      %205 = dma.done [#allocation5], 256
    $region41: #{_lambda_.11} parent=1 // pred_fallthru
      _
    %206 = vsyncpa [#allocation4], 1
    %207 = vsyncpa [#allocation7], 1
    %208 = vsyncpa [#allocation5], 1

// kernel: _lambda_.10
$region0: #{_lambda_.10}
  #allocation0 [shape = 'u32[]', space=smem, size = 0x4, offset = 0x4, fixed_abs, tag = 'smem constant byte address 0x4 - core index']
  #allocation1 [shape = 'u32[144,128]{1,0:T(1,128)}', space=vmem, size = 0x12000, scoped, tag = 'internal scratch']
  %s0 = inlined_call_operand.hbm [shape: f32[16,128], index: 0, kind: input, shape index: {}]
  %s1 = inlined_call_operand.hbm [shape: bf16[128,256], index: 1, kind: input, shape index: {}]
  %s2 = inlined_call_operand.hbm [shape: f32[1,256], index: 2, kind: input, shape index: {}]
  %s3 = inlined_call_operand.hbm [shape: bf16[256,128], index: 3, kind: input, shape index: {}]
  %s4 = inlined_call_operand.hbm [shape: f32[1,128], index: 4, kind: input, shape index: {}]
  %s5 = inlined_call_operand.hbm [shape: f32[1,128], index: 5, kind: input, shape index: {}]
  %s6 = inlined_call_operand.hbm [shape: f32[1,128], index: 6, kind: input, shape index: {}]
  %s7 = inlined_call_operand.hbm [shape: f32[16,128], index: 7, kind: output, shape index: {}]
  %s8 = sld [smem:[#allocation0]]
  $region66: #{_lambda_.10} parent=0
    _
  %s10 = ssub.s32 1, %s8
  %s11 = scalar_select 0, %s10, %s8
  $region1: #{_lambda_.10} parent=0
    #allocation2 [shape = 'u8[8192]{0}', space=vmem, size = 0x2000, scoped, tag = 'input window, operand 0, single buffered']
    #allocation3 [shape = 's32[1]{0}', space=sflag, size = 0x4, scoped, tag = 'scoped memory for _lambda_.10']
    #allocation4 [shape = 's32[1]{0}', space=sflag, size = 0x4, scoped, tag = 'scoped memory for _lambda_.10']
    #allocation5 [shape = 'u8[65536]{0}', space=vmem, size = 0x10000, scoped, tag = 'input window, operand 1, single buffered']
    #allocation6 [shape = 's32[1]{0}', space=sflag, size = 0x4, scoped, tag = 'scoped memory for _lambda_.10']
    #allocation7 [shape = 'u8[1024]{0}', space=vmem, size = 0x400, scoped, tag = 'input window, operand 2, single buffered']
    #allocation8 [shape = 'u8[65536]{0}', space=vmem, size = 0x10000, scoped, tag = 'input window, operand 3, single buffered']
    #allocation9 [shape = 's32[1]{0}', space=sflag, size = 0x4, scoped, tag = 'scoped memory for _lambda_.10']
    #allocation10 [shape = 'u8[512]{0}', space=vmem, size = 0x400, scoped, tag = 'input window, operand 4, single buffered']
    #allocation11 [shape = 'u8[512]{0}', space=vmem, size = 0x400, scoped, tag = 'input window, operand 5, single buffered']
    #allocation12 [shape = 's32[1]{0}', space=sflag, size = 0x4, scoped, tag = 'scoped memory for _lambda_.10']
    #allocation13 [shape = 'u8[512]{0}', space=vmem, size = 0x400, scoped, tag = 'input window, operand 6, single buffered']
    #allocation14 [shape = 'u8[8192]{0}', space=vmem, size = 0x2000, scoped, tag = 'output window, operand 0, single buffered']
    %12 = vsyncpa [#allocation3], 0
    %13 = vsyncpa [#allocation6], 0
    %14 = vsyncpa [#allocation9], 0
    %15 = vsyncpa [#allocation12], 0
    %16 = vsyncpa [#allocation4], 0
    // Predicated region
    $region2: #{_lambda_.10} parent=1 // pred_check
      _
    $region3: #{_lambda_.10} parent=1 // pred_check_branch
      %18 = sbr.rel (0) target = $region5
    $region4: #{_lambda_.10} parent=1 // pred_region
      %s20 = ssub.s32 256, 256
      %21 = vsyncadd [#allocation3], %s20
      %s22 = sshll.u32 [#allocation2], 4
      %s23 = int_to_ptr.vmem [resolvable:$true] %s22
      %28 = dma.hbm_to_vmem [thread:$0]  %s0, 256, %s23, [#allocation3], 128, 128, 8
    $region5: #{_lambda_.10} parent=1 // pred_fallthru
      _
    // Predicated region
    $region6: #{_lambda_.10} parent=1 // pred_check
      _
    $region7: #{_lambda_.10} parent=1 // pred_check_branch
      %30 = sbr.rel (0) target = $region9
    $region8: #{_lambda_.10} parent=1 // pred_region
      %s32 = ssub.s32 2048, 2048
      %33 = vsyncadd [#allocation6], %s32
      %s34 = sshll.u32 [#allocation5], 4
      %s35 = int_to_ptr.vmem [resolvable:$true] %s34
      %40 = dma.hbm_to_vmem [thread:$0]  %s1, 2048, %s35, [#allocation6], 128, 128, 8
    $region9: #{_lambda_.10} parent=1 // pred_fallthru
      _
    // Predicated region
    $region10: #{_lambda_.10} parent=1 // pred_check
      _
    $region11: #{_lambda_.10} parent=1 // pred_check_branch
      %42 = sbr.rel (0) target = $region13
    $region12: #{_lambda_.10} parent=1 // pred_region
      %s44 = ssub.s32 32, 32
      %45 = vsyncadd [#allocation6], %s44
      %s47 = sshll.u32 [#allocation7], 4
      %s48 = int_to_ptr.vmem [resolvable:$true] %s47
      %50 = dma.hbm_to_vmem [thread:$0]  %s2, 32, %s48, [#allocation6]
    $region13: #{_lambda_.10} parent=1 // pred_fallthru
      _
    // Predicated region
    $region14: #{_lambda_.10} parent=1 // pred_check
      _
    $region15: #{_lambda_.10} parent=1 // pred_check_branch
      %52 = sbr.rel (0) target = $region17
    $region16: #{_lambda_.10} parent=1 // pred_region
      %s54 = ssub.s32 2048, 2048
      %55 = vsyncadd [#allocation9], %s54
      %s56 = sshll.u32 [#allocation8], 4
      %s57 = int_to_ptr.vmem [resolvable:$true] %s56
      %62 = dma.hbm_to_vmem [thread:$0]  %s3, 2048, %s57, [#allocation9], 64, 64, 4
    $region17: #{_lambda_.10} parent=1 // pred_fallthru
      _
    // Predicated region
    $region18: #{_lambda_.10} parent=1 // pred_check
      _
    $region19: #{_lambda_.10} parent=1 // pred_check_branch
      %64 = sbr.rel (0) target = $region21
    $region20: #{_lambda_.10} parent=1 // pred_region
      %s66 = ssub.s32 16, 16
      %67 = vsyncadd [#allocation9], %s66
      %s69 = sshll.u32 [#allocation10], 4
      %s70 = int_to_ptr.vmem [resolvable:$true] %s69
      %72 = dma.hbm_to_vmem [thread:$0]  %s4, 16, %s70, [#allocation9]
    $region21: #{_lambda_.10} parent=1 // pred_fallthru
      _
    // Predicated region
    $region22: #{_lambda_.10} parent=1 // pred_check
      _
    $region23: #{_lambda_.10} parent=1 // pred_check_branch
      %74 = sbr.rel (0) target = $region25
    $region24: #{_lambda_.10} parent=1 // pred_region
      %s76 = ssub.s32 16, 16
      %77 = vsyncadd [#allocation12], %s76
      %s79 = sshll.u32 [#allocation11], 4
      %s80 = int_to_ptr.vmem [resolvable:$true] %s79
      %82 = dma.hbm_to_vmem [thread:$0]  %s5, 16, %s80, [#allocation12]
    $region25: #{_lambda_.10} parent=1 // pred_fallthru
      _
    // Predicated region
    $region26: #{_lambda_.10} parent=1 // pred_check
      _
    $region27: #{_lambda_.10} parent=1 // pred_check_branch
      %84 = sbr.rel (0) target = $region29
    $region28: #{_lambda_.10} parent=1 // pred_region
      %s86 = ssub.s32 16, 16
      %87 = vsyncadd [#allocation12], %s86
      %s89 = sshll.u32 [#allocation13], 4
      %s90 = int_to_ptr.vmem [resolvable:$true] %s89
      %92 = dma.hbm_to_vmem [thread:$0]  %s6, 16, %s90, [#allocation12]
    $region29: #{_lambda_.10} parent=1 // pred_fallthru
      _
    // Predicated region
    $region30: #{_lambda_.10} parent=1 // pred_check
      _
    $region31: #{_lambda_.10} parent=1 // pred_check_branch
      %94 = sbr.rel (0) target = $region33
    $region32: #{_lambda_.10} parent=1 // pred_region
      %95 = dma.done [#allocation3], 256
    $region33: #{_lambda_.10} parent=1 // pred_fallthru
      _
    // Predicated region
    $region34: #{_lambda_.10} parent=1 // pred_check
      _
    $region35: #{_lambda_.10} parent=1 // pred_check_branch
      %97 = sbr.rel (0) target = $region37
    $region36: #{_lambda_.10} parent=1 // pred_region
      %98 = dma.done [#allocation6], 2048
    $region37: #{_lambda_.10} parent=1 // pred_fallthru
      _
    // Predicated region
    $region38: #{_lambda_.10} parent=1 // pred_check
      _
    $region39: #{_lambda_.10} parent=1 // pred_check_branch
      %100 = sbr.rel (0) target = $region41
    $region40: #{_lambda_.10} parent=1 // pred_region
      %101 = dma.done [#allocation6], 32
    $region41: #{_lambda_.10} parent=1 // pred_fallthru
      _
    // Predicated region
    $region42: #{_lambda_.10} parent=1 // pred_check
      _
    $region43: #{_lambda_.10} parent=1 // pred_check_branch
      %103 = sbr.rel (0) target = $region45
    $region44: #{_lambda_.10} parent=1 // pred_region
      %104 = dma.done [#allocation9], 2048
    $region45: #{_lambda_.10} parent=1 // pred_fallthru
      _
    // Predicated region
    $region46: #{_lambda_.10} parent=1 // pred_check
      _
    $region47: #{_lambda_.10} parent=1 // pred_check_branch
      %106 = sbr.rel (0) target = $region49
    $region48: #{_lambda_.10} parent=1 // pred_region
      %107 = dma.done [#allocation9], 16
    $region49: #{_lambda_.10} parent=1 // pred_fallthru
      _
    // Predicated region
    $region50: #{_lambda_.10} parent=1 // pred_check
      _
    $region51: #{_lambda_.10} parent=1 // pred_check_branch
      %109 = sbr.rel (0) target = $region53
    $region52: #{_lambda_.10} parent=1 // pred_region
      %110 = dma.done [#allocation12], 16
    $region53: #{_lambda_.10} parent=1 // pred_fallthru
      _
    // Predicated region
    $region54: #{_lambda_.10} parent=1 // pred_check
      _
    $region55: #{_lambda_.10} parent=1 // pred_check_branch
      %112 = sbr.rel (0) target = $region57
    $region56: #{_lambda_.10} parent=1 // pred_region
      %113 = dma.done [#allocation12], 16
    $region57: #{_lambda_.10} parent=1 // pred_fallthru
      _
    %v115 = vld [vmem:[#allocation2] sm:$0xff]
    %v116 = vld [vmem:[#allocation2 + $0x8] sm:$0xff]
    %v117 = vpack.c.bf16 %v116, %v115
    %v118 = vld [vmem:[#allocation5] sm:$0xff]
    %v119 = vld [vmem:[#allocation5 + $0x8] sm:$0xff]
    %v120 = vld [vmem:[#allocation5 + $0x10] sm:$0xff]
    %v121 = vld [vmem:[#allocation5 + $0x18] sm:$0xff]
    %v122 = vld [vmem:[#allocation5 + $0x20] sm:$0xff]
    %v123 = vld [vmem:[#allocation5 + $0x28] sm:$0xff]
    %v124 = vld [vmem:[#allocation5 + $0x30] sm:$0xff]
    %v125 = vld [vmem:[#allocation5 + $0x38] sm:$0xff]
    %v126 = vld [vmem:[#allocation5 + $0x40] sm:$0xff]
    %v127 = vld [vmem:[#allocation5 + $0x48] sm:$0xff]
    %v128 = vld [vmem:[#allocation5 + $0x50] sm:$0xff]
    %v129 = vld [vmem:[#allocation5 + $0x58] sm:$0xff]
    %v130 = vld [vmem:[#allocation5 + $0x60] sm:$0xff]
    %v131 = vld [vmem:[#allocation5 + $0x68] sm:$0xff]
    %v132 = vld [vmem:[#allocation5 + $0x70] sm:$0xff]
    %v133 = vld [vmem:[#allocation5 + $0x78] sm:$0xff]
    %v134 = vld [vmem:[#allocation7] sm:$0x3]
    %v136 = vlaneseq
    %v137 = vshrl.u32 %v136, 7
    %v138 = vsub.s32 0, %v137
    %v139 = vrot.slane %v134, %v138
    %v140 = vlaneseq
    %v141 = vshrl.u32 %v140, 7
    %v142 = vsub.s32 1, %v141
    %v143 = vrot.slane %v134, %v142
    %v162 = vunpack.c.l.b16 %v118
    %v163 = vunpack.c.h.b16 %v118
    %v164 = vunpack.c.l.b16 %v119
    %v165 = vunpack.c.h.b16 %v119
    %v166 = vunpack.c.l.b16 %v120
    %v167 = vunpack.c.h.b16 %v120
    %v168 = vunpack.c.l.b16 %v121
    %v169 = vunpack.c.h.b16 %v121
    %v170 = vunpack.c.l.b16 %v122
    %v171 = vunpack.c.h.b16 %v122
    %v172 = vunpack.c.l.b16 %v123
    %v173 = vunpack.c.h.b16 %v123
    %v174 = vunpack.c.l.b16 %v124
    %v175 = vunpack.c.h.b16 %v124
    %v176 = vunpack.c.l.b16 %v125
    %v177 = vunpack.c.h.b16 %v125
    %v178 = vunpack.c.l.b16 %v126
    %v179 = vunpack.c.h.b16 %v126
    %v180 = vunpack.c.l.b16 %v127
    %v181 = vunpack.c.h.b16 %v127
    %v182 = vunpack.c.l.b16 %v128
    %v183 = vunpack.c.h.b16 %v128
    %v184 = vunpack.c.l.b16 %v129
    %v185 = vunpack.c.h.b16 %v129
    %v186 = vunpack.c.l.b16 %v130
    %v187 = vunpack.c.h.b16 %v130
    %v188 = vunpack.c.l.b16 %v131
    %v189 = vunpack.c.h.b16 %v131
    %v190 = vunpack.c.l.b16 %v132
    %v191 = vunpack.c.h.b16 %v132
    %v192 = vunpack.c.l.b16 %v133
    %v193 = vunpack.c.h.b16 %v133
    %v194 = vpack.c.b16 %v164, %v162
    %v195 = vpack.c.b16 %v165, %v163
    %v196 = vpack.c.b16 %v168, %v166
    %v197 = vpack.c.b16 %v169, %v167
    %v198 = vpack.c.b16 %v172, %v170
    %v199 = vpack.c.b16 %v173, %v171
    %v200 = vpack.c.b16 %v176, %v174
    %v201 = vpack.c.b16 %v177, %v175
    %v202 = vpack.c.b16 %v180, %v178
    %v203 = vpack.c.b16 %v181, %v179
    %v204 = vpack.c.b16 %v184, %v182
    %v205 = vpack.c.b16 %v185, %v183
    %v206 = vpack.c.b16 %v188, %v186
    %v207 = vpack.c.b16 %v189, %v187
    %v208 = vpack.c.b16 %v192, %v190
    %v209 = vpack.c.b16 %v193, %v191
    %226 = vmatprep.subr.bf16.mxu0 %v195
    %227 = vmatpush1.bf16.msra.mxu0 %v194
    %228 = vmatprep.subr.bf16.mxu0 %v197
    %229 = vmatpush1.bf16.msra.mxu0 %v196
    %230 = vmatprep.subr.bf16.mxu0 %v199
    %231 = vmatpush1.bf16.msra.mxu0 %v198
    %232 = vmatprep.subr.bf16.mxu0 %v201
    %233 = vmatpush1.bf16.msra.mxu0 %v200
    %234 = vmatprep.subr.bf16.mxu0 %v203
    %235 = vmatpush1.bf16.msra.mxu0 %v202
    %236 = vmatprep.subr.bf16.mxu0 %v205
    %237 = vmatpush1.bf16.msra.mxu0 %v204
    %238 = vmatprep.subr.bf16.mxu0 %v207
    %239 = vmatpush1.bf16.msra.mxu0 %v206
    %240 = vmatprep.subr.bf16.mxu0 %v209
    %241 = vmatpush1.bf16.msra.mxu0 %v208
    %242 = vmatprep.subr.bf16.mxu0 0
    %243 = vmatpush1.bf16.msra.mxu0 0
    %244 = vmatprep.subr.bf16.mxu0 0
    %245 = vmatpush1.bf16.msra.mxu0 0
    %246 = vmatprep.subr.bf16.mxu0 0
    %247 = vmatpush1.bf16.msra.mxu0 0
    %248 = vmatprep.subr.bf16.mxu0 0
    %249 = vmatpush1.bf16.msra.mxu0 0
    %250 = vmatprep.subr.bf16.mxu0 0
    %251 = vmatpush1.bf16.msra.mxu0 0
    %252 = vmatprep.subr.bf16.mxu0 0
    %253 = vmatpush1.bf16.msra.mxu0 0
    %254 = vmatprep.subr.bf16.mxu0 0
    %255 = vmatpush1.bf16.msra.mxu0 0
    %256 = vmatprep.subr.bf16.mxu0 0
    %257 = vmatpush1.bf16.msra.mxu0 0
    %258 = vmatprep.mubr.bf16.mxu0 0
    %259 = vmatmul.mubr.bf16.gmra.mrb[0].mxu0 %v117
    %v260 = vpop.f32.mrb[0].mxu0
    %v261 = vadd.f32 %v139, %v260
    %v262 = vpop.f32.mrb[0].mxu0
    %v263 = vadd.f32 %v143, %v262
    %v264 = vpop.f32.mrb[0].mxu0
    %v265 = vadd.f32 %v139, %v264
    %v266 = vpop.f32.mrb[0].mxu0
    %v267 = vadd.f32 %v143, %v266
    %268 = vdwg.mxu0
    %v269 = vmul.f32 %v261, 0.5
    %v270 = vmul.f32 %v263, 0.5
    %v271 = vmul.f32 %v265, 0.5
    %v272 = vmul.f32 %v267, 0.5
    %v273 = vmul.f32 %v261, 0.70710677
    %v274 = vmul.f32 %v263, 0.70710677
    %v275 = vmul.f32 %v265, 0.70710677
    %v276 = vmul.f32 %v267, 0.70710677
    %vm277 = vcmp.lt.f32.partialorder %v273, 0.0
    %vm278 = vcmp.lt.f32.partialorder %v274, 0.0
    %vm279 = vcmp.lt.f32.partialorder %v275, 0.0
    %vm280 = vcmp.lt.f32.partialorder %v276, 0.0
    %v281 = vsel %vm277, -1.0, 1.0
    %v282 = vsel %vm278, -1.0, 1.0
    %v283 = vsel %vm279, -1.0, 1.0
    %v284 = vsel %vm280, -1.0, 1.0
    %v285 = vand.u32 2147483647, %v273
    %v286 = vand.u32 2147483647, %v274
    %v287 = vand.u32 2147483647, %v275
    %v288 = vand.u32 2147483647, %v276
    %v289 = vmul.f32 %v285, 0.3275911
    %v290 = vmul.f32 %v286, 0.3275911
    %v291 = vmul.f32 %v287, 0.3275911
    %v292 = vmul.f32 %v288, 0.3275911
    %v293 = vadd.f32 %v289, 1.0
    %v294 = vadd.f32 %v290, 1.0
    %v295 = vadd.f32 %v291, 1.0
    %v296 = vadd.f32 %v292, 1.0
    %v297 = vrcp.pop %v293
    %v298 = vmul.f32 1.0, %v297
    %v299 = vrcp.pop %v294
    %v300 = vmul.f32 1.0, %v299
    %v301 = vrcp.pop %v295
    %v302 = vmul.f32 1.0, %v301
    %v303 = vrcp.pop %v296
    %v304 = vmul.f32 1.0, %v303
    %v305 = vmul.f32 %v298, 1.0614054
    %v306 = vmul.f32 %v300, 1.0614054
    %v307 = vmul.f32 %v302, 1.0614054
    %v308 = vmul.f32 %v304, 1.0614054
    %v309 = vadd.f32 %v305, -1.4531521
    %v310 = vadd.f32 %v306, -1.4531521
    %v311 = vadd.f32 %v307, -1.4531521
    %v312 = vadd.f32 %v308, -1.4531521
    %v313 = vmul.f32 %v309, %v298
    %v314 = vmul.f32 %v310, %v300
    %v315 = vmul.f32 %v311, %v302
    %v316 = vmul.f32 %v312, %v304
    %v317 = vadd.f32 %v313, 1.4214138
    %v318 = vadd.f32 %v314, 1.4214138
    %v319 = vadd.f32 %v315, 1.4214138
    %v320 = vadd.f32 %v316, 1.4214138
    %v321 = vmul.f32 %v317, %v298
    %v322 = vmul.f32 %v318, %v300
    %v323 = vmul.f32 %v319, %v302
    %v324 = vmul.f32 %v320, %v304
    %v325 = vadd.f32 %v321, -0.28449672
    %v326 = vadd.f32 %v322, -0.28449672
    %v327 = vadd.f32 %v323, -0.28449672
    %v328 = vadd.f32 %v324, -0.28449672
    %v329 = vmul.f32 %v325, %v298
    %v330 = vmul.f32 %v326, %v300
    %v331 = vmul.f32 %v327, %v302
    %v332 = vmul.f32 %v328, %v304
    %v333 = vadd.f32 %v329, 0.2548296
    %v334 = vadd.f32 %v330, 0.2548296
    %v335 = vadd.f32 %v331, 0.2548296
    %v336 = vadd.f32 %v332, 0.2548296
    %v337 = vmul.f32 %v333, %v298
    %v338 = vmul.f32 %v334, %v300
    %v339 = vmul.f32 %v335, %v302
    %v340 = vmul.f32 %v336, %v304
    %v341 = vsub.f32 0.0, %v285
    %v342 = vsub.f32 0.0, %v286
    %v343 = vsub.f32 0.0, %v287
    %v344 = vsub.f32 0.0, %v288
    %v345 = vmul.f32 %v341, %v285
    %v346 = vmul.f32 %v342, %v286
    %v347 = vmul.f32 %v343, %v287
    %v348 = vmul.f32 %v344, %v288
    %v349 = vmul.f32 %v345, 1.442695
    %v350 = vpow.pop %v349
    %v351 = vmul.f32 %v346, 1.442695
    %v352 = vpow.pop %v351
    %v353 = vmul.f32 %v347, 1.442695
    %v354 = vpow.pop %v353
    %v355 = vmul.f32 %v348, 1.442695
    %v356 = vpow.pop %v355
    %v357 = vmul.f32 %v337, %v350
    %v358 = vmul.f32 %v338, %v352
    %v359 = vmul.f32 %v339, %v354
    %v360 = vmul.f32 %v340, %v356
    %v361 = vsub.f32 1.0, %v357
    %v362 = vsub.f32 1.0, %v358
    %v363 = vsub.f32 1.0, %v359
    %v364 = vsub.f32 1.0, %v360
    %v365 = vmul.f32 %v281, %v361
    %v366 = vmul.f32 %v282, %v362
    %v367 = vmul.f32 %v283, %v363
    %v368 = vmul.f32 %v284, %v364
    %v369 = vadd.f32 %v365, 1.0
    %v370 = vadd.f32 %v366, 1.0
    %v371 = vadd.f32 %v367, 1.0
    %v372 = vadd.f32 %v368, 1.0
    %v373 = vmul.f32 %v269, %v369
    %v374 = vmul.f32 %v270, %v370
    %v375 = vmul.f32 %v271, %v371
    %v376 = vmul.f32 %v272, %v372
    %v377 = vpack.c.bf16 %v375, %v373
    %v378 = vpack.c.bf16 %v376, %v374
    %v379 = vld [vmem:[#allocation8] sm:$0xf]
    %v380 = vld [vmem:[#allocation8 + $0x4] sm:$0xf]
    %v381 = vld [vmem:[#allocation8 + $0x8] sm:$0xf]
    %v382 = vld [vmem:[#allocation8 + $0xc] sm:$0xf]
    %v383 = vld [vmem:[#allocation8 + $0x10] sm:$0xf]
    %v384 = vld [vmem:[#allocation8 + $0x14] sm:$0xf]
    %v385 = vld [vmem:[#allocation8 + $0x18] sm:$0xf]
    %v386 = vld [vmem:[#allocation8 + $0x1c] sm:$0xf]
    %v387 = vld [vmem:[#allocation8 + $0x20] sm:$0xf]
    %v388 = vld [vmem:[#allocation8 + $0x24] sm:$0xf]
    %v389 = vld [vmem:[#allocation8 + $0x28] sm:$0xf]
    %v390 = vld [vmem:[#allocation8 + $0x2c] sm:$0xf]
    %v391 = vld [vmem:[#allocation8 + $0x30] sm:$0xf]
    %v392 = vld [vmem:[#allocation8 + $0x34] sm:$0xf]
    %v393 = vld [vmem:[#allocation8 + $0x38] sm:$0xf]
    %v394 = vld [vmem:[#allocation8 + $0x3c] sm:$0xf]
    %v395 = vld [vmem:[#allocation8 + $0x40] sm:$0xf]
    %v396 = vld [vmem:[#allocation8 + $0x44] sm:$0xf]
    %v397 = vld [vmem:[#allocation8 + $0x48] sm:$0xf]
    %v398 = vld [vmem:[#allocation8 + $0x4c] sm:$0xf]
    %v399 = vld [vmem:[#allocation8 + $0x50] sm:$0xf]
    %v400 = vld [vmem:[#allocation8 + $0x54] sm:$0xf]
    %v401 = vld [vmem:[#allocation8 + $0x58] sm:$0xf]
    %v402 = vld [vmem:[#allocation8 + $0x5c] sm:$0xf]
    %v403 = vld [vmem:[#allocation8 + $0x60] sm:$0xf]
    %v404 = vld [vmem:[#allocation8 + $0x64] sm:$0xf]
    %v405 = vld [vmem:[#allocation8 + $0x68] sm:$0xf]
    %v406 = vld [vmem:[#allocation8 + $0x6c] sm:$0xf]
    %v407 = vld [vmem:[#allocation8 + $0x70] sm:$0xf]
    %v408 = vld [vmem:[#allocation8 + $0x74] sm:$0xf]
    %v409 = vld [vmem:[#allocation8 + $0x78] sm:$0xf]
    %v410 = vld [vmem:[#allocation8 + $0x7c] sm:$0xf]
    %v411 = vld [vmem:[#allocation10] sm:$0x1]
    %v413 = vlaneseq
    %v414 = vshrl.u32 %v413, 7
    %v415 = vsub.s32 0, %v414
    %v416 = vrot.slane %v411, %v415
    %v450 = vunpack.c.l.b16 %v379
    %v451 = vunpack.c.l.b16 %v380
    %v452 = vunpack.c.l.b16 %v381
    %v453 = vunpack.c.l.b16 %v382
    %v454 = vunpack.c.l.b16 %v383
    %v455 = vunpack.c.l.b16 %v384
    %v456 = vunpack.c.l.b16 %v385
    %v457 = vunpack.c.l.b16 %v386
    %v458 = vunpack.c.l.b16 %v387
    %v459 = vunpack.c.l.b16 %v388
    %v460 = vunpack.c.l.b16 %v389
    %v461 = vunpack.c.l.b16 %v390
    %v462 = vunpack.c.l.b16 %v391
    %v463 = vunpack.c.l.b16 %v392
    %v464 = vunpack.c.l.b16 %v393
    %v465 = vunpack.c.l.b16 %v394
    %v466 = vunpack.c.l.b16 %v395
    %v467 = vunpack.c.l.b16 %v396
    %v468 = vunpack.c.l.b16 %v397
    %v469 = vunpack.c.l.b16 %v398
    %v470 = vunpack.c.l.b16 %v399
    %v471 = vunpack.c.l.b16 %v400
    %v472 = vunpack.c.l.b16 %v401
    %v473 = vunpack.c.l.b16 %v402
    %v474 = vunpack.c.l.b16 %v403
    %v475 = vunpack.c.l.b16 %v404
    %v476 = vunpack.c.l.b16 %v405
    %v477 = vunpack.c.l.b16 %v406
    %v478 = vunpack.c.l.b16 %v407
    %v479 = vunpack.c.l.b16 %v408
    %v480 = vunpack.c.l.b16 %v409
    %v481 = vunpack.c.l.b16 %v410
    %v482 = vpack.c.b16 %v451, %v450
    %v483 = vpack.c.b16 %v453, %v452
    %v484 = vpack.c.b16 %v455, %v454
    %v485 = vpack.c.b16 %v457, %v456
    %v486 = vpack.c.b16 %v459, %v458
    %v487 = vpack.c.b16 %v461, %v460
    %v488 = vpack.c.b16 %v463, %v462
    %v489 = vpack.c.b16 %v465, %v464
    %v490 = vpack.c.b16 %v467, %v466
    %v491 = vpack.c.b16 %v469, %v468
    %v492 = vpack.c.b16 %v471, %v470
    %v493 = vpack.c.b16 %v473, %v472
    %v494 = vpack.c.b16 %v475, %v474
    %v495 = vpack.c.b16 %v477, %v476
    %v496 = vpack.c.b16 %v479, %v478
    %v497 = vpack.c.b16 %v481, %v480
    %514 = vmatprep.subr.bf16.mxu0 0
    %515 = vmatpush1.bf16.msra.mxu0 %v482
    %516 = vmatprep.subr.bf16.mxu0 0
    %517 = vmatpush1.bf16.msra.mxu0 %v483
    %518 = vmatprep.subr.bf16.mxu0 0
    %519 = vmatpush1.bf16.msra.mxu0 %v484
    %520 = vmatprep.subr.bf16.mxu0 0
    %521 = vmatpush1.bf16.msra.mxu0 %v485
    %522 = vmatprep.subr.bf16.mxu0 0
    %523 = vmatpush1.bf16.msra.mxu0 %v486
    %524 = vmatprep.subr.bf16.mxu0 0
    %525 = vmatpush1.bf16.msra.mxu0 %v487
    %526 = vmatprep.subr.bf16.mxu0 0
    %527 = vmatpush1.bf16.msra.mxu0 %v488
    %528 = vmatprep.subr.bf16.mxu0 0
    %529 = vmatpush1.bf16.msra.mxu0 %v489
    %530 = vmatprep.subr.bf16.mxu0 0
    %531 = vmatpush1.bf16.msra.mxu0 %v490
    %532 = vmatprep.subr.bf16.mxu0 0
    %533 = vmatpush1.bf16.msra.mxu0 %v491
    %534 = vmatprep.subr.bf16.mxu0 0
    %535 = vmatpush1.bf16.msra.mxu0 %v492
    %536 = vmatprep.subr.bf16.mxu0 0
    %537 = vmatpush1.bf16.msra.mxu0 %v493
    %538 = vmatprep.subr.bf16.mxu0 0
    %539 = vmatpush1.bf16.msra.mxu0 %v494
    %540 = vmatprep.subr.bf16.mxu0 0
    %541 = vmatpush1.bf16.msra.mxu0 %v495
    %542 = vmatprep.subr.bf16.mxu0 0
    %543 = vmatpush1.bf16.msra.mxu0 %v496
    %544 = vmatprep.subr.bf16.mxu0 0
    %545 = vmatpush1.bf16.msra.mxu0 %v497
    %546 = vmatprep.mubr.bf16.mxu0 %v378
    %547 = vmatmul.mubr.bf16.gmra.mrb[0].mxu0 %v377
    %v548 = vpop.f32.mrb[0].mxu0
    %v549 = vadd.f32 %v416, %v548
    %v550 = vpop.f32.mrb[0].mxu0
    %v551 = vpop.f32.mrb[0].mxu0
    %v552 = vadd.f32 %v416, %v551
    %v553 = vpop.f32.mrb[0].mxu0
    %554 = vdwg.mxu0
    %v555 = vadd.f32 %v549, %v115
    %v556 = vadd.f32 %v552, %v116
    %v557 = vld [vmem:[#allocation11] sm:$0x1]
    %v558 = vld [vmem:[#allocation13] sm:$0x1]
    %559 = vadd.xlane.f32.xlu0 %v555
    %v560 = vpop.xlane.xlu0 %559
    %561 = vadd.xlane.f32.xlu0 %v556
    %v562 = vpop.xlane.xlu0 %561
    %v563 = vrcp.pop 128.0
    %v564 = vmul.f32 %v560, %v563
    %v565 = vmul.f32 %v562, %v563
    %v566 = vsub.f32 %v555, %v564
    %v567 = vsub.f32 %v556, %v565
    %v568 = vmul.f32 %v566, %v566
    %v569 = vmul.f32 %v567, %v567
    %570 = vadd.xlane.f32.xlu0 %v568
    %v571 = vpop.xlane.xlu0 %570
    %572 = vadd.xlane.f32.xlu0 %v569
    %v573 = vpop.xlane.xlu0 %572
    %v574 = vmul.f32 %v571, %v563
    %v575 = vmul.f32 %v573, %v563
    %v576 = vadd.f32 %v574, 1e-05
    %v577 = vadd.f32 %v575, 1e-05
    %v578 = vrsqrt.pop %v576
    %v579 = vrsqrt.pop %v577
    %v580 = vmul.f32 %v566, %v578
    %v581 = vmul.f32 %v567, %v579
    %v583 = vlaneseq
    %v584 = vshrl.u32 %v583, 7
    %v585 = vsub.s32 0, %v584
    %v586 = vrot.slane %v557, %v585
    %v588 = vmul.f32 %v580, %v586
    %v589 = vmul.f32 %v581, %v586
    %v591 = vlaneseq
    %v592 = vshrl.u32 %v591, 7
    %v593 = vsub.s32 0, %v592
    %v594 = vrot.slane %v558, %v593
    %v596 = vadd.f32 %v588, %v594
    %v597 = vadd.f32 %v589, %v594
    %598 = vst [vmem:[#allocation14] sm:$0xff] %v596
    %599 = vst [vmem:[#allocation14 + $0x8] sm:$0xff] %v597
    // Predicated region
    $region58: #{_lambda_.10} parent=1 // pred_check
      _
    $region59: #{_lambda_.10} parent=1 // pred_check_branch
      %601 = sbr.rel (0) target = $region61
    $region60: #{_lambda_.10} parent=1 // pred_region
      %s603 = ssub.s32 256, 256
      %604 = vsyncadd [#allocation4], %s603
      %s605 = sshll.u32 [#allocation14], 4
      %s606 = int_to_ptr.vmem [resolvable:$true] %s605
      %611 = dma.vmem_to_hbm [thread:$0]  %s606, 256, %s7, [#allocation4], 128, 128, 8
    $region61: #{_lambda_.10} parent=1 // pred_fallthru
      _
    // Predicated region
    $region62: #{_lambda_.10} parent=1 // pred_check
      _
    $region63: #{_lambda_.10} parent=1 // pred_check_branch
      %613 = sbr.rel (0) target = $region65
    $region64: #{_lambda_.10} parent=1 // pred_region
      %614 = dma.done [#allocation4], 256
    $region65: #{_lambda_.10} parent=1 // pred_fallthru
      _
    %615 = vsyncpa [#allocation3], 1
    %616 = vsyncpa [#allocation6], 1
    %617 = vsyncpa [#allocation9], 1
    %618 = vsyncpa [#allocation12], 1
    %619 = vsyncpa [#allocation4], 1

// kernel: _lambda_.9
$region0: #{_lambda_.9}
  #allocation0 [shape = 'u32[]', space=smem, size = 0x4, offset = 0x4, fixed_abs, tag = 'smem constant byte address 0x4 - core index']
  #allocation1 [shape = 'u32[144,128]{1,0:T(1,128)}', space=vmem, size = 0x12000, scoped, tag = 'internal scratch']
  #allocation2 [shape = 'f32[8,128]{1,0:T(8,128)}', space=vmem, size = 0x1000, scoped, tag = 'scratch operand']
  %s0 = inlined_call_operand.hbm [shape: f32[2,8,128], index: 0, kind: input, shape index: {}]
  %s1 = inlined_call_operand.hbm [shape: f32[2,1,8], index: 1, kind: input, shape index: {}]
  %s2 = inlined_call_operand.hbm [shape: bf16[128,384], index: 2, kind: input, shape index: {}]
  %s3 = inlined_call_operand.hbm [shape: f32[1,384], index: 3, kind: input, shape index: {}]
  %s4 = inlined_call_operand.hbm [shape: bf16[128,128], index: 4, kind: input, shape index: {}]
  %s5 = inlined_call_operand.hbm [shape: f32[1,128], index: 5, kind: input, shape index: {}]
  %s6 = inlined_call_operand.hbm [shape: f32[1,128], index: 6, kind: input, shape index: {}]
  %s7 = inlined_call_operand.hbm [shape: f32[1,128], index: 7, kind: input, shape index: {}]
  %s8 = inlined_call_operand.hbm [shape: f32[2,8,128], index: 8, kind: output, shape index: {}]
  %s9 = sld [smem:[#allocation0]]
  $region97: #{_lambda_.9} parent=0
    _
  %s11 = ssub.s32 1, %s9
  %s12 = scalar_select 0, %s11, %s9
  $region1: #{_lambda_.9} parent=0
    #allocation3 [shape = 'u8[8192]{0}', space=vmem, size = 0x2000, scoped, tag = 'input window, operand 0']
    #allocation4 [shape = 's32[2]{0}', space=sflag, size = 0x8, scoped, tag = 'scoped memory for _lambda_.9']
    #allocation5 [shape = 's32[2]{0}', space=sflag, size = 0x8, scoped, tag = 'scoped memory for _lambda_.9']
    #allocation6 [shape = 'u8[1024]{0}', space=vmem, size = 0x400, scoped, tag = 'input window, operand 1']
    #allocation7 [shape = 's32[2]{0}', space=sflag, size = 0x8, scoped, tag = 'scoped memory for _lambda_.9']
    #allocation8 [shape = 'u8[98304]{0}', space=vmem, size = 0x18000, scoped, tag = 'input window, operand 2, single buffered']
    #allocation9 [shape = 'u8[1536]{0}', space=vmem, size = 0x800, scoped, tag = 'input window, operand 3, single buffered']
    #allocation10 [shape = 's32[1]{0}', space=sflag, size = 0x4, scoped, tag = 'scoped memory for _lambda_.9']
    #allocation11 [shape = 'u8[32768]{0}', space=vmem, size = 0x8000, scoped, tag = 'input window, operand 4, single buffered']
    #allocation12 [shape = 'u8[512]{0}', space=vmem, size = 0x400, scoped, tag = 'input window, operand 5, single buffered']
    #allocation13 [shape = 's32[1]{0}', space=sflag, size = 0x4, scoped, tag = 'scoped memory for _lambda_.9']
    #allocation14 [shape = 'u8[512]{0}', space=vmem, size = 0x400, scoped, tag = 'input window, operand 6, single buffered']
    #allocation15 [shape = 'u8[512]{0}', space=vmem, size = 0x400, scoped, tag = 'input window, operand 7, single buffered']
    #allocation16 [shape = 's32[1]{0}', space=sflag, size = 0x4, scoped, tag = 'scoped memory for _lambda_.9']
    #allocation17 [shape = 'u8[8192]{0}', space=vmem, size = 0x2000, scoped, tag = 'output window, operand 0']
    %13 = vsyncpa [#allocation4], 0
    %s14 = scalar_lea.sflag [#allocation4], 1
    %15 = vsyncpa %s14, 0
    %16 = vsyncpa [#allocation7], 0
    %s17 = scalar_lea.sflag [#allocation7], 1
    %18 = vsyncpa %s17, 0
    %19 = vsyncpa [#allocation10], 0
    %20 = vsyncpa [#allocation13], 0
    %21 = vsyncpa [#allocation16], 0
    %22 = vsyncpa [#allocation5], 0
    %s23 = scalar_lea.sflag [#allocation5], 1
    %24 = vsyncpa %s23, 0
    loop: start=0, step=1, limit=4
    $region2: #{_lambda_.9} parent=1 // loop_pre_header
      _
    $region3: #{_lambda_.9} parent=1 // loop_header
      %s26 = sphi 0, %s30
      %p27 = scmp.ge.s32.totalorder %s26, 4
      %s36 = sphi 0, %s38
      %s39 = sphi 0, %s36
      %s40 = sphi 0, %s39
      %s56 = sphi 0, %s40
      %s62 = sphi 0, %s64
      %s65 = sphi 0, %s62
      %s66 = sphi 0, %s65
      %s82 = sphi 0, %s66
      %s86 = sphi 0, %s86
      %s88 = sphi 0, %s86
      %s89 = sphi 0, %s88
      %s103 = sphi 0, %s89
      %s107 = sphi 0, %s107
      %s109 = sphi 0, %s107
      %s110 = sphi 0, %s109
      %s124 = sphi 0, %s110
      %s128 = sphi 0, %s128
      %s130 = sphi 0, %s128
      %s131 = sphi 0, %s130
      %s145 = sphi 0, %s131
      %s149 = sphi 0, %s149
      %s151 = sphi 0, %s149
      %s152 = sphi 0, %s151
      %s166 = sphi 0, %s152
      %s170 = sphi 0, %s170
      %s172 = sphi 0, %s170
      %s173 = sphi 0, %s172
      %s187 = sphi 0, %s173
      %s191 = sphi 0, %s191
      %s193 = sphi 0, %s191
      %s194 = sphi 0, %s193
      %s208 = sphi 0, %s194
      %s214 = sphi 0, %s216
      %s217 = sphi 0, %s214
      %s218 = sphi 0, %s217
      %s234 = sphi 0, %s218
    $region4: #{_lambda_.9} parent=1 // loop_header_branch
      %29 = sbr.rel (%p27) target = $region8
    $region5: #{_lambda_.9} parent=1 // loop_body
      %s31 = ssub.s32 %s26, 1
      %s32 = ssub.s32 %s26, 2
      %s33 = sadd.s32 %s26, 1
      %s34 = ssub.s32 %s26, %s33
      %p35 = scmp.eq.s32.totalorder %s34, 0
      %s37 = sadd.s32 %s36, 1
      %s38 = scalar_select %p35, %s36, %s37
      %p41 = pneg %p35
      %p42 = scmp.eq.s32.totalorder %s26, 1
      %p43 = por %p41, %p42
      %p44 = scmp.ne.s32.totalorder %s36, %s39
      %p45 = scmp.eq.s32.totalorder %s26, 0
      %p46 = por %p44, %p45
      %p47 = scmp.ne.s32.totalorder %s36, %s39
      %p48 = scmp.eq.s32.totalorder %s31, 1
      %p49 = por %p47, %p48
      %p50 = scmp.ne.s32.totalorder %s39, %s40
      %p51 = scmp.eq.s32.totalorder %s31, 0
      %p52 = por %p50, %p51
      %p53 = scmp.ne.s32.totalorder %s39, %s40
      %p54 = scmp.eq.s32.totalorder %s32, 1
      %p55 = por %p53, %p54
      %p57 = scmp.ne.s32.totalorder %s40, %s56
      %p58 = scmp.eq.s32.totalorder %s32, 0
      %p59 = por %p57, %p58
      %s60 = ssub.s32 %s26, %s33
      %p61 = scmp.eq.s32.totalorder %s60, 0
      %s63 = sadd.s32 %s62, 1
      %s64 = scalar_select %p61, %s62, %s63
      %p67 = pneg %p61
      %p68 = scmp.eq.s32.totalorder %s26, 1
      %p69 = por %p67, %p68
      %p70 = scmp.ne.s32.totalorder %s62, %s65
      %p71 = scmp.eq.s32.totalorder %s26, 0
      %p72 = por %p70, %p71
      %p73 = scmp.ne.s32.totalorder %s62, %s65
      %p74 = scmp.eq.s32.totalorder %s31, 1
      %p75 = por %p73, %p74
      %p76 = scmp.ne.s32.totalorder %s65, %s66
      %p77 = scmp.eq.s32.totalorder %s31, 0
      %p78 = por %p76, %p77
      %p79 = scmp.ne.s32.totalorder %s65, %s66
      %p80 = scmp.eq.s32.totalorder %s32, 1
      %p81 = por %p79, %p80
      %p83 = scmp.ne.s32.totalorder %s66, %s82
      %p84 = scmp.eq.s32.totalorder %s32, 0
      %p85 = por %p83, %p84
      %s87 = sadd.s32 %s86, 1
      %p90 = scmp.eq.s32.totalorder %s26, 1
      %p91 = scmp.ne.s32.totalorder %s86, %s88
      %p92 = scmp.eq.s32.totalorder %s26, 0
      %p93 = por %p91, %p92
      %p94 = scmp.ne.s32.totalorder %s86, %s88
      %p95 = scmp.eq.s32.totalorder %s31, 1
      %p96 = por %p94, %p95
      %p97 = scmp.ne.s32.totalorder %s88, %s89
      %p98 = scmp.eq.s32.totalorder %s31, 0
      %p99 = por %p97, %p98
      %p100 = scmp.ne.s32.totalorder %s88, %s89
      %p101 = scmp.eq.s32.totalorder %s32, 1
      %p102 = por %p100, %p101
      %p104 = scmp.ne.s32.totalorder %s89, %s103
      %p105 = scmp.eq.s32.totalorder %s32, 0
      %p106 = por %p104, %p105
      %s108 = sadd.s32 %s107, 1
      %p111 = scmp.eq.s32.totalorder %s26, 1
      %p112 = scmp.ne.s32.totalorder %s107, %s109
      %p113 = scmp.eq.s32.totalorder %s26, 0
      %p114 = por %p112, %p113
      %p115 = scmp.ne.s32.totalorder %s107, %s109
      %p116 = scmp.eq.s32.totalorder %s31, 1
      %p117 = por %p115, %p116
      %p118 = scmp.ne.s32.totalorder %s109, %s110
      %p119 = scmp.eq.s32.totalorder %s31, 0
      %p120 = por %p118, %p119
      %p121 = scmp.ne.s32.totalorder %s109, %s110
      %p122 = scmp.eq.s32.totalorder %s32, 1
      %p123 = por %p121, %p122
      %p125 = scmp.ne.s32.totalorder %s110, %s124
      %p126 = scmp.eq.s32.totalorder %s32, 0
      %p127 = por %p125, %p126
      %s129 = sadd.s32 %s128, 1
      %p132 = scmp.eq.s32.totalorder %s26, 1
      %p133 = scmp.ne.s32.totalorder %s128, %s130
      %p134 = scmp.eq.s32.totalorder %s26, 0
      %p135 = por %p133, %p134
      %p136 = scmp.ne.s32.totalorder %s128, %s130
      %p137 = scmp.eq.s32.totalorder %s31, 1
      %p138 = por %p136, %p137
      %p139 = scmp.ne.s32.totalorder %s130, %s131
      %p140 = scmp.eq.s32.totalorder %s31, 0
      %p141 = por %p139, %p140
      %p142 = scmp.ne.s32.totalorder %s130, %s131
      %p143 = scmp.eq.s32.totalorder %s32, 1
      %p144 = por %p142, %p143
      %p146 = scmp.ne.s32.totalorder %s131, %s145
      %p147 = scmp.eq.s32.totalorder %s32, 0
      %p148 = por %p146, %p147
      %s150 = sadd.s32 %s149, 1
      %p153 = scmp.eq.s32.totalorder %s26, 1
      %p154 = scmp.ne.s32.totalorder %s149, %s151
      %p155 = scmp.eq.s32.totalorder %s26, 0
      %p156 = por %p154, %p155
      %p157 = scmp.ne.s32.totalorder %s149, %s151
      %p158 = scmp.eq.s32.totalorder %s31, 1
      %p159 = por %p157, %p158
      %p160 = scmp.ne.s32.totalorder %s151, %s152
      %p161 = scmp.eq.s32.totalorder %s31, 0
      %p162 = por %p160, %p161
      %p163 = scmp.ne.s32.totalorder %s151, %s152
      %p164 = scmp.eq.s32.totalorder %s32, 1
      %p165 = por %p163, %p164
      %p167 = scmp.ne.s32.totalorder %s152, %s166
      %p168 = scmp.eq.s32.totalorder %s32, 0
      %p169 = por %p167, %p168
      %s171 = sadd.s32 %s170, 1
      %p174 = scmp.eq.s32.totalorder %s26, 1
      %p175 = scmp.ne.s32.totalorder %s170, %s172
      %p176 = scmp.eq.s32.totalorder %s26, 0
      %p177 = por %p175, %p176
      %p178 = scmp.ne.s32.totalorder %s170, %s172
      %p179 = scmp.eq.s32.totalorder %s31, 1
      %p180 = por %p178, %p179
      %p181 = scmp.ne.s32.totalorder %s172, %s173
      %p182 = scmp.eq.s32.totalorder %s31, 0
      %p183 = por %p181, %p182
      %p184 = scmp.ne.s32.totalorder %s172, %s173
      %p185 = scmp.eq.s32.totalorder %s32, 1
      %p186 = por %p184, %p185
      %p188 = scmp.ne.s32.totalorder %s173, %s187
      %p189 = scmp.eq.s32.totalorder %s32, 0
      %p190 = por %p188, %p189
      %s192 = sadd.s32 %s191, 1
      %p195 = scmp.eq.s32.totalorder %s26, 1
      %p196 = scmp.ne.s32.totalorder %s191, %s193
      %p197 = scmp.eq.s32.totalorder %s26, 0
      %p198 = por %p196, %p197
      %p199 = scmp.ne.s32.totalorder %s191, %s193
      %p200 = scmp.eq.s32.totalorder %s31, 1
      %p201 = por %p199, %p200
      %p202 = scmp.ne.s32.totalorder %s193, %s194
      %p203 = scmp.eq.s32.totalorder %s31, 0
      %p204 = por %p202, %p203
      %p205 = scmp.ne.s32.totalorder %s193, %s194
      %p206 = scmp.eq.s32.totalorder %s32, 1
      %p207 = por %p205, %p206
      %p209 = scmp.ne.s32.totalorder %s194, %s208
      %p210 = scmp.eq.s32.totalorder %s32, 0
      %p211 = por %p209, %p210
      %s212 = ssub.s32 %s26, %s33
      %p213 = scmp.eq.s32.totalorder %s212, 0
      %s215 = sadd.s32 %s214, 1
      %s216 = scalar_select %p213, %s214, %s215
      %p219 = pneg %p213
      %p220 = scmp.eq.s32.totalorder %s26, 1
      %p221 = por %p219, %p220
      %p222 = scmp.ne.s32.totalorder %s214, %s217
      %p223 = scmp.eq.s32.totalorder %s26, 0
      %p224 = por %p222, %p223
      %p225 = scmp.ne.s32.totalorder %s214, %s217
      %p226 = scmp.eq.s32.totalorder %s31, 1
      %p227 = por %p225, %p226
      %p228 = scmp.ne.s32.totalorder %s217, %s218
      %p229 = scmp.eq.s32.totalorder %s31, 0
      %p230 = por %p228, %p229
      %p231 = scmp.ne.s32.totalorder %s217, %s218
      %p232 = scmp.eq.s32.totalorder %s32, 1
      %p233 = por %p231, %p232
      %p235 = scmp.ne.s32.totalorder %s218, %s234
      %p236 = scmp.eq.s32.totalorder %s32, 0
      %p237 = por %p235, %p236
      %p238 = scmp.le.s32.totalorder 1, %s26
      %p239 = scmp.lt.s32.totalorder %s26, 3
      %p240 = pnand %p238, %p239
      %p241 = pneg %p240
      // Predicated region
      $region9: #{_lambda_.9} parent=5 // pred_check
        _
      $region10: #{_lambda_.9} parent=5 // pred_check_branch
        %243 = sbr.rel (%p240) target = $region12
      $region11: #{_lambda_.9} parent=5 // pred_region
        %s244 = ssub.s32 %s26, 1
        // Predicated region
        $region13: #{_lambda_.9} parent=11 // pred_check
          %p245 = pneg %p99
        $region14: #{_lambda_.9} parent=11 // pred_check_branch
          %247 = sbr.rel (%p245) target = $region16
        $region15: #{_lambda_.9} parent=11 // pred_region
          %s249 = ssub.s32 3072, 3072
          %250 = vsyncadd [#allocation7], %s249
          %s251 = sshll.u32 [#allocation8], 4
          %s252 = int_to_ptr.vmem [resolvable:$true] %s251
          %257 = dma.hbm_to_vmem [thread:$0]  %s2, 3072, %s252, [#allocation7], 192, 192, 12
        $region16: #{_lambda_.9} parent=11 // pred_fallthru
          _
        // Predicated region
        $region17: #{_lambda_.9} parent=11 // pred_check
          %p258 = pneg %p120
        $region18: #{_lambda_.9} parent=11 // pred_check_branch
          %260 = sbr.rel (%p258) target = $region20
        $region19: #{_lambda_.9} parent=11 // pred_region
          %s262 = ssub.s32 48, 48
          %263 = vsyncadd [#allocation10], %s262
          %s265 = sshll.u32 [#allocation9], 4
          %s266 = int_to_ptr.vmem [resolvable:$true] %s265
          %268 = dma.hbm_to_vmem [thread:$0]  %s3, 48, %s266, [#allocation10]
        $region20: #{_lambda_.9} parent=11 // pred_fallthru
          _
        // Predicated region
        $region21: #{_lambda_.9} parent=11 // pred_check
          %p269 = pneg %p141
        $region22: #{_lambda_.9} parent=11 // pred_check_branch
          %271 = sbr.rel (%p269) target = $region24
        $region23: #{_lambda_.9} parent=11 // pred_region
          %s273 = ssub.s32 1024, 1024
          %274 = vsyncadd [#allocation10], %s273
          %s275 = sshll.u32 [#allocation11], 4
          %s276 = int_to_ptr.vmem [resolvable:$true] %s275
          %281 = dma.hbm_to_vmem [thread:$0]  %s4, 1024, %s276, [#allocation10], 64, 64, 4
        $region24: #{_lambda_.9} parent=11 // pred_fallthru
          _
        // Predicated region
        $region25: #{_lambda_.9} parent=11 // pred_check
          %p282 = pneg %p162
        $region26: #{_lambda_.9} parent=11 // pred_check_branch
          %284 = sbr.rel (%p282) target = $region28
        $region27: #{_lambda_.9} parent=11 // pred_region
          %s286 = ssub.s32 16, 16
          %287 = vsyncadd [#allocation13], %s286
          %s289 = sshll.u32 [#allocation12], 4
          %s290 = int_to_ptr.vmem [resolvable:$true] %s289
          %292 = dma.hbm_to_vmem [thread:$0]  %s5, 16, %s290, [#allocation13]
        $region28: #{_lambda_.9} parent=11 // pred_fallthru
          _
        // Predicated region
        $region29: #{_lambda_.9} parent=11 // pred_check
          %p293 = pneg %p183
        $region30: #{_lambda_.9} parent=11 // pred_check_branch
          %295 = sbr.rel (%p293) target = $region32
        $region31: #{_lambda_.9} parent=11 // pred_region
          %s297 = ssub.s32 16, 16
          %298 = vsyncadd [#allocation13], %s297
          %s300 = sshll.u32 [#allocation14], 4
          %s301 = int_to_ptr.vmem [resolvable:$true] %s300
          %303 = dma.hbm_to_vmem [thread:$0]  %s6, 16, %s301, [#allocation13]
        $region32: #{_lambda_.9} parent=11 // pred_fallthru
          _
        // Predicated region
        $region33: #{_lambda_.9} parent=11 // pred_check
          %p304 = pneg %p204
        $region34: #{_lambda_.9} parent=11 // pred_check_branch
          %306 = sbr.rel (%p304) target = $region36
        $region35: #{_lambda_.9} parent=11 // pred_region
          %s308 = ssub.s32 16, 16
          %309 = vsyncadd [#allocation16], %s308
          %s311 = sshll.u32 [#allocation15], 4
          %s312 = int_to_ptr.vmem [resolvable:$true] %s311
          %314 = dma.hbm_to_vmem [thread:$0]  %s7, 16, %s312, [#allocation16]
        $region36: #{_lambda_.9} parent=11 // pred_fallthru
          _
      $region12: #{_lambda_.9} parent=5 // pred_fallthru
        _
      %p315 = scmp.lt.s32.totalorder %s26, 2
      // Predicated region
      $region37: #{_lambda_.9} parent=5 // pred_check
        %p316 = pneg %p315
      $region38: #{_lambda_.9} parent=5 // pred_check_branch
        %318 = sbr.rel (%p316) target = $region40
      $region39: #{_lambda_.9} parent=5 // pred_region
        // Predicated region
        $region41: #{_lambda_.9} parent=39 // pred_check
          %p319 = pneg %p46
        $region42: #{_lambda_.9} parent=39 // pred_check_branch
          %321 = sbr.rel (%p319) target = $region44
        $region43: #{_lambda_.9} parent=39 // pred_region
          %s322 = sand.u32 %s36, 1
          %s323 = scalar_lea.sflag [#allocation4], %s322
          %s324 = sand.u32 %s36, 1
          %s325 = smul.addr %s324, 8
          %s326 = scalar_lea.vmem [#allocation3], %s325
          %s328 = ssub.s32 128, 128
          %329 = vsyncadd %s323, %s328
          %s330 = smul.addr %s26, 128
          %s331 = scalar_lea.hbm %s0, %s330
          %s333 = sshll.u32 %s326, 4
          %s334 = int_to_ptr.vmem [resolvable:$true] %s333
          %336 = dma.hbm_to_vmem [thread:$0]  %s331, 128, %s334, %s323
        $region44: #{_lambda_.9} parent=39 // pred_fallthru
          _
        // Predicated region
        $region45: #{_lambda_.9} parent=39 // pred_check
          %p337 = pneg %p72
        $region46: #{_lambda_.9} parent=39 // pred_check_branch
          %339 = sbr.rel (%p337) target = $region48
        $region47: #{_lambda_.9} parent=39 // pred_region
          %s340 = sand.u32 %s26, 1
          %s341 = scalar_lea.sflag [#allocation7], %s340
          %s342 = sand.u32 %s62, 1
          %s343 = scalar_lea.vmem [#allocation6], %s342
          %s345 = ssub.s32 16, 16
          %346 = vsyncadd %s341, %s345
          %s347 = smul.addr %s26, 16
          %s348 = scalar_lea.hbm %s1, %s347
          %s350 = sshll.u32 %s343, 4
          %s351 = int_to_ptr.vmem [resolvable:$true] %s350
          %353 = dma.hbm_to_vmem [thread:$0]  %s348, 16, %s351, %s341
        $region48: #{_lambda_.9} parent=39 // pred_fallthru
          _
      $region40: #{_lambda_.9} parent=5 // pred_fallthru
        _
      %p354 = scmp.le.s32.totalorder 1, %s26
      %p355 = scmp.lt.s32.totalorder %s26, 3
      %p356 = pnand %p354, %p355
      %p357 = pneg %p356
      // Predicated region
      $region49: #{_lambda_.9} parent=5 // pred_check
        _
      $region50: #{_lambda_.9} parent=5 // pred_check_branch
        %359 = sbr.rel (%p356) target = $region52
      $region51: #{_lambda_.9} parent=5 // pred_region
        %s360 = ssub.s32 %s26, 1
        %s361 = sand.u32 %s39, 1
        %s362 = scalar_lea.sflag [#allocation4], %s361
        %s363 = sand.u32 %s39, 1
        %s364 = smul.addr %s363, 8
        %s365 = scalar_lea.vmem [#allocation3], %s364
        // Predicated region
        $region53: #{_lambda_.9} parent=51 // pred_check
          %p366 = pneg %p52
        $region54: #{_lambda_.9} parent=51 // pred_check_branch
          %368 = sbr.rel (%p366) target = $region56
        $region55: #{_lambda_.9} parent=51 // pred_region
          %369 = dma.done %s362, 128
        $region56: #{_lambda_.9} parent=51 // pred_fallthru
          _
        %s370 = sand.u32 %s31, 1
        %s371 = scalar_lea.sflag [#allocation7], %s370
        %s372 = sand.u32 %s65, 1
        %s373 = scalar_lea.vmem [#allocation6], %s372
        // Predicated region
        $region57: #{_lambda_.9} parent=51 // pred_check
          %p374 = pneg %p78
        $region58: #{_lambda_.9} parent=51 // pred_check_branch
          %376 = sbr.rel (%p374) target = $region60
        $region59: #{_lambda_.9} parent=51 // pred_region
          %377 = dma.done %s371, 16
        $region60: #{_lambda_.9} parent=51 // pred_fallthru
          _
        // Predicated region
        $region61: #{_lambda_.9} parent=51 // pred_check
          %p378 = pneg %p99
        $region62: #{_lambda_.9} parent=51 // pred_check_branch
          %380 = sbr.rel (%p378) target = $region64
        $region63: #{_lambda_.9} parent=51 // pred_region
          %381 = dma.done [#allocation7], 3072
        $region64: #{_lambda_.9} parent=51 // pred_fallthru
          _
        // Predicated region
        $region65: #{_lambda_.9} parent=51 // pred_check
          %p382 = pneg %p120
        $region66: #{_lambda_.9} parent=51 // pred_check_branch
          %384 = sbr.rel (%p382) target = $region68
        $region67: #{_lambda_.9} parent=51 // pred_region
          %385 = dma.done [#allocation10], 48
        $region68: #{_lambda_.9} parent=51 // pred_fallthru
          _
        // Predicated region
        $region69: #{_lambda_.9} parent=51 // pred_check
          %p386 = pneg %p141
        $region70: #{_lambda_.9} parent=51 // pred_check_branch
          %388 = sbr.rel (%p386) target = $region72
        $region71: #{_lambda_.9} parent=51 // pred_region
          %389 = dma.done [#allocation10], 1024
        $region72: #{_lambda_.9} parent=51 // pred_fallthru
          _
        // Predicated region
        $region73: #{_lambda_.9} parent=51 // pred_check
          %p390 = pneg %p162
        $region74: #{_lambda_.9} parent=51 // pred_check_branch
          %392 = sbr.rel (%p390) target = $region76
        $region75: #{_lambda_.9} parent=51 // pred_region
          %393 = dma.done [#allocation13], 16
        $region76: #{_lambda_.9} parent=51 // pred_fallthru
          _
        // Predicated region
        $region77: #{_lambda_.9} parent=51 // pred_check
          %p394 = pneg %p183
        $region78: #{_lambda_.9} parent=51 // pred_check_branch
          %396 = sbr.rel (%p394) target = $region80
        $region79: #{_lambda_.9} parent=51 // pred_region
          %397 = dma.done [#allocation13], 16
        $region80: #{_lambda_.9} parent=51 // pred_fallthru
          _
        // Predicated region
        $region81: #{_lambda_.9} parent=51 // pred_check
          %p398 = pneg %p204
        $region82: #{_lambda_.9} parent=51 // pred_check_branch
          %400 = sbr.rel (%p398) target = $region84
        $region83: #{_lambda_.9} parent=51 // pred_region
          %401 = dma.done [#allocation16], 16
        $region84: #{_lambda_.9} parent=51 // pred_fallthru
          _
        %s402 = sand.u32 %s39, 1
        %s403 = scalar_lea.sflag [#allocation4], %s402
        %s404 = sand.u32 %s39, 1
        %s405 = smul.addr %s404, 8
        %s406 = scalar_lea.vmem [#allocation3], %s405
        %p407 = pneg %p52
        %p408 = pneg %p49
        %s409 = sand.u32 %s31, 1
        %s410 = scalar_lea.sflag [#allocation7], %s409
        %s411 = sand.u32 %s65, 1
        %s412 = scalar_lea.vmem [#allocation6], %s411
        %p413 = pneg %p78
        %p414 = pneg %p75
        %p415 = pneg %p99
        %p416 = pneg %p96
        %p417 = pneg %p120
        %p418 = pneg %p117
        %p419 = pneg %p141
        %p420 = pneg %p138
        %p421 = pneg %p162
        %p422 = pneg %p159
        %p423 = pneg %p183
        %p424 = pneg %p180
        %p425 = pneg %p204
        %p426 = pneg %p201
        %p427 = pneg %p230
        %p428 = pneg %p227
        %s429 = sand.u32 %s217, 1
        %s430 = scalar_lea.sflag [#allocation5], %s429
        %s431 = sand.u32 %s217, 1
        %s432 = smul.addr %s431, 8
        %s433 = scalar_lea.vmem [#allocation17], %s432
        %v435 = vld [vmem:[%s365] sm:$0xff]
        %v436 = vpack.c.bf16 %v435, %v435
        %v437 = vld [vmem:[#allocation8] sm:$0xff]
        %v438 = vld [vmem:[#allocation8 + $0x8] sm:$0xf]
        %v439 = vld [vmem:[#allocation8 + $0xc] sm:$0xff]
        %v440 = vld [vmem:[#allocation8 + $0x14] sm:$0xf]
        %v441 = vld [vmem:[#allocation8 + $0x18] sm:$0xff]
        %v442 = vld [vmem:[#allocation8 + $0x20] sm:$0xf]
        %v443 = vld [vmem:[#allocation8 + $0x24] sm:$0xff]
        %v444 = vld [vmem:[#allocation8 + $0x2c] sm:$0xf]
        %v445 = vld [vmem:[#allocation8 + $0x30] sm:$0xff]
        %v446 = vld [vmem:[#allocation8 + $0x38] sm:$0xf]
        %v447 = vld [vmem:[#allocation8 + $0x3c] sm:$0xff]
        %v448 = vld [vmem:[#allocation8 + $0x44] sm:$0xf]
        %v449 = vld [vmem:[#allocation8 + $0x48] sm:$0xff]
        %v450 = vld [vmem:[#allocation8 + $0x50] sm:$0xf]
        %v451 = vld [vmem:[#allocation8 + $0x54] sm:$0xff]
        %v452 = vld [vmem:[#allocation8 + $0x5c] sm:$0xf]
        %v453 = vld [vmem:[#allocation8 + $0x60] sm:$0xff]
        %v454 = vld [vmem:[#allocation8 + $0x68] sm:$0xf]
        %v455 = vld [vmem:[#allocation8 + $0x6c] sm:$0xff]
        %v456 = vld [vmem:[#allocation8 + $0x74] sm:$0xf]
        %v457 = vld [vmem:[#allocation8 + $0x78] sm:$0xff]
        %v458 = vld [vmem:[#allocation8 + $0x80] sm:$0xf]
        %v459 = vld [vmem:[#allocation8 + $0x84] sm:$0xff]
        %v460 = vld [vmem:[#allocation8 + $0x8c] sm:$0xf]
        %v461 = vld [vmem:[#allocation8 + $0x90] sm:$0xff]
        %v462 = vld [vmem:[#allocation8 + $0x98] sm:$0xf]
        %v463 = vld [vmem:[#allocation8 + $0x9c] sm:$0xff]
        %v464 = vld [vmem:[#allocation8 + $0xa4] sm:$0xf]
        %v465 = vld [vmem:[#allocation8 + $0xa8] sm:$0xff]
        %v466 = vld [vmem:[#allocation8 + $0xb0] sm:$0xf]
        %v467 = vld [vmem:[#allocation8 + $0xb4] sm:$0xff]
        %v468 = vld [vmem:[#allocation8 + $0xbc] sm:$0xf]
        %v469 = vld [vmem:[#allocation9] sm:$0x7]
        %v471 = vlaneseq
        %v472 = vshrl.u32 %v471, 7
        %v473 = vsub.s32 0, %v472
        %v474 = vrot.slane %v469, %v473
        %v475 = vlaneseq
        %v476 = vshrl.u32 %v475, 7
        %v477 = vsub.s32 1, %v476
        %v478 = vrot.slane %v469, %v477
        %v479 = vlaneseq
        %v480 = vshrl.u32 %v479, 7
        %v481 = vsub.s32 2, %v480
        %v482 = vrot.slane %v469, %v481
        %v518 = vunpack.c.l.b16 %v437
        %v519 = vunpack.c.h.b16 %v437
        %v520 = vunpack.c.l.b16 %v438
        %v521 = vunpack.c.l.b16 %v439
        %v522 = vunpack.c.h.b16 %v439
        %v523 = vunpack.c.l.b16 %v440
        %v524 = vunpack.c.l.b16 %v441
        %v525 = vunpack.c.h.b16 %v441
        %v526 = vunpack.c.l.b16 %v442
        %v527 = vunpack.c.l.b16 %v443
        %v528 = vunpack.c.h.b16 %v443
        %v529 = vunpack.c.l.b16 %v444
        %v530 = vunpack.c.l.b16 %v445
        %v531 = vunpack.c.h.b16 %v445
        %v532 = vunpack.c.l.b16 %v446
        %v533 = vunpack.c.l.b16 %v447
        %v534 = vunpack.c.h.b16 %v447
        %v535 = vunpack.c.l.b16 %v448
        %v536 = vunpack.c.l.b16 %v449
        %v537 = vunpack.c.h.b16 %v449
        %v538 = vunpack.c.l.b16 %v450
        %v539 = vunpack.c.l.b16 %v451
        %v540 = vunpack.c.h.b16 %v451
        %v541 = vunpack.c.l.b16 %v452
        %v542 = vunpack.c.l.b16 %v453
        %v543 = vunpack.c.h.b16 %v453
        %v544 = vunpack.c.l.b16 %v454
        %v545 = vunpack.c.l.b16 %v455
        %v546 = vunpack.c.h.b16 %v455
        %v547 = vunpack.c.l.b16 %v456
        %v548 = vunpack.c.l.b16 %v457
        %v549 = vunpack.c.h.b16 %v457
        %v550 = vunpack.c.l.b16 %v458
        %v551 = vunpack.c.l.b16 %v459
        %v552 = vunpack.c.h.b16 %v459
        %v553 = vunpack.c.l.b16 %v460
        %v554 = vunpack.c.l.b16 %v461
        %v555 = vunpack.c.h.b16 %v461
        %v556 = vunpack.c.l.b16 %v462
        %v557 = vunpack.c.l.b16 %v463
        %v558 = vunpack.c.h.b16 %v463
        %v559 = vunpack.c.l.b16 %v464
        %v560 = vunpack.c.l.b16 %v465
        %v561 = vunpack.c.h.b16 %v465
        %v562 = vunpack.c.l.b16 %v466
        %v563 = vunpack.c.l.b16 %v467
        %v564 = vunpack.c.h.b16 %v467
        %v565 = vunpack.c.l.b16 %v468
        %v566 = vpack.c.b16 %v521, %v518
        %v567 = vpack.c.b16 %v522, %v519
        %v568 = vpack.c.b16 %v523, %v520
        %v569 = vpack.c.b16 %v527, %v524
        %v570 = vpack.c.b16 %v528, %v525
        %v571 = vpack.c.b16 %v529, %v526
        %v572 = vpack.c.b16 %v533, %v530
        %v573 = vpack.c.b16 %v534, %v531
        %v574 = vpack.c.b16 %v535, %v532
        %v575 = vpack.c.b16 %v539, %v536
        %v576 = vpack.c.b16 %v540, %v537
        %v577 = vpack.c.b16 %v541, %v538
        %v578 = vpack.c.b16 %v545, %v542
        %v579 = vpack.c.b16 %v546, %v543
        %v580 = vpack.c.b16 %v547, %v544
        %v581 = vpack.c.b16 %v551, %v548
        %v582 = vpack.c.b16 %v552, %v549
        %v583 = vpack.c.b16 %v553, %v550
        %v584 = vpack.c.b16 %v557, %v554
        %v585 = vpack.c.b16 %v558, %v555
        %v586 = vpack.c.b16 %v559, %v556
        %v587 = vpack.c.b16 %v563, %v560
        %v588 = vpack.c.b16 %v564, %v561
        %v589 = vpack.c.b16 %v565, %v562
        %614 = vmatprep.subr.bf16.mxu0 %v567
        %615 = vmatpush1.bf16.msra.mxu0 %v566
        %616 = vmatprep.subr.bf16.mxu0 %v570
        %617 = vmatpush1.bf16.msra.mxu0 %v569
        %618 = vmatprep.subr.bf16.mxu0 %v573
        %619 = vmatpush1.bf16.msra.mxu0 %v572
        %620 = vmatprep.subr.bf16.mxu0 %v576
        %621 = vmatpush1.bf16.msra.mxu0 %v575
        %622 = vmatprep.subr.bf16.mxu0 %v579
        %623 = vmatpush1.bf16.msra.mxu0 %v578
        %624 = vmatprep.subr.bf16.mxu0 %v582
        %625 = vmatpush1.bf16.msra.mxu0 %v581
        %626 = vmatprep.subr.bf16.mxu0 %v585
        %627 = vmatpush1.bf16.msra.mxu0 %v584
        %628 = vmatprep.subr.bf16.mxu0 %v588
        %629 = vmatpush1.bf16.msra.mxu0 %v587
        %630 = vmatprep.subr.bf16.mxu0 0
        %631 = vmatpush1.bf16.msra.mxu0 0
        %632 = vmatprep.subr.bf16.mxu0 0
        %633 = vmatpush1.bf16.msra.mxu0 0
        %634 = vmatprep.subr.bf16.mxu0 0
        %635 = vmatpush1.bf16.msra.mxu0 0
        %636 = vmatprep.subr.bf16.mxu0 0
        %637 = vmatpush1.bf16.msra.mxu0 0
        %638 = vmatprep.subr.bf16.mxu0 0
        %639 = vmatpush1.bf16.msra.mxu0 0
        %640 = vmatprep.subr.bf16.mxu0 0
        %641 = vmatpush1.bf16.msra.mxu0 0
        %642 = vmatprep.subr.bf16.mxu0 0
        %643 = vmatpush1.bf16.msra.mxu0 0
        %644 = vmatprep.subr.bf16.mxu0 0
        %645 = vmatpush1.bf16.msra.mxu0 0
        %646 = vmatprep.mubr.bf16.mxu0 0
        %647 = vmatmul.mubr.bf16.gmra.mrb[0].mxu0 %v436
        %v648 = vpop.f32.mrb[0].mxu0
        %v649 = vadd.f32 %v474, %v648
        %v650 = vpop.f32.mrb[0].mxu0
        %v651 = vadd.f32 %v478, %v650
        %v652 = vpop.f32.mrb[0].mxu0
        %v653 = vpop.f32.mrb[0].mxu0
        %654 = vdwg.mxu0
        %655 = vmatprep.subr.bf16.mxu0 0
        %656 = vmatpush1.bf16.msra.mxu0 %v568
        %657 = vmatprep.subr.bf16.mxu0 0
        %658 = vmatpush1.bf16.msra.mxu0 %v571
        %659 = vmatprep.subr.bf16.mxu0 0
        %660 = vmatpush1.bf16.msra.mxu0 %v574
        %661 = vmatprep.subr.bf16.mxu0 0
        %662 = vmatpush1.bf16.msra.mxu0 %v577
        %663 = vmatprep.subr.bf16.mxu0 0
        %664 = vmatpush1.bf16.msra.mxu0 %v580
        %665 = vmatprep.subr.bf16.mxu0 0
        %666 = vmatpush1.bf16.msra.mxu0 %v583
        %667 = vmatprep.subr.bf16.mxu0 0
        %668 = vmatpush1.bf16.msra.mxu0 %v586
        %669 = vmatprep.subr.bf16.mxu0 0
        %670 = vmatpush1.bf16.msra.mxu0 %v589
        %671 = vmatprep.subr.bf16.mxu0 0
        %672 = vmatpush1.bf16.msra.mxu0 0
        %673 = vmatprep.subr.bf16.mxu0 0
        %674 = vmatpush1.bf16.msra.mxu0 0
        %675 = vmatprep.subr.bf16.mxu0 0
        %676 = vmatpush1.bf16.msra.mxu0 0
        %677 = vmatprep.subr.bf16.mxu0 0
        %678 = vmatpush1.bf16.msra.mxu0 0
        %679 = vmatprep.subr.bf16.mxu0 0
        %680 = vmatpush1.bf16.msra.mxu0 0
        %681 = vmatprep.subr.bf16.mxu0 0
        %682 = vmatpush1.bf16.msra.mxu0 0
        %683 = vmatprep.subr.bf16.mxu0 0
        %684 = vmatpush1.bf16.msra.mxu0 0
        %685 = vmatprep.subr.bf16.mxu0 0
        %686 = vmatpush1.bf16.msra.mxu0 0
        %687 = vmatprep.mubr.bf16.mxu0 0
        %688 = vmatmul.mubr.bf16.gmra.mrb[0].mxu0 %v436
        %v689 = vpop.f32.mrb[0].mxu0
        %v690 = vadd.f32 %v482, %v689
        %v691 = vpop.f32.mrb[0].mxu0
        %v692 = vpop.f32.mrb[0].mxu0
        %v693 = vpop.f32.mrb[0].mxu0
        %694 = vdwg.mxu0
        %v695 = vld [vmem:[%s373] sm:$0x1]
        %v696 = vpack.c.bf16 %v649, %v649
        %v697 = vpack.c.bf16 %v651, %v651
        %v698 = vpack.c.bf16 %v690, %v690
        %vm699 = vcmask 261120
        %v701 = vsel %vm699, %v696, 0
        %v704 = vsel %vm699, %v697, 0
        %706 = vmatprep.subr.bf16.mxu0 0
        %707 = vmatpush1.bf16.xpose.msra.mxu0 %v704
        %708 = vmatprep.subr.bf16.mxu0 0
        %709 = vmatpush1.bf16.xpose.msra.mxu0 0
        %710 = vmatprep.subr.bf16.mxu0 0
        %711 = vmatpush1.bf16.xpose.msra.mxu0 0
        %712 = vmatprep.subr.bf16.mxu0 0
        %713 = vmatpush1.bf16.xpose.msra.mxu0 0
        %714 = vmatprep.subr.bf16.mxu0 0
        %715 = vmatpush1.bf16.xpose.msra.mxu0 0
        %716 = vmatprep.subr.bf16.mxu0 0
        %717 = vmatpush1.bf16.xpose.msra.mxu0 0
        %718 = vmatprep.subr.bf16.mxu0 0
        %719 = vmatpush1.bf16.xpose.msra.mxu0 0
        %720 = vmatprep.subr.bf16.mxu0 0
        %721 = vmatpush1.bf16.xpose.msra.mxu0 0
        %722 = vmatprep.subr.bf16.mxu0 0
        %723 = vmatpush1.bf16.xpose.msra.mxu0 0
        %724 = vmatprep.subr.bf16.mxu0 0
        %725 = vmatpush1.bf16.xpose.msra.mxu0 0
        %726 = vmatprep.subr.bf16.mxu0 0
        %727 = vmatpush1.bf16.xpose.msra.mxu0 0
        %728 = vmatprep.subr.bf16.mxu0 0
        %729 = vmatpush1.bf16.xpose.msra.mxu0 0
        %730 = vmatprep.subr.bf16.mxu0 0
        %731 = vmatpush1.bf16.xpose.msra.mxu0 0
        %732 = vmatprep.subr.bf16.mxu0 0
        %733 = vmatpush1.bf16.xpose.msra.mxu0 0
        %734 = vmatprep.subr.bf16.mxu0 0
        %735 = vmatpush1.bf16.xpose.msra.mxu0 0
        %736 = vmatprep.subr.bf16.mxu0 0
        %737 = vmatpush1.bf16.xpose.msra.mxu0 0
        %738 = vmatprep.mubr.bf16.mxu0 0
        %739 = vmatmul.mubr.bf16.gmra.mrb[0].mxu0 %v701
        %v740 = vpop.f32.mrb[0].mxu0
        %v741 = vadd.f32 0.0, %v740
        %v742 = vpop.f32.mrb[0].mxu0
        %v743 = vpop.f32.mrb[0].mxu0
        %v744 = vpop.f32.mrb[0].mxu0
        %745 = vdwg.mxu0
        %v746 = vmul.f32 %v741, 0.17677669
        %v748 = vlaneseq
        %v749 = vshrl.u32 %v748, 7
        %v750 = vsub.s32 0, %v749
        %v751 = vrot.slane %v695, %v750
        %v753 = vadd.f32 %v746, %v751
        %vm754 = vcmask 64512
        %v755 = vsel %vm754, %v753, -inf
        %756 = vmax.xlane.f32.xlu0 %v755
        %v757 = vpop.xlane.xlu0 %756
        %v758 = vsub.f32 %v753, %v757
        %v759 = vmul.f32 %v758, 1.442695
        %v760 = vpow.pop %v759
        %v761 = vsel %vm754, %v760, 0.0
        %762 = vadd.xlane.f32.xlu0 %v761
        %v763 = vpop.xlane.xlu0 %762
        %v764 = vrcp.pop %v763
        %v765 = vmul.f32 %v760, %v764
        %v766 = vpack.c.bf16 %v765, %v765
        %v768 = vsel %vm754, %v766, 0
        %vm770 = vcmask 1043456
        %v772 = vsel %vm770, %v698, 0
        %774 = vmatprep.subr.bf16.mxu0 0
        %775 = vmatpush1.bf16.msra.mxu0 %v772
        %776 = vmatprep.subr.bf16.mxu0 0
        %777 = vmatpush1.bf16.msra.mxu0 0
        %778 = vmatprep.subr.bf16.mxu0 0
        %779 = vmatpush1.bf16.msra.mxu0 0
        %780 = vmatprep.subr.bf16.mxu0 0
        %781 = vmatpush1.bf16.msra.mxu0 0
        %782 = vmatprep.subr.bf16.mxu0 0
        %783 = vmatpush1.bf16.msra.mxu0 0
        %784 = vmatprep.subr.bf16.mxu0 0
        %785 = vmatpush1.bf16.msra.mxu0 0
        %786 = vmatprep.subr.bf16.mxu0 0
        %787 = vmatpush1.bf16.msra.mxu0 0
        %788 = vmatprep.subr.bf16.mxu0 0
        %789 = vmatpush1.bf16.msra.mxu0 0
        %790 = vmatprep.subr.bf16.mxu0 0
        %791 = vmatpush1.bf16.msra.mxu0 0
        %792 = vmatprep.subr.bf16.mxu0 0
        %793 = vmatpush1.bf16.msra.mxu0 0
        %794 = vmatprep.subr.bf16.mxu0 0
        %795 = vmatpush1.bf16.msra.mxu0 0
        %796 = vmatprep.subr.bf16.mxu0 0
        %797 = vmatpush1.bf16.msra.mxu0 0
        %798 = vmatprep.subr.bf16.mxu0 0
        %799 = vmatpush1.bf16.msra.mxu0 0
        %800 = vmatprep.subr.bf16.mxu0 0
        %801 = vmatpush1.bf16.msra.mxu0 0
        %802 = vmatprep.subr.bf16.mxu0 0
        %803 = vmatpush1.bf16.msra.mxu0 0
        %804 = vmatprep.subr.bf16.mxu0 0
        %805 = vmatpush1.bf16.msra.mxu0 0
        %806 = vmatprep.mubr.bf16.mxu0 0
        %807 = vmatmul.mubr.bf16.gmra.mrb[0].mxu0 %v768
        %v808 = vpop.f32.mrb[0].mxu0
        %v809 = vadd.f32 0.0, %v808
        %v810 = vpop.f32.mrb[0].mxu0
        %v811 = vpop.f32.mrb[0].mxu0
        %v812 = vpop.f32.mrb[0].mxu0
        %813 = vdwg.mxu0
        %814 = vst.msk [vmem:[#allocation2] sm:$0xff] %vm699, %v809
        %816 = vrot.lane.b32.xlu0 %v696, 96
        %v817 = vpop.permute.xlu0 %816
        %819 = vrot.lane.b32.xlu0 %v697, 96
        %v820 = vpop.permute.xlu0 %819
        %v822 = vsel %vm699, %v817, 0
        %v825 = vsel %vm699, %v820, 0
        %827 = vmatprep.subr.bf16.mxu0 0
        %828 = vmatpush1.bf16.xpose.msra.mxu0 %v825
        %829 = vmatprep.subr.bf16.mxu0 0
        %830 = vmatpush1.bf16.xpose.msra.mxu0 0
        %831 = vmatprep.subr.bf16.mxu0 0
        %832 = vmatpush1.bf16.xpose.msra.mxu0 0
        %833 = vmatprep.subr.bf16.mxu0 0
        %834 = vmatpush1.bf16.xpose.msra.mxu0 0
        %835 = vmatprep.subr.bf16.mxu0 0
        %836 = vmatpush1.bf16.xpose.msra.mxu0 0
        %837 = vmatprep.subr.bf16.mxu0 0
        %838 = vmatpush1.bf16.xpose.msra.mxu0 0
        %839 = vmatprep.subr.bf16.mxu0 0
        %840 = vmatpush1.bf16.xpose.msra.mxu0 0
        %841 = vmatprep.subr.bf16.mxu0 0
        %842 = vmatpush1.bf16.xpose.msra.mxu0 0
        %843 = vmatprep.subr.bf16.mxu0 0
        %844 = vmatpush1.bf16.xpose.msra.mxu0 0
        %845 = vmatprep.subr.bf16.mxu0 0
        %846 = vmatpush1.bf16.xpose.msra.mxu0 0
        %847 = vmatprep.subr.bf16.mxu0 0
        %848 = vmatpush1.bf16.xpose.msra.mxu0 0
        %849 = vmatprep.subr.bf16.mxu0 0
        %850 = vmatpush1.bf16.xpose.msra.mxu0 0
        %851 = vmatprep.subr.bf16.mxu0 0
        %852 = vmatpush1.bf16.xpose.msra.mxu0 0
        %853 = vmatprep.subr.bf16.mxu0 0
        %854 = vmatpush1.bf16.xpose.msra.mxu0 0
        %855 = vmatprep.subr.bf16.mxu0 0
        %856 = vmatpush1.bf16.xpose.msra.mxu0 0
        %857 = vmatprep.subr.bf16.mxu0 0
        %858 = vmatpush1.bf16.xpose.msra.mxu0 0
        %859 = vmatprep.mubr.bf16.mxu0 0
        %860 = vmatmul.mubr.bf16.gmra.mrb[0].mxu0 %v822
        %v861 = vpop.f32.mrb[0].mxu0
        %v862 = vadd.f32 0.0, %v861
        %v863 = vpop.f32.mrb[0].mxu0
        %v864 = vpop.f32.mrb[0].mxu0
        %v865 = vpop.f32.mrb[0].mxu0
        %866 = vdwg.mxu0
        %v867 = vmul.f32 %v862, 0.17677669
        %v868 = vadd.f32 %v867, %v751
        %v869 = vsel %vm754, %v868, -inf
        %870 = vmax.xlane.f32.xlu0 %v869
        %v871 = vpop.xlane.xlu0 %870
        %v872 = vsub.f32 %v868, %v871
        %v873 = vmul.f32 %v872, 1.442695
        %v874 = vpow.pop %v873
        %v875 = vsel %vm754, %v874, 0.0
        %876 = vadd.xlane.f32.xlu0 %v875
        %v877 = vpop.xlane.xlu0 %876
        %v878 = vrcp.pop %v877
        %v879 = vmul.f32 %v874, %v878
        %v880 = vpack.c.bf16 %v879, %v879
        %882 = vrot.lane.b32.xlu0 %v698, 96
        %v883 = vpop.permute.xlu0 %882
        %v885 = vsel %vm754, %v880, 0
        %v888 = vsel %vm770, %v883, 0
        %890 = vmatprep.subr.bf16.mxu0 0
        %891 = vmatpush1.bf16.msra.mxu0 %v888
        %892 = vmatprep.subr.bf16.mxu0 0
        %893 = vmatpush1.bf16.msra.mxu0 0
        %894 = vmatprep.subr.bf16.mxu0 0
        %895 = vmatpush1.bf16.msra.mxu0 0
        %896 = vmatprep.subr.bf16.mxu0 0
        %897 = vmatpush1.bf16.msra.mxu0 0
        %898 = vmatprep.subr.bf16.mxu0 0
        %899 = vmatpush1.bf16.msra.mxu0 0
        %900 = vmatprep.subr.bf16.mxu0 0
        %901 = vmatpush1.bf16.msra.mxu0 0
        %902 = vmatprep.subr.bf16.mxu0 0
        %903 = vmatpush1.bf16.msra.mxu0 0
        %904 = vmatprep.subr.bf16.mxu0 0
        %905 = vmatpush1.bf16.msra.mxu0 0
        %906 = vmatprep.subr.bf16.mxu0 0
        %907 = vmatpush1.bf16.msra.mxu0 0
        %908 = vmatprep.subr.bf16.mxu0 0
        %909 = vmatpush1.bf16.msra.mxu0 0
        %910 = vmatprep.subr.bf16.mxu0 0
        %911 = vmatpush1.bf16.msra.mxu0 0
        %912 = vmatprep.subr.bf16.mxu0 0
        %913 = vmatpush1.bf16.msra.mxu0 0
        %914 = vmatprep.subr.bf16.mxu0 0
        %915 = vmatpush1.bf16.msra.mxu0 0
        %916 = vmatprep.subr.bf16.mxu0 0
        %917 = vmatpush1.bf16.msra.mxu0 0
        %918 = vmatprep.subr.bf16.mxu0 0
        %919 = vmatpush1.bf16.msra.mxu0 0
        %920 = vmatprep.subr.bf16.mxu0 0
        %921 = vmatpush1.bf16.msra.mxu0 0
        %922 = vmatprep.mubr.bf16.mxu0 0
        %923 = vmatmul.mubr.bf16.gmra.mrb[0].mxu0 %v885
        %v924 = vpop.f32.mrb[0].mxu0
        %v925 = vadd.f32 0.0, %v924
        %v926 = vpop.f32.mrb[0].mxu0
        %v927 = vpop.f32.mrb[0].mxu0
        %v928 = vpop.f32.mrb[0].mxu0
        %929 = vdwg.mxu0
        %931 = vrot.lane.b32.xlu0 %v925, 32
        %v932 = vpop.permute.xlu0 %931
        %vm934 = vcmask 523520
        %935 = vst.msk [vmem:[#allocation2] sm:$0xff] %vm934, %v932
        %936 = vrot.lane.b32.xlu0 %v696, 64
        %v937 = vpop.permute.xlu0 %936
        %938 = vrot.lane.b32.xlu0 %v697, 64
        %v939 = vpop.permute.xlu0 %938
        %v941 = vsel %vm699, %v937, 0
        %v944 = vsel %vm699, %v939, 0
        %946 = vmatprep.subr.bf16.mxu0 0
        %947 = vmatpush1.bf16.xpose.msra.mxu0 %v944
        %948 = vmatprep.subr.bf16.mxu0 0
        %949 = vmatpush1.bf16.xpose.msra.mxu0 0
        %950 = vmatprep.subr.bf16.mxu0 0
        %951 = vmatpush1.bf16.xpose.msra.mxu0 0
        %952 = vmatprep.subr.bf16.mxu0 0
        %953 = vmatpush1.bf16.xpose.msra.mxu0 0
        %954 = vmatprep.subr.bf16.mxu0 0
        %955 = vmatpush1.bf16.xpose.msra.mxu0 0
        %956 = vmatprep.subr.bf16.mxu0 0
        %957 = vmatpush1.bf16.xpose.msra.mxu0 0
        %958 = vmatprep.subr.bf16.mxu0 0
        %959 = vmatpush1.bf16.xpose.msra.mxu0 0
        %960 = vmatprep.subr.bf16.mxu0 0
        %961 = vmatpush1.bf16.xpose.msra.mxu0 0
        %962 = vmatprep.subr.bf16.mxu0 0
        %963 = vmatpush1.bf16.xpose.msra.mxu0 0
        %964 = vmatprep.subr.bf16.mxu0 0
        %965 = vmatpush1.bf16.xpose.msra.mxu0 0
        %966 = vmatprep.subr.bf16.mxu0 0
        %967 = vmatpush1.bf16.xpose.msra.mxu0 0
        %968 = vmatprep.subr.bf16.mxu0 0
        %969 = vmatpush1.bf16.xpose.msra.mxu0 0
        %970 = vmatprep.subr.bf16.mxu0 0
        %971 = vmatpush1.bf16.xpose.msra.mxu0 0
        %972 = vmatprep.subr.bf16.mxu0 0
        %973 = vmatpush1.bf16.xpose.msra.mxu0 0
        %974 = vmatprep.subr.bf16.mxu0 0
        %975 = vmatpush1.bf16.xpose.msra.mxu0 0
        %976 = vmatprep.subr.bf16.mxu0 0
        %977 = vmatpush1.bf16.xpose.msra.mxu0 0
        %978 = vmatprep.mubr.bf16.mxu0 0
        %979 = vmatmul.mubr.bf16.gmra.mrb[0].mxu0 %v941
        %v980 = vpop.f32.mrb[0].mxu0
        %v981 = vadd.f32 0.0, %v980
        %v982 = vpop.f32.mrb[0].mxu0
        %v983 = vpop.f32.mrb[0].mxu0
        %v984 = vpop.f32.mrb[0].mxu0
        %985 = vdwg.mxu0
        %v986 = vmul.f32 %v981, 0.17677669
        %v987 = vadd.f32 %v986, %v751
        %v988 = vsel %vm754, %v987, -inf
        %989 = vmax.xlane.f32.xlu0 %v988
        %v990 = vpop.xlane.xlu0 %989
        %v991 = vsub.f32 %v987, %v990
        %v992 = vmul.f32 %v991, 1.442695
        %v993 = vpow.pop %v992
        %v994 = vsel %vm754, %v993, 0.0
        %995 = vadd.xlane.f32.xlu0 %v994
        %v996 = vpop.xlane.xlu0 %995
        %v997 = vrcp.pop %v996
        %v998 = vmul.f32 %v993, %v997
        %v999 = vpack.c.bf16 %v998, %v998
        %1000 = vrot.lane.b32.xlu0 %v698, 64
        %v1001 = vpop.permute.xlu0 %1000
        %v1003 = vsel %vm754, %v999, 0
        %v1006 = vsel %vm770, %v1001, 0
        %1008 = vmatprep.subr.bf16.mxu0 0
        %1009 = vmatpush1.bf16.msra.mxu0 %v1006
        %1010 = vmatprep.subr.bf16.mxu0 0
        %1011 = vmatpush1.bf16.msra.mxu0 0
        %1012 = vmatprep.subr.bf16.mxu0 0
        %1013 = vmatpush1.bf16.msra.mxu0 0
        %1014 = vmatprep.subr.bf16.mxu0 0
        %1015 = vmatpush1.bf16.msra.mxu0 0
        %1016 = vmatprep.subr.bf16.mxu0 0
        %1017 = vmatpush1.bf16.msra.mxu0 0
        %1018 = vmatprep.subr.bf16.mxu0 0
        %1019 = vmatpush1.bf16.msra.mxu0 0
        %1020 = vmatprep.subr.bf16.mxu0 0
        %1021 = vmatpush1.bf16.msra.mxu0 0
        %1022 = vmatprep.subr.bf16.mxu0 0
        %1023 = vmatpush1.bf16.msra.mxu0 0
        %1024 = vmatprep.subr.bf16.mxu0 0
        %1025 = vmatpush1.bf16.msra.mxu0 0
        %1026 = vmatprep.subr.bf16.mxu0 0
        %1027 = vmatpush1.bf16.msra.mxu0 0
        %1028 = vmatprep.subr.bf16.mxu0 0
        %1029 = vmatpush1.bf16.msra.mxu0 0
        %1030 = vmatprep.subr.bf16.mxu0 0
        %1031 = vmatpush1.bf16.msra.mxu0 0
        %1032 = vmatprep.subr.bf16.mxu0 0
        %1033 = vmatpush1.bf16.msra.mxu0 0
        %1034 = vmatprep.subr.bf16.mxu0 0
        %1035 = vmatpush1.bf16.msra.mxu0 0
        %1036 = vmatprep.subr.bf16.mxu0 0
        %1037 = vmatpush1.bf16.msra.mxu0 0
        %1038 = vmatprep.subr.bf16.mxu0 0
        %1039 = vmatpush1.bf16.msra.mxu0 0
        %1040 = vmatprep.mubr.bf16.mxu0 0
        %1041 = vmatmul.mubr.bf16.gmra.mrb[0].mxu0 %v1003
        %v1042 = vpop.f32.mrb[0].mxu0
        %v1043 = vadd.f32 0.0, %v1042
        %v1044 = vpop.f32.mrb[0].mxu0
        %v1045 = vpop.f32.mrb[0].mxu0
        %v1046 = vpop.f32.mrb[0].mxu0
        %1047 = vdwg.mxu0
        %1049 = vrot.lane.b32.xlu0 %v1043, 64
        %v1050 = vpop.permute.xlu0 %1049
        %vm1052 = vcmask 785920
        %1053 = vst.msk [vmem:[#allocation2] sm:$0xff] %vm1052, %v1050
        %1054 = vrot.lane.b32.xlu0 %v696, 32
        %v1055 = vpop.permute.xlu0 %1054
        %1056 = vrot.lane.b32.xlu0 %v697, 32
        %v1057 = vpop.permute.xlu0 %1056
        %v1059 = vsel %vm699, %v1055, 0
        %v1062 = vsel %vm699, %v1057, 0
        %1064 = vmatprep.subr.bf16.mxu0 0
        %1065 = vmatpush1.bf16.xpose.msra.mxu0 %v1062
        %1066 = vmatprep.subr.bf16.mxu0 0
        %1067 = vmatpush1.bf16.xpose.msra.mxu0 0
        %1068 = vmatprep.subr.bf16.mxu0 0
        %1069 = vmatpush1.bf16.xpose.msra.mxu0 0
        %1070 = vmatprep.subr.bf16.mxu0 0
        %1071 = vmatpush1.bf16.xpose.msra.mxu0 0
        %1072 = vmatprep.subr.bf16.mxu0 0
        %1073 = vmatpush1.bf16.xpose.msra.mxu0 0
        %1074 = vmatprep.subr.bf16.mxu0 0
        %1075 = vmatpush1.bf16.xpose.msra.mxu0 0
        %1076 = vmatprep.subr.bf16.mxu0 0
        %1077 = vmatpush1.bf16.xpose.msra.mxu0 0
        %1078 = vmatprep.subr.bf16.mxu0 0
        %1079 = vmatpush1.bf16.xpose.msra.mxu0 0
        %1080 = vmatprep.subr.bf16.mxu0 0
        %1081 = vmatpush1.bf16.xpose.msra.mxu0 0
        %1082 = vmatprep.subr.bf16.mxu0 0
        %1083 = vmatpush1.bf16.xpose.msra.mxu0 0
        %1084 = vmatprep.subr.bf16.mxu0 0
        %1085 = vmatpush1.bf16.xpose.msra.mxu0 0
        %1086 = vmatprep.subr.bf16.mxu0 0
        %1087 = vmatpush1.bf16.xpose.msra.mxu0 0
        %1088 = vmatprep.subr.bf16.mxu0 0
        %1089 = vmatpush1.bf16.xpose.msra.mxu0 0
        %1090 = vmatprep.subr.bf16.mxu0 0
        %1091 = vmatpush1.bf16.xpose.msra.mxu0 0
        %1092 = vmatprep.subr.bf16.mxu0 0
        %1093 = vmatpush1.bf16.xpose.msra.mxu0 0
        %1094 = vmatprep.subr.bf16.mxu0 0
        %1095 = vmatpush1.bf16.xpose.msra.mxu0 0
        %1096 = vmatprep.mubr.bf16.mxu0 0
        %1097 = vmatmul.mubr.bf16.gmra.mrb[0].mxu0 %v1059
        %v1098 = vpop.f32.mrb[0].mxu0
        %v1099 = vadd.f32 0.0, %v1098
        %v1100 = vpop.f32.mrb[0].mxu0
        %v1101 = vpop.f32.mrb[0].mxu0
        %v1102 = vpop.f32.mrb[0].mxu0
        %1103 = vdwg.mxu0
        %v1104 = vmul.f32 %v1099, 0.17677669
        %v1105 = vadd.f32 %v1104, %v751
        %v1106 = vsel %vm754, %v1105, -inf
        %1107 = vmax.xlane.f32.xlu0 %v1106
        %v1108 = vpop.xlane.xlu0 %1107
        %v1109 = vsub.f32 %v1105, %v1108
        %v1110 = vmul.f32 %v1109, 1.442695
        %v1111 = vpow.pop %v1110
        %v1112 = vsel %vm754, %v1111, 0.0
        %1113 = vadd.xlane.f32.xlu0 %v1112
        %v1114 = vpop.xlane.xlu0 %1113
        %v1115 = vrcp.pop %v1114
        %v1116 = vmul.f32 %v1111, %v1115
        %v1117 = vpack.c.bf16 %v1116, %v1116
        %1118 = vrot.lane.b32.xlu0 %v698, 32
        %v1119 = vpop.permute.xlu0 %1118
        %v1121 = vsel %vm754, %v1117, 0
        %v1124 = vsel %vm770, %v1119, 0
        %1126 = vmatprep.subr.bf16.mxu0 0
        %1127 = vmatpush1.bf16.msra.mxu0 %v1124
        %1128 = vmatprep.subr.bf16.mxu0 0
        %1129 = vmatpush1.bf16.msra.mxu0 0
        %1130 = vmatprep.subr.bf16.mxu0 0
        %1131 = vmatpush1.bf16.msra.mxu0 0
        %1132 = vmatprep.subr.bf16.mxu0 0
        %1133 = vmatpush1.bf16.msra.mxu0 0
        %1134 = vmatprep.subr.bf16.mxu0 0
        %1135 = vmatpush1.bf16.msra.mxu0 0
        %1136 = vmatprep.subr.bf16.mxu0 0
        %1137 = vmatpush1.bf16.msra.mxu0 0
        %1138 = vmatprep.subr.bf16.mxu0 0
        %1139 = vmatpush1.bf16.msra.mxu0 0
        %1140 = vmatprep.subr.bf16.mxu0 0
        %1141 = vmatpush1.bf16.msra.mxu0 0
        %1142 = vmatprep.subr.bf16.mxu0 0
        %1143 = vmatpush1.bf16.msra.mxu0 0
        %1144 = vmatprep.subr.bf16.mxu0 0
        %1145 = vmatpush1.bf16.msra.mxu0 0
        %1146 = vmatprep.subr.bf16.mxu0 0
        %1147 = vmatpush1.bf16.msra.mxu0 0
        %1148 = vmatprep.subr.bf16.mxu0 0
        %1149 = vmatpush1.bf16.msra.mxu0 0
        %1150 = vmatprep.subr.bf16.mxu0 0
        %1151 = vmatpush1.bf16.msra.mxu0 0
        %1152 = vmatprep.subr.bf16.mxu0 0
        %1153 = vmatpush1.bf16.msra.mxu0 0
        %1154 = vmatprep.subr.bf16.mxu0 0
        %1155 = vmatpush1.bf16.msra.mxu0 0
        %1156 = vmatprep.subr.bf16.mxu0 0
        %1157 = vmatpush1.bf16.msra.mxu0 0
        %1158 = vmatprep.mubr.bf16.mxu0 0
        %1159 = vmatmul.mubr.bf16.gmra.mrb[0].mxu0 %v1121
        %v1160 = vpop.f32.mrb[0].mxu0
        %v1161 = vadd.f32 0.0, %v1160
        %v1162 = vpop.f32.mrb[0].mxu0
        %v1163 = vpop.f32.mrb[0].mxu0
        %v1164 = vpop.f32.mrb[0].mxu0
        %1165 = vdwg.mxu0
        %1167 = vrot.lane.b32.xlu0 %v1161, 96
        %v1168 = vpop.permute.xlu0 %1167
        %vm1170 = vcmask 1048320
        %1171 = vst.msk [vmem:[#allocation2] sm:$0xff] %vm1170, %v1168
        %v1172 = vld [vmem:[#allocation2] sm:$0xff]
        %v1173 = vpack.c.bf16 %v1172, %v1172
        %v1174 = vld [vmem:[#allocation11] sm:$0xf]
        %v1175 = vld [vmem:[#allocation11 + $0x4] sm:$0xf]
        %v1176 = vld [vmem:[#allocation11 + $0x8] sm:$0xf]
        %v1177 = vld [vmem:[#allocation11 + $0xc] sm:$0xf]
        %v1178 = vld [vmem:[#allocation11 + $0x10] sm:$0xf]
        %v1179 = vld [vmem:[#allocation11 + $0x14] sm:$0xf]
        %v1180 = vld [vmem:[#allocation11 + $0x18] sm:$0xf]
        %v1181 = vld [vmem:[#allocation11 + $0x1c] sm:$0xf]
        %v1182 = vld [vmem:[#allocation11 + $0x20] sm:$0xf]
        %v1183 = vld [vmem:[#allocation11 + $0x24] sm:$0xf]
        %v1184 = vld [vmem:[#allocation11 + $0x28] sm:$0xf]
        %v1185 = vld [vmem:[#allocation11 + $0x2c] sm:$0xf]
        %v1186 = vld [vmem:[#allocation11 + $0x30] sm:$0xf]
        %v1187 = vld [vmem:[#allocation11 + $0x34] sm:$0xf]
        %v1188 = vld [vmem:[#allocation11 + $0x38] sm:$0xf]
        %v1189 = vld [vmem:[#allocation11 + $0x3c] sm:$0xf]
        %v1190 = vld [vmem:[#allocation12] sm:$0x1]
        %v1192 = vlaneseq
        %v1193 = vshrl.u32 %v1192, 7
        %v1194 = vsub.s32 0, %v1193
        %v1195 = vrot.slane %v1190, %v1194
        %v1213 = vunpack.c.l.b16 %v1174
        %v1214 = vunpack.c.l.b16 %v1175
        %v1215 = vunpack.c.l.b16 %v1176
        %v1216 = vunpack.c.l.b16 %v1177
        %v1217 = vunpack.c.l.b16 %v1178
        %v1218 = vunpack.c.l.b16 %v1179
        %v1219 = vunpack.c.l.b16 %v1180
        %v1220 = vunpack.c.l.b16 %v1181
        %v1221 = vunpack.c.l.b16 %v1182
        %v1222 = vunpack.c.l.b16 %v1183
        %v1223 = vunpack.c.l.b16 %v1184
        %v1224 = vunpack.c.l.b16 %v1185
        %v1225 = vunpack.c.l.b16 %v1186
        %v1226 = vunpack.c.l.b16 %v1187
        %v1227 = vunpack.c.l.b16 %v1188
        %v1228 = vunpack.c.l.b16 %v1189
        %v1229 = vpack.c.b16 %v1214, %v1213
        %v1230 = vpack.c.b16 %v1216, %v1215
        %v1231 = vpack.c.b16 %v1218, %v1217
        %v1232 = vpack.c.b16 %v1220, %v1219
        %v1233 = vpack.c.b16 %v1222, %v1221
        %v1234 = vpack.c.b16 %v1224, %v1223
        %v1235 = vpack.c.b16 %v1226, %v1225
        %v1236 = vpack.c.b16 %v1228, %v1227
        %1245 = vmatprep.subr.bf16.mxu0 0
        %1246 = vmatpush1.bf16.msra.mxu0 %v1229
        %1247 = vmatprep.subr.bf16.mxu0 0
        %1248 = vmatpush1.bf16.msra.mxu0 %v1230
        %1249 = vmatprep.subr.bf16.mxu0 0
        %1250 = vmatpush1.bf16.msra.mxu0 %v1231
        %1251 = vmatprep.subr.bf16.mxu0 0
        %1252 = vmatpush1.bf16.msra.mxu0 %v1232
        %1253 = vmatprep.subr.bf16.mxu0 0
        %1254 = vmatpush1.bf16.msra.mxu0 %v1233
        %1255 = vmatprep.subr.bf16.mxu0 0
        %1256 = vmatpush1.bf16.msra.mxu0 %v1234
        %1257 = vmatprep.subr.bf16.mxu0 0
        %1258 = vmatpush1.bf16.msra.mxu0 %v1235
        %1259 = vmatprep.subr.bf16.mxu0 0
        %1260 = vmatpush1.bf16.msra.mxu0 %v1236
        %1261 = vmatprep.subr.bf16.mxu0 0
        %1262 = vmatpush1.bf16.msra.mxu0 0
        %1263 = vmatprep.subr.bf16.mxu0 0
        %1264 = vmatpush1.bf16.msra.mxu0 0
        %1265 = vmatprep.subr.bf16.mxu0 0
        %1266 = vmatpush1.bf16.msra.mxu0 0
        %1267 = vmatprep.subr.bf16.mxu0 0
        %1268 = vmatpush1.bf16.msra.mxu0 0
        %1269 = vmatprep.subr.bf16.mxu0 0
        %1270 = vmatpush1.bf16.msra.mxu0 0
        %1271 = vmatprep.subr.bf16.mxu0 0
        %1272 = vmatpush1.bf16.msra.mxu0 0
        %1273 = vmatprep.subr.bf16.mxu0 0
        %1274 = vmatpush1.bf16.msra.mxu0 0
        %1275 = vmatprep.subr.bf16.mxu0 0
        %1276 = vmatpush1.bf16.msra.mxu0 0
        %1277 = vmatprep.mubr.bf16.mxu0 0
        %1278 = vmatmul.mubr.bf16.gmra.mrb[0].mxu0 %v1173
        %v1279 = vpop.f32.mrb[0].mxu0
        %v1280 = vadd.f32 %v1195, %v1279
        %v1281 = vpop.f32.mrb[0].mxu0
        %v1282 = vpop.f32.mrb[0].mxu0
        %v1283 = vpop.f32.mrb[0].mxu0
        %1284 = vdwg.mxu0
        %v1285 = vadd.f32 %v1280, %v435
        %v1286 = vld [vmem:[#allocation14] sm:$0x1]
        %v1287 = vld [vmem:[#allocation15] sm:$0x1]
        %1288 = vadd.xlane.f32.xlu0 %v1285
        %v1289 = vpop.xlane.xlu0 %1288
        %v1290 = vrcp.pop 128.0
        %v1291 = vmul.f32 %v1289, %v1290
        %v1292 = vsub.f32 %v1285, %v1291
        %v1293 = vmul.f32 %v1292, %v1292
        %1294 = vadd.xlane.f32.xlu0 %v1293
        %v1295 = vpop.xlane.xlu0 %1294
        %v1296 = vmul.f32 %v1295, %v1290
        %v1297 = vadd.f32 %v1296, 1e-05
        %v1298 = vrsqrt.pop %v1297
        %v1299 = vmul.f32 %v1292, %v1298
        %v1301 = vlaneseq
        %v1302 = vshrl.u32 %v1301, 7
        %v1303 = vsub.s32 0, %v1302
        %v1304 = vrot.slane %v1286, %v1303
        %v1306 = vmul.f32 %v1299, %v1304
        %v1308 = vlaneseq
        %v1309 = vshrl.u32 %v1308, 7
        %v1310 = vsub.s32 0, %v1309
        %v1311 = vrot.slane %v1287, %v1310
        %v1313 = vadd.f32 %v1306, %v1311
        %1314 = vst [vmem:[%s433] sm:$0xff] %v1313
        %s1315 = sand.u32 %s217, 1
        %s1316 = scalar_lea.sflag [#allocation5], %s1315
        %s1317 = sand.u32 %s217, 1
        %s1318 = smul.addr %s1317, 8
        %s1319 = scalar_lea.vmem [#allocation17], %s1318
        // Predicated region
        $region85: #{_lambda_.9} parent=51 // pred_check
          %p1320 = pneg %p227
        $region86: #{_lambda_.9} parent=51 // pred_check_branch
          %1322 = sbr.rel (%p1320) target = $region88
        $region87: #{_lambda_.9} parent=51 // pred_region
          %s1324 = ssub.s32 128, 128
          %1325 = vsyncadd %s1316, %s1324
          %s1326 = smul.addr %s31, 128
          %s1327 = scalar_lea.hbm %s8, %s1326
          %s1329 = sshll.u32 %s1319, 4
          %s1330 = int_to_ptr.vmem [resolvable:$true] %s1329
          %1332 = dma.vmem_to_hbm [thread:$0]  %s1330, 128, %s1327, %s1316
        $region88: #{_lambda_.9} parent=51 // pred_fallthru
          _
      $region52: #{_lambda_.9} parent=5 // pred_fallthru
        _
      %p1333 = scmp.le.s32.totalorder 2, %s26
      // Predicated region
      $region89: #{_lambda_.9} parent=5 // pred_check
        %p1334 = pneg %p1333
      $region90: #{_lambda_.9} parent=5 // pred_check_branch
        %1336 = sbr.rel (%p1334) target = $region92
      $region91: #{_lambda_.9} parent=5 // pred_region
        %s1337 = ssub.s32 %s26, 2
        // Predicated region
        $region93: #{_lambda_.9} parent=91 // pred_check
          %p1338 = pneg %p233
        $region94: #{_lambda_.9} parent=91 // pred_check_branch
          %1340 = sbr.rel (%p1338) target = $region96
        $region95: #{_lambda_.9} parent=91 // pred_region
          %s1341 = sand.u32 %s218, 1
          %s1342 = scalar_lea.sflag [#allocation5], %s1341
          %s1343 = sand.u32 %s218, 1
          %s1344 = smul.addr %s1343, 8
          %s1345 = scalar_lea.vmem [#allocation17], %s1344
          %1346 = dma.done %s1342, 128
        $region96: #{_lambda_.9} parent=91 // pred_fallthru
          _
      $region92: #{_lambda_.9} parent=5 // pred_fallthru
        _
    $region6: #{_lambda_.9} parent=1 // loop_footer
      %s30 = sadd.s32 1, %s26
    $region7: #{_lambda_.9} parent=1 // loop_footer_branch
      %25 = sbr.rel target = $region3
    $region8: #{_lambda_.9} parent=1 // loop_exit
      _
    %1347 = vsyncpa [#allocation4], 1
    %s1348 = scalar_lea.sflag [#allocation4], 1
    %1349 = vsyncpa %s1348, 1
    %1350 = vsyncpa [#allocation7], 1
    %s1351 = scalar_lea.sflag [#allocation7], 1
    %1352 = vsyncpa %s1351, 1
    %1353 = vsyncpa [#allocation10], 1
    %1354 = vsyncpa [#allocation13], 1
    %1355 = vsyncpa [#allocation16], 1
    %1356 = vsyncpa [#allocation5], 1
    %s1357 = scalar_lea.sflag [#allocation5], 1
    %1358 = vsyncpa %s1357, 1

// kernel: _lambda_.15
$region0: #{_lambda_.15}
  #allocation0 [shape = 'u32[]', space=smem, size = 0x4, offset = 0x4, fixed_abs, tag = 'smem constant byte address 0x4 - core index']
  #allocation1 [shape = 'u32[144,128]{1,0:T(1,128)}', space=vmem, size = 0x12000, scoped, tag = 'internal scratch']
  #allocation2 [shape = 'f32[16,256]{1,0:T(8,128)}', space=vmem, size = 0x4000, scoped, tag = 'scratch operand']
  %s0 = inlined_call_operand.hbm [shape: f32[16,128], index: 0, kind: input, shape index: {}]
  %s1 = inlined_call_operand.hbm [shape: bf16[128,256], index: 1, kind: input, shape index: {}]
  %s2 = inlined_call_operand.hbm [shape: f32[1,256], index: 2, kind: input, shape index: {}]
  %s3 = inlined_call_operand.hbm [shape: s32[16,1], index: 3, kind: input, shape index: {}]
  %s4 = inlined_call_operand.hbm [shape: f32[16,256], index: 4, kind: output, shape index: {0}]
  %s5 = inlined_call_operand.hbm [shape: f32[16,1], index: 5, kind: output, shape index: {1}]
  %6 = xla_tuple %s4, %s5
  %s7 = sld [smem:[#allocation0]]
  $region58: #{_lambda_.15} parent=0
    _
  %s9 = ssub.s32 1, %s7
  %s10 = scalar_select 0, %s9, %s7
  $region1: #{_lambda_.15} parent=0
    #allocation3 [shape = 'u8[8192]{0}', space=vmem, size = 0x2000, scoped, tag = 'input window, operand 0, single buffered']
    #allocation4 [shape = 's32[1]{0}', space=sflag, size = 0x4, scoped, tag = 'scoped memory for _lambda_.15']
    #allocation5 [shape = 's32[1]{0}', space=sflag, size = 0x4, scoped, tag = 'scoped memory for _lambda_.15']
    #allocation6 [shape = 'u8[65536]{0}', space=vmem, size = 0x10000, scoped, tag = 'input window, operand 1, single buffered']
    #allocation7 [shape = 's32[1]{0}', space=sflag, size = 0x4, scoped, tag = 'scoped memory for _lambda_.15']
    #allocation8 [shape = 'u8[1024]{0}', space=vmem, size = 0x400, scoped, tag = 'input window, operand 2, single buffered']
    #allocation9 [shape = 'u8[8192]{0}', space=vmem, size = 0x2000, scoped, tag = 'input window, operand 3, single buffered']
    #allocation10 [shape = 's32[1]{0}', space=sflag, size = 0x4, scoped, tag = 'scoped memory for _lambda_.15']
    #allocation11 [shape = 'u8[16384]{0}', space=vmem, size = 0x4000, scoped, tag = 'output window, operand 0, single buffered']
    #allocation12 [shape = 'u8[8192]{0}', space=vmem, size = 0x2000, scoped, tag = 'output window, operand 1, single buffered']
    #allocation13 [shape = 's32[1]{0}', space=sflag, size = 0x4, scoped, tag = 'scoped memory for _lambda_.15']
    %11 = vsyncpa [#allocation4], 0
    %12 = vsyncpa [#allocation7], 0
    %13 = vsyncpa [#allocation10], 0
    %14 = vsyncpa [#allocation5], 0
    %15 = vsyncpa [#allocation13], 0
    // Predicated region
    $region2: #{_lambda_.15} parent=1 // pred_check
      _
    $region3: #{_lambda_.15} parent=1 // pred_check_branch
      %17 = sbr.rel (0) target = $region5
    $region4: #{_lambda_.15} parent=1 // pred_region
      %s19 = ssub.s32 256, 256
      %20 = vsyncadd [#allocation4], %s19
      %s21 = sshll.u32 [#allocation3], 4
      %s22 = int_to_ptr.vmem [resolvable:$true] %s21
      %27 = dma.hbm_to_vmem [thread:$0]  %s0, 256, %s22, [#allocation4], 128, 128, 8
    $region5: #{_lambda_.15} parent=1 // pred_fallthru
      _
    // Predicated region
    $region6: #{_lambda_.15} parent=1 // pred_check
      _
    $region7: #{_lambda_.15} parent=1 // pred_check_branch
      %29 = sbr.rel (0) target = $region9
    $region8: #{_lambda_.15} parent=1 // pred_region
      %s31 = ssub.s32 2048, 2048
      %32 = vsyncadd [#allocation7], %s31
      %s33 = sshll.u32 [#allocation6], 4
      %s34 = int_to_ptr.vmem [resolvable:$true] %s33
      %39 = dma.hbm_to_vmem [thread:$0]  %s1, 2048, %s34, [#allocation7], 128, 128, 8
    $region9: #{_lambda_.15} parent=1 // pred_fallthru
      _
    // Predicated region
    $region10: #{_lambda_.15} parent=1 // pred_check
      _
    $region11: #{_lambda_.15} parent=1 // pred_check_branch
      %41 = sbr.rel (0) target = $region13
    $region12: #{_lambda_.15} parent=1 // pred_region
      %s43 = ssub.s32 32, 32
      %44 = vsyncadd [#allocation7], %s43
      %s46 = sshll.u32 [#allocation8], 4
      %s47 = int_to_ptr.vmem [resolvable:$true] %s46
      %49 = dma.hbm_to_vmem [thread:$0]  %s2, 32, %s47, [#allocation7]
    $region13: #{_lambda_.15} parent=1 // pred_fallthru
      _
    // Predicated region
    $region14: #{_lambda_.15} parent=1 // pred_check
      _
    $region15: #{_lambda_.15} parent=1 // pred_check_branch
      %51 = sbr.rel (0) target = $region17
    $region16: #{_lambda_.15} parent=1 // pred_region
      %s53 = ssub.s32 256, 256
      %54 = vsyncadd [#allocation10], %s53
      %s55 = sshll.u32 [#allocation9], 4
      %s56 = int_to_ptr.vmem [resolvable:$true] %s55
      %61 = dma.hbm_to_vmem [thread:$0]  %s3, 256, %s56, [#allocation10], 128, 128, 8
    $region17: #{_lambda_.15} parent=1 // pred_fallthru
      _
    // Predicated region
    $region18: #{_lambda_.15} parent=1 // pred_check
      _
    $region19: #{_lambda_.15} parent=1 // pred_check_branch
      %63 = sbr.rel (0) target = $region21
    $region20: #{_lambda_.15} parent=1 // pred_region
      %64 = dma.done [#allocation4], 256
    $region21: #{_lambda_.15} parent=1 // pred_fallthru
      _
    // Predicated region
    $region22: #{_lambda_.15} parent=1 // pred_check
      _
    $region23: #{_lambda_.15} parent=1 // pred_check_branch
      %66 = sbr.rel (0) target = $region25
    $region24: #{_lambda_.15} parent=1 // pred_region
      %67 = dma.done [#allocation7], 2048
    $region25: #{_lambda_.15} parent=1 // pred_fallthru
      _
    // Predicated region
    $region26: #{_lambda_.15} parent=1 // pred_check
      _
    $region27: #{_lambda_.15} parent=1 // pred_check_branch
      %69 = sbr.rel (0) target = $region29
    $region28: #{_lambda_.15} parent=1 // pred_region
      %70 = dma.done [#allocation7], 32
    $region29: #{_lambda_.15} parent=1 // pred_fallthru
      _
    // Predicated region
    $region30: #{_lambda_.15} parent=1 // pred_check
      _
    $region31: #{_lambda_.15} parent=1 // pred_check_branch
      %72 = sbr.rel (0) target = $region33
    $region32: #{_lambda_.15} parent=1 // pred_region
      %73 = dma.done [#allocation10], 256
    $region33: #{_lambda_.15} parent=1 // pred_fallthru
      _
    %p75 = scmp.eq.s32.totalorder 0, 0
    // Predicated region
    $region34: #{_lambda_.15} parent=1 // pred_check
      %p76 = pneg %p75
    $region35: #{_lambda_.15} parent=1 // pred_check_branch
      %78 = sbr.rel (%p76) target = $region37
    $region36: #{_lambda_.15} parent=1 // pred_region
      %79 = vst [vmem:[#allocation2] sm:$0xff] 0.0
      %80 = vst [vmem:[#allocation2 + $0x8] sm:$0xff] 0.0
      %81 = vst [vmem:[#allocation2 + $0x10] sm:$0xff] 0.0
      %82 = vst [vmem:[#allocation2 + $0x18] sm:$0xff] 0.0
    $region37: #{_lambda_.15} parent=1 // pred_fallthru
      _
    %v83 = vld [vmem:[#allocation2] sm:$0xff]
    %v84 = vld [vmem:[#allocation2 + $0x8] sm:$0xff]
    %v85 = vld [vmem:[#allocation2 + $0x10] sm:$0xff]
    %v86 = vld [vmem:[#allocation2 + $0x18] sm:$0xff]
    %v87 = vld [vmem:[#allocation3] sm:$0xff]
    %v88 = vld [vmem:[#allocation3 + $0x8] sm:$0xff]
    %v89 = vpack.c.bf16 %v88, %v87
    %v90 = vld [vmem:[#allocation6] sm:$0xff]
    %v91 = vld [vmem:[#allocation6 + $0x8] sm:$0xff]
    %v92 = vld [vmem:[#allocation6 + $0x10] sm:$0xff]
    %v93 = vld [vmem:[#allocation6 + $0x18] sm:$0xff]
    %v94 = vld [vmem:[#allocation6 + $0x20] sm:$0xff]
    %v95 = vld [vmem:[#allocation6 + $0x28] sm:$0xff]
    %v96 = vld [vmem:[#allocation6 + $0x30] sm:$0xff]
    %v97 = vld [vmem:[#allocation6 + $0x38] sm:$0xff]
    %v98 = vld [vmem:[#allocation6 + $0x40] sm:$0xff]
    %v99 = vld [vmem:[#allocation6 + $0x48] sm:$0xff]
    %v100 = vld [vmem:[#allocation6 + $0x50] sm:$0xff]
    %v101 = vld [vmem:[#allocation6 + $0x58] sm:$0xff]
    %v102 = vld [vmem:[#allocation6 + $0x60] sm:$0xff]
    %v103 = vld [vmem:[#allocation6 + $0x68] sm:$0xff]
    %v104 = vld [vmem:[#allocation6 + $0x70] sm:$0xff]
    %v105 = vld [vmem:[#allocation6 + $0x78] sm:$0xff]
    %v122 = vunpack.c.l.b16 %v90
    %v123 = vunpack.c.h.b16 %v90
    %v124 = vunpack.c.l.b16 %v91
    %v125 = vunpack.c.h.b16 %v91
    %v126 = vunpack.c.l.b16 %v92
    %v127 = vunpack.c.h.b16 %v92
    %v128 = vunpack.c.l.b16 %v93
    %v129 = vunpack.c.h.b16 %v93
    %v130 = vunpack.c.l.b16 %v94
    %v131 = vunpack.c.h.b16 %v94
    %v132 = vunpack.c.l.b16 %v95
    %v133 = vunpack.c.h.b16 %v95
    %v134 = vunpack.c.l.b16 %v96
    %v135 = vunpack.c.h.b16 %v96
    %v136 = vunpack.c.l.b16 %v97
    %v137 = vunpack.c.h.b16 %v97
    %v138 = vunpack.c.l.b16 %v98
    %v139 = vunpack.c.h.b16 %v98
    %v140 = vunpack.c.l.b16 %v99
    %v141 = vunpack.c.h.b16 %v99
    %v142 = vunpack.c.l.b16 %v100
    %v143 = vunpack.c.h.b16 %v100
    %v144 = vunpack.c.l.b16 %v101
    %v145 = vunpack.c.h.b16 %v101
    %v146 = vunpack.c.l.b16 %v102
    %v147 = vunpack.c.h.b16 %v102
    %v148 = vunpack.c.l.b16 %v103
    %v149 = vunpack.c.h.b16 %v103
    %v150 = vunpack.c.l.b16 %v104
    %v151 = vunpack.c.h.b16 %v104
    %v152 = vunpack.c.l.b16 %v105
    %v153 = vunpack.c.h.b16 %v105
    %v154 = vpack.c.b16 %v124, %v122
    %v155 = vpack.c.b16 %v125, %v123
    %v156 = vpack.c.b16 %v128, %v126
    %v157 = vpack.c.b16 %v129, %v127
    %v158 = vpack.c.b16 %v132, %v130
    %v159 = vpack.c.b16 %v133, %v131
    %v160 = vpack.c.b16 %v136, %v134
    %v161 = vpack.c.b16 %v137, %v135
    %v162 = vpack.c.b16 %v140, %v138
    %v163 = vpack.c.b16 %v141, %v139
    %v164 = vpack.c.b16 %v144, %v142
    %v165 = vpack.c.b16 %v145, %v143
    %v166 = vpack.c.b16 %v148, %v146
    %v167 = vpack.c.b16 %v149, %v147
    %v168 = vpack.c.b16 %v152, %v150
    %v169 = vpack.c.b16 %v153, %v151
    %186 = vmatprep.subr.bf16.mxu0 %v155
    %187 = vmatpush1.bf16.msra.mxu0 %v154
    %188 = vmatprep.subr.bf16.mxu0 %v157
    %189 = vmatpush1.bf16.msra.mxu0 %v156
    %190 = vmatprep.subr.bf16.mxu0 %v159
    %191 = vmatpush1.bf16.msra.mxu0 %v158
    %192 = vmatprep.subr.bf16.mxu0 %v161
    %193 = vmatpush1.bf16.msra.mxu0 %v160
    %194 = vmatprep.subr.bf16.mxu0 %v163
    %195 = vmatpush1.bf16.msra.mxu0 %v162
    %196 = vmatprep.subr.bf16.mxu0 %v165
    %197 = vmatpush1.bf16.msra.mxu0 %v164
    %198 = vmatprep.subr.bf16.mxu0 %v167
    %199 = vmatpush1.bf16.msra.mxu0 %v166
    %200 = vmatprep.subr.bf16.mxu0 %v169
    %201 = vmatpush1.bf16.msra.mxu0 %v168
    %202 = vmatprep.subr.bf16.mxu0 0
    %203 = vmatpush1.bf16.msra.mxu0 0
    %204 = vmatprep.subr.bf16.mxu0 0
    %205 = vmatpush1.bf16.msra.mxu0 0
    %206 = vmatprep.subr.bf16.mxu0 0
    %207 = vmatpush1.bf16.msra.mxu0 0
    %208 = vmatprep.subr.bf16.mxu0 0
    %209 = vmatpush1.bf16.msra.mxu0 0
    %210 = vmatprep.subr.bf16.mxu0 0
    %211 = vmatpush1.bf16.msra.mxu0 0
    %212 = vmatprep.subr.bf16.mxu0 0
    %213 = vmatpush1.bf16.msra.mxu0 0
    %214 = vmatprep.subr.bf16.mxu0 0
    %215 = vmatpush1.bf16.msra.mxu0 0
    %216 = vmatprep.subr.bf16.mxu0 0
    %217 = vmatpush1.bf16.msra.mxu0 0
    %218 = vmatprep.mubr.bf16.mxu0 0
    %219 = vmatmul.mubr.bf16.gmra.mrb[0].mxu0 %v89
    %v220 = vpop.f32.mrb[0].mxu0
    %v221 = vadd.f32 0.0, %v220
    %v222 = vpop.f32.mrb[0].mxu0
    %v223 = vadd.f32 0.0, %v222
    %v224 = vpop.f32.mrb[0].mxu0
    %v225 = vadd.f32 0.0, %v224
    %v226 = vpop.f32.mrb[0].mxu0
    %v227 = vadd.f32 0.0, %v226
    %228 = vdwg.mxu0
    %v229 = vadd.f32 %v83, %v221
    %v230 = vadd.f32 %v84, %v223
    %v231 = vadd.f32 %v85, %v225
    %v232 = vadd.f32 %v86, %v227
    %233 = vst [vmem:[#allocation2] sm:$0xff] %v229
    %234 = vst [vmem:[#allocation2 + $0x8] sm:$0xff] %v230
    %235 = vst [vmem:[#allocation2 + $0x10] sm:$0xff] %v231
    %236 = vst [vmem:[#allocation2 + $0x18] sm:$0xff] %v232
    // Predicated region
    $region38: #{_lambda_.15} parent=1 // pred_check
      %p237 = pneg %p75
    $region39: #{_lambda_.15} parent=1 // pred_check_branch
      %239 = sbr.rel (%p237) target = $region41
    $region40: #{_lambda_.15} parent=1 // pred_region
      %v240 = vld [vmem:[#allocation2] sm:$0xff]
      %v241 = vld [vmem:[#allocation2 + $0x8] sm:$0xff]
      %v242 = vld [vmem:[#allocation2 + $0x10] sm:$0xff]
      %v243 = vld [vmem:[#allocation2 + $0x18] sm:$0xff]
      %v244 = vld [vmem:[#allocation8] sm:$0x3]
      %v246 = vlaneseq
      %v247 = vshrl.u32 %v246, 7
      %v248 = vsub.s32 0, %v247
      %v249 = vrot.slane %v244, %v248
      %v250 = vlaneseq
      %v251 = vshrl.u32 %v250, 7
      %v252 = vsub.s32 1, %v251
      %v253 = vrot.slane %v244, %v252
      %v256 = vadd.f32 %v240, %v249
      %v257 = vadd.f32 %v241, %v253
      %v258 = vadd.f32 %v242, %v249
      %v259 = vadd.f32 %v243, %v253
      %260 = vst [vmem:[#allocation11] sm:$0xff] %v256
      %261 = vst [vmem:[#allocation11 + $0x8] sm:$0xff] %v257
      %262 = vst [vmem:[#allocation11 + $0x10] sm:$0xff] %v258
      %263 = vst [vmem:[#allocation11 + $0x18] sm:$0xff] %v259
      %v264 = vlaneseq
      %v265 = vand.u32 %v264, 127
      %v266 = vadd.s32 %v265, 128
      %vm267 = vcmp.lt.s32.totalorder %v265, 256
      %vm268 = vcmp.lt.s32.totalorder %v266, 256
      %v269 = vsel %vm267, %v256, -1e+30
      %v270 = vsel %vm268, %v257, -1e+30
      %v271 = vsel %vm267, %v258, -1e+30
      %v272 = vsel %vm268, %v259, -1e+30
      %v273 = vmax.f32 %v269, %v270
      %274 = vmax.xlane.f32.xlu0 %v273
      %v275 = vpop.xlane.xlu0 %274
      %v276 = vmax.f32 %v271, %v272
      %277 = vmax.xlane.f32.xlu0 %v276
      %v278 = vpop.xlane.xlu0 %277
      %v279 = vsub.f32 %v269, %v275
      %v280 = vsub.f32 %v270, %v275
      %v281 = vsub.f32 %v271, %v278
      %v282 = vsub.f32 %v272, %v278
      %v283 = vmul.f32 %v279, 1.442695
      %v284 = vpow.pop %v283
      %v285 = vmul.f32 %v280, 1.442695
      %v286 = vpow.pop %v285
      %v287 = vmul.f32 %v281, 1.442695
      %v288 = vpow.pop %v287
      %v289 = vmul.f32 %v282, 1.442695
      %v290 = vpow.pop %v289
      %v291 = vadd.f32 %v284, %v286
      %292 = vadd.xlane.f32.xlu0 %v291
      %v293 = vpop.xlane.xlu0 %292
      %v294 = vadd.f32 %v288, %v290
      %295 = vadd.xlane.f32.xlu0 %v294
      %v296 = vpop.xlane.xlu0 %295
      %v297 = vlog2.pop %v293
      %v298 = vmul.f32 %v297, 0.6931472
      %v299 = vlog2.pop %v296
      %v300 = vmul.f32 %v299, 0.6931472
      %v301 = vadd.f32 %v298, %v275
      %v302 = vadd.f32 %v300, %v278
      %v303 = vld [vmem:[#allocation9] sm:$0xff]
      %v304 = vld [vmem:[#allocation9 + $0x8] sm:$0xff]
      %305 = vset.pattern.permute.xlu0 0
      %306 = vperm.xlu0 %305, %v303
      %v307 = vpop.permute.xlu0 %306
      %308 = vset.pattern.permute.xlu0 0
      %309 = vperm.xlu0 %308, %v304
      %v310 = vpop.permute.xlu0 %309
      %vm311 = vcmp.eq.s32.totalorder %v265, %v307
      %vm312 = vcmp.eq.s32.totalorder %v266, %v307
      %vm313 = vcmp.eq.s32.totalorder %v265, %v310
      %vm314 = vcmp.eq.s32.totalorder %v266, %v310
      %v315 = vsel %vm311, %v256, 0.0
      %v316 = vsel %vm312, %v257, 0.0
      %v317 = vsel %vm313, %v258, 0.0
      %v318 = vsel %vm314, %v259, 0.0
      %v319 = vadd.f32 %v315, %v316
      %320 = vadd.xlane.f32.xlu0 %v319
      %v321 = vpop.xlane.xlu0 %320
      %v322 = vadd.f32 %v317, %v318
      %323 = vadd.xlane.f32.xlu0 %v322
      %v324 = vpop.xlane.xlu0 %323
      %vm325 = vcmp.ge.s32.totalorder %v303, 0
      %vm326 = vcmp.ge.s32.totalorder %v304, 0
      %v327 = vsel %vm325, 1, 0
      %v328 = vsel %vm326, 1, 0
      %v329 = vcvt.s32.f32 %v327
      %v330 = vcvt.s32.f32 %v328
      %v331 = vsub.f32 %v301, %v321
      %v332 = vsub.f32 %v302, %v324
      %v333 = vmul.f32 %v331, %v329
      %v334 = vmul.f32 %v332, %v330
      %vm335 = vcmask 7168
      %336 = vst.msk [vmem:[#allocation12] sm:$0xff] %vm335, %v333
      %337 = vst.msk [vmem:[#allocation12 + $0x8] sm:$0xff] %vm335, %v334
    $region41: #{_lambda_.15} parent=1 // pred_fallthru
      _
    // Predicated region
    $region42: #{_lambda_.15} parent=1 // pred_check
      _
    $region43: #{_lambda_.15} parent=1 // pred_check_branch
      %339 = sbr.rel (0) target = $region45
    $region44: #{_lambda_.15} parent=1 // pred_region
      %s341 = ssub.s32 512, 512
      %342 = vsyncadd [#allocation5], %s341
      %s343 = sshll.u32 [#allocation11], 4
      %s344 = int_to_ptr.vmem [resolvable:$true] %s343
      %349 = dma.vmem_to_hbm [thread:$0]  %s344, 512, %s4, [#allocation5], 256, 256, 16
    $region45: #{_lambda_.15} parent=1 // pred_fallthru
      _
    // Predicated region
    $region46: #{_lambda_.15} parent=1 // pred_check
      _
    $region47: #{_lambda_.15} parent=1 // pred_check_branch
      %351 = sbr.rel (0) target = $region49
    $region48: #{_lambda_.15} parent=1 // pred_region
      %s353 = ssub.s32 256, 256
      %354 = vsyncadd [#allocation13], %s353
      %s355 = sshll.u32 [#allocation12], 4
      %s356 = int_to_ptr.vmem [resolvable:$true] %s355
      %361 = dma.vmem_to_hbm [thread:$0]  %s356, 256, %s5, [#allocation13], 128, 128, 8
    $region49: #{_lambda_.15} parent=1 // pred_fallthru
      _
    // Predicated region
    $region50: #{_lambda_.15} parent=1 // pred_check
      _
    $region51: #{_lambda_.15} parent=1 // pred_check_branch
      %363 = sbr.rel (0) target = $region53
    $region52: #{_lambda_.15} parent=1 // pred_region
      %364 = dma.done [#allocation5], 512
    $region53: #{_lambda_.15} parent=1 // pred_fallthru
      _
    // Predicated region
    $region54: #{_lambda_.15} parent=1 // pred_check
      _
    $region55: #{_lambda_.15} parent=1 // pred_check_branch
      %366 = sbr.rel (0) target = $region57
    $region56: #{_lambda_.15} parent=1 // pred_region
      %367 = dma.done [#allocation13], 256
    $region57: #{_lambda_.15} parent=1 // pred_fallthru
      _
    %368 = vsyncpa [#allocation4], 1
    %369 = vsyncpa [#allocation7], 1
    %370 = vsyncpa [#allocation10], 1
    %371 = vsyncpa [#allocation5], 1
    %372 = vsyncpa [#allocation13], 1

// kernel: _lambda_.12
$region0: #{_lambda_.12}
  #allocation0 [shape = 'u32[]', space=smem, size = 0x4, offset = 0x4, fixed_abs, tag = 'smem constant byte address 0x4 - core index']
  #allocation1 [shape = 'u32[144,128]{1,0:T(1,128)}', space=vmem, size = 0x12000, scoped, tag = 'internal scratch']
  #allocation2 [shape = 'f32[8,128]{1,0:T(8,128)}', space=vmem, size = 0x1000, scoped, tag = 'scratch operand']
  %s0 = inlined_call_operand.hbm [shape: f32[2,8,128], index: 0, kind: input, shape index: {}]
  %s1 = inlined_call_operand.hbm [shape: f32[1,8,8], index: 1, kind: input, shape index: {}]
  %s2 = inlined_call_operand.hbm [shape: bf16[128,384], index: 2, kind: input, shape index: {}]
  %s3 = inlined_call_operand.hbm [shape: f32[1,384], index: 3, kind: input, shape index: {}]
  %s4 = inlined_call_operand.hbm [shape: bf16[128,128], index: 4, kind: input, shape index: {}]
  %s5 = inlined_call_operand.hbm [shape: f32[1,128], index: 5, kind: input, shape index: {}]
  %s6 = inlined_call_operand.hbm [shape: f32[1,128], index: 6, kind: input, shape index: {}]
  %s7 = inlined_call_operand.hbm [shape: f32[1,128], index: 7, kind: input, shape index: {}]
  %s8 = inlined_call_operand.hbm [shape: f32[2,8,128], index: 8, kind: output, shape index: {}]
  %s9 = sld [smem:[#allocation0]]
  $region97: #{_lambda_.12} parent=0
    _
  %s11 = ssub.s32 1, %s9
  %s12 = scalar_select 0, %s11, %s9
  $region1: #{_lambda_.12} parent=0
    #allocation3 [shape = 'u8[8192]{0}', space=vmem, size = 0x2000, scoped, tag = 'input window, operand 0']
    #allocation4 [shape = 's32[2]{0}', space=sflag, size = 0x8, scoped, tag = 'scoped memory for _lambda_.12']
    #allocation5 [shape = 's32[2]{0}', space=sflag, size = 0x8, scoped, tag = 'scoped memory for _lambda_.12']
    #allocation6 [shape = 'u8[4096]{0}', space=vmem, size = 0x1000, scoped, tag = 'input window, operand 1, single buffered']
    #allocation7 [shape = 's32[1]{0}', space=sflag, size = 0x4, scoped, tag = 'scoped memory for _lambda_.12']
    #allocation8 [shape = 'u8[98304]{0}', space=vmem, size = 0x18000, scoped, tag = 'input window, operand 2, single buffered']
    #allocation9 [shape = 'u8[1536]{0}', space=vmem, size = 0x800, scoped, tag = 'input window, operand 3, single buffered']
    #allocation10 [shape = 's32[1]{0}', space=sflag, size = 0x4, scoped, tag = 'scoped memory for _lambda_.12']
    #allocation11 [shape = 'u8[32768]{0}', space=vmem, size = 0x8000, scoped, tag = 'input window, operand 4, single buffered']
    #allocation12 [shape = 'u8[512]{0}', space=vmem, size = 0x400, scoped, tag = 'input window, operand 5, single buffered']
    #allocation13 [shape = 's32[1]{0}', space=sflag, size = 0x4, scoped, tag = 'scoped memory for _lambda_.12']
    #allocation14 [shape = 'u8[512]{0}', space=vmem, size = 0x400, scoped, tag = 'input window, operand 6, single buffered']
    #allocation15 [shape = 'u8[512]{0}', space=vmem, size = 0x400, scoped, tag = 'input window, operand 7, single buffered']
    #allocation16 [shape = 's32[1]{0}', space=sflag, size = 0x4, scoped, tag = 'scoped memory for _lambda_.12']
    #allocation17 [shape = 'u8[8192]{0}', space=vmem, size = 0x2000, scoped, tag = 'output window, operand 0']
    %13 = vsyncpa [#allocation4], 0
    %s14 = scalar_lea.sflag [#allocation4], 1
    %15 = vsyncpa %s14, 0
    %16 = vsyncpa [#allocation7], 0
    %17 = vsyncpa [#allocation10], 0
    %18 = vsyncpa [#allocation13], 0
    %19 = vsyncpa [#allocation16], 0
    %20 = vsyncpa [#allocation5], 0
    %s21 = scalar_lea.sflag [#allocation5], 1
    %22 = vsyncpa %s21, 0
    loop: start=0, step=1, limit=4
    $region2: #{_lambda_.12} parent=1 // loop_pre_header
      _
    $region3: #{_lambda_.12} parent=1 // loop_header
      %s24 = sphi 0, %s28
      %p25 = scmp.ge.s32.totalorder %s24, 4
      %s34 = sphi 0, %s36
      %s37 = sphi 0, %s34
      %s38 = sphi 0, %s37
      %s54 = sphi 0, %s38
      %s58 = sphi 0, %s58
      %s60 = sphi 0, %s58
      %s61 = sphi 0, %s60
      %s75 = sphi 0, %s61
      %s79 = sphi 0, %s79
      %s81 = sphi 0, %s79
      %s82 = sphi 0, %s81
      %s96 = sphi 0, %s82
      %s100 = sphi 0, %s100
      %s102 = sphi 0, %s100
      %s103 = sphi 0, %s102
      %s117 = sphi 0, %s103
      %s121 = sphi 0, %s121
      %s123 = sphi 0, %s121
      %s124 = sphi 0, %s123
      %s138 = sphi 0, %s124
      %s142 = sphi 0, %s142
      %s144 = sphi 0, %s142
      %s145 = sphi 0, %s144
      %s159 = sphi 0, %s145
      %s163 = sphi 0, %s163
      %s165 = sphi 0, %s163
      %s166 = sphi 0, %s165
      %s180 = sphi 0, %s166
      %s184 = sphi 0, %s184
      %s186 = sphi 0, %s184
      %s187 = sphi 0, %s186
      %s201 = sphi 0, %s187
      %s207 = sphi 0, %s209
      %s210 = sphi 0, %s207
      %s211 = sphi 0, %s210
      %s227 = sphi 0, %s211
    $region4: #{_lambda_.12} parent=1 // loop_header_branch
      %27 = sbr.rel (%p25) target = $region8
    $region5: #{_lambda_.12} parent=1 // loop_body
      %s29 = ssub.s32 %s24, 1
      %s30 = ssub.s32 %s24, 2
      %s31 = sadd.s32 %s24, 1
      %s32 = ssub.s32 %s24, %s31
      %p33 = scmp.eq.s32.totalorder %s32, 0
      %s35 = sadd.s32 %s34, 1
      %s36 = scalar_select %p33, %s34, %s35
      %p39 = pneg %p33
      %p40 = scmp.eq.s32.totalorder %s24, 1
      %p41 = por %p39, %p40
      %p42 = scmp.ne.s32.totalorder %s34, %s37
      %p43 = scmp.eq.s32.totalorder %s24, 0
      %p44 = por %p42, %p43
      %p45 = scmp.ne.s32.totalorder %s34, %s37
      %p46 = scmp.eq.s32.totalorder %s29, 1
      %p47 = por %p45, %p46
      %p48 = scmp.ne.s32.totalorder %s37, %s38
      %p49 = scmp.eq.s32.totalorder %s29, 0
      %p50 = por %p48, %p49
      %p51 = scmp.ne.s32.totalorder %s37, %s38
      %p52 = scmp.eq.s32.totalorder %s30, 1
      %p53 = por %p51, %p52
      %p55 = scmp.ne.s32.totalorder %s38, %s54
      %p56 = scmp.eq.s32.totalorder %s30, 0
      %p57 = por %p55, %p56
      %s59 = sadd.s32 %s58, 1
      %p62 = scmp.eq.s32.totalorder %s24, 1
      %p63 = scmp.ne.s32.totalorder %s58, %s60
      %p64 = scmp.eq.s32.totalorder %s24, 0
      %p65 = por %p63, %p64
      %p66 = scmp.ne.s32.totalorder %s58, %s60
      %p67 = scmp.eq.s32.totalorder %s29, 1
      %p68 = por %p66, %p67
      %p69 = scmp.ne.s32.totalorder %s60, %s61
      %p70 = scmp.eq.s32.totalorder %s29, 0
      %p71 = por %p69, %p70
      %p72 = scmp.ne.s32.totalorder %s60, %s61
      %p73 = scmp.eq.s32.totalorder %s30, 1
      %p74 = por %p72, %p73
      %p76 = scmp.ne.s32.totalorder %s61, %s75
      %p77 = scmp.eq.s32.totalorder %s30, 0
      %p78 = por %p76, %p77
      %s80 = sadd.s32 %s79, 1
      %p83 = scmp.eq.s32.totalorder %s24, 1
      %p84 = scmp.ne.s32.totalorder %s79, %s81
      %p85 = scmp.eq.s32.totalorder %s24, 0
      %p86 = por %p84, %p85
      %p87 = scmp.ne.s32.totalorder %s79, %s81
      %p88 = scmp.eq.s32.totalorder %s29, 1
      %p89 = por %p87, %p88
      %p90 = scmp.ne.s32.totalorder %s81, %s82
      %p91 = scmp.eq.s32.totalorder %s29, 0
      %p92 = por %p90, %p91
      %p93 = scmp.ne.s32.totalorder %s81, %s82
      %p94 = scmp.eq.s32.totalorder %s30, 1
      %p95 = por %p93, %p94
      %p97 = scmp.ne.s32.totalorder %s82, %s96
      %p98 = scmp.eq.s32.totalorder %s30, 0
      %p99 = por %p97, %p98
      %s101 = sadd.s32 %s100, 1
      %p104 = scmp.eq.s32.totalorder %s24, 1
      %p105 = scmp.ne.s32.totalorder %s100, %s102
      %p106 = scmp.eq.s32.totalorder %s24, 0
      %p107 = por %p105, %p106
      %p108 = scmp.ne.s32.totalorder %s100, %s102
      %p109 = scmp.eq.s32.totalorder %s29, 1
      %p110 = por %p108, %p109
      %p111 = scmp.ne.s32.totalorder %s102, %s103
      %p112 = scmp.eq.s32.totalorder %s29, 0
      %p113 = por %p111, %p112
      %p114 = scmp.ne.s32.totalorder %s102, %s103
      %p115 = scmp.eq.s32.totalorder %s30, 1
      %p116 = por %p114, %p115
      %p118 = scmp.ne.s32.totalorder %s103, %s117
      %p119 = scmp.eq.s32.totalorder %s30, 0
      %p120 = por %p118, %p119
      %s122 = sadd.s32 %s121, 1
      %p125 = scmp.eq.s32.totalorder %s24, 1
      %p126 = scmp.ne.s32.totalorder %s121, %s123
      %p127 = scmp.eq.s32.totalorder %s24, 0
      %p128 = por %p126, %p127
      %p129 = scmp.ne.s32.totalorder %s121, %s123
      %p130 = scmp.eq.s32.totalorder %s29, 1
      %p131 = por %p129, %p130
      %p132 = scmp.ne.s32.totalorder %s123, %s124
      %p133 = scmp.eq.s32.totalorder %s29, 0
      %p134 = por %p132, %p133
      %p135 = scmp.ne.s32.totalorder %s123, %s124
      %p136 = scmp.eq.s32.totalorder %s30, 1
      %p137 = por %p135, %p136
      %p139 = scmp.ne.s32.totalorder %s124, %s138
      %p140 = scmp.eq.s32.totalorder %s30, 0
      %p141 = por %p139, %p140
      %s143 = sadd.s32 %s142, 1
      %p146 = scmp.eq.s32.totalorder %s24, 1
      %p147 = scmp.ne.s32.totalorder %s142, %s144
      %p148 = scmp.eq.s32.totalorder %s24, 0
      %p149 = por %p147, %p148
      %p150 = scmp.ne.s32.totalorder %s142, %s144
      %p151 = scmp.eq.s32.totalorder %s29, 1
      %p152 = por %p150, %p151
      %p153 = scmp.ne.s32.totalorder %s144, %s145
      %p154 = scmp.eq.s32.totalorder %s29, 0
      %p155 = por %p153, %p154
      %p156 = scmp.ne.s32.totalorder %s144, %s145
      %p157 = scmp.eq.s32.totalorder %s30, 1
      %p158 = por %p156, %p157
      %p160 = scmp.ne.s32.totalorder %s145, %s159
      %p161 = scmp.eq.s32.totalorder %s30, 0
      %p162 = por %p160, %p161
      %s164 = sadd.s32 %s163, 1
      %p167 = scmp.eq.s32.totalorder %s24, 1
      %p168 = scmp.ne.s32.totalorder %s163, %s165
      %p169 = scmp.eq.s32.totalorder %s24, 0
      %p170 = por %p168, %p169
      %p171 = scmp.ne.s32.totalorder %s163, %s165
      %p172 = scmp.eq.s32.totalorder %s29, 1
      %p173 = por %p171, %p172
      %p174 = scmp.ne.s32.totalorder %s165, %s166
      %p175 = scmp.eq.s32.totalorder %s29, 0
      %p176 = por %p174, %p175
      %p177 = scmp.ne.s32.totalorder %s165, %s166
      %p178 = scmp.eq.s32.totalorder %s30, 1
      %p179 = por %p177, %p178
      %p181 = scmp.ne.s32.totalorder %s166, %s180
      %p182 = scmp.eq.s32.totalorder %s30, 0
      %p183 = por %p181, %p182
      %s185 = sadd.s32 %s184, 1
      %p188 = scmp.eq.s32.totalorder %s24, 1
      %p189 = scmp.ne.s32.totalorder %s184, %s186
      %p190 = scmp.eq.s32.totalorder %s24, 0
      %p191 = por %p189, %p190
      %p192 = scmp.ne.s32.totalorder %s184, %s186
      %p193 = scmp.eq.s32.totalorder %s29, 1
      %p194 = por %p192, %p193
      %p195 = scmp.ne.s32.totalorder %s186, %s187
      %p196 = scmp.eq.s32.totalorder %s29, 0
      %p197 = por %p195, %p196
      %p198 = scmp.ne.s32.totalorder %s186, %s187
      %p199 = scmp.eq.s32.totalorder %s30, 1
      %p200 = por %p198, %p199
      %p202 = scmp.ne.s32.totalorder %s187, %s201
      %p203 = scmp.eq.s32.totalorder %s30, 0
      %p204 = por %p202, %p203
      %s205 = ssub.s32 %s24, %s31
      %p206 = scmp.eq.s32.totalorder %s205, 0
      %s208 = sadd.s32 %s207, 1
      %s209 = scalar_select %p206, %s207, %s208
      %p212 = pneg %p206
      %p213 = scmp.eq.s32.totalorder %s24, 1
      %p214 = por %p212, %p213
      %p215 = scmp.ne.s32.totalorder %s207, %s210
      %p216 = scmp.eq.s32.totalorder %s24, 0
      %p217 = por %p215, %p216
      %p218 = scmp.ne.s32.totalorder %s207, %s210
      %p219 = scmp.eq.s32.totalorder %s29, 1
      %p220 = por %p218, %p219
      %p221 = scmp.ne.s32.totalorder %s210, %s211
      %p222 = scmp.eq.s32.totalorder %s29, 0
      %p223 = por %p221, %p222
      %p224 = scmp.ne.s32.totalorder %s210, %s211
      %p225 = scmp.eq.s32.totalorder %s30, 1
      %p226 = por %p224, %p225
      %p228 = scmp.ne.s32.totalorder %s211, %s227
      %p229 = scmp.eq.s32.totalorder %s30, 0
      %p230 = por %p228, %p229
      %p231 = scmp.le.s32.totalorder 1, %s24
      %p232 = scmp.lt.s32.totalorder %s24, 3
      %p233 = pnand %p231, %p232
      %p234 = pneg %p233
      // Predicated region
      $region9: #{_lambda_.12} parent=5 // pred_check
        _
      $region10: #{_lambda_.12} parent=5 // pred_check_branch
        %236 = sbr.rel (%p233) target = $region12
      $region11: #{_lambda_.12} parent=5 // pred_region
        %s237 = ssub.s32 %s24, 1
        // Predicated region
        $region13: #{_lambda_.12} parent=11 // pred_check
          %p238 = pneg %p71
        $region14: #{_lambda_.12} parent=11 // pred_check_branch
          %240 = sbr.rel (%p238) target = $region16
        $region15: #{_lambda_.12} parent=11 // pred_region
          %s242 = ssub.s32 128, 128
          %243 = vsyncadd [#allocation7], %s242
          %s245 = sshll.u32 [#allocation6], 4
          %s246 = int_to_ptr.vmem [resolvable:$true] %s245
          %248 = dma.hbm_to_vmem [thread:$0]  %s1, 128, %s246, [#allocation7]
        $region16: #{_lambda_.12} parent=11 // pred_fallthru
          _
        // Predicated region
        $region17: #{_lambda_.12} parent=11 // pred_check
          %p249 = pneg %p92
        $region18: #{_lambda_.12} parent=11 // pred_check_branch
          %251 = sbr.rel (%p249) target = $region20
        $region19: #{_lambda_.12} parent=11 // pred_region
          %s253 = ssub.s32 3072, 3072
          %254 = vsyncadd [#allocation7], %s253
          %s255 = sshll.u32 [#allocation8], 4
          %s256 = int_to_ptr.vmem [resolvable:$true] %s255
          %261 = dma.hbm_to_vmem [thread:$0]  %s2, 3072, %s256, [#allocation7], 192, 192, 12
        $region20: #{_lambda_.12} parent=11 // pred_fallthru
          _
        // Predicated region
        $region21: #{_lambda_.12} parent=11 // pred_check
          %p262 = pneg %p113
        $region22: #{_lambda_.12} parent=11 // pred_check_branch
          %264 = sbr.rel (%p262) target = $region24
        $region23: #{_lambda_.12} parent=11 // pred_region
          %s266 = ssub.s32 48, 48
          %267 = vsyncadd [#allocation10], %s266
          %s269 = sshll.u32 [#allocation9], 4
          %s270 = int_to_ptr.vmem [resolvable:$true] %s269
          %272 = dma.hbm_to_vmem [thread:$0]  %s3, 48, %s270, [#allocation10]
        $region24: #{_lambda_.12} parent=11 // pred_fallthru
          _
        // Predicated region
        $region25: #{_lambda_.12} parent=11 // pred_check
          %p273 = pneg %p134
        $region26: #{_lambda_.12} parent=11 // pred_check_branch
          %275 = sbr.rel (%p273) target = $region28
        $region27: #{_lambda_.12} parent=11 // pred_region
          %s277 = ssub.s32 1024, 1024
          %278 = vsyncadd [#allocation10], %s277
          %s279 = sshll.u32 [#allocation11], 4
          %s280 = int_to_ptr.vmem [resolvable:$true] %s279
          %285 = dma.hbm_to_vmem [thread:$0]  %s4, 1024, %s280, [#allocation10], 64, 64, 4
        $region28: #{_lambda_.12} parent=11 // pred_fallthru
          _
        // Predicated region
        $region29: #{_lambda_.12} parent=11 // pred_check
          %p286 = pneg %p155
        $region30: #{_lambda_.12} parent=11 // pred_check_branch
          %288 = sbr.rel (%p286) target = $region32
        $region31: #{_lambda_.12} parent=11 // pred_region
          %s290 = ssub.s32 16, 16
          %291 = vsyncadd [#allocation13], %s290
          %s293 = sshll.u32 [#allocation12], 4
          %s294 = int_to_ptr.vmem [resolvable:$true] %s293
          %296 = dma.hbm_to_vmem [thread:$0]  %s5, 16, %s294, [#allocation13]
        $region32: #{_lambda_.12} parent=11 // pred_fallthru
          _
        // Predicated region
        $region33: #{_lambda_.12} parent=11 // pred_check
          %p297 = pneg %p176
        $region34: #{_lambda_.12} parent=11 // pred_check_branch
          %299 = sbr.rel (%p297) target = $region36
        $region35: #{_lambda_.12} parent=11 // pred_region
          %s301 = ssub.s32 16, 16
          %302 = vsyncadd [#allocation13], %s301
          %s304 = sshll.u32 [#allocation14], 4
          %s305 = int_to_ptr.vmem [resolvable:$true] %s304
          %307 = dma.hbm_to_vmem [thread:$0]  %s6, 16, %s305, [#allocation13]
        $region36: #{_lambda_.12} parent=11 // pred_fallthru
          _
        // Predicated region
        $region37: #{_lambda_.12} parent=11 // pred_check
          %p308 = pneg %p197
        $region38: #{_lambda_.12} parent=11 // pred_check_branch
          %310 = sbr.rel (%p308) target = $region40
        $region39: #{_lambda_.12} parent=11 // pred_region
          %s312 = ssub.s32 16, 16
          %313 = vsyncadd [#allocation16], %s312
          %s315 = sshll.u32 [#allocation15], 4
          %s316 = int_to_ptr.vmem [resolvable:$true] %s315
          %318 = dma.hbm_to_vmem [thread:$0]  %s7, 16, %s316, [#allocation16]
        $region40: #{_lambda_.12} parent=11 // pred_fallthru
          _
      $region12: #{_lambda_.12} parent=5 // pred_fallthru
        _
      %p319 = scmp.lt.s32.totalorder %s24, 2
      // Predicated region
      $region41: #{_lambda_.12} parent=5 // pred_check
        %p320 = pneg %p319
      $region42: #{_lambda_.12} parent=5 // pred_check_branch
        %322 = sbr.rel (%p320) target = $region44
      $region43: #{_lambda_.12} parent=5 // pred_region
        // Predicated region
        $region45: #{_lambda_.12} parent=43 // pred_check
          %p323 = pneg %p44
        $region46: #{_lambda_.12} parent=43 // pred_check_branch
          %325 = sbr.rel (%p323) target = $region48
        $region47: #{_lambda_.12} parent=43 // pred_region
          %s326 = sand.u32 %s34, 1
          %s327 = scalar_lea.sflag [#allocation4], %s326
          %s328 = sand.u32 %s34, 1
          %s329 = smul.addr %s328, 8
          %s330 = scalar_lea.vmem [#allocation3], %s329
          %s332 = ssub.s32 128, 128
          %333 = vsyncadd %s327, %s332
          %s334 = smul.addr %s24, 128
          %s335 = scalar_lea.hbm %s0, %s334
          %s337 = sshll.u32 %s330, 4
          %s338 = int_to_ptr.vmem [resolvable:$true] %s337
          %340 = dma.hbm_to_vmem [thread:$0]  %s335, 128, %s338, %s327
        $region48: #{_lambda_.12} parent=43 // pred_fallthru
          _
      $region44: #{_lambda_.12} parent=5 // pred_fallthru
        _
      %p341 = scmp.le.s32.totalorder 1, %s24
      %p342 = scmp.lt.s32.totalorder %s24, 3
      %p343 = pnand %p341, %p342
      %p344 = pneg %p343
      // Predicated region
      $region49: #{_lambda_.12} parent=5 // pred_check
        _
      $region50: #{_lambda_.12} parent=5 // pred_check_branch
        %346 = sbr.rel (%p343) target = $region52
      $region51: #{_lambda_.12} parent=5 // pred_region
        %s347 = ssub.s32 %s24, 1
        %s348 = sand.u32 %s37, 1
        %s349 = scalar_lea.sflag [#allocation4], %s348
        %s350 = sand.u32 %s37, 1
        %s351 = smul.addr %s350, 8
        %s352 = scalar_lea.vmem [#allocation3], %s351
        // Predicated region
        $region53: #{_lambda_.12} parent=51 // pred_check
          %p353 = pneg %p50
        $region54: #{_lambda_.12} parent=51 // pred_check_branch
          %355 = sbr.rel (%p353) target = $region56
        $region55: #{_lambda_.12} parent=51 // pred_region
          %356 = dma.done %s349, 128
        $region56: #{_lambda_.12} parent=51 // pred_fallthru
          _
        // Predicated region
        $region57: #{_lambda_.12} parent=51 // pred_check
          %p357 = pneg %p71
        $region58: #{_lambda_.12} parent=51 // pred_check_branch
          %359 = sbr.rel (%p357) target = $region60
        $region59: #{_lambda_.12} parent=51 // pred_region
          %360 = dma.done [#allocation7], 128
        $region60: #{_lambda_.12} parent=51 // pred_fallthru
          _
        // Predicated region
        $region61: #{_lambda_.12} parent=51 // pred_check
          %p361 = pneg %p92
        $region62: #{_lambda_.12} parent=51 // pred_check_branch
          %363 = sbr.rel (%p361) target = $region64
        $region63: #{_lambda_.12} parent=51 // pred_region
          %364 = dma.done [#allocation7], 3072
        $region64: #{_lambda_.12} parent=51 // pred_fallthru
          _
        // Predicated region
        $region65: #{_lambda_.12} parent=51 // pred_check
          %p365 = pneg %p113
        $region66: #{_lambda_.12} parent=51 // pred_check_branch
          %367 = sbr.rel (%p365) target = $region68
        $region67: #{_lambda_.12} parent=51 // pred_region
          %368 = dma.done [#allocation10], 48
        $region68: #{_lambda_.12} parent=51 // pred_fallthru
          _
        // Predicated region
        $region69: #{_lambda_.12} parent=51 // pred_check
          %p369 = pneg %p134
        $region70: #{_lambda_.12} parent=51 // pred_check_branch
          %371 = sbr.rel (%p369) target = $region72
        $region71: #{_lambda_.12} parent=51 // pred_region
          %372 = dma.done [#allocation10], 1024
        $region72: #{_lambda_.12} parent=51 // pred_fallthru
          _
        // Predicated region
        $region73: #{_lambda_.12} parent=51 // pred_check
          %p373 = pneg %p155
        $region74: #{_lambda_.12} parent=51 // pred_check_branch
          %375 = sbr.rel (%p373) target = $region76
        $region75: #{_lambda_.12} parent=51 // pred_region
          %376 = dma.done [#allocation13], 16
        $region76: #{_lambda_.12} parent=51 // pred_fallthru
          _
        // Predicated region
        $region77: #{_lambda_.12} parent=51 // pred_check
          %p377 = pneg %p176
        $region78: #{_lambda_.12} parent=51 // pred_check_branch
          %379 = sbr.rel (%p377) target = $region80
        $region79: #{_lambda_.12} parent=51 // pred_region
          %380 = dma.done [#allocation13], 16
        $region80: #{_lambda_.12} parent=51 // pred_fallthru
          _
        // Predicated region
        $region81: #{_lambda_.12} parent=51 // pred_check
          %p381 = pneg %p197
        $region82: #{_lambda_.12} parent=51 // pred_check_branch
          %383 = sbr.rel (%p381) target = $region84
        $region83: #{_lambda_.12} parent=51 // pred_region
          %384 = dma.done [#allocation16], 16
        $region84: #{_lambda_.12} parent=51 // pred_fallthru
          _
        %s385 = sand.u32 %s37, 1
        %s386 = scalar_lea.sflag [#allocation4], %s385
        %s387 = sand.u32 %s37, 1
        %s388 = smul.addr %s387, 8
        %s389 = scalar_lea.vmem [#allocation3], %s388
        %p390 = pneg %p50
        %p391 = pneg %p47
        %p392 = pneg %p71
        %p393 = pneg %p68
        %p394 = pneg %p92
        %p395 = pneg %p89
        %p396 = pneg %p113
        %p397 = pneg %p110
        %p398 = pneg %p134
        %p399 = pneg %p131
        %p400 = pneg %p155
        %p401 = pneg %p152
        %p402 = pneg %p176
        %p403 = pneg %p173
        %p404 = pneg %p197
        %p405 = pneg %p194
        %p406 = pneg %p223
        %p407 = pneg %p220
        %s408 = sand.u32 %s210, 1
        %s409 = scalar_lea.sflag [#allocation5], %s408
        %s410 = sand.u32 %s210, 1
        %s411 = smul.addr %s410, 8
        %s412 = scalar_lea.vmem [#allocation17], %s411
        %v414 = vld [vmem:[%s352] sm:$0xff]
        %v415 = vpack.c.bf16 %v414, %v414
        %v416 = vld [vmem:[#allocation8] sm:$0xff]
        %v417 = vld [vmem:[#allocation8 + $0x8] sm:$0xf]
        %v418 = vld [vmem:[#allocation8 + $0xc] sm:$0xff]
        %v419 = vld [vmem:[#allocation8 + $0x14] sm:$0xf]
        %v420 = vld [vmem:[#allocation8 + $0x18] sm:$0xff]
        %v421 = vld [vmem:[#allocation8 + $0x20] sm:$0xf]
        %v422 = vld [vmem:[#allocation8 + $0x24] sm:$0xff]
        %v423 = vld [vmem:[#allocation8 + $0x2c] sm:$0xf]
        %v424 = vld [vmem:[#allocation8 + $0x30] sm:$0xff]
        %v425 = vld [vmem:[#allocation8 + $0x38] sm:$0xf]
        %v426 = vld [vmem:[#allocation8 + $0x3c] sm:$0xff]
        %v427 = vld [vmem:[#allocation8 + $0x44] sm:$0xf]
        %v428 = vld [vmem:[#allocation8 + $0x48] sm:$0xff]
        %v429 = vld [vmem:[#allocation8 + $0x50] sm:$0xf]
        %v430 = vld [vmem:[#allocation8 + $0x54] sm:$0xff]
        %v431 = vld [vmem:[#allocation8 + $0x5c] sm:$0xf]
        %v432 = vld [vmem:[#allocation8 + $0x60] sm:$0xff]
        %v433 = vld [vmem:[#allocation8 + $0x68] sm:$0xf]
        %v434 = vld [vmem:[#allocation8 + $0x6c] sm:$0xff]
        %v435 = vld [vmem:[#allocation8 + $0x74] sm:$0xf]
        %v436 = vld [vmem:[#allocation8 + $0x78] sm:$0xff]
        %v437 = vld [vmem:[#allocation8 + $0x80] sm:$0xf]
        %v438 = vld [vmem:[#allocation8 + $0x84] sm:$0xff]
        %v439 = vld [vmem:[#allocation8 + $0x8c] sm:$0xf]
        %v440 = vld [vmem:[#allocation8 + $0x90] sm:$0xff]
        %v441 = vld [vmem:[#allocation8 + $0x98] sm:$0xf]
        %v442 = vld [vmem:[#allocation8 + $0x9c] sm:$0xff]
        %v443 = vld [vmem:[#allocation8 + $0xa4] sm:$0xf]
        %v444 = vld [vmem:[#allocation8 + $0xa8] sm:$0xff]
        %v445 = vld [vmem:[#allocation8 + $0xb0] sm:$0xf]
        %v446 = vld [vmem:[#allocation8 + $0xb4] sm:$0xff]
        %v447 = vld [vmem:[#allocation8 + $0xbc] sm:$0xf]
        %v448 = vld [vmem:[#allocation9] sm:$0x7]
        %v450 = vlaneseq
        %v451 = vshrl.u32 %v450, 7
        %v452 = vsub.s32 0, %v451
        %v453 = vrot.slane %v448, %v452
        %v454 = vlaneseq
        %v455 = vshrl.u32 %v454, 7
        %v456 = vsub.s32 1, %v455
        %v457 = vrot.slane %v448, %v456
        %v458 = vlaneseq
        %v459 = vshrl.u32 %v458, 7
        %v460 = vsub.s32 2, %v459
        %v461 = vrot.slane %v448, %v460
        %v497 = vunpack.c.l.b16 %v416
        %v498 = vunpack.c.h.b16 %v416
        %v499 = vunpack.c.l.b16 %v417
        %v500 = vunpack.c.l.b16 %v418
        %v501 = vunpack.c.h.b16 %v418
        %v502 = vunpack.c.l.b16 %v419
        %v503 = vunpack.c.l.b16 %v420
        %v504 = vunpack.c.h.b16 %v420
        %v505 = vunpack.c.l.b16 %v421
        %v506 = vunpack.c.l.b16 %v422
        %v507 = vunpack.c.h.b16 %v422
        %v508 = vunpack.c.l.b16 %v423
        %v509 = vunpack.c.l.b16 %v424
        %v510 = vunpack.c.h.b16 %v424
        %v511 = vunpack.c.l.b16 %v425
        %v512 = vunpack.c.l.b16 %v426
        %v513 = vunpack.c.h.b16 %v426
        %v514 = vunpack.c.l.b16 %v427
        %v515 = vunpack.c.l.b16 %v428
        %v516 = vunpack.c.h.b16 %v428
        %v517 = vunpack.c.l.b16 %v429
        %v518 = vunpack.c.l.b16 %v430
        %v519 = vunpack.c.h.b16 %v430
        %v520 = vunpack.c.l.b16 %v431
        %v521 = vunpack.c.l.b16 %v432
        %v522 = vunpack.c.h.b16 %v432
        %v523 = vunpack.c.l.b16 %v433
        %v524 = vunpack.c.l.b16 %v434
        %v525 = vunpack.c.h.b16 %v434
        %v526 = vunpack.c.l.b16 %v435
        %v527 = vunpack.c.l.b16 %v436
        %v528 = vunpack.c.h.b16 %v436
        %v529 = vunpack.c.l.b16 %v437
        %v530 = vunpack.c.l.b16 %v438
        %v531 = vunpack.c.h.b16 %v438
        %v532 = vunpack.c.l.b16 %v439
        %v533 = vunpack.c.l.b16 %v440
        %v534 = vunpack.c.h.b16 %v440
        %v535 = vunpack.c.l.b16 %v441
        %v536 = vunpack.c.l.b16 %v442
        %v537 = vunpack.c.h.b16 %v442
        %v538 = vunpack.c.l.b16 %v443
        %v539 = vunpack.c.l.b16 %v444
        %v540 = vunpack.c.h.b16 %v444
        %v541 = vunpack.c.l.b16 %v445
        %v542 = vunpack.c.l.b16 %v446
        %v543 = vunpack.c.h.b16 %v446
        %v544 = vunpack.c.l.b16 %v447
        %v545 = vpack.c.b16 %v500, %v497
        %v546 = vpack.c.b16 %v501, %v498
        %v547 = vpack.c.b16 %v502, %v499
        %v548 = vpack.c.b16 %v506, %v503
        %v549 = vpack.c.b16 %v507, %v504
        %v550 = vpack.c.b16 %v508, %v505
        %v551 = vpack.c.b16 %v512, %v509
        %v552 = vpack.c.b16 %v513, %v510
        %v553 = vpack.c.b16 %v514, %v511
        %v554 = vpack.c.b16 %v518, %v515
        %v555 = vpack.c.b16 %v519, %v516
        %v556 = vpack.c.b16 %v520, %v517
        %v557 = vpack.c.b16 %v524, %v521
        %v558 = vpack.c.b16 %v525, %v522
        %v559 = vpack.c.b16 %v526, %v523
        %v560 = vpack.c.b16 %v530, %v527
        %v561 = vpack.c.b16 %v531, %v528
        %v562 = vpack.c.b16 %v532, %v529
        %v563 = vpack.c.b16 %v536, %v533
        %v564 = vpack.c.b16 %v537, %v534
        %v565 = vpack.c.b16 %v538, %v535
        %v566 = vpack.c.b16 %v542, %v539
        %v567 = vpack.c.b16 %v543, %v540
        %v568 = vpack.c.b16 %v544, %v541
        %593 = vmatprep.subr.bf16.mxu0 %v546
        %594 = vmatpush1.bf16.msra.mxu0 %v545
        %595 = vmatprep.subr.bf16.mxu0 %v549
        %596 = vmatpush1.bf16.msra.mxu0 %v548
        %597 = vmatprep.subr.bf16.mxu0 %v552
        %598 = vmatpush1.bf16.msra.mxu0 %v551
        %599 = vmatprep.subr.bf16.mxu0 %v555
        %600 = vmatpush1.bf16.msra.mxu0 %v554
        %601 = vmatprep.subr.bf16.mxu0 %v558
        %602 = vmatpush1.bf16.msra.mxu0 %v557
        %603 = vmatprep.subr.bf16.mxu0 %v561
        %604 = vmatpush1.bf16.msra.mxu0 %v560
        %605 = vmatprep.subr.bf16.mxu0 %v564
        %606 = vmatpush1.bf16.msra.mxu0 %v563
        %607 = vmatprep.subr.bf16.mxu0 %v567
        %608 = vmatpush1.bf16.msra.mxu0 %v566
        %609 = vmatprep.subr.bf16.mxu0 0
        %610 = vmatpush1.bf16.msra.mxu0 0
        %611 = vmatprep.subr.bf16.mxu0 0
        %612 = vmatpush1.bf16.msra.mxu0 0
        %613 = vmatprep.subr.bf16.mxu0 0
        %614 = vmatpush1.bf16.msra.mxu0 0
        %615 = vmatprep.subr.bf16.mxu0 0
        %616 = vmatpush1.bf16.msra.mxu0 0
        %617 = vmatprep.subr.bf16.mxu0 0
        %618 = vmatpush1.bf16.msra.mxu0 0
        %619 = vmatprep.subr.bf16.mxu0 0
        %620 = vmatpush1.bf16.msra.mxu0 0
        %621 = vmatprep.subr.bf16.mxu0 0
        %622 = vmatpush1.bf16.msra.mxu0 0
        %623 = vmatprep.subr.bf16.mxu0 0
        %624 = vmatpush1.bf16.msra.mxu0 0
        %625 = vmatprep.mubr.bf16.mxu0 0
        %626 = vmatmul.mubr.bf16.gmra.mrb[0].mxu0 %v415
        %v627 = vpop.f32.mrb[0].mxu0
        %v628 = vadd.f32 %v453, %v627
        %v629 = vpop.f32.mrb[0].mxu0
        %v630 = vadd.f32 %v457, %v629
        %v631 = vpop.f32.mrb[0].mxu0
        %v632 = vpop.f32.mrb[0].mxu0
        %633 = vdwg.mxu0
        %634 = vmatprep.subr.bf16.mxu0 0
        %635 = vmatpush1.bf16.msra.mxu0 %v547
        %636 = vmatprep.subr.bf16.mxu0 0
        %637 = vmatpush1.bf16.msra.mxu0 %v550
        %638 = vmatprep.subr.bf16.mxu0 0
        %639 = vmatpush1.bf16.msra.mxu0 %v553
        %640 = vmatprep.subr.bf16.mxu0 0
        %641 = vmatpush1.bf16.msra.mxu0 %v556
        %642 = vmatprep.subr.bf16.mxu0 0
        %643 = vmatpush1.bf16.msra.mxu0 %v559
        %644 = vmatprep.subr.bf16.mxu0 0
        %645 = vmatpush1.bf16.msra.mxu0 %v562
        %646 = vmatprep.subr.bf16.mxu0 0
        %647 = vmatpush1.bf16.msra.mxu0 %v565
        %648 = vmatprep.subr.bf16.mxu0 0
        %649 = vmatpush1.bf16.msra.mxu0 %v568
        %650 = vmatprep.subr.bf16.mxu0 0
        %651 = vmatpush1.bf16.msra.mxu0 0
        %652 = vmatprep.subr.bf16.mxu0 0
        %653 = vmatpush1.bf16.msra.mxu0 0
        %654 = vmatprep.subr.bf16.mxu0 0
        %655 = vmatpush1.bf16.msra.mxu0 0
        %656 = vmatprep.subr.bf16.mxu0 0
        %657 = vmatpush1.bf16.msra.mxu0 0
        %658 = vmatprep.subr.bf16.mxu0 0
        %659 = vmatpush1.bf16.msra.mxu0 0
        %660 = vmatprep.subr.bf16.mxu0 0
        %661 = vmatpush1.bf16.msra.mxu0 0
        %662 = vmatprep.subr.bf16.mxu0 0
        %663 = vmatpush1.bf16.msra.mxu0 0
        %664 = vmatprep.subr.bf16.mxu0 0
        %665 = vmatpush1.bf16.msra.mxu0 0
        %666 = vmatprep.mubr.bf16.mxu0 0
        %667 = vmatmul.mubr.bf16.gmra.mrb[0].mxu0 %v415
        %v668 = vpop.f32.mrb[0].mxu0
        %v669 = vadd.f32 %v461, %v668
        %v670 = vpop.f32.mrb[0].mxu0
        %v671 = vpop.f32.mrb[0].mxu0
        %v672 = vpop.f32.mrb[0].mxu0
        %673 = vdwg.mxu0
        %v674 = vld [vmem:[#allocation6] sm:$0xff]
        %v675 = vpack.c.bf16 %v628, %v628
        %v676 = vpack.c.bf16 %v630, %v630
        %v677 = vpack.c.bf16 %v669, %v669
        %vm678 = vcmask 261120
        %v680 = vsel %vm678, %v675, 0
        %v683 = vsel %vm678, %v676, 0
        %685 = vmatprep.subr.bf16.mxu0 0
        %686 = vmatpush1.bf16.xpose.msra.mxu0 %v683
        %687 = vmatprep.subr.bf16.mxu0 0
        %688 = vmatpush1.bf16.xpose.msra.mxu0 0
        %689 = vmatprep.subr.bf16.mxu0 0
        %690 = vmatpush1.bf16.xpose.msra.mxu0 0
        %691 = vmatprep.subr.bf16.mxu0 0
        %692 = vmatpush1.bf16.xpose.msra.mxu0 0
        %693 = vmatprep.subr.bf16.mxu0 0
        %694 = vmatpush1.bf16.xpose.msra.mxu0 0
        %695 = vmatprep.subr.bf16.mxu0 0
        %696 = vmatpush1.bf16.xpose.msra.mxu0 0
        %697 = vmatprep.subr.bf16.mxu0 0
        %698 = vmatpush1.bf16.xpose.msra.mxu0 0
        %699 = vmatprep.subr.bf16.mxu0 0
        %700 = vmatpush1.bf16.xpose.msra.mxu0 0
        %701 = vmatprep.subr.bf16.mxu0 0
        %702 = vmatpush1.bf16.xpose.msra.mxu0 0
        %703 = vmatprep.subr.bf16.mxu0 0
        %704 = vmatpush1.bf16.xpose.msra.mxu0 0
        %705 = vmatprep.subr.bf16.mxu0 0
        %706 = vmatpush1.bf16.xpose.msra.mxu0 0
        %707 = vmatprep.subr.bf16.mxu0 0
        %708 = vmatpush1.bf16.xpose.msra.mxu0 0
        %709 = vmatprep.subr.bf16.mxu0 0
        %710 = vmatpush1.bf16.xpose.msra.mxu0 0
        %711 = vmatprep.subr.bf16.mxu0 0
        %712 = vmatpush1.bf16.xpose.msra.mxu0 0
        %713 = vmatprep.subr.bf16.mxu0 0
        %714 = vmatpush1.bf16.xpose.msra.mxu0 0
        %715 = vmatprep.subr.bf16.mxu0 0
        %716 = vmatpush1.bf16.xpose.msra.mxu0 0
        %717 = vmatprep.mubr.bf16.mxu0 0
        %718 = vmatmul.mubr.bf16.gmra.mrb[0].mxu0 %v680
        %v719 = vpop.f32.mrb[0].mxu0
        %v720 = vadd.f32 0.0, %v719
        %v721 = vpop.f32.mrb[0].mxu0
        %v722 = vpop.f32.mrb[0].mxu0
        %v723 = vpop.f32.mrb[0].mxu0
        %724 = vdwg.mxu0
        %v725 = vmul.f32 %v720, 0.17677669
        %v726 = vadd.f32 %v725, %v674
        %vm727 = vcmask 64512
        %v728 = vsel %vm727, %v726, -inf
        %729 = vmax.xlane.f32.xlu0 %v728
        %v730 = vpop.xlane.xlu0 %729
        %v731 = vsub.f32 %v726, %v730
        %v732 = vmul.f32 %v731, 1.442695
        %v733 = vpow.pop %v732
        %v734 = vsel %vm727, %v733, 0.0
        %735 = vadd.xlane.f32.xlu0 %v734
        %v736 = vpop.xlane.xlu0 %735
        %v737 = vrcp.pop %v736
        %v738 = vmul.f32 %v733, %v737
        %v739 = vpack.c.bf16 %v738, %v738
        %v741 = vsel %vm727, %v739, 0
        %vm743 = vcmask 1043456
        %v745 = vsel %vm743, %v677, 0
        %747 = vmatprep.subr.bf16.mxu0 0
        %748 = vmatpush1.bf16.msra.mxu0 %v745
        %749 = vmatprep.subr.bf16.mxu0 0
        %750 = vmatpush1.bf16.msra.mxu0 0
        %751 = vmatprep.subr.bf16.mxu0 0
        %752 = vmatpush1.bf16.msra.mxu0 0
        %753 = vmatprep.subr.bf16.mxu0 0
        %754 = vmatpush1.bf16.msra.mxu0 0
        %755 = vmatprep.subr.bf16.mxu0 0
        %756 = vmatpush1.bf16.msra.mxu0 0
        %757 = vmatprep.subr.bf16.mxu0 0
        %758 = vmatpush1.bf16.msra.mxu0 0
        %759 = vmatprep.subr.bf16.mxu0 0
        %760 = vmatpush1.bf16.msra.mxu0 0
        %761 = vmatprep.subr.bf16.mxu0 0
        %762 = vmatpush1.bf16.msra.mxu0 0
        %763 = vmatprep.subr.bf16.mxu0 0
        %764 = vmatpush1.bf16.msra.mxu0 0
        %765 = vmatprep.subr.bf16.mxu0 0
        %766 = vmatpush1.bf16.msra.mxu0 0
        %767 = vmatprep.subr.bf16.mxu0 0
        %768 = vmatpush1.bf16.msra.mxu0 0
        %769 = vmatprep.subr.bf16.mxu0 0
        %770 = vmatpush1.bf16.msra.mxu0 0
        %771 = vmatprep.subr.bf16.mxu0 0
        %772 = vmatpush1.bf16.msra.mxu0 0
        %773 = vmatprep.subr.bf16.mxu0 0
        %774 = vmatpush1.bf16.msra.mxu0 0
        %775 = vmatprep.subr.bf16.mxu0 0
        %776 = vmatpush1.bf16.msra.mxu0 0
        %777 = vmatprep.subr.bf16.mxu0 0
        %778 = vmatpush1.bf16.msra.mxu0 0
        %779 = vmatprep.mubr.bf16.mxu0 0
        %780 = vmatmul.mubr.bf16.gmra.mrb[0].mxu0 %v741
        %v781 = vpop.f32.mrb[0].mxu0
        %v782 = vadd.f32 0.0, %v781
        %v783 = vpop.f32.mrb[0].mxu0
        %v784 = vpop.f32.mrb[0].mxu0
        %v785 = vpop.f32.mrb[0].mxu0
        %786 = vdwg.mxu0
        %787 = vst.msk [vmem:[#allocation2] sm:$0xff] %vm678, %v782
        %789 = vrot.lane.b32.xlu0 %v675, 96
        %v790 = vpop.permute.xlu0 %789
        %792 = vrot.lane.b32.xlu0 %v676, 96
        %v793 = vpop.permute.xlu0 %792
        %v795 = vsel %vm678, %v790, 0
        %v798 = vsel %vm678, %v793, 0
        %800 = vmatprep.subr.bf16.mxu0 0
        %801 = vmatpush1.bf16.xpose.msra.mxu0 %v798
        %802 = vmatprep.subr.bf16.mxu0 0
        %803 = vmatpush1.bf16.xpose.msra.mxu0 0
        %804 = vmatprep.subr.bf16.mxu0 0
        %805 = vmatpush1.bf16.xpose.msra.mxu0 0
        %806 = vmatprep.subr.bf16.mxu0 0
        %807 = vmatpush1.bf16.xpose.msra.mxu0 0
        %808 = vmatprep.subr.bf16.mxu0 0
        %809 = vmatpush1.bf16.xpose.msra.mxu0 0
        %810 = vmatprep.subr.bf16.mxu0 0
        %811 = vmatpush1.bf16.xpose.msra.mxu0 0
        %812 = vmatprep.subr.bf16.mxu0 0
        %813 = vmatpush1.bf16.xpose.msra.mxu0 0
        %814 = vmatprep.subr.bf16.mxu0 0
        %815 = vmatpush1.bf16.xpose.msra.mxu0 0
        %816 = vmatprep.subr.bf16.mxu0 0
        %817 = vmatpush1.bf16.xpose.msra.mxu0 0
        %818 = vmatprep.subr.bf16.mxu0 0
        %819 = vmatpush1.bf16.xpose.msra.mxu0 0
        %820 = vmatprep.subr.bf16.mxu0 0
        %821 = vmatpush1.bf16.xpose.msra.mxu0 0
        %822 = vmatprep.subr.bf16.mxu0 0
        %823 = vmatpush1.bf16.xpose.msra.mxu0 0
        %824 = vmatprep.subr.bf16.mxu0 0
        %825 = vmatpush1.bf16.xpose.msra.mxu0 0
        %826 = vmatprep.subr.bf16.mxu0 0
        %827 = vmatpush1.bf16.xpose.msra.mxu0 0
        %828 = vmatprep.subr.bf16.mxu0 0
        %829 = vmatpush1.bf16.xpose.msra.mxu0 0
        %830 = vmatprep.subr.bf16.mxu0 0
        %831 = vmatpush1.bf16.xpose.msra.mxu0 0
        %832 = vmatprep.mubr.bf16.mxu0 0
        %833 = vmatmul.mubr.bf16.gmra.mrb[0].mxu0 %v795
        %v834 = vpop.f32.mrb[0].mxu0
        %v835 = vadd.f32 0.0, %v834
        %v836 = vpop.f32.mrb[0].mxu0
        %v837 = vpop.f32.mrb[0].mxu0
        %v838 = vpop.f32.mrb[0].mxu0
        %839 = vdwg.mxu0
        %v840 = vmul.f32 %v835, 0.17677669
        %v841 = vadd.f32 %v840, %v674
        %v842 = vsel %vm727, %v841, -inf
        %843 = vmax.xlane.f32.xlu0 %v842
        %v844 = vpop.xlane.xlu0 %843
        %v845 = vsub.f32 %v841, %v844
        %v846 = vmul.f32 %v845, 1.442695
        %v847 = vpow.pop %v846
        %v848 = vsel %vm727, %v847, 0.0
        %849 = vadd.xlane.f32.xlu0 %v848
        %v850 = vpop.xlane.xlu0 %849
        %v851 = vrcp.pop %v850
        %v852 = vmul.f32 %v847, %v851
        %v853 = vpack.c.bf16 %v852, %v852
        %855 = vrot.lane.b32.xlu0 %v677, 96
        %v856 = vpop.permute.xlu0 %855
        %v858 = vsel %vm727, %v853, 0
        %v861 = vsel %vm743, %v856, 0
        %863 = vmatprep.subr.bf16.mxu0 0
        %864 = vmatpush1.bf16.msra.mxu0 %v861
        %865 = vmatprep.subr.bf16.mxu0 0
        %866 = vmatpush1.bf16.msra.mxu0 0
        %867 = vmatprep.subr.bf16.mxu0 0
        %868 = vmatpush1.bf16.msra.mxu0 0
        %869 = vmatprep.subr.bf16.mxu0 0
        %870 = vmatpush1.bf16.msra.mxu0 0
        %871 = vmatprep.subr.bf16.mxu0 0
        %872 = vmatpush1.bf16.msra.mxu0 0
        %873 = vmatprep.subr.bf16.mxu0 0
        %874 = vmatpush1.bf16.msra.mxu0 0
        %875 = vmatprep.subr.bf16.mxu0 0
        %876 = vmatpush1.bf16.msra.mxu0 0
        %877 = vmatprep.subr.bf16.mxu0 0
        %878 = vmatpush1.bf16.msra.mxu0 0
        %879 = vmatprep.subr.bf16.mxu0 0
        %880 = vmatpush1.bf16.msra.mxu0 0
        %881 = vmatprep.subr.bf16.mxu0 0
        %882 = vmatpush1.bf16.msra.mxu0 0
        %883 = vmatprep.subr.bf16.mxu0 0
        %884 = vmatpush1.bf16.msra.mxu0 0
        %885 = vmatprep.subr.bf16.mxu0 0
        %886 = vmatpush1.bf16.msra.mxu0 0
        %887 = vmatprep.subr.bf16.mxu0 0
        %888 = vmatpush1.bf16.msra.mxu0 0
        %889 = vmatprep.subr.bf16.mxu0 0
        %890 = vmatpush1.bf16.msra.mxu0 0
        %891 = vmatprep.subr.bf16.mxu0 0
        %892 = vmatpush1.bf16.msra.mxu0 0
        %893 = vmatprep.subr.bf16.mxu0 0
        %894 = vmatpush1.bf16.msra.mxu0 0
        %895 = vmatprep.mubr.bf16.mxu0 0
        %896 = vmatmul.mubr.bf16.gmra.mrb[0].mxu0 %v858
        %v897 = vpop.f32.mrb[0].mxu0
        %v898 = vadd.f32 0.0, %v897
        %v899 = vpop.f32.mrb[0].mxu0
        %v900 = vpop.f32.mrb[0].mxu0
        %v901 = vpop.f32.mrb[0].mxu0
        %902 = vdwg.mxu0
        %904 = vrot.lane.b32.xlu0 %v898, 32
        %v905 = vpop.permute.xlu0 %904
        %vm907 = vcmask 523520
        %908 = vst.msk [vmem:[#allocation2] sm:$0xff] %vm907, %v905
        %909 = vrot.lane.b32.xlu0 %v675, 64
        %v910 = vpop.permute.xlu0 %909
        %911 = vrot.lane.b32.xlu0 %v676, 64
        %v912 = vpop.permute.xlu0 %911
        %v914 = vsel %vm678, %v910, 0
        %v917 = vsel %vm678, %v912, 0
        %919 = vmatprep.subr.bf16.mxu0 0
        %920 = vmatpush1.bf16.xpose.msra.mxu0 %v917
        %921 = vmatprep.subr.bf16.mxu0 0
        %922 = vmatpush1.bf16.xpose.msra.mxu0 0
        %923 = vmatprep.subr.bf16.mxu0 0
        %924 = vmatpush1.bf16.xpose.msra.mxu0 0
        %925 = vmatprep.subr.bf16.mxu0 0
        %926 = vmatpush1.bf16.xpose.msra.mxu0 0
        %927 = vmatprep.subr.bf16.mxu0 0
        %928 = vmatpush1.bf16.xpose.msra.mxu0 0
        %929 = vmatprep.subr.bf16.mxu0 0
        %930 = vmatpush1.bf16.xpose.msra.mxu0 0
        %931 = vmatprep.subr.bf16.mxu0 0
        %932 = vmatpush1.bf16.xpose.msra.mxu0 0
        %933 = vmatprep.subr.bf16.mxu0 0
        %934 = vmatpush1.bf16.xpose.msra.mxu0 0
        %935 = vmatprep.subr.bf16.mxu0 0
        %936 = vmatpush1.bf16.xpose.msra.mxu0 0
        %937 = vmatprep.subr.bf16.mxu0 0
        %938 = vmatpush1.bf16.xpose.msra.mxu0 0
        %939 = vmatprep.subr.bf16.mxu0 0
        %940 = vmatpush1.bf16.xpose.msra.mxu0 0
        %941 = vmatprep.subr.bf16.mxu0 0
        %942 = vmatpush1.bf16.xpose.msra.mxu0 0
        %943 = vmatprep.subr.bf16.mxu0 0
        %944 = vmatpush1.bf16.xpose.msra.mxu0 0
        %945 = vmatprep.subr.bf16.mxu0 0
        %946 = vmatpush1.bf16.xpose.msra.mxu0 0
        %947 = vmatprep.subr.bf16.mxu0 0
        %948 = vmatpush1.bf16.xpose.msra.mxu0 0
        %949 = vmatprep.subr.bf16.mxu0 0
        %950 = vmatpush1.bf16.xpose.msra.mxu0 0
        %951 = vmatprep.mubr.bf16.mxu0 0
        %952 = vmatmul.mubr.bf16.gmra.mrb[0].mxu0 %v914
        %v953 = vpop.f32.mrb[0].mxu0
        %v954 = vadd.f32 0.0, %v953
        %v955 = vpop.f32.mrb[0].mxu0
        %v956 = vpop.f32.mrb[0].mxu0
        %v957 = vpop.f32.mrb[0].mxu0
        %958 = vdwg.mxu0
        %v959 = vmul.f32 %v954, 0.17677669
        %v960 = vadd.f32 %v959, %v674
        %v961 = vsel %vm727, %v960, -inf
        %962 = vmax.xlane.f32.xlu0 %v961
        %v963 = vpop.xlane.xlu0 %962
        %v964 = vsub.f32 %v960, %v963
        %v965 = vmul.f32 %v964, 1.442695
        %v966 = vpow.pop %v965
        %v967 = vsel %vm727, %v966, 0.0
        %968 = vadd.xlane.f32.xlu0 %v967
        %v969 = vpop.xlane.xlu0 %968
        %v970 = vrcp.pop %v969
        %v971 = vmul.f32 %v966, %v970
        %v972 = vpack.c.bf16 %v971, %v971
        %973 = vrot.lane.b32.xlu0 %v677, 64
        %v974 = vpop.permute.xlu0 %973
        %v976 = vsel %vm727, %v972, 0
        %v979 = vsel %vm743, %v974, 0
        %981 = vmatprep.subr.bf16.mxu0 0
        %982 = vmatpush1.bf16.msra.mxu0 %v979
        %983 = vmatprep.subr.bf16.mxu0 0
        %984 = vmatpush1.bf16.msra.mxu0 0
        %985 = vmatprep.subr.bf16.mxu0 0
        %986 = vmatpush1.bf16.msra.mxu0 0
        %987 = vmatprep.subr.bf16.mxu0 0
        %988 = vmatpush1.bf16.msra.mxu0 0
        %989 = vmatprep.subr.bf16.mxu0 0
        %990 = vmatpush1.bf16.msra.mxu0 0
        %991 = vmatprep.subr.bf16.mxu0 0
        %992 = vmatpush1.bf16.msra.mxu0 0
        %993 = vmatprep.subr.bf16.mxu0 0
        %994 = vmatpush1.bf16.msra.mxu0 0
        %995 = vmatprep.subr.bf16.mxu0 0
        %996 = vmatpush1.bf16.msra.mxu0 0
        %997 = vmatprep.subr.bf16.mxu0 0
        %998 = vmatpush1.bf16.msra.mxu0 0
        %999 = vmatprep.subr.bf16.mxu0 0
        %1000 = vmatpush1.bf16.msra.mxu0 0
        %1001 = vmatprep.subr.bf16.mxu0 0
        %1002 = vmatpush1.bf16.msra.mxu0 0
        %1003 = vmatprep.subr.bf16.mxu0 0
        %1004 = vmatpush1.bf16.msra.mxu0 0
        %1005 = vmatprep.subr.bf16.mxu0 0
        %1006 = vmatpush1.bf16.msra.mxu0 0
        %1007 = vmatprep.subr.bf16.mxu0 0
        %1008 = vmatpush1.bf16.msra.mxu0 0
        %1009 = vmatprep.subr.bf16.mxu0 0
        %1010 = vmatpush1.bf16.msra.mxu0 0
        %1011 = vmatprep.subr.bf16.mxu0 0
        %1012 = vmatpush1.bf16.msra.mxu0 0
        %1013 = vmatprep.mubr.bf16.mxu0 0
        %1014 = vmatmul.mubr.bf16.gmra.mrb[0].mxu0 %v976
        %v1015 = vpop.f32.mrb[0].mxu0
        %v1016 = vadd.f32 0.0, %v1015
        %v1017 = vpop.f32.mrb[0].mxu0
        %v1018 = vpop.f32.mrb[0].mxu0
        %v1019 = vpop.f32.mrb[0].mxu0
        %1020 = vdwg.mxu0
        %1022 = vrot.lane.b32.xlu0 %v1016, 64
        %v1023 = vpop.permute.xlu0 %1022
        %vm1025 = vcmask 785920
        %1026 = vst.msk [vmem:[#allocation2] sm:$0xff] %vm1025, %v1023
        %1027 = vrot.lane.b32.xlu0 %v675, 32
        %v1028 = vpop.permute.xlu0 %1027
        %1029 = vrot.lane.b32.xlu0 %v676, 32
        %v1030 = vpop.permute.xlu0 %1029
        %v1032 = vsel %vm678, %v1028, 0
        %v1035 = vsel %vm678, %v1030, 0
        %1037 = vmatprep.subr.bf16.mxu0 0
        %1038 = vmatpush1.bf16.xpose.msra.mxu0 %v1035
        %1039 = vmatprep.subr.bf16.mxu0 0
        %1040 = vmatpush1.bf16.xpose.msra.mxu0 0
        %1041 = vmatprep.subr.bf16.mxu0 0
        %1042 = vmatpush1.bf16.xpose.msra.mxu0 0
        %1043 = vmatprep.subr.bf16.mxu0 0
        %1044 = vmatpush1.bf16.xpose.msra.mxu0 0
        %1045 = vmatprep.subr.bf16.mxu0 0
        %1046 = vmatpush1.bf16.xpose.msra.mxu0 0
        %1047 = vmatprep.subr.bf16.mxu0 0
        %1048 = vmatpush1.bf16.xpose.msra.mxu0 0
        %1049 = vmatprep.subr.bf16.mxu0 0
        %1050 = vmatpush1.bf16.xpose.msra.mxu0 0
        %1051 = vmatprep.subr.bf16.mxu0 0
        %1052 = vmatpush1.bf16.xpose.msra.mxu0 0
        %1053 = vmatprep.subr.bf16.mxu0 0
        %1054 = vmatpush1.bf16.xpose.msra.mxu0 0
        %1055 = vmatprep.subr.bf16.mxu0 0
        %1056 = vmatpush1.bf16.xpose.msra.mxu0 0
        %1057 = vmatprep.subr.bf16.mxu0 0
        %1058 = vmatpush1.bf16.xpose.msra.mxu0 0
        %1059 = vmatprep.subr.bf16.mxu0 0
        %1060 = vmatpush1.bf16.xpose.msra.mxu0 0
        %1061 = vmatprep.subr.bf16.mxu0 0
        %1062 = vmatpush1.bf16.xpose.msra.mxu0 0
        %1063 = vmatprep.subr.bf16.mxu0 0
        %1064 = vmatpush1.bf16.xpose.msra.mxu0 0
        %1065 = vmatprep.subr.bf16.mxu0 0
        %1066 = vmatpush1.bf16.xpose.msra.mxu0 0
        %1067 = vmatprep.subr.bf16.mxu0 0
        %1068 = vmatpush1.bf16.xpose.msra.mxu0 0
        %1069 = vmatprep.mubr.bf16.mxu0 0
        %1070 = vmatmul.mubr.bf16.gmra.mrb[0].mxu0 %v1032
        %v1071 = vpop.f32.mrb[0].mxu0
        %v1072 = vadd.f32 0.0, %v1071
        %v1073 = vpop.f32.mrb[0].mxu0
        %v1074 = vpop.f32.mrb[0].mxu0
        %v1075 = vpop.f32.mrb[0].mxu0
        %1076 = vdwg.mxu0
        %v1077 = vmul.f32 %v1072, 0.17677669
        %v1078 = vadd.f32 %v1077, %v674
        %v1079 = vsel %vm727, %v1078, -inf
        %1080 = vmax.xlane.f32.xlu0 %v1079
        %v1081 = vpop.xlane.xlu0 %1080
        %v1082 = vsub.f32 %v1078, %v1081
        %v1083 = vmul.f32 %v1082, 1.442695
        %v1084 = vpow.pop %v1083
        %v1085 = vsel %vm727, %v1084, 0.0
        %1086 = vadd.xlane.f32.xlu0 %v1085
        %v1087 = vpop.xlane.xlu0 %1086
        %v1088 = vrcp.pop %v1087
        %v1089 = vmul.f32 %v1084, %v1088
        %v1090 = vpack.c.bf16 %v1089, %v1089
        %1091 = vrot.lane.b32.xlu0 %v677, 32
        %v1092 = vpop.permute.xlu0 %1091
        %v1094 = vsel %vm727, %v1090, 0
        %v1097 = vsel %vm743, %v1092, 0
        %1099 = vmatprep.subr.bf16.mxu0 0
        %1100 = vmatpush1.bf16.msra.mxu0 %v1097
        %1101 = vmatprep.subr.bf16.mxu0 0
        %1102 = vmatpush1.bf16.msra.mxu0 0
        %1103 = vmatprep.subr.bf16.mxu0 0
        %1104 = vmatpush1.bf16.msra.mxu0 0
        %1105 = vmatprep.subr.bf16.mxu0 0
        %1106 = vmatpush1.bf16.msra.mxu0 0
        %1107 = vmatprep.subr.bf16.mxu0 0
        %1108 = vmatpush1.bf16.msra.mxu0 0
        %1109 = vmatprep.subr.bf16.mxu0 0
        %1110 = vmatpush1.bf16.msra.mxu0 0
        %1111 = vmatprep.subr.bf16.mxu0 0
        %1112 = vmatpush1.bf16.msra.mxu0 0
        %1113 = vmatprep.subr.bf16.mxu0 0
        %1114 = vmatpush1.bf16.msra.mxu0 0
        %1115 = vmatprep.subr.bf16.mxu0 0
        %1116 = vmatpush1.bf16.msra.mxu0 0
        %1117 = vmatprep.subr.bf16.mxu0 0
        %1118 = vmatpush1.bf16.msra.mxu0 0
        %1119 = vmatprep.subr.bf16.mxu0 0
        %1120 = vmatpush1.bf16.msra.mxu0 0
        %1121 = vmatprep.subr.bf16.mxu0 0
        %1122 = vmatpush1.bf16.msra.mxu0 0
        %1123 = vmatprep.subr.bf16.mxu0 0
        %1124 = vmatpush1.bf16.msra.mxu0 0
        %1125 = vmatprep.subr.bf16.mxu0 0
        %1126 = vmatpush1.bf16.msra.mxu0 0
        %1127 = vmatprep.subr.bf16.mxu0 0
        %1128 = vmatpush1.bf16.msra.mxu0 0
        %1129 = vmatprep.subr.bf16.mxu0 0
        %1130 = vmatpush1.bf16.msra.mxu0 0
        %1131 = vmatprep.mubr.bf16.mxu0 0
        %1132 = vmatmul.mubr.bf16.gmra.mrb[0].mxu0 %v1094
        %v1133 = vpop.f32.mrb[0].mxu0
        %v1134 = vadd.f32 0.0, %v1133
        %v1135 = vpop.f32.mrb[0].mxu0
        %v1136 = vpop.f32.mrb[0].mxu0
        %v1137 = vpop.f32.mrb[0].mxu0
        %1138 = vdwg.mxu0
        %1140 = vrot.lane.b32.xlu0 %v1134, 96
        %v1141 = vpop.permute.xlu0 %1140
        %vm1143 = vcmask 1048320
        %1144 = vst.msk [vmem:[#allocation2] sm:$0xff] %vm1143, %v1141
        %v1145 = vld [vmem:[#allocation2] sm:$0xff]
        %v1146 = vpack.c.bf16 %v1145, %v1145
        %v1147 = vld [vmem:[#allocation11] sm:$0xf]
        %v1148 = vld [vmem:[#allocation11 + $0x4] sm:$0xf]
        %v1149 = vld [vmem:[#allocation11 + $0x8] sm:$0xf]
        %v1150 = vld [vmem:[#allocation11 + $0xc] sm:$0xf]
        %v1151 = vld [vmem:[#allocation11 + $0x10] sm:$0xf]
        %v1152 = vld [vmem:[#allocation11 + $0x14] sm:$0xf]
        %v1153 = vld [vmem:[#allocation11 + $0x18] sm:$0xf]
        %v1154 = vld [vmem:[#allocation11 + $0x1c] sm:$0xf]
        %v1155 = vld [vmem:[#allocation11 + $0x20] sm:$0xf]
        %v1156 = vld [vmem:[#allocation11 + $0x24] sm:$0xf]
        %v1157 = vld [vmem:[#allocation11 + $0x28] sm:$0xf]
        %v1158 = vld [vmem:[#allocation11 + $0x2c] sm:$0xf]
        %v1159 = vld [vmem:[#allocation11 + $0x30] sm:$0xf]
        %v1160 = vld [vmem:[#allocation11 + $0x34] sm:$0xf]
        %v1161 = vld [vmem:[#allocation11 + $0x38] sm:$0xf]
        %v1162 = vld [vmem:[#allocation11 + $0x3c] sm:$0xf]
        %v1163 = vld [vmem:[#allocation12] sm:$0x1]
        %v1165 = vlaneseq
        %v1166 = vshrl.u32 %v1165, 7
        %v1167 = vsub.s32 0, %v1166
        %v1168 = vrot.slane %v1163, %v1167
        %v1186 = vunpack.c.l.b16 %v1147
        %v1187 = vunpack.c.l.b16 %v1148
        %v1188 = vunpack.c.l.b16 %v1149
        %v1189 = vunpack.c.l.b16 %v1150
        %v1190 = vunpack.c.l.b16 %v1151
        %v1191 = vunpack.c.l.b16 %v1152
        %v1192 = vunpack.c.l.b16 %v1153
        %v1193 = vunpack.c.l.b16 %v1154
        %v1194 = vunpack.c.l.b16 %v1155
        %v1195 = vunpack.c.l.b16 %v1156
        %v1196 = vunpack.c.l.b16 %v1157
        %v1197 = vunpack.c.l.b16 %v1158
        %v1198 = vunpack.c.l.b16 %v1159
        %v1199 = vunpack.c.l.b16 %v1160
        %v1200 = vunpack.c.l.b16 %v1161
        %v1201 = vunpack.c.l.b16 %v1162
        %v1202 = vpack.c.b16 %v1187, %v1186
        %v1203 = vpack.c.b16 %v1189, %v1188
        %v1204 = vpack.c.b16 %v1191, %v1190
        %v1205 = vpack.c.b16 %v1193, %v1192
        %v1206 = vpack.c.b16 %v1195, %v1194
        %v1207 = vpack.c.b16 %v1197, %v1196
        %v1208 = vpack.c.b16 %v1199, %v1198
        %v1209 = vpack.c.b16 %v1201, %v1200
        %1218 = vmatprep.subr.bf16.mxu0 0
        %1219 = vmatpush1.bf16.msra.mxu0 %v1202
        %1220 = vmatprep.subr.bf16.mxu0 0
        %1221 = vmatpush1.bf16.msra.mxu0 %v1203
        %1222 = vmatprep.subr.bf16.mxu0 0
        %1223 = vmatpush1.bf16.msra.mxu0 %v1204
        %1224 = vmatprep.subr.bf16.mxu0 0
        %1225 = vmatpush1.bf16.msra.mxu0 %v1205
        %1226 = vmatprep.subr.bf16.mxu0 0
        %1227 = vmatpush1.bf16.msra.mxu0 %v1206
        %1228 = vmatprep.subr.bf16.mxu0 0
        %1229 = vmatpush1.bf16.msra.mxu0 %v1207
        %1230 = vmatprep.subr.bf16.mxu0 0
        %1231 = vmatpush1.bf16.msra.mxu0 %v1208
        %1232 = vmatprep.subr.bf16.mxu0 0
        %1233 = vmatpush1.bf16.msra.mxu0 %v1209
        %1234 = vmatprep.subr.bf16.mxu0 0
        %1235 = vmatpush1.bf16.msra.mxu0 0
        %1236 = vmatprep.subr.bf16.mxu0 0
        %1237 = vmatpush1.bf16.msra.mxu0 0
        %1238 = vmatprep.subr.bf16.mxu0 0
        %1239 = vmatpush1.bf16.msra.mxu0 0
        %1240 = vmatprep.subr.bf16.mxu0 0
        %1241 = vmatpush1.bf16.msra.mxu0 0
        %1242 = vmatprep.subr.bf16.mxu0 0
        %1243 = vmatpush1.bf16.msra.mxu0 0
        %1244 = vmatprep.subr.bf16.mxu0 0
        %1245 = vmatpush1.bf16.msra.mxu0 0
        %1246 = vmatprep.subr.bf16.mxu0 0
        %1247 = vmatpush1.bf16.msra.mxu0 0
        %1248 = vmatprep.subr.bf16.mxu0 0
        %1249 = vmatpush1.bf16.msra.mxu0 0
        %1250 = vmatprep.mubr.bf16.mxu0 0
        %1251 = vmatmul.mubr.bf16.gmra.mrb[0].mxu0 %v1146
        %v1252 = vpop.f32.mrb[0].mxu0
        %v1253 = vadd.f32 %v1168, %v1252
        %v1254 = vpop.f32.mrb[0].mxu0
        %v1255 = vpop.f32.mrb[0].mxu0
        %v1256 = vpop.f32.mrb[0].mxu0
        %1257 = vdwg.mxu0
        %v1258 = vadd.f32 %v1253, %v414
        %v1259 = vld [vmem:[#allocation14] sm:$0x1]
        %v1260 = vld [vmem:[#allocation15] sm:$0x1]
        %1261 = vadd.xlane.f32.xlu0 %v1258
        %v1262 = vpop.xlane.xlu0 %1261
        %v1263 = vrcp.pop 128.0
        %v1264 = vmul.f32 %v1262, %v1263
        %v1265 = vsub.f32 %v1258, %v1264
        %v1266 = vmul.f32 %v1265, %v1265
        %1267 = vadd.xlane.f32.xlu0 %v1266
        %v1268 = vpop.xlane.xlu0 %1267
        %v1269 = vmul.f32 %v1268, %v1263
        %v1270 = vadd.f32 %v1269, 1e-05
        %v1271 = vrsqrt.pop %v1270
        %v1272 = vmul.f32 %v1265, %v1271
        %v1274 = vlaneseq
        %v1275 = vshrl.u32 %v1274, 7
        %v1276 = vsub.s32 0, %v1275
        %v1277 = vrot.slane %v1259, %v1276
        %v1279 = vmul.f32 %v1272, %v1277
        %v1281 = vlaneseq
        %v1282 = vshrl.u32 %v1281, 7
        %v1283 = vsub.s32 0, %v1282
        %v1284 = vrot.slane %v1260, %v1283
        %v1286 = vadd.f32 %v1279, %v1284
        %1287 = vst [vmem:[%s412] sm:$0xff] %v1286
        %s1288 = sand.u32 %s210, 1
        %s1289 = scalar_lea.sflag [#allocation5], %s1288
        %s1290 = sand.u32 %s210, 1
        %s1291 = smul.addr %s1290, 8
        %s1292 = scalar_lea.vmem [#allocation17], %s1291
        // Predicated region
        $region85: #{_lambda_.12} parent=51 // pred_check
          %p1293 = pneg %p220
        $region86: #{_lambda_.12} parent=51 // pred_check_branch
          %1295 = sbr.rel (%p1293) target = $region88
        $region87: #{_lambda_.12} parent=51 // pred_region
          %s1297 = ssub.s32 128, 128
          %1298 = vsyncadd %s1289, %s1297
          %s1299 = smul.addr %s29, 128
          %s1300 = scalar_lea.hbm %s8, %s1299
          %s1302 = sshll.u32 %s1292, 4
          %s1303 = int_to_ptr.vmem [resolvable:$true] %s1302
          %1305 = dma.vmem_to_hbm [thread:$0]  %s1303, 128, %s1300, %s1289
        $region88: #{_lambda_.12} parent=51 // pred_fallthru
          _
      $region52: #{_lambda_.12} parent=5 // pred_fallthru
        _
      %p1306 = scmp.le.s32.totalorder 2, %s24
      // Predicated region
      $region89: #{_lambda_.12} parent=5 // pred_check
        %p1307 = pneg %p1306
      $region90: #{_lambda_.12} parent=5 // pred_check_branch
        %1309 = sbr.rel (%p1307) target = $region92
      $region91: #{_lambda_.12} parent=5 // pred_region
        %s1310 = ssub.s32 %s24, 2
        // Predicated region
        $region93: #{_lambda_.12} parent=91 // pred_check
          %p1311 = pneg %p226
        $region94: #{_lambda_.12} parent=91 // pred_check_branch
          %1313 = sbr.rel (%p1311) target = $region96
        $region95: #{_lambda_.12} parent=91 // pred_region
          %s1314 = sand.u32 %s211, 1
          %s1315 = scalar_lea.sflag [#allocation5], %s1314
          %s1316 = sand.u32 %s211, 1
          %s1317 = smul.addr %s1316, 8
          %s1318 = scalar_lea.vmem [#allocation17], %s1317
          %1319 = dma.done %s1315, 128
        $region96: #{_lambda_.12} parent=91 // pred_fallthru
          _
      $region92: #{_lambda_.12} parent=5 // pred_fallthru
        _
    $region6: #{_lambda_.12} parent=1 // loop_footer
      %s28 = sadd.s32 1, %s24
    $region7: #{_lambda_.12} parent=1 // loop_footer_branch
      %23 = sbr.rel target = $region3
    $region8: #{_lambda_.12} parent=1 // loop_exit
      _
    %1320 = vsyncpa [#allocation4], 1
    %s1321 = scalar_lea.sflag [#allocation4], 1
    %1322 = vsyncpa %s1321, 1
    %1323 = vsyncpa [#allocation7], 1
    %1324 = vsyncpa [#allocation10], 1
    %1325 = vsyncpa [#allocation13], 1
    %1326 = vsyncpa [#allocation16], 1
    %1327 = vsyncpa [#allocation5], 1
    %s1328 = scalar_lea.sflag [#allocation5], 1
    %1329 = vsyncpa %s1328, 1

// kernel: _lambda_.13
$region0: #{_lambda_.13}
  #allocation0 [shape = 'u32[]', space=smem, size = 0x4, offset = 0x4, fixed_abs, tag = 'smem constant byte address 0x4 - core index']
  #allocation1 [shape = 'u32[144,128]{1,0:T(1,128)}', space=vmem, size = 0x12000, scoped, tag = 'internal scratch']
  #allocation2 [shape = 'f32[8,128]{1,0:T(8,128)}', space=vmem, size = 0x1000, scoped, tag = 'scratch operand']
  %s0 = inlined_call_operand.hbm [shape: f32[2,8,128], index: 0, kind: input, shape index: {}]
  %s1 = inlined_call_operand.hbm [shape: f32[2,8,128], index: 1, kind: input, shape index: {}]
  %s2 = inlined_call_operand.hbm [shape: f32[2,1,8], index: 2, kind: input, shape index: {}]
  %s3 = inlined_call_operand.hbm [shape: bf16[128,128], index: 3, kind: input, shape index: {}]
  %s4 = inlined_call_operand.hbm [shape: f32[1,128], index: 4, kind: input, shape index: {}]
  %s5 = inlined_call_operand.hbm [shape: bf16[128,256], index: 5, kind: input, shape index: {}]
  %s6 = inlined_call_operand.hbm [shape: f32[1,256], index: 6, kind: input, shape index: {}]
  %s7 = inlined_call_operand.hbm [shape: bf16[128,128], index: 7, kind: input, shape index: {}]
  %s8 = inlined_call_operand.hbm [shape: f32[1,128], index: 8, kind: input, shape index: {}]
  %s9 = inlined_call_operand.hbm [shape: f32[1,128], index: 9, kind: input, shape index: {}]
  %s10 = inlined_call_operand.hbm [shape: f32[1,128], index: 10, kind: input, shape index: {}]
  %s11 = inlined_call_operand.hbm [shape: f32[2,8,128], index: 11, kind: output, shape index: {}]
  %s12 = sld [smem:[#allocation0]]
  $region121: #{_lambda_.13} parent=0
    _
  %s14 = ssub.s32 1, %s12
  %s15 = scalar_select 0, %s14, %s12
  $region1: #{_lambda_.13} parent=0
    #allocation3 [shape = 'u8[8192]{0}', space=vmem, size = 0x2000, scoped, tag = 'input window, operand 0']
    #allocation4 [shape = 's32[2]{0}', space=sflag, size = 0x8, scoped, tag = 'scoped memory for _lambda_.13']
    #allocation5 [shape = 's32[2]{0}', space=sflag, size = 0x8, scoped, tag = 'scoped memory for _lambda_.13']
    #allocation6 [shape = 'u8[8192]{0}', space=vmem, size = 0x2000, scoped, tag = 'input window, operand 1']
    #allocation7 [shape = 's32[2]{0}', space=sflag, size = 0x8, scoped, tag = 'scoped memory for _lambda_.13']
    #allocation8 [shape = 'u8[1024]{0}', space=vmem, size = 0x400, scoped, tag = 'input window, operand 2']
    #allocation9 [shape = 'u8[32768]{0}', space=vmem, size = 0x8000, scoped, tag = 'input window, operand 3, single buffered']
    #allocation10 [shape = 's32[1]{0}', space=sflag, size = 0x4, scoped, tag = 'scoped memory for _lambda_.13']
    #allocation11 [shape = 'u8[512]{0}', space=vmem, size = 0x400, scoped, tag = 'input window, operand 4, single buffered']
    #allocation12 [shape = 'u8[65536]{0}', space=vmem, size = 0x10000, scoped, tag = 'input window, operand 5, single buffered']
    #allocation13 [shape = 's32[1]{0}', space=sflag, size = 0x4, scoped, tag = 'scoped memory for _lambda_.13']
    #allocation14 [shape = 'u8[1024]{0}', space=vmem, size = 0x400, scoped, tag = 'input window, operand 6, single buffered']
    #allocation15 [shape = 'u8[32768]{0}', space=vmem, size = 0x8000, scoped, tag = 'input window, operand 7, single buffered']
    #allocation16 [shape = 's32[1]{0}', space=sflag, size = 0x4, scoped, tag = 'scoped memory for _lambda_.13']
    #allocation17 [shape = 'u8[512]{0}', space=vmem, size = 0x400, scoped, tag = 'input window, operand 8, single buffered']
    #allocation18 [shape = 'u8[512]{0}', space=vmem, size = 0x400, scoped, tag = 'input window, operand 9, single buffered']
    #allocation19 [shape = 's32[1]{0}', space=sflag, size = 0x4, scoped, tag = 'scoped memory for _lambda_.13']
    #allocation20 [shape = 'u8[512]{0}', space=vmem, size = 0x400, scoped, tag = 'input window, operand 10, single buffered']
    #allocation21 [shape = 'u8[8192]{0}', space=vmem, size = 0x2000, scoped, tag = 'output window, operand 0']
    %16 = vsyncpa [#allocation4], 0
    %s17 = scalar_lea.sflag [#allocation4], 1
    %18 = vsyncpa %s17, 0
    %19 = vsyncpa [#allocation7], 0
    %s20 = scalar_lea.sflag [#allocation7], 1
    %21 = vsyncpa %s20, 0
    %22 = vsyncpa [#allocation10], 0
    %23 = vsyncpa [#allocation13], 0
    %24 = vsyncpa [#allocation16], 0
    %25 = vsyncpa [#allocation19], 0
    %26 = vsyncpa [#allocation5], 0
    %s27 = scalar_lea.sflag [#allocation5], 1
    %28 = vsyncpa %s27, 0
    loop: start=0, step=1, limit=4
    $region2: #{_lambda_.13} parent=1 // loop_pre_header
      _
    $region3: #{_lambda_.13} parent=1 // loop_header
      %s30 = sphi 0, %s34
      %p31 = scmp.ge.s32.totalorder %s30, 4
      %s40 = sphi 0, %s42
      %s43 = sphi 0, %s40
      %s44 = sphi 0, %s43
      %s60 = sphi 0, %s44
      %s66 = sphi 0, %s68
      %s69 = sphi 0, %s66
      %s70 = sphi 0, %s69
      %s86 = sphi 0, %s70
      %s92 = sphi 0, %s94
      %s95 = sphi 0, %s92
      %s96 = sphi 0, %s95
      %s112 = sphi 0, %s96
      %s116 = sphi 0, %s116
      %s118 = sphi 0, %s116
      %s119 = sphi 0, %s118
      %s133 = sphi 0, %s119
      %s137 = sphi 0, %s137
      %s139 = sphi 0, %s137
      %s140 = sphi 0, %s139
      %s154 = sphi 0, %s140
      %s158 = sphi 0, %s158
      %s160 = sphi 0, %s158
      %s161 = sphi 0, %s160
      %s175 = sphi 0, %s161
      %s179 = sphi 0, %s179
      %s181 = sphi 0, %s179
      %s182 = sphi 0, %s181
      %s196 = sphi 0, %s182
      %s200 = sphi 0, %s200
      %s202 = sphi 0, %s200
      %s203 = sphi 0, %s202
      %s217 = sphi 0, %s203
      %s221 = sphi 0, %s221
      %s223 = sphi 0, %s221
      %s224 = sphi 0, %s223
      %s238 = sphi 0, %s224
      %s242 = sphi 0, %s242
      %s244 = sphi 0, %s242
      %s245 = sphi 0, %s244
      %s259 = sphi 0, %s245
      %s263 = sphi 0, %s263
      %s265 = sphi 0, %s263
      %s266 = sphi 0, %s265
      %s280 = sphi 0, %s266
      %s286 = sphi 0, %s288
      %s289 = sphi 0, %s286
      %s290 = sphi 0, %s289
      %s306 = sphi 0, %s290
    $region4: #{_lambda_.13} parent=1 // loop_header_branch
      %33 = sbr.rel (%p31) target = $region8
    $region5: #{_lambda_.13} parent=1 // loop_body
      %s35 = ssub.s32 %s30, 1
      %s36 = ssub.s32 %s30, 2
      %s37 = sadd.s32 %s30, 1
      %s38 = ssub.s32 %s30, %s37
      %p39 = scmp.eq.s32.totalorder %s38, 0
      %s41 = sadd.s32 %s40, 1
      %s42 = scalar_select %p39, %s40, %s41
      %p45 = pneg %p39
      %p46 = scmp.eq.s32.totalorder %s30, 1
      %p47 = por %p45, %p46
      %p48 = scmp.ne.s32.totalorder %s40, %s43
      %p49 = scmp.eq.s32.totalorder %s30, 0
      %p50 = por %p48, %p49
      %p51 = scmp.ne.s32.totalorder %s40, %s43
      %p52 = scmp.eq.s32.totalorder %s35, 1
      %p53 = por %p51, %p52
      %p54 = scmp.ne.s32.totalorder %s43, %s44
      %p55 = scmp.eq.s32.totalorder %s35, 0
      %p56 = por %p54, %p55
      %p57 = scmp.ne.s32.totalorder %s43, %s44
      %p58 = scmp.eq.s32.totalorder %s36, 1
      %p59 = por %p57, %p58
      %p61 = scmp.ne.s32.totalorder %s44, %s60
      %p62 = scmp.eq.s32.totalorder %s36, 0
      %p63 = por %p61, %p62
      %s64 = ssub.s32 %s30, %s37
      %p65 = scmp.eq.s32.totalorder %s64, 0
      %s67 = sadd.s32 %s66, 1
      %s68 = scalar_select %p65, %s66, %s67
      %p71 = pneg %p65
      %p72 = scmp.eq.s32.totalorder %s30, 1
      %p73 = por %p71, %p72
      %p74 = scmp.ne.s32.totalorder %s66, %s69
      %p75 = scmp.eq.s32.totalorder %s30, 0
      %p76 = por %p74, %p75
      %p77 = scmp.ne.s32.totalorder %s66, %s69
      %p78 = scmp.eq.s32.totalorder %s35, 1
      %p79 = por %p77, %p78
      %p80 = scmp.ne.s32.totalorder %s69, %s70
      %p81 = scmp.eq.s32.totalorder %s35, 0
      %p82 = por %p80, %p81
      %p83 = scmp.ne.s32.totalorder %s69, %s70
      %p84 = scmp.eq.s32.totalorder %s36, 1
      %p85 = por %p83, %p84
      %p87 = scmp.ne.s32.totalorder %s70, %s86
      %p88 = scmp.eq.s32.totalorder %s36, 0
      %p89 = por %p87, %p88
      %s90 = ssub.s32 %s30, %s37
      %p91 = scmp.eq.s32.totalorder %s90, 0
      %s93 = sadd.s32 %s92, 1
      %s94 = scalar_select %p91, %s92, %s93
      %p97 = pneg %p91
      %p98 = scmp.eq.s32.totalorder %s30, 1
      %p99 = por %p97, %p98
      %p100 = scmp.ne.s32.totalorder %s92, %s95
      %p101 = scmp.eq.s32.totalorder %s30, 0
      %p102 = por %p100, %p101
      %p103 = scmp.ne.s32.totalorder %s92, %s95
      %p104 = scmp.eq.s32.totalorder %s35, 1
      %p105 = por %p103, %p104
      %p106 = scmp.ne.s32.totalorder %s95, %s96
      %p107 = scmp.eq.s32.totalorder %s35, 0
      %p108 = por %p106, %p107
      %p109 = scmp.ne.s32.totalorder %s95, %s96
      %p110 = scmp.eq.s32.totalorder %s36, 1
      %p111 = por %p109, %p110
      %p113 = scmp.ne.s32.totalorder %s96, %s112
      %p114 = scmp.eq.s32.totalorder %s36, 0
      %p115 = por %p113, %p114
      %s117 = sadd.s32 %s116, 1
      %p120 = scmp.eq.s32.totalorder %s30, 1
      %p121 = scmp.ne.s32.totalorder %s116, %s118
      %p122 = scmp.eq.s32.totalorder %s30, 0
      %p123 = por %p121, %p122
      %p124 = scmp.ne.s32.totalorder %s116, %s118
      %p125 = scmp.eq.s32.totalorder %s35, 1
      %p126 = por %p124, %p125
      %p127 = scmp.ne.s32.totalorder %s118, %s119
      %p128 = scmp.eq.s32.totalorder %s35, 0
      %p129 = por %p127, %p128
      %p130 = scmp.ne.s32.totalorder %s118, %s119
      %p131 = scmp.eq.s32.totalorder %s36, 1
      %p132 = por %p130, %p131
      %p134 = scmp.ne.s32.totalorder %s119, %s133
      %p135 = scmp.eq.s32.totalorder %s36, 0
      %p136 = por %p134, %p135
      %s138 = sadd.s32 %s137, 1
      %p141 = scmp.eq.s32.totalorder %s30, 1
      %p142 = scmp.ne.s32.totalorder %s137, %s139
      %p143 = scmp.eq.s32.totalorder %s30, 0
      %p144 = por %p142, %p143
      %p145 = scmp.ne.s32.totalorder %s137, %s139
      %p146 = scmp.eq.s32.totalorder %s35, 1
      %p147 = por %p145, %p146
      %p148 = scmp.ne.s32.totalorder %s139, %s140
      %p149 = scmp.eq.s32.totalorder %s35, 0
      %p150 = por %p148, %p149
      %p151 = scmp.ne.s32.totalorder %s139, %s140
      %p152 = scmp.eq.s32.totalorder %s36, 1
      %p153 = por %p151, %p152
      %p155 = scmp.ne.s32.totalorder %s140, %s154
      %p156 = scmp.eq.s32.totalorder %s36, 0
      %p157 = por %p155, %p156
      %s159 = sadd.s32 %s158, 1
      %p162 = scmp.eq.s32.totalorder %s30, 1
      %p163 = scmp.ne.s32.totalorder %s158, %s160
      %p164 = scmp.eq.s32.totalorder %s30, 0
      %p165 = por %p163, %p164
      %p166 = scmp.ne.s32.totalorder %s158, %s160
      %p167 = scmp.eq.s32.totalorder %s35, 1
      %p168 = por %p166, %p167
      %p169 = scmp.ne.s32.totalorder %s160, %s161
      %p170 = scmp.eq.s32.totalorder %s35, 0
      %p171 = por %p169, %p170
      %p172 = scmp.ne.s32.totalorder %s160, %s161
      %p173 = scmp.eq.s32.totalorder %s36, 1
      %p174 = por %p172, %p173
      %p176 = scmp.ne.s32.totalorder %s161, %s175
      %p177 = scmp.eq.s32.totalorder %s36, 0
      %p178 = por %p176, %p177
      %s180 = sadd.s32 %s179, 1
      %p183 = scmp.eq.s32.totalorder %s30, 1
      %p184 = scmp.ne.s32.totalorder %s179, %s181
      %p185 = scmp.eq.s32.totalorder %s30, 0
      %p186 = por %p184, %p185
      %p187 = scmp.ne.s32.totalorder %s179, %s181
      %p188 = scmp.eq.s32.totalorder %s35, 1
      %p189 = por %p187, %p188
      %p190 = scmp.ne.s32.totalorder %s181, %s182
      %p191 = scmp.eq.s32.totalorder %s35, 0
      %p192 = por %p190, %p191
      %p193 = scmp.ne.s32.totalorder %s181, %s182
      %p194 = scmp.eq.s32.totalorder %s36, 1
      %p195 = por %p193, %p194
      %p197 = scmp.ne.s32.totalorder %s182, %s196
      %p198 = scmp.eq.s32.totalorder %s36, 0
      %p199 = por %p197, %p198
      %s201 = sadd.s32 %s200, 1
      %p204 = scmp.eq.s32.totalorder %s30, 1
      %p205 = scmp.ne.s32.totalorder %s200, %s202
      %p206 = scmp.eq.s32.totalorder %s30, 0
      %p207 = por %p205, %p206
      %p208 = scmp.ne.s32.totalorder %s200, %s202
      %p209 = scmp.eq.s32.totalorder %s35, 1
      %p210 = por %p208, %p209
      %p211 = scmp.ne.s32.totalorder %s202, %s203
      %p212 = scmp.eq.s32.totalorder %s35, 0
      %p213 = por %p211, %p212
      %p214 = scmp.ne.s32.totalorder %s202, %s203
      %p215 = scmp.eq.s32.totalorder %s36, 1
      %p216 = por %p214, %p215
      %p218 = scmp.ne.s32.totalorder %s203, %s217
      %p219 = scmp.eq.s32.totalorder %s36, 0
      %p220 = por %p218, %p219
      %s222 = sadd.s32 %s221, 1
      %p225 = scmp.eq.s32.totalorder %s30, 1
      %p226 = scmp.ne.s32.totalorder %s221, %s223
      %p227 = scmp.eq.s32.totalorder %s30, 0
      %p228 = por %p226, %p227
      %p229 = scmp.ne.s32.totalorder %s221, %s223
      %p230 = scmp.eq.s32.totalorder %s35, 1
      %p231 = por %p229, %p230
      %p232 = scmp.ne.s32.totalorder %s223, %s224
      %p233 = scmp.eq.s32.totalorder %s35, 0
      %p234 = por %p232, %p233
      %p235 = scmp.ne.s32.totalorder %s223, %s224
      %p236 = scmp.eq.s32.totalorder %s36, 1
      %p237 = por %p235, %p236
      %p239 = scmp.ne.s32.totalorder %s224, %s238
      %p240 = scmp.eq.s32.totalorder %s36, 0
      %p241 = por %p239, %p240
      %s243 = sadd.s32 %s242, 1
      %p246 = scmp.eq.s32.totalorder %s30, 1
      %p247 = scmp.ne.s32.totalorder %s242, %s244
      %p248 = scmp.eq.s32.totalorder %s30, 0
      %p249 = por %p247, %p248
      %p250 = scmp.ne.s32.totalorder %s242, %s244
      %p251 = scmp.eq.s32.totalorder %s35, 1
      %p252 = por %p250, %p251
      %p253 = scmp.ne.s32.totalorder %s244, %s245
      %p254 = scmp.eq.s32.totalorder %s35, 0
      %p255 = por %p253, %p254
      %p256 = scmp.ne.s32.totalorder %s244, %s245
      %p257 = scmp.eq.s32.totalorder %s36, 1
      %p258 = por %p256, %p257
      %p260 = scmp.ne.s32.totalorder %s245, %s259
      %p261 = scmp.eq.s32.totalorder %s36, 0
      %p262 = por %p260, %p261
      %s264 = sadd.s32 %s263, 1
      %p267 = scmp.eq.s32.totalorder %s30, 1
      %p268 = scmp.ne.s32.totalorder %s263, %s265
      %p269 = scmp.eq.s32.totalorder %s30, 0
      %p270 = por %p268, %p269
      %p271 = scmp.ne.s32.totalorder %s263, %s265
      %p272 = scmp.eq.s32.totalorder %s35, 1
      %p273 = por %p271, %p272
      %p274 = scmp.ne.s32.totalorder %s265, %s266
      %p275 = scmp.eq.s32.totalorder %s35, 0
      %p276 = por %p274, %p275
      %p277 = scmp.ne.s32.totalorder %s265, %s266
      %p278 = scmp.eq.s32.totalorder %s36, 1
      %p279 = por %p277, %p278
      %p281 = scmp.ne.s32.totalorder %s266, %s280
      %p282 = scmp.eq.s32.totalorder %s36, 0
      %p283 = por %p281, %p282
      %s284 = ssub.s32 %s30, %s37
      %p285 = scmp.eq.s32.totalorder %s284, 0
      %s287 = sadd.s32 %s286, 1
      %s288 = scalar_select %p285, %s286, %s287
      %p291 = pneg %p285
      %p292 = scmp.eq.s32.totalorder %s30, 1
      %p293 = por %p291, %p292
      %p294 = scmp.ne.s32.totalorder %s286, %s289
      %p295 = scmp.eq.s32.totalorder %s30, 0
      %p296 = por %p294, %p295
      %p297 = scmp.ne.s32.totalorder %s286, %s289
      %p298 = scmp.eq.s32.totalorder %s35, 1
      %p299 = por %p297, %p298
      %p300 = scmp.ne.s32.totalorder %s289, %s290
      %p301 = scmp.eq.s32.totalorder %s35, 0
      %p302 = por %p300, %p301
      %p303 = scmp.ne.s32.totalorder %s289, %s290
      %p304 = scmp.eq.s32.totalorder %s36, 1
      %p305 = por %p303, %p304
      %p307 = scmp.ne.s32.totalorder %s290, %s306
      %p308 = scmp.eq.s32.totalorder %s36, 0
      %p309 = por %p307, %p308
      %p310 = scmp.le.s32.totalorder 1, %s30
      %p311 = scmp.lt.s32.totalorder %s30, 3
      %p312 = pnand %p310, %p311
      %p313 = pneg %p312
      // Predicated region
      $region9: #{_lambda_.13} parent=5 // pred_check
        _
      $region10: #{_lambda_.13} parent=5 // pred_check_branch
        %315 = sbr.rel (%p312) target = $region12
      $region11: #{_lambda_.13} parent=5 // pred_region
        %s316 = ssub.s32 %s30, 1
        // Predicated region
        $region13: #{_lambda_.13} parent=11 // pred_check
          %p317 = pneg %p129
        $region14: #{_lambda_.13} parent=11 // pred_check_branch
          %319 = sbr.rel (%p317) target = $region16
        $region15: #{_lambda_.13} parent=11 // pred_region
          %s321 = ssub.s32 1024, 1024
          %322 = vsyncadd [#allocation10], %s321
          %s323 = sshll.u32 [#allocation9], 4
          %s324 = int_to_ptr.vmem [resolvable:$true] %s323
          %329 = dma.hbm_to_vmem [thread:$0]  %s3, 1024, %s324, [#allocation10], 64, 64, 4
        $region16: #{_lambda_.13} parent=11 // pred_fallthru
          _
        // Predicated region
        $region17: #{_lambda_.13} parent=11 // pred_check
          %p330 = pneg %p150
        $region18: #{_lambda_.13} parent=11 // pred_check_branch
          %332 = sbr.rel (%p330) target = $region20
        $region19: #{_lambda_.13} parent=11 // pred_region
          %s334 = ssub.s32 16, 16
          %335 = vsyncadd [#allocation10], %s334
          %s337 = sshll.u32 [#allocation11], 4
          %s338 = int_to_ptr.vmem [resolvable:$true] %s337
          %340 = dma.hbm_to_vmem [thread:$0]  %s4, 16, %s338, [#allocation10]
        $region20: #{_lambda_.13} parent=11 // pred_fallthru
          _
        // Predicated region
        $region21: #{_lambda_.13} parent=11 // pred_check
          %p341 = pneg %p171
        $region22: #{_lambda_.13} parent=11 // pred_check_branch
          %343 = sbr.rel (%p341) target = $region24
        $region23: #{_lambda_.13} parent=11 // pred_region
          %s345 = ssub.s32 2048, 2048
          %346 = vsyncadd [#allocation13], %s345
          %s347 = sshll.u32 [#allocation12], 4
          %s348 = int_to_ptr.vmem [resolvable:$true] %s347
          %353 = dma.hbm_to_vmem [thread:$0]  %s5, 2048, %s348, [#allocation13], 128, 128, 8
        $region24: #{_lambda_.13} parent=11 // pred_fallthru
          _
        // Predicated region
        $region25: #{_lambda_.13} parent=11 // pred_check
          %p354 = pneg %p192
        $region26: #{_lambda_.13} parent=11 // pred_check_branch
          %356 = sbr.rel (%p354) target = $region28
        $region27: #{_lambda_.13} parent=11 // pred_region
          %s358 = ssub.s32 32, 32
          %359 = vsyncadd [#allocation13], %s358
          %s361 = sshll.u32 [#allocation14], 4
          %s362 = int_to_ptr.vmem [resolvable:$true] %s361
          %364 = dma.hbm_to_vmem [thread:$0]  %s6, 32, %s362, [#allocation13]
        $region28: #{_lambda_.13} parent=11 // pred_fallthru
          _
        // Predicated region
        $region29: #{_lambda_.13} parent=11 // pred_check
          %p365 = pneg %p213
        $region30: #{_lambda_.13} parent=11 // pred_check_branch
          %367 = sbr.rel (%p365) target = $region32
        $region31: #{_lambda_.13} parent=11 // pred_region
          %s369 = ssub.s32 1024, 1024
          %370 = vsyncadd [#allocation16], %s369
          %s371 = sshll.u32 [#allocation15], 4
          %s372 = int_to_ptr.vmem [resolvable:$true] %s371
          %377 = dma.hbm_to_vmem [thread:$0]  %s7, 1024, %s372, [#allocation16], 64, 64, 4
        $region32: #{_lambda_.13} parent=11 // pred_fallthru
          _
        // Predicated region
        $region33: #{_lambda_.13} parent=11 // pred_check
          %p378 = pneg %p234
        $region34: #{_lambda_.13} parent=11 // pred_check_branch
          %380 = sbr.rel (%p378) target = $region36
        $region35: #{_lambda_.13} parent=11 // pred_region
          %s382 = ssub.s32 16, 16
          %383 = vsyncadd [#allocation16], %s382
          %s385 = sshll.u32 [#allocation17], 4
          %s386 = int_to_ptr.vmem [resolvable:$true] %s385
          %388 = dma.hbm_to_vmem [thread:$0]  %s8, 16, %s386, [#allocation16]
        $region36: #{_lambda_.13} parent=11 // pred_fallthru
          _
        // Predicated region
        $region37: #{_lambda_.13} parent=11 // pred_check
          %p389 = pneg %p255
        $region38: #{_lambda_.13} parent=11 // pred_check_branch
          %391 = sbr.rel (%p389) target = $region40
        $region39: #{_lambda_.13} parent=11 // pred_region
          %s393 = ssub.s32 16, 16
          %394 = vsyncadd [#allocation19], %s393
          %s396 = sshll.u32 [#allocation18], 4
          %s397 = int_to_ptr.vmem [resolvable:$true] %s396
          %399 = dma.hbm_to_vmem [thread:$0]  %s9, 16, %s397, [#allocation19]
        $region40: #{_lambda_.13} parent=11 // pred_fallthru
          _
        // Predicated region
        $region41: #{_lambda_.13} parent=11 // pred_check
          %p400 = pneg %p276
        $region42: #{_lambda_.13} parent=11 // pred_check_branch
          %402 = sbr.rel (%p400) target = $region44
        $region43: #{_lambda_.13} parent=11 // pred_region
          %s404 = ssub.s32 16, 16
          %405 = vsyncadd [#allocation19], %s404
          %s407 = sshll.u32 [#allocation20], 4
          %s408 = int_to_ptr.vmem [resolvable:$true] %s407
          %410 = dma.hbm_to_vmem [thread:$0]  %s10, 16, %s408, [#allocation19]
        $region44: #{_lambda_.13} parent=11 // pred_fallthru
          _
      $region12: #{_lambda_.13} parent=5 // pred_fallthru
        _
      %p411 = scmp.lt.s32.totalorder %s30, 2
      // Predicated region
      $region45: #{_lambda_.13} parent=5 // pred_check
        %p412 = pneg %p411
      $region46: #{_lambda_.13} parent=5 // pred_check_branch
        %414 = sbr.rel (%p412) target = $region48
      $region47: #{_lambda_.13} parent=5 // pred_region
        // Predicated region
        $region49: #{_lambda_.13} parent=47 // pred_check
          %p415 = pneg %p50
        $region50: #{_lambda_.13} parent=47 // pred_check_branch
          %417 = sbr.rel (%p415) target = $region52
        $region51: #{_lambda_.13} parent=47 // pred_region
          %s418 = sand.u32 %s40, 1
          %s419 = scalar_lea.sflag [#allocation4], %s418
          %s420 = sand.u32 %s40, 1
          %s421 = smul.addr %s420, 8
          %s422 = scalar_lea.vmem [#allocation3], %s421
          %s424 = ssub.s32 128, 128
          %425 = vsyncadd %s419, %s424
          %s426 = smul.addr %s30, 128
          %s427 = scalar_lea.hbm %s0, %s426
          %s429 = sshll.u32 %s422, 4
          %s430 = int_to_ptr.vmem [resolvable:$true] %s429
          %432 = dma.hbm_to_vmem [thread:$0]  %s427, 128, %s430, %s419
        $region52: #{_lambda_.13} parent=47 // pred_fallthru
          _
        // Predicated region
        $region53: #{_lambda_.13} parent=47 // pred_check
          %p433 = pneg %p76
        $region54: #{_lambda_.13} parent=47 // pred_check_branch
          %435 = sbr.rel (%p433) target = $region56
        $region55: #{_lambda_.13} parent=47 // pred_region
          %s436 = sand.u32 %s30, 1
          %s437 = scalar_lea.sflag [#allocation7], %s436
          %s438 = sand.u32 %s66, 1
          %s439 = smul.addr %s438, 8
          %s440 = scalar_lea.vmem [#allocation6], %s439
          %s442 = ssub.s32 128, 128
          %443 = vsyncadd %s437, %s442
          %s444 = smul.addr %s30, 128
          %s445 = scalar_lea.hbm %s1, %s444
          %s447 = sshll.u32 %s440, 4
          %s448 = int_to_ptr.vmem [resolvable:$true] %s447
          %450 = dma.hbm_to_vmem [thread:$0]  %s445, 128, %s448, %s437
        $region56: #{_lambda_.13} parent=47 // pred_fallthru
          _
        // Predicated region
        $region57: #{_lambda_.13} parent=47 // pred_check
          %p451 = pneg %p102
        $region58: #{_lambda_.13} parent=47 // pred_check_branch
          %453 = sbr.rel (%p451) target = $region60
        $region59: #{_lambda_.13} parent=47 // pred_region
          %s454 = sand.u32 %s30, 1
          %s455 = scalar_lea.sflag [#allocation7], %s454
          %s456 = sand.u32 %s92, 1
          %s457 = scalar_lea.vmem [#allocation8], %s456
          %s459 = ssub.s32 16, 16
          %460 = vsyncadd %s455, %s459
          %s461 = smul.addr %s30, 16
          %s462 = scalar_lea.hbm %s2, %s461
          %s464 = sshll.u32 %s457, 4
          %s465 = int_to_ptr.vmem [resolvable:$true] %s464
          %467 = dma.hbm_to_vmem [thread:$0]  %s462, 16, %s465, %s455
        $region60: #{_lambda_.13} parent=47 // pred_fallthru
          _
      $region48: #{_lambda_.13} parent=5 // pred_fallthru
        _
      %p468 = scmp.le.s32.totalorder 1, %s30
      %p469 = scmp.lt.s32.totalorder %s30, 3
      %p470 = pnand %p468, %p469
      %p471 = pneg %p470
      // Predicated region
      $region61: #{_lambda_.13} parent=5 // pred_check
        _
      $region62: #{_lambda_.13} parent=5 // pred_check_branch
        %473 = sbr.rel (%p470) target = $region64
      $region63: #{_lambda_.13} parent=5 // pred_region
        %s474 = ssub.s32 %s30, 1
        %s475 = sand.u32 %s43, 1
        %s476 = scalar_lea.sflag [#allocation4], %s475
        %s477 = sand.u32 %s43, 1
        %s478 = smul.addr %s477, 8
        %s479 = scalar_lea.vmem [#allocation3], %s478
        // Predicated region
        $region65: #{_lambda_.13} parent=63 // pred_check
          %p480 = pneg %p56
        $region66: #{_lambda_.13} parent=63 // pred_check_branch
          %482 = sbr.rel (%p480) target = $region68
        $region67: #{_lambda_.13} parent=63 // pred_region
          %483 = dma.done %s476, 128
        $region68: #{_lambda_.13} parent=63 // pred_fallthru
          _
        %s484 = sand.u32 %s35, 1
        %s485 = scalar_lea.sflag [#allocation7], %s484
        %s486 = sand.u32 %s69, 1
        %s487 = smul.addr %s486, 8
        %s488 = scalar_lea.vmem [#allocation6], %s487
        // Predicated region
        $region69: #{_lambda_.13} parent=63 // pred_check
          %p489 = pneg %p82
        $region70: #{_lambda_.13} parent=63 // pred_check_branch
          %491 = sbr.rel (%p489) target = $region72
        $region71: #{_lambda_.13} parent=63 // pred_region
          %492 = dma.done %s485, 128
        $region72: #{_lambda_.13} parent=63 // pred_fallthru
          _
        %s493 = sand.u32 %s35, 1
        %s494 = scalar_lea.sflag [#allocation7], %s493
        %s495 = sand.u32 %s95, 1
        %s496 = scalar_lea.vmem [#allocation8], %s495
        // Predicated region
        $region73: #{_lambda_.13} parent=63 // pred_check
          %p497 = pneg %p108
        $region74: #{_lambda_.13} parent=63 // pred_check_branch
          %499 = sbr.rel (%p497) target = $region76
        $region75: #{_lambda_.13} parent=63 // pred_region
          %500 = dma.done %s494, 16
        $region76: #{_lambda_.13} parent=63 // pred_fallthru
          _
        // Predicated region
        $region77: #{_lambda_.13} parent=63 // pred_check
          %p501 = pneg %p129
        $region78: #{_lambda_.13} parent=63 // pred_check_branch
          %503 = sbr.rel (%p501) target = $region80
        $region79: #{_lambda_.13} parent=63 // pred_region
          %504 = dma.done [#allocation10], 1024
        $region80: #{_lambda_.13} parent=63 // pred_fallthru
          _
        // Predicated region
        $region81: #{_lambda_.13} parent=63 // pred_check
          %p505 = pneg %p150
        $region82: #{_lambda_.13} parent=63 // pred_check_branch
          %507 = sbr.rel (%p505) target = $region84
        $region83: #{_lambda_.13} parent=63 // pred_region
          %508 = dma.done [#allocation10], 16
        $region84: #{_lambda_.13} parent=63 // pred_fallthru
          _
        // Predicated region
        $region85: #{_lambda_.13} parent=63 // pred_check
          %p509 = pneg %p171
        $region86: #{_lambda_.13} parent=63 // pred_check_branch
          %511 = sbr.rel (%p509) target = $region88
        $region87: #{_lambda_.13} parent=63 // pred_region
          %512 = dma.done [#allocation13], 2048
        $region88: #{_lambda_.13} parent=63 // pred_fallthru
          _
        // Predicated region
        $region89: #{_lambda_.13} parent=63 // pred_check
          %p513 = pneg %p192
        $region90: #{_lambda_.13} parent=63 // pred_check_branch
          %515 = sbr.rel (%p513) target = $region92
        $region91: #{_lambda_.13} parent=63 // pred_region
          %516 = dma.done [#allocation13], 32
        $region92: #{_lambda_.13} parent=63 // pred_fallthru
          _
        // Predicated region
        $region93: #{_lambda_.13} parent=63 // pred_check
          %p517 = pneg %p213
        $region94: #{_lambda_.13} parent=63 // pred_check_branch
          %519 = sbr.rel (%p517) target = $region96
        $region95: #{_lambda_.13} parent=63 // pred_region
          %520 = dma.done [#allocation16], 1024
        $region96: #{_lambda_.13} parent=63 // pred_fallthru
          _
        // Predicated region
        $region97: #{_lambda_.13} parent=63 // pred_check
          %p521 = pneg %p234
        $region98: #{_lambda_.13} parent=63 // pred_check_branch
          %523 = sbr.rel (%p521) target = $region100
        $region99: #{_lambda_.13} parent=63 // pred_region
          %524 = dma.done [#allocation16], 16
        $region100: #{_lambda_.13} parent=63 // pred_fallthru
          _
        // Predicated region
        $region101: #{_lambda_.13} parent=63 // pred_check
          %p525 = pneg %p255
        $region102: #{_lambda_.13} parent=63 // pred_check_branch
          %527 = sbr.rel (%p525) target = $region104
        $region103: #{_lambda_.13} parent=63 // pred_region
          %528 = dma.done [#allocation19], 16
        $region104: #{_lambda_.13} parent=63 // pred_fallthru
          _
        // Predicated region
        $region105: #{_lambda_.13} parent=63 // pred_check
          %p529 = pneg %p276
        $region106: #{_lambda_.13} parent=63 // pred_check_branch
          %531 = sbr.rel (%p529) target = $region108
        $region107: #{_lambda_.13} parent=63 // pred_region
          %532 = dma.done [#allocation19], 16
        $region108: #{_lambda_.13} parent=63 // pred_fallthru
          _
        %s533 = sand.u32 %s43, 1
        %s534 = scalar_lea.sflag [#allocation4], %s533
        %s535 = sand.u32 %s43, 1
        %s536 = smul.addr %s535, 8
        %s537 = scalar_lea.vmem [#allocation3], %s536
        %p538 = pneg %p56
        %p539 = pneg %p53
        %s540 = sand.u32 %s35, 1
        %s541 = scalar_lea.sflag [#allocation7], %s540
        %s542 = sand.u32 %s69, 1
        %s543 = smul.addr %s542, 8
        %s544 = scalar_lea.vmem [#allocation6], %s543
        %p545 = pneg %p82
        %p546 = pneg %p79
        %s547 = sand.u32 %s35, 1
        %s548 = scalar_lea.sflag [#allocation7], %s547
        %s549 = sand.u32 %s95, 1
        %s550 = scalar_lea.vmem [#allocation8], %s549
        %p551 = pneg %p108
        %p552 = pneg %p105
        %p553 = pneg %p129
        %p554 = pneg %p126
        %p555 = pneg %p150
        %p556 = pneg %p147
        %p557 = pneg %p171
        %p558 = pneg %p168
        %p559 = pneg %p192
        %p560 = pneg %p189
        %p561 = pneg %p213
        %p562 = pneg %p210
        %p563 = pneg %p234
        %p564 = pneg %p231
        %p565 = pneg %p255
        %p566 = pneg %p252
        %p567 = pneg %p276
        %p568 = pneg %p273
        %p569 = pneg %p302
        %p570 = pneg %p299
        %s571 = sand.u32 %s289, 1
        %s572 = scalar_lea.sflag [#allocation5], %s571
        %s573 = sand.u32 %s289, 1
        %s574 = smul.addr %s573, 8
        %s575 = scalar_lea.vmem [#allocation21], %s574
        %v577 = vld [vmem:[%s479] sm:$0xff]
        %v578 = vld [vmem:[%s488] sm:$0xff]
        %v579 = vpack.c.bf16 %v577, %v577
        %v580 = vld [vmem:[#allocation9] sm:$0xf]
        %v581 = vld [vmem:[#allocation9 + $0x4] sm:$0xf]
        %v582 = vld [vmem:[#allocation9 + $0x8] sm:$0xf]
        %v583 = vld [vmem:[#allocation9 + $0xc] sm:$0xf]
        %v584 = vld [vmem:[#allocation9 + $0x10] sm:$0xf]
        %v585 = vld [vmem:[#allocation9 + $0x14] sm:$0xf]
        %v586 = vld [vmem:[#allocation9 + $0x18] sm:$0xf]
        %v587 = vld [vmem:[#allocation9 + $0x1c] sm:$0xf]
        %v588 = vld [vmem:[#allocation9 + $0x20] sm:$0xf]
        %v589 = vld [vmem:[#allocation9 + $0x24] sm:$0xf]
        %v590 = vld [vmem:[#allocation9 + $0x28] sm:$0xf]
        %v591 = vld [vmem:[#allocation9 + $0x2c] sm:$0xf]
        %v592 = vld [vmem:[#allocation9 + $0x30] sm:$0xf]
        %v593 = vld [vmem:[#allocation9 + $0x34] sm:$0xf]
        %v594 = vld [vmem:[#allocation9 + $0x38] sm:$0xf]
        %v595 = vld [vmem:[#allocation9 + $0x3c] sm:$0xf]
        %v596 = vld [vmem:[#allocation11] sm:$0x1]
        %v598 = vlaneseq
        %v599 = vshrl.u32 %v598, 7
        %v600 = vsub.s32 0, %v599
        %v601 = vrot.slane %v596, %v600
        %v619 = vunpack.c.l.b16 %v580
        %v620 = vunpack.c.l.b16 %v581
        %v621 = vunpack.c.l.b16 %v582
        %v622 = vunpack.c.l.b16 %v583
        %v623 = vunpack.c.l.b16 %v584
        %v624 = vunpack.c.l.b16 %v585
        %v625 = vunpack.c.l.b16 %v586
        %v626 = vunpack.c.l.b16 %v587
        %v627 = vunpack.c.l.b16 %v588
        %v628 = vunpack.c.l.b16 %v589
        %v629 = vunpack.c.l.b16 %v590
        %v630 = vunpack.c.l.b16 %v591
        %v631 = vunpack.c.l.b16 %v592
        %v632 = vunpack.c.l.b16 %v593
        %v633 = vunpack.c.l.b16 %v594
        %v634 = vunpack.c.l.b16 %v595
        %v635 = vpack.c.b16 %v620, %v619
        %v636 = vpack.c.b16 %v622, %v621
        %v637 = vpack.c.b16 %v624, %v623
        %v638 = vpack.c.b16 %v626, %v625
        %v639 = vpack.c.b16 %v628, %v627
        %v640 = vpack.c.b16 %v630, %v629
        %v641 = vpack.c.b16 %v632, %v631
        %v642 = vpack.c.b16 %v634, %v633
        %651 = vmatprep.subr.bf16.mxu0 0
        %652 = vmatpush1.bf16.msra.mxu0 %v635
        %653 = vmatprep.subr.bf16.mxu0 0
        %654 = vmatpush1.bf16.msra.mxu0 %v636
        %655 = vmatprep.subr.bf16.mxu0 0
        %656 = vmatpush1.bf16.msra.mxu0 %v637
        %657 = vmatprep.subr.bf16.mxu0 0
        %658 = vmatpush1.bf16.msra.mxu0 %v638
        %659 = vmatprep.subr.bf16.mxu0 0
        %660 = vmatpush1.bf16.msra.mxu0 %v639
        %661 = vmatprep.subr.bf16.mxu0 0
        %662 = vmatpush1.bf16.msra.mxu0 %v640
        %663 = vmatprep.subr.bf16.mxu0 0
        %664 = vmatpush1.bf16.msra.mxu0 %v641
        %665 = vmatprep.subr.bf16.mxu0 0
        %666 = vmatpush1.bf16.msra.mxu0 %v642
        %667 = vmatprep.subr.bf16.mxu0 0
        %668 = vmatpush1.bf16.msra.mxu0 0
        %669 = vmatprep.subr.bf16.mxu0 0
        %670 = vmatpush1.bf16.msra.mxu0 0
        %671 = vmatprep.subr.bf16.mxu0 0
        %672 = vmatpush1.bf16.msra.mxu0 0
        %673 = vmatprep.subr.bf16.mxu0 0
        %674 = vmatpush1.bf16.msra.mxu0 0
        %675 = vmatprep.subr.bf16.mxu0 0
        %676 = vmatpush1.bf16.msra.mxu0 0
        %677 = vmatprep.subr.bf16.mxu0 0
        %678 = vmatpush1.bf16.msra.mxu0 0
        %679 = vmatprep.subr.bf16.mxu0 0
        %680 = vmatpush1.bf16.msra.mxu0 0
        %681 = vmatprep.subr.bf16.mxu0 0
        %682 = vmatpush1.bf16.msra.mxu0 0
        %683 = vmatprep.mubr.bf16.mxu0 0
        %684 = vmatmul.mubr.bf16.gmra.mrb[0].mxu0 %v579
        %v685 = vpop.f32.mrb[0].mxu0
        %v686 = vadd.f32 %v601, %v685
        %v687 = vpop.f32.mrb[0].mxu0
        %v688 = vpop.f32.mrb[0].mxu0
        %v689 = vpop.f32.mrb[0].mxu0
        %690 = vdwg.mxu0
        %v691 = vpack.c.bf16 %v578, %v578
        %v692 = vld [vmem:[#allocation12] sm:$0xff]
        %v693 = vld [vmem:[#allocation12 + $0x8] sm:$0xff]
        %v694 = vld [vmem:[#allocation12 + $0x10] sm:$0xff]
        %v695 = vld [vmem:[#allocation12 + $0x18] sm:$0xff]
        %v696 = vld [vmem:[#allocation12 + $0x20] sm:$0xff]
        %v697 = vld [vmem:[#allocation12 + $0x28] sm:$0xff]
        %v698 = vld [vmem:[#allocation12 + $0x30] sm:$0xff]
        %v699 = vld [vmem:[#allocation12 + $0x38] sm:$0xff]
        %v700 = vld [vmem:[#allocation12 + $0x40] sm:$0xff]
        %v701 = vld [vmem:[#allocation12 + $0x48] sm:$0xff]
        %v702 = vld [vmem:[#allocation12 + $0x50] sm:$0xff]
        %v703 = vld [vmem:[#allocation12 + $0x58] sm:$0xff]
        %v704 = vld [vmem:[#allocation12 + $0x60] sm:$0xff]
        %v705 = vld [vmem:[#allocation12 + $0x68] sm:$0xff]
        %v706 = vld [vmem:[#allocation12 + $0x70] sm:$0xff]
        %v707 = vld [vmem:[#allocation12 + $0x78] sm:$0xff]
        %v708 = vld [vmem:[#allocation14] sm:$0x3]
        %v710 = vlaneseq
        %v711 = vshrl.u32 %v710, 7
        %v712 = vsub.s32 0, %v711
        %v713 = vrot.slane %v708, %v712
        %v714 = vlaneseq
        %v715 = vshrl.u32 %v714, 7
        %v716 = vsub.s32 1, %v715
        %v717 = vrot.slane %v708, %v716
        %v736 = vunpack.c.l.b16 %v692
        %v737 = vunpack.c.h.b16 %v692
        %v738 = vunpack.c.l.b16 %v693
        %v739 = vunpack.c.h.b16 %v693
        %v740 = vunpack.c.l.b16 %v694
        %v741 = vunpack.c.h.b16 %v694
        %v742 = vunpack.c.l.b16 %v695
        %v743 = vunpack.c.h.b16 %v695
        %v744 = vunpack.c.l.b16 %v696
        %v745 = vunpack.c.h.b16 %v696
        %v746 = vunpack.c.l.b16 %v697
        %v747 = vunpack.c.h.b16 %v697
        %v748 = vunpack.c.l.b16 %v698
        %v749 = vunpack.c.h.b16 %v698
        %v750 = vunpack.c.l.b16 %v699
        %v751 = vunpack.c.h.b16 %v699
        %v752 = vunpack.c.l.b16 %v700
        %v753 = vunpack.c.h.b16 %v700
        %v754 = vunpack.c.l.b16 %v701
        %v755 = vunpack.c.h.b16 %v701
        %v756 = vunpack.c.l.b16 %v702
        %v757 = vunpack.c.h.b16 %v702
        %v758 = vunpack.c.l.b16 %v703
        %v759 = vunpack.c.h.b16 %v703
        %v760 = vunpack.c.l.b16 %v704
        %v761 = vunpack.c.h.b16 %v704
        %v762 = vunpack.c.l.b16 %v705
        %v763 = vunpack.c.h.b16 %v705
        %v764 = vunpack.c.l.b16 %v706
        %v765 = vunpack.c.h.b16 %v706
        %v766 = vunpack.c.l.b16 %v707
        %v767 = vunpack.c.h.b16 %v707
        %v768 = vpack.c.b16 %v738, %v736
        %v769 = vpack.c.b16 %v739, %v737
        %v770 = vpack.c.b16 %v742, %v740
        %v771 = vpack.c.b16 %v743, %v741
        %v772 = vpack.c.b16 %v746, %v744
        %v773 = vpack.c.b16 %v747, %v745
        %v774 = vpack.c.b16 %v750, %v748
        %v775 = vpack.c.b16 %v751, %v749
        %v776 = vpack.c.b16 %v754, %v752
        %v777 = vpack.c.b16 %v755, %v753
        %v778 = vpack.c.b16 %v758, %v756
        %v779 = vpack.c.b16 %v759, %v757
        %v780 = vpack.c.b16 %v762, %v760
        %v781 = vpack.c.b16 %v763, %v761
        %v782 = vpack.c.b16 %v766, %v764
        %v783 = vpack.c.b16 %v767, %v765
        %800 = vmatprep.subr.bf16.mxu0 %v769
        %801 = vmatpush1.bf16.msra.mxu0 %v768
        %802 = vmatprep.subr.bf16.mxu0 %v771
        %803 = vmatpush1.bf16.msra.mxu0 %v770
        %804 = vmatprep.subr.bf16.mxu0 %v773
        %805 = vmatpush1.bf16.msra.mxu0 %v772
        %806 = vmatprep.subr.bf16.mxu0 %v775
        %807 = vmatpush1.bf16.msra.mxu0 %v774
        %808 = vmatprep.subr.bf16.mxu0 %v777
        %809 = vmatpush1.bf16.msra.mxu0 %v776
        %810 = vmatprep.subr.bf16.mxu0 %v779
        %811 = vmatpush1.bf16.msra.mxu0 %v778
        %812 = vmatprep.subr.bf16.mxu0 %v781
        %813 = vmatpush1.bf16.msra.mxu0 %v780
        %814 = vmatprep.subr.bf16.mxu0 %v783
        %815 = vmatpush1.bf16.msra.mxu0 %v782
        %816 = vmatprep.subr.bf16.mxu0 0
        %817 = vmatpush1.bf16.msra.mxu0 0
        %818 = vmatprep.subr.bf16.mxu0 0
        %819 = vmatpush1.bf16.msra.mxu0 0
        %820 = vmatprep.subr.bf16.mxu0 0
        %821 = vmatpush1.bf16.msra.mxu0 0
        %822 = vmatprep.subr.bf16.mxu0 0
        %823 = vmatpush1.bf16.msra.mxu0 0
        %824 = vmatprep.subr.bf16.mxu0 0
        %825 = vmatpush1.bf16.msra.mxu0 0
        %826 = vmatprep.subr.bf16.mxu0 0
        %827 = vmatpush1.bf16.msra.mxu0 0
        %828 = vmatprep.subr.bf16.mxu0 0
        %829 = vmatpush1.bf16.msra.mxu0 0
        %830 = vmatprep.subr.bf16.mxu0 0
        %831 = vmatpush1.bf16.msra.mxu0 0
        %832 = vmatprep.mubr.bf16.mxu0 0
        %833 = vmatmul.mubr.bf16.gmra.mrb[0].mxu0 %v691
        %v834 = vpop.f32.mrb[0].mxu0
        %v835 = vadd.f32 %v713, %v834
        %v836 = vpop.f32.mrb[0].mxu0
        %v837 = vadd.f32 %v717, %v836
        %v838 = vpop.f32.mrb[0].mxu0
        %v839 = vpop.f32.mrb[0].mxu0
        %840 = vdwg.mxu0
        %v841 = vld [vmem:[%s496] sm:$0x1]
        %v842 = vpack.c.bf16 %v686, %v686
        %v843 = vpack.c.bf16 %v835, %v835
        %v844 = vpack.c.bf16 %v837, %v837
        %vm845 = vcmask 261120
        %v847 = vsel %vm845, %v842, 0
        %v850 = vsel %vm845, %v843, 0
        %852 = vmatprep.subr.bf16.mxu0 0
        %853 = vmatpush1.bf16.xpose.msra.mxu0 %v850
        %854 = vmatprep.subr.bf16.mxu0 0
        %855 = vmatpush1.bf16.xpose.msra.mxu0 0
        %856 = vmatprep.subr.bf16.mxu0 0
        %857 = vmatpush1.bf16.xpose.msra.mxu0 0
        %858 = vmatprep.subr.bf16.mxu0 0
        %859 = vmatpush1.bf16.xpose.msra.mxu0 0
        %860 = vmatprep.subr.bf16.mxu0 0
        %861 = vmatpush1.bf16.xpose.msra.mxu0 0
        %862 = vmatprep.subr.bf16.mxu0 0
        %863 = vmatpush1.bf16.xpose.msra.mxu0 0
        %864 = vmatprep.subr.bf16.mxu0 0
        %865 = vmatpush1.bf16.xpose.msra.mxu0 0
        %866 = vmatprep.subr.bf16.mxu0 0
        %867 = vmatpush1.bf16.xpose.msra.mxu0 0
        %868 = vmatprep.subr.bf16.mxu0 0
        %869 = vmatpush1.bf16.xpose.msra.mxu0 0
        %870 = vmatprep.subr.bf16.mxu0 0
        %871 = vmatpush1.bf16.xpose.msra.mxu0 0
        %872 = vmatprep.subr.bf16.mxu0 0
        %873 = vmatpush1.bf16.xpose.msra.mxu0 0
        %874 = vmatprep.subr.bf16.mxu0 0
        %875 = vmatpush1.bf16.xpose.msra.mxu0 0
        %876 = vmatprep.subr.bf16.mxu0 0
        %877 = vmatpush1.bf16.xpose.msra.mxu0 0
        %878 = vmatprep.subr.bf16.mxu0 0
        %879 = vmatpush1.bf16.xpose.msra.mxu0 0
        %880 = vmatprep.subr.bf16.mxu0 0
        %881 = vmatpush1.bf16.xpose.msra.mxu0 0
        %882 = vmatprep.subr.bf16.mxu0 0
        %883 = vmatpush1.bf16.xpose.msra.mxu0 0
        %884 = vmatprep.mubr.bf16.mxu0 0
        %885 = vmatmul.mubr.bf16.gmra.mrb[0].mxu0 %v847
        %v886 = vpop.f32.mrb[0].mxu0
        %v887 = vadd.f32 0.0, %v886
        %v888 = vpop.f32.mrb[0].mxu0
        %v889 = vpop.f32.mrb[0].mxu0
        %v890 = vpop.f32.mrb[0].mxu0
        %891 = vdwg.mxu0
        %v892 = vmul.f32 %v887, 0.17677669
        %v894 = vlaneseq
        %v895 = vshrl.u32 %v894, 7
        %v896 = vsub.s32 0, %v895
        %v897 = vrot.slane %v841, %v896
        %v899 = vadd.f32 %v892, %v897
        %vm900 = vcmask 64512
        %v901 = vsel %vm900, %v899, -inf
        %902 = vmax.xlane.f32.xlu0 %v901
        %v903 = vpop.xlane.xlu0 %902
        %v904 = vsub.f32 %v899, %v903
        %v905 = vmul.f32 %v904, 1.442695
        %v906 = vpow.pop %v905
        %v907 = vsel %vm900, %v906, 0.0
        %908 = vadd.xlane.f32.xlu0 %v907
        %v909 = vpop.xlane.xlu0 %908
        %v910 = vrcp.pop %v909
        %v911 = vmul.f32 %v906, %v910
        %v912 = vpack.c.bf16 %v911, %v911
        %v914 = vsel %vm900, %v912, 0
        %vm916 = vcmask 1043456
        %v918 = vsel %vm916, %v844, 0
        %920 = vmatprep.subr.bf16.mxu0 0
        %921 = vmatpush1.bf16.msra.mxu0 %v918
        %922 = vmatprep.subr.bf16.mxu0 0
        %923 = vmatpush1.bf16.msra.mxu0 0
        %924 = vmatprep.subr.bf16.mxu0 0
        %925 = vmatpush1.bf16.msra.mxu0 0
        %926 = vmatprep.subr.bf16.mxu0 0
        %927 = vmatpush1.bf16.msra.mxu0 0
        %928 = vmatprep.subr.bf16.mxu0 0
        %929 = vmatpush1.bf16.msra.mxu0 0
        %930 = vmatprep.subr.bf16.mxu0 0
        %931 = vmatpush1.bf16.msra.mxu0 0
        %932 = vmatprep.subr.bf16.mxu0 0
        %933 = vmatpush1.bf16.msra.mxu0 0
        %934 = vmatprep.subr.bf16.mxu0 0
        %935 = vmatpush1.bf16.msra.mxu0 0
        %936 = vmatprep.subr.bf16.mxu0 0
        %937 = vmatpush1.bf16.msra.mxu0 0
        %938 = vmatprep.subr.bf16.mxu0 0
        %939 = vmatpush1.bf16.msra.mxu0 0
        %940 = vmatprep.subr.bf16.mxu0 0
        %941 = vmatpush1.bf16.msra.mxu0 0
        %942 = vmatprep.subr.bf16.mxu0 0
        %943 = vmatpush1.bf16.msra.mxu0 0
        %944 = vmatprep.subr.bf16.mxu0 0
        %945 = vmatpush1.bf16.msra.mxu0 0
        %946 = vmatprep.subr.bf16.mxu0 0
        %947 = vmatpush1.bf16.msra.mxu0 0
        %948 = vmatprep.subr.bf16.mxu0 0
        %949 = vmatpush1.bf16.msra.mxu0 0
        %950 = vmatprep.subr.bf16.mxu0 0
        %951 = vmatpush1.bf16.msra.mxu0 0
        %952 = vmatprep.mubr.bf16.mxu0 0
        %953 = vmatmul.mubr.bf16.gmra.mrb[0].mxu0 %v914
        %v954 = vpop.f32.mrb[0].mxu0
        %v955 = vadd.f32 0.0, %v954
        %v956 = vpop.f32.mrb[0].mxu0
        %v957 = vpop.f32.mrb[0].mxu0
        %v958 = vpop.f32.mrb[0].mxu0
        %959 = vdwg.mxu0
        %960 = vst.msk [vmem:[#allocation2] sm:$0xff] %vm845, %v955
        %962 = vrot.lane.b32.xlu0 %v842, 96
        %v963 = vpop.permute.xlu0 %962
        %965 = vrot.lane.b32.xlu0 %v843, 96
        %v966 = vpop.permute.xlu0 %965
        %v968 = vsel %vm845, %v963, 0
        %v971 = vsel %vm845, %v966, 0
        %973 = vmatprep.subr.bf16.mxu0 0
        %974 = vmatpush1.bf16.xpose.msra.mxu0 %v971
        %975 = vmatprep.subr.bf16.mxu0 0
        %976 = vmatpush1.bf16.xpose.msra.mxu0 0
        %977 = vmatprep.subr.bf16.mxu0 0
        %978 = vmatpush1.bf16.xpose.msra.mxu0 0
        %979 = vmatprep.subr.bf16.mxu0 0
        %980 = vmatpush1.bf16.xpose.msra.mxu0 0
        %981 = vmatprep.subr.bf16.mxu0 0
        %982 = vmatpush1.bf16.xpose.msra.mxu0 0
        %983 = vmatprep.subr.bf16.mxu0 0
        %984 = vmatpush1.bf16.xpose.msra.mxu0 0
        %985 = vmatprep.subr.bf16.mxu0 0
        %986 = vmatpush1.bf16.xpose.msra.mxu0 0
        %987 = vmatprep.subr.bf16.mxu0 0
        %988 = vmatpush1.bf16.xpose.msra.mxu0 0
        %989 = vmatprep.subr.bf16.mxu0 0
        %990 = vmatpush1.bf16.xpose.msra.mxu0 0
        %991 = vmatprep.subr.bf16.mxu0 0
        %992 = vmatpush1.bf16.xpose.msra.mxu0 0
        %993 = vmatprep.subr.bf16.mxu0 0
        %994 = vmatpush1.bf16.xpose.msra.mxu0 0
        %995 = vmatprep.subr.bf16.mxu0 0
        %996 = vmatpush1.bf16.xpose.msra.mxu0 0
        %997 = vmatprep.subr.bf16.mxu0 0
        %998 = vmatpush1.bf16.xpose.msra.mxu0 0
        %999 = vmatprep.subr.bf16.mxu0 0
        %1000 = vmatpush1.bf16.xpose.msra.mxu0 0
        %1001 = vmatprep.subr.bf16.mxu0 0
        %1002 = vmatpush1.bf16.xpose.msra.mxu0 0
        %1003 = vmatprep.subr.bf16.mxu0 0
        %1004 = vmatpush1.bf16.xpose.msra.mxu0 0
        %1005 = vmatprep.mubr.bf16.mxu0 0
        %1006 = vmatmul.mubr.bf16.gmra.mrb[0].mxu0 %v968
        %v1007 = vpop.f32.mrb[0].mxu0
        %v1008 = vadd.f32 0.0, %v1007
        %v1009 = vpop.f32.mrb[0].mxu0
        %v1010 = vpop.f32.mrb[0].mxu0
        %v1011 = vpop.f32.mrb[0].mxu0
        %1012 = vdwg.mxu0
        %v1013 = vmul.f32 %v1008, 0.17677669
        %v1014 = vadd.f32 %v1013, %v897
        %v1015 = vsel %vm900, %v1014, -inf
        %1016 = vmax.xlane.f32.xlu0 %v1015
        %v1017 = vpop.xlane.xlu0 %1016
        %v1018 = vsub.f32 %v1014, %v1017
        %v1019 = vmul.f32 %v1018, 1.442695
        %v1020 = vpow.pop %v1019
        %v1021 = vsel %vm900, %v1020, 0.0
        %1022 = vadd.xlane.f32.xlu0 %v1021
        %v1023 = vpop.xlane.xlu0 %1022
        %v1024 = vrcp.pop %v1023
        %v1025 = vmul.f32 %v1020, %v1024
        %v1026 = vpack.c.bf16 %v1025, %v1025
        %1028 = vrot.lane.b32.xlu0 %v844, 96
        %v1029 = vpop.permute.xlu0 %1028
        %v1031 = vsel %vm900, %v1026, 0
        %v1034 = vsel %vm916, %v1029, 0
        %1036 = vmatprep.subr.bf16.mxu0 0
        %1037 = vmatpush1.bf16.msra.mxu0 %v1034
        %1038 = vmatprep.subr.bf16.mxu0 0
        %1039 = vmatpush1.bf16.msra.mxu0 0
        %1040 = vmatprep.subr.bf16.mxu0 0
        %1041 = vmatpush1.bf16.msra.mxu0 0
        %1042 = vmatprep.subr.bf16.mxu0 0
        %1043 = vmatpush1.bf16.msra.mxu0 0
        %1044 = vmatprep.subr.bf16.mxu0 0
        %1045 = vmatpush1.bf16.msra.mxu0 0
        %1046 = vmatprep.subr.bf16.mxu0 0
        %1047 = vmatpush1.bf16.msra.mxu0 0
        %1048 = vmatprep.subr.bf16.mxu0 0
        %1049 = vmatpush1.bf16.msra.mxu0 0
        %1050 = vmatprep.subr.bf16.mxu0 0
        %1051 = vmatpush1.bf16.msra.mxu0 0
        %1052 = vmatprep.subr.bf16.mxu0 0
        %1053 = vmatpush1.bf16.msra.mxu0 0
        %1054 = vmatprep.subr.bf16.mxu0 0
        %1055 = vmatpush1.bf16.msra.mxu0 0
        %1056 = vmatprep.subr.bf16.mxu0 0
        %1057 = vmatpush1.bf16.msra.mxu0 0
        %1058 = vmatprep.subr.bf16.mxu0 0
        %1059 = vmatpush1.bf16.msra.mxu0 0
        %1060 = vmatprep.subr.bf16.mxu0 0
        %1061 = vmatpush1.bf16.msra.mxu0 0
        %1062 = vmatprep.subr.bf16.mxu0 0
        %1063 = vmatpush1.bf16.msra.mxu0 0
        %1064 = vmatprep.subr.bf16.mxu0 0
        %1065 = vmatpush1.bf16.msra.mxu0 0
        %1066 = vmatprep.subr.bf16.mxu0 0
        %1067 = vmatpush1.bf16.msra.mxu0 0
        %1068 = vmatprep.mubr.bf16.mxu0 0
        %1069 = vmatmul.mubr.bf16.gmra.mrb[0].mxu0 %v1031
        %v1070 = vpop.f32.mrb[0].mxu0
        %v1071 = vadd.f32 0.0, %v1070
        %v1072 = vpop.f32.mrb[0].mxu0
        %v1073 = vpop.f32.mrb[0].mxu0
        %v1074 = vpop.f32.mrb[0].mxu0
        %1075 = vdwg.mxu0
        %1077 = vrot.lane.b32.xlu0 %v1071, 32
        %v1078 = vpop.permute.xlu0 %1077
        %vm1080 = vcmask 523520
        %1081 = vst.msk [vmem:[#allocation2] sm:$0xff] %vm1080, %v1078
        %1082 = vrot.lane.b32.xlu0 %v842, 64
        %v1083 = vpop.permute.xlu0 %1082
        %1084 = vrot.lane.b32.xlu0 %v843, 64
        %v1085 = vpop.permute.xlu0 %1084
        %v1087 = vsel %vm845, %v1083, 0
        %v1090 = vsel %vm845, %v1085, 0
        %1092 = vmatprep.subr.bf16.mxu0 0
        %1093 = vmatpush1.bf16.xpose.msra.mxu0 %v1090
        %1094 = vmatprep.subr.bf16.mxu0 0
        %1095 = vmatpush1.bf16.xpose.msra.mxu0 0
        %1096 = vmatprep.subr.bf16.mxu0 0
        %1097 = vmatpush1.bf16.xpose.msra.mxu0 0
        %1098 = vmatprep.subr.bf16.mxu0 0
        %1099 = vmatpush1.bf16.xpose.msra.mxu0 0
        %1100 = vmatprep.subr.bf16.mxu0 0
        %1101 = vmatpush1.bf16.xpose.msra.mxu0 0
        %1102 = vmatprep.subr.bf16.mxu0 0
        %1103 = vmatpush1.bf16.xpose.msra.mxu0 0
        %1104 = vmatprep.subr.bf16.mxu0 0
        %1105 = vmatpush1.bf16.xpose.msra.mxu0 0
        %1106 = vmatprep.subr.bf16.mxu0 0
        %1107 = vmatpush1.bf16.xpose.msra.mxu0 0
        %1108 = vmatprep.subr.bf16.mxu0 0
        %1109 = vmatpush1.bf16.xpose.msra.mxu0 0
        %1110 = vmatprep.subr.bf16.mxu0 0
        %1111 = vmatpush1.bf16.xpose.msra.mxu0 0
        %1112 = vmatprep.subr.bf16.mxu0 0
        %1113 = vmatpush1.bf16.xpose.msra.mxu0 0
        %1114 = vmatprep.subr.bf16.mxu0 0
        %1115 = vmatpush1.bf16.xpose.msra.mxu0 0
        %1116 = vmatprep.subr.bf16.mxu0 0
        %1117 = vmatpush1.bf16.xpose.msra.mxu0 0
        %1118 = vmatprep.subr.bf16.mxu0 0
        %1119 = vmatpush1.bf16.xpose.msra.mxu0 0
        %1120 = vmatprep.subr.bf16.mxu0 0
        %1121 = vmatpush1.bf16.xpose.msra.mxu0 0
        %1122 = vmatprep.subr.bf16.mxu0 0
        %1123 = vmatpush1.bf16.xpose.msra.mxu0 0
        %1124 = vmatprep.mubr.bf16.mxu0 0
        %1125 = vmatmul.mubr.bf16.gmra.mrb[0].mxu0 %v1087
        %v1126 = vpop.f32.mrb[0].mxu0
        %v1127 = vadd.f32 0.0, %v1126
        %v1128 = vpop.f32.mrb[0].mxu0
        %v1129 = vpop.f32.mrb[0].mxu0
        %v1130 = vpop.f32.mrb[0].mxu0
        %1131 = vdwg.mxu0
        %v1132 = vmul.f32 %v1127, 0.17677669
        %v1133 = vadd.f32 %v1132, %v897
        %v1134 = vsel %vm900, %v1133, -inf
        %1135 = vmax.xlane.f32.xlu0 %v1134
        %v1136 = vpop.xlane.xlu0 %1135
        %v1137 = vsub.f32 %v1133, %v1136
        %v1138 = vmul.f32 %v1137, 1.442695
        %v1139 = vpow.pop %v1138
        %v1140 = vsel %vm900, %v1139, 0.0
        %1141 = vadd.xlane.f32.xlu0 %v1140
        %v1142 = vpop.xlane.xlu0 %1141
        %v1143 = vrcp.pop %v1142
        %v1144 = vmul.f32 %v1139, %v1143
        %v1145 = vpack.c.bf16 %v1144, %v1144
        %1146 = vrot.lane.b32.xlu0 %v844, 64
        %v1147 = vpop.permute.xlu0 %1146
        %v1149 = vsel %vm900, %v1145, 0
        %v1152 = vsel %vm916, %v1147, 0
        %1154 = vmatprep.subr.bf16.mxu0 0
        %1155 = vmatpush1.bf16.msra.mxu0 %v1152
        %1156 = vmatprep.subr.bf16.mxu0 0
        %1157 = vmatpush1.bf16.msra.mxu0 0
        %1158 = vmatprep.subr.bf16.mxu0 0
        %1159 = vmatpush1.bf16.msra.mxu0 0
        %1160 = vmatprep.subr.bf16.mxu0 0
        %1161 = vmatpush1.bf16.msra.mxu0 0
        %1162 = vmatprep.subr.bf16.mxu0 0
        %1163 = vmatpush1.bf16.msra.mxu0 0
        %1164 = vmatprep.subr.bf16.mxu0 0
        %1165 = vmatpush1.bf16.msra.mxu0 0
        %1166 = vmatprep.subr.bf16.mxu0 0
        %1167 = vmatpush1.bf16.msra.mxu0 0
        %1168 = vmatprep.subr.bf16.mxu0 0
        %1169 = vmatpush1.bf16.msra.mxu0 0
        %1170 = vmatprep.subr.bf16.mxu0 0
        %1171 = vmatpush1.bf16.msra.mxu0 0
        %1172 = vmatprep.subr.bf16.mxu0 0
        %1173 = vmatpush1.bf16.msra.mxu0 0
        %1174 = vmatprep.subr.bf16.mxu0 0
        %1175 = vmatpush1.bf16.msra.mxu0 0
        %1176 = vmatprep.subr.bf16.mxu0 0
        %1177 = vmatpush1.bf16.msra.mxu0 0
        %1178 = vmatprep.subr.bf16.mxu0 0
        %1179 = vmatpush1.bf16.msra.mxu0 0
        %1180 = vmatprep.subr.bf16.mxu0 0
        %1181 = vmatpush1.bf16.msra.mxu0 0
        %1182 = vmatprep.subr.bf16.mxu0 0
        %1183 = vmatpush1.bf16.msra.mxu0 0
        %1184 = vmatprep.subr.bf16.mxu0 0
        %1185 = vmatpush1.bf16.msra.mxu0 0
        %1186 = vmatprep.mubr.bf16.mxu0 0
        %1187 = vmatmul.mubr.bf16.gmra.mrb[0].mxu0 %v1149
        %v1188 = vpop.f32.mrb[0].mxu0
        %v1189 = vadd.f32 0.0, %v1188
        %v1190 = vpop.f32.mrb[0].mxu0
        %v1191 = vpop.f32.mrb[0].mxu0
        %v1192 = vpop.f32.mrb[0].mxu0
        %1193 = vdwg.mxu0
        %1195 = vrot.lane.b32.xlu0 %v1189, 64
        %v1196 = vpop.permute.xlu0 %1195
        %vm1198 = vcmask 785920
        %1199 = vst.msk [vmem:[#allocation2] sm:$0xff] %vm1198, %v1196
        %1200 = vrot.lane.b32.xlu0 %v842, 32
        %v1201 = vpop.permute.xlu0 %1200
        %1202 = vrot.lane.b32.xlu0 %v843, 32
        %v1203 = vpop.permute.xlu0 %1202
        %v1205 = vsel %vm845, %v1201, 0
        %v1208 = vsel %vm845, %v1203, 0
        %1210 = vmatprep.subr.bf16.mxu0 0
        %1211 = vmatpush1.bf16.xpose.msra.mxu0 %v1208
        %1212 = vmatprep.subr.bf16.mxu0 0
        %1213 = vmatpush1.bf16.xpose.msra.mxu0 0
        %1214 = vmatprep.subr.bf16.mxu0 0
        %1215 = vmatpush1.bf16.xpose.msra.mxu0 0
        %1216 = vmatprep.subr.bf16.mxu0 0
        %1217 = vmatpush1.bf16.xpose.msra.mxu0 0
        %1218 = vmatprep.subr.bf16.mxu0 0
        %1219 = vmatpush1.bf16.xpose.msra.mxu0 0
        %1220 = vmatprep.subr.bf16.mxu0 0
        %1221 = vmatpush1.bf16.xpose.msra.mxu0 0
        %1222 = vmatprep.subr.bf16.mxu0 0
        %1223 = vmatpush1.bf16.xpose.msra.mxu0 0
        %1224 = vmatprep.subr.bf16.mxu0 0
        %1225 = vmatpush1.bf16.xpose.msra.mxu0 0
        %1226 = vmatprep.subr.bf16.mxu0 0
        %1227 = vmatpush1.bf16.xpose.msra.mxu0 0
        %1228 = vmatprep.subr.bf16.mxu0 0
        %1229 = vmatpush1.bf16.xpose.msra.mxu0 0
        %1230 = vmatprep.subr.bf16.mxu0 0
        %1231 = vmatpush1.bf16.xpose.msra.mxu0 0
        %1232 = vmatprep.subr.bf16.mxu0 0
        %1233 = vmatpush1.bf16.xpose.msra.mxu0 0
        %1234 = vmatprep.subr.bf16.mxu0 0
        %1235 = vmatpush1.bf16.xpose.msra.mxu0 0
        %1236 = vmatprep.subr.bf16.mxu0 0
        %1237 = vmatpush1.bf16.xpose.msra.mxu0 0
        %1238 = vmatprep.subr.bf16.mxu0 0
        %1239 = vmatpush1.bf16.xpose.msra.mxu0 0
        %1240 = vmatprep.subr.bf16.mxu0 0
        %1241 = vmatpush1.bf16.xpose.msra.mxu0 0
        %1242 = vmatprep.mubr.bf16.mxu0 0
        %1243 = vmatmul.mubr.bf16.gmra.mrb[0].mxu0 %v1205
        %v1244 = vpop.f32.mrb[0].mxu0
        %v1245 = vadd.f32 0.0, %v1244
        %v1246 = vpop.f32.mrb[0].mxu0
        %v1247 = vpop.f32.mrb[0].mxu0
        %v1248 = vpop.f32.mrb[0].mxu0
        %1249 = vdwg.mxu0
        %v1250 = vmul.f32 %v1245, 0.17677669
        %v1251 = vadd.f32 %v1250, %v897
        %v1252 = vsel %vm900, %v1251, -inf
        %1253 = vmax.xlane.f32.xlu0 %v1252
        %v1254 = vpop.xlane.xlu0 %1253
        %v1255 = vsub.f32 %v1251, %v1254
        %v1256 = vmul.f32 %v1255, 1.442695
        %v1257 = vpow.pop %v1256
        %v1258 = vsel %vm900, %v1257, 0.0
        %1259 = vadd.xlane.f32.xlu0 %v1258
        %v1260 = vpop.xlane.xlu0 %1259
        %v1261 = vrcp.pop %v1260
        %v1262 = vmul.f32 %v1257, %v1261
        %v1263 = vpack.c.bf16 %v1262, %v1262
        %1264 = vrot.lane.b32.xlu0 %v844, 32
        %v1265 = vpop.permute.xlu0 %1264
        %v1267 = vsel %vm900, %v1263, 0
        %v1270 = vsel %vm916, %v1265, 0
        %1272 = vmatprep.subr.bf16.mxu0 0
        %1273 = vmatpush1.bf16.msra.mxu0 %v1270
        %1274 = vmatprep.subr.bf16.mxu0 0
        %1275 = vmatpush1.bf16.msra.mxu0 0
        %1276 = vmatprep.subr.bf16.mxu0 0
        %1277 = vmatpush1.bf16.msra.mxu0 0
        %1278 = vmatprep.subr.bf16.mxu0 0
        %1279 = vmatpush1.bf16.msra.mxu0 0
        %1280 = vmatprep.subr.bf16.mxu0 0
        %1281 = vmatpush1.bf16.msra.mxu0 0
        %1282 = vmatprep.subr.bf16.mxu0 0
        %1283 = vmatpush1.bf16.msra.mxu0 0
        %1284 = vmatprep.subr.bf16.mxu0 0
        %1285 = vmatpush1.bf16.msra.mxu0 0
        %1286 = vmatprep.subr.bf16.mxu0 0
        %1287 = vmatpush1.bf16.msra.mxu0 0
        %1288 = vmatprep.subr.bf16.mxu0 0
        %1289 = vmatpush1.bf16.msra.mxu0 0
        %1290 = vmatprep.subr.bf16.mxu0 0
        %1291 = vmatpush1.bf16.msra.mxu0 0
        %1292 = vmatprep.subr.bf16.mxu0 0
        %1293 = vmatpush1.bf16.msra.mxu0 0
        %1294 = vmatprep.subr.bf16.mxu0 0
        %1295 = vmatpush1.bf16.msra.mxu0 0
        %1296 = vmatprep.subr.bf16.mxu0 0
        %1297 = vmatpush1.bf16.msra.mxu0 0
        %1298 = vmatprep.subr.bf16.mxu0 0
        %1299 = vmatpush1.bf16.msra.mxu0 0
        %1300 = vmatprep.subr.bf16.mxu0 0
        %1301 = vmatpush1.bf16.msra.mxu0 0
        %1302 = vmatprep.subr.bf16.mxu0 0
        %1303 = vmatpush1.bf16.msra.mxu0 0
        %1304 = vmatprep.mubr.bf16.mxu0 0
        %1305 = vmatmul.mubr.bf16.gmra.mrb[0].mxu0 %v1267
        %v1306 = vpop.f32.mrb[0].mxu0
        %v1307 = vadd.f32 0.0, %v1306
        %v1308 = vpop.f32.mrb[0].mxu0
        %v1309 = vpop.f32.mrb[0].mxu0
        %v1310 = vpop.f32.mrb[0].mxu0
        %1311 = vdwg.mxu0
        %1313 = vrot.lane.b32.xlu0 %v1307, 96
        %v1314 = vpop.permute.xlu0 %1313
        %vm1316 = vcmask 1048320
        %1317 = vst.msk [vmem:[#allocation2] sm:$0xff] %vm1316, %v1314
        %v1318 = vld [vmem:[#allocation2] sm:$0xff]
        %v1319 = vpack.c.bf16 %v1318, %v1318
        %v1320 = vld [vmem:[#allocation15] sm:$0xf]
        %v1321 = vld [vmem:[#allocation15 + $0x4] sm:$0xf]
        %v1322 = vld [vmem:[#allocation15 + $0x8] sm:$0xf]
        %v1323 = vld [vmem:[#allocation15 + $0xc] sm:$0xf]
        %v1324 = vld [vmem:[#allocation15 + $0x10] sm:$0xf]
        %v1325 = vld [vmem:[#allocation15 + $0x14] sm:$0xf]
        %v1326 = vld [vmem:[#allocation15 + $0x18] sm:$0xf]
        %v1327 = vld [vmem:[#allocation15 + $0x1c] sm:$0xf]
        %v1328 = vld [vmem:[#allocation15 + $0x20] sm:$0xf]
        %v1329 = vld [vmem:[#allocation15 + $0x24] sm:$0xf]
        %v1330 = vld [vmem:[#allocation15 + $0x28] sm:$0xf]
        %v1331 = vld [vmem:[#allocation15 + $0x2c] sm:$0xf]
        %v1332 = vld [vmem:[#allocation15 + $0x30] sm:$0xf]
        %v1333 = vld [vmem:[#allocation15 + $0x34] sm:$0xf]
        %v1334 = vld [vmem:[#allocation15 + $0x38] sm:$0xf]
        %v1335 = vld [vmem:[#allocation15 + $0x3c] sm:$0xf]
        %v1336 = vld [vmem:[#allocation17] sm:$0x1]
        %v1338 = vlaneseq
        %v1339 = vshrl.u32 %v1338, 7
        %v1340 = vsub.s32 0, %v1339
        %v1341 = vrot.slane %v1336, %v1340
        %v1359 = vunpack.c.l.b16 %v1320
        %v1360 = vunpack.c.l.b16 %v1321
        %v1361 = vunpack.c.l.b16 %v1322
        %v1362 = vunpack.c.l.b16 %v1323
        %v1363 = vunpack.c.l.b16 %v1324
        %v1364 = vunpack.c.l.b16 %v1325
        %v1365 = vunpack.c.l.b16 %v1326
        %v1366 = vunpack.c.l.b16 %v1327
        %v1367 = vunpack.c.l.b16 %v1328
        %v1368 = vunpack.c.l.b16 %v1329
        %v1369 = vunpack.c.l.b16 %v1330
        %v1370 = vunpack.c.l.b16 %v1331
        %v1371 = vunpack.c.l.b16 %v1332
        %v1372 = vunpack.c.l.b16 %v1333
        %v1373 = vunpack.c.l.b16 %v1334
        %v1374 = vunpack.c.l.b16 %v1335
        %v1375 = vpack.c.b16 %v1360, %v1359
        %v1376 = vpack.c.b16 %v1362, %v1361
        %v1377 = vpack.c.b16 %v1364, %v1363
        %v1378 = vpack.c.b16 %v1366, %v1365
        %v1379 = vpack.c.b16 %v1368, %v1367
        %v1380 = vpack.c.b16 %v1370, %v1369
        %v1381 = vpack.c.b16 %v1372, %v1371
        %v1382 = vpack.c.b16 %v1374, %v1373
        %1391 = vmatprep.subr.bf16.mxu0 0
        %1392 = vmatpush1.bf16.msra.mxu0 %v1375
        %1393 = vmatprep.subr.bf16.mxu0 0
        %1394 = vmatpush1.bf16.msra.mxu0 %v1376
        %1395 = vmatprep.subr.bf16.mxu0 0
        %1396 = vmatpush1.bf16.msra.mxu0 %v1377
        %1397 = vmatprep.subr.bf16.mxu0 0
        %1398 = vmatpush1.bf16.msra.mxu0 %v1378
        %1399 = vmatprep.subr.bf16.mxu0 0
        %1400 = vmatpush1.bf16.msra.mxu0 %v1379
        %1401 = vmatprep.subr.bf16.mxu0 0
        %1402 = vmatpush1.bf16.msra.mxu0 %v1380
        %1403 = vmatprep.subr.bf16.mxu0 0
        %1404 = vmatpush1.bf16.msra.mxu0 %v1381
        %1405 = vmatprep.subr.bf16.mxu0 0
        %1406 = vmatpush1.bf16.msra.mxu0 %v1382
        %1407 = vmatprep.subr.bf16.mxu0 0
        %1408 = vmatpush1.bf16.msra.mxu0 0
        %1409 = vmatprep.subr.bf16.mxu0 0
        %1410 = vmatpush1.bf16.msra.mxu0 0
        %1411 = vmatprep.subr.bf16.mxu0 0
        %1412 = vmatpush1.bf16.msra.mxu0 0
        %1413 = vmatprep.subr.bf16.mxu0 0
        %1414 = vmatpush1.bf16.msra.mxu0 0
        %1415 = vmatprep.subr.bf16.mxu0 0
        %1416 = vmatpush1.bf16.msra.mxu0 0
        %1417 = vmatprep.subr.bf16.mxu0 0
        %1418 = vmatpush1.bf16.msra.mxu0 0
        %1419 = vmatprep.subr.bf16.mxu0 0
        %1420 = vmatpush1.bf16.msra.mxu0 0
        %1421 = vmatprep.subr.bf16.mxu0 0
        %1422 = vmatpush1.bf16.msra.mxu0 0
        %1423 = vmatprep.mubr.bf16.mxu0 0
        %1424 = vmatmul.mubr.bf16.gmra.mrb[0].mxu0 %v1319
        %v1425 = vpop.f32.mrb[0].mxu0
        %v1426 = vadd.f32 %v1341, %v1425
        %v1427 = vpop.f32.mrb[0].mxu0
        %v1428 = vpop.f32.mrb[0].mxu0
        %v1429 = vpop.f32.mrb[0].mxu0
        %1430 = vdwg.mxu0
        %v1431 = vadd.f32 %v1426, %v577
        %v1432 = vld [vmem:[#allocation18] sm:$0x1]
        %v1433 = vld [vmem:[#allocation20] sm:$0x1]
        %1434 = vadd.xlane.f32.xlu0 %v1431
        %v1435 = vpop.xlane.xlu0 %1434
        %v1436 = vrcp.pop 128.0
        %v1437 = vmul.f32 %v1435, %v1436
        %v1438 = vsub.f32 %v1431, %v1437
        %v1439 = vmul.f32 %v1438, %v1438
        %1440 = vadd.xlane.f32.xlu0 %v1439
        %v1441 = vpop.xlane.xlu0 %1440
        %v1442 = vmul.f32 %v1441, %v1436
        %v1443 = vadd.f32 %v1442, 1e-05
        %v1444 = vrsqrt.pop %v1443
        %v1445 = vmul.f32 %v1438, %v1444
        %v1447 = vlaneseq
        %v1448 = vshrl.u32 %v1447, 7
        %v1449 = vsub.s32 0, %v1448
        %v1450 = vrot.slane %v1432, %v1449
        %v1452 = vmul.f32 %v1445, %v1450
        %v1454 = vlaneseq
        %v1455 = vshrl.u32 %v1454, 7
        %v1456 = vsub.s32 0, %v1455
        %v1457 = vrot.slane %v1433, %v1456
        %v1459 = vadd.f32 %v1452, %v1457
        %1460 = vst [vmem:[%s575] sm:$0xff] %v1459
        %s1461 = sand.u32 %s289, 1
        %s1462 = scalar_lea.sflag [#allocation5], %s1461
        %s1463 = sand.u32 %s289, 1
        %s1464 = smul.addr %s1463, 8
        %s1465 = scalar_lea.vmem [#allocation21], %s1464
        // Predicated region
        $region109: #{_lambda_.13} parent=63 // pred_check
          %p1466 = pneg %p299
        $region110: #{_lambda_.13} parent=63 // pred_check_branch
          %1468 = sbr.rel (%p1466) target = $region112
        $region111: #{_lambda_.13} parent=63 // pred_region
          %s1470 = ssub.s32 128, 128
          %1471 = vsyncadd %s1462, %s1470
          %s1472 = smul.addr %s35, 128
          %s1473 = scalar_lea.hbm %s11, %s1472
          %s1475 = sshll.u32 %s1465, 4
          %s1476 = int_to_ptr.vmem [resolvable:$true] %s1475
          %1478 = dma.vmem_to_hbm [thread:$0]  %s1476, 128, %s1473, %s1462
        $region112: #{_lambda_.13} parent=63 // pred_fallthru
          _
      $region64: #{_lambda_.13} parent=5 // pred_fallthru
        _
      %p1479 = scmp.le.s32.totalorder 2, %s30
      // Predicated region
      $region113: #{_lambda_.13} parent=5 // pred_check
        %p1480 = pneg %p1479
      $region114: #{_lambda_.13} parent=5 // pred_check_branch
        %1482 = sbr.rel (%p1480) target = $region116
      $region115: #{_lambda_.13} parent=5 // pred_region
        %s1483 = ssub.s32 %s30, 2
        // Predicated region
        $region117: #{_lambda_.13} parent=115 // pred_check
          %p1484 = pneg %p305
        $region118: #{_lambda_.13} parent=115 // pred_check_branch
          %1486 = sbr.rel (%p1484) target = $region120
        $region119: #{_lambda_.13} parent=115 // pred_region
          %s1487 = sand.u32 %s290, 1
          %s1488 = scalar_lea.sflag [#allocation5], %s1487
          %s1489 = sand.u32 %s290, 1
          %s1490 = smul.addr %s1489, 8
          %s1491 = scalar_lea.vmem [#allocation21], %s1490
          %1492 = dma.done %s1488, 128
        $region120: #{_lambda_.13} parent=115 // pred_fallthru
          _
      $region116: #{_lambda_.13} parent=5 // pred_fallthru
        _
    $region6: #{_lambda_.13} parent=1 // loop_footer
      %s34 = sadd.s32 1, %s30
    $region7: #{_lambda_.13} parent=1 // loop_footer_branch
      %29 = sbr.rel target = $region3
    $region8: #{_lambda_.13} parent=1 // loop_exit
      _
    %1493 = vsyncpa [#allocation4], 1
    %s1494 = scalar_lea.sflag [#allocation4], 1
    %1495 = vsyncpa %s1494, 1
    %1496 = vsyncpa [#allocation7], 1
    %s1497 = scalar_lea.sflag [#allocation7], 1
    %1498 = vsyncpa %s1497, 1
    %1499 = vsyncpa [#allocation10], 1
    %1500 = vsyncpa [#allocation13], 1
    %1501 = vsyncpa [#allocation16], 1
    %1502 = vsyncpa [#allocation19], 1
    %1503 = vsyncpa [#allocation5], 1
    %s1504 = scalar_lea.sflag [#allocation5], 1
    %1505 = vsyncpa %s1504, 1

</llo_original>
